<compile_context>
chip_gen: v7x
topology: tpu7x:2x2x1
jax: 0.10.0
libtpu: 0.0.40
codegen_flags: <defaults>
</compile_context>

<pallas_src>
import functools

import jax
import jax.numpy as jnp
from jax.experimental import pallas as pl
from jax.experimental.pallas import tpu as pltpu

K = 4                      # every ConvTranspose2d in the module is 4x4
BN_EPS = 1e-5
_VMEM = pltpu.MemorySpace.VMEM

# Sub-pixel (output-parity) tables for ConvTranspose2d(k=4, s=2, p=1):
# output row oy = 2*q + py only receives kernel rows kh with kh % 2 == 1 - py,
# reading input row iy = q + dy with dy from _REL (same tables apply to x/kx).
_REL = ((0, -1), (1, 0))     # [parity] -> relative input offsets dy (or dx)
_PAR_K = ((1, 3), (0, 2))    # [parity] -> kernel taps paired with _REL entries


# ------------------------------ shared helpers -------------------------------

def _shift_cols(x, delta):
    """y[:, c] = x[:, (c + delta) % n]; wrapped columns are masked by the caller."""
    if delta == 0:
        return x
    n = x.shape[-1]
    d = delta % n
    return jnp.concatenate([x[:, d:], x[:, :d]], axis=-1)


def _parity_patch(x, masks, py, px, spatial_w):
    """(4*Cin, mt) patch matrix for output parity (py, px), built in VMEM.

    x:     (Cin, mt) bf16 activation tile, columns flattened (batch, y, x)
    masks: (9, mt)   bf16 boundary masks, row index (dy+1)*3 + (dx+1)
    Replaces the old HBM-materialized (4, 4*Cin, M) im2col tensor with
    static lane shifts + masks on the resident activation tile."""
    cols = []
    for dy in _REL[py]:
        for dx in _REL[px]:
            tap = _shift_cols(x, dy * spatial_w + dx)
            r = (dy + 1) * 3 + (dx + 1)
            cols.append(tap * masks[r:r + 1])
    return jnp.concatenate(cols, axis=0)


def _channel_mean(y):
    """Mean over axes (0, 2) of a (P, C, M) tensor -> (1, C, 1)."""
    s = jnp.sum(y, axis=2, keepdims=True)
    s = jnp.sum(s, axis=0, keepdims=True)
    return s / (y.shape[0] * y.shape[2])


# ------------------------------ Pallas kernels --------------------------------

def _head_kernel(z_ref, w_ref, gb_ref, o_ref):
    """Fused conv_layer_1 + conv_layer_2 (1x1 spatial) + BN(train) + ReLU.

    z:  (Cin1+Cin2, B) bf16    concatenated noise/label vectors
    w:  (16*C, Cin1+Cin2) bf16 block-structured weight, rows (spatial, channel)
    gb: (1, C, 2) f32          [..., 0]=gamma, [..., 1]=beta
    o:  (16, C, B) bf16
    """
    y = jnp.dot(w_ref[...], z_ref[...], preferred_element_type=jnp.float32)
    c = o_ref.shape[1]
    y = y.reshape(K * K, c, y.shape[-1])                  # (16, C, B)
    mean = _channel_mean(y)
    var = _channel_mean(jnp.square(y - mean))
    xhat = (y - mean) * jax.lax.rsqrt(var + BN_EPS)
    gb = gb_ref[...]
    o_ref[...] = jnp.maximum(xhat * gb[:, :, 0:1] + gb[:, :, 1:2],
                             0.0).astype(o_ref.dtype)


def _convt_stats_kernel(x_ref, w_ref, m_ref, gb_ref, ss_ref, *, spatial_w, count):
    """Pass 1 of ConvT(k4,s2,p1)+BN: per-channel sum/sumsq over all parities and
    tiles, finalized into BN scale/shift on the last tile.

    x: (Cin, mt) bf16   w: (4, Cout, 4*Cin) bf16   m: (9, mt) bf16
    gb: (Cout, 2) f32 = (gamma, beta)    ss (out): (Cout, 2) f32 -> (scale, shift)
    """
    j = pl.program_id(0)

    @pl.when(j == 0)
    def _init():
        ss_ref[...] = jnp.zeros_like(ss_ref)

    x = x_ref[...]
    masks = m_ref[...]
    acc_s = jnp.zeros((ss_ref.shape[0], 1), jnp.float32)
    acc_q = jnp.zeros((ss_ref.shape[0], 1), jnp.float32)
    for py in range(2):
        for px in range(2):
            a = _parity_patch(x, masks, py, px, spatial_w)
            y = jnp.dot(w_ref[2 * py + px], a, preferred_element_type=jnp.float32)
            acc_s = acc_s + jnp.sum(y, axis=1, keepdims=True)
            acc_q = acc_q + jnp.sum(y * y, axis=1, keepdims=True)
    ss_ref[:, 0:1] += acc_s
    ss_ref[:, 1:2] += acc_q

    @pl.when(j == pl.num_programs(0) - 1)
    def _finalize():
        mean = ss_ref[:, 0:1] / count
        var = ss_ref[:, 1:2] / count - mean * mean        # biased, like torch BN
        scale = gb_ref[:, 0:1] * jax.lax.rsqrt(var + BN_EPS)
        shift = gb_ref[:, 1:2] - mean * scale
        ss_ref[:, 0:1] = scale
        ss_ref[:, 1:2] = shift


def _convt_norm_kernel(x_ref, w_ref, m_ref, ss_ref, o_ref, *, spatial_w):
    """Pass 2: recompute the parity matmuls per tile, apply scale/shift + ReLU.

    o: (4, Cout, mt) bf16 — one parity per leading index, no stacked temps."""
    x = x_ref[...]
    masks = m_ref[...]
    scale = ss_ref[:, 0:1]
    shift = ss_ref[:, 1:2]
    for py in range(2):
        for px in range(2):
            p = 2 * py + px
            a = _parity_patch(x, masks, py, px, spatial_w)
            y = jnp.dot(w_ref[p], a, preferred_element_type=jnp.float32)
            o_ref[p] = jnp.maximum(y * scale + shift, 0.0).astype(o_ref.dtype)


def _convt_tanh_kernel(x_ref, w_ref, m_ref, b_ref, o_ref, *, spatial_w, cout):
    """Final ConvT(k4,s2,p1) + bias + tanh.  Parity folded into the sublane
    axis: parity p writes output rows [p*cout, (p+1)*cout)."""
    x = x_ref[...]
    masks = m_ref[...]
    bias = b_ref[...]                                     # (cout, 1) f32
    for py in range(2):
        for px in range(2):
            p = 2 * py + px
            a = _parity_patch(x, masks, py, px, spatial_w)
            y = jnp.dot(w_ref[p], a, preferred_element_type=jnp.float32)
            o_ref[p * cout:(p + 1) * cout, :] = jnp.tanh(y + bias)


# --------------------------------- JAX glue -----------------------------------

def _parity_weights(w):
    """(Cin, Cout, 4, 4) ConvTranspose2d weight -> (4, Cout, 4*Cin) bf16."""
    cin, cout = w.shape[0], w.shape[1]
    mats = []
    for py in range(2):
        for px in range(2):
            sel = w[:, :, list(_PAR_K[py]), :][:, :, :, list(_PAR_K[px])]
            mats.append(sel.transpose(2, 3, 0, 1).reshape(4 * cin, cout).T)
    return jnp.stack(mats, axis=0).astype(jnp.bfloat16)


def _boundary_masks(tb, h, w):
    """(9, tb*h*w) 0/1 masks: row (dy+1)*3+(dx+1) is 1 where (y+dy, x+dx) is a
    valid (unpadded) input position.  Replaces explicit spatial padding."""
    idx = jnp.arange(tb * h * w)
    y = (idx // w) % h
    x = idx % w
    rows = []
    for dy in (-1, 0, 1):
        my = (y + dy >= 0) & (y + dy < h)
        for dx in (-1, 0, 1):
            mx = (x + dx >= 0) & (x + dx < w)
            rows.append(my & mx)
    return jnp.stack(rows, axis=0).astype(jnp.bfloat16)


def _pick_batch_tile(b, hw, target_m):
    """Largest whole-batch tile with tile*hw <= target_m lanes (multiple of 128
    unless it is the full batch).  Whole-batch tiles keep every in-bounds tap
    neighbour inside the tile (padding=1 never crosses a batch)."""
    if b * hw <= target_m:
        return b
    for tb in range(b, 0, -1):
        if b % tb == 0:
            mt = tb * hw
            if mt <= target_m and mt % 128 == 0:
                return tb
    return b            # TODO(synk): pad the batch instead of one giant tile


def _vmem_limit(*arrays):
    """Scoped-VMEM request derived from operand sizes (review: no fixed 32 MB).
    Clamped to [32 MiB, 64 MiB] so it is valid on every generation (v7x has
    64 MiB physical per core); raise the cap on v5e/v6e for huge batches."""
    need = sum(int(a.size) * a.dtype.itemsize for a in arrays)
    return int(min(64 * 2 ** 20, max(32 * 2 ** 20, 8 * need)))


def _interleave_parity(o4, cout, b, h, w):
    """(4, Cout, b*h*w) per-parity columns -> (Cout, b, 2h, 2w).
    TODO(synk): fold this relayout into the consumer kernel (review item 8)."""
    o = o4.reshape(2, 2, cout, b, h, w)
    o = o.transpose(2, 3, 4, 0, 5, 1)             # (C, B, H, py, W, px)
    return o.reshape(cout, b, 2 * h, 2 * w)


def head_layers(noise, label, w1, w2, g1, be1, g2, be2):
    """conv_layer_1 + conv_layer_2 + channel concat, fused in one kernel.
    Returns the flat channel-major activation (4d, B*4*4) in bf16."""
    b = noise.shape[0]
    cin1, c1 = w1.shape[0], w1.shape[1]
    cin2, c2 = w2.shape[0], w2.shape[1]
    ctot = c1 + c2
    z = jnp.concatenate([noise.reshape(b, cin1).T,
                         label.reshape(b, cin2).T], axis=0).astype(jnp.bfloat16)

    # Block-structured weight: rows = (spatial tap, out channel), cols = cin1+cin2.
    w1m = w1.transpose(2, 3, 1, 0)                        # (4, 4, c1, cin1)
    w2m = w2.transpose(2, 3, 1, 0)                        # (4, 4, c2, cin2)
    top = jnp.concatenate([w1m, jnp.zeros((K, K, c1, cin2), w1.dtype)], axis=-1)
    bot = jnp.concatenate([jnp.zeros((K, K, c2, cin1), w2.dtype), w2m], axis=-1)
    wc = jnp.concatenate([top, bot], axis=2)
    wc = wc.reshape(K * K * ctot, cin1 + cin2).astype(jnp.bfloat16)

    gb = jnp.stack([jnp.concatenate([g1, g2]),
                    jnp.concatenate([be1, be2])], axis=-1)[None]   # (1, 4d, 2)

    out = pl.pallas_call(
        _head_kernel,
        out_shape=jax.ShapeDtypeStruct((K * K, ctot, b), jnp.bfloat16),
        in_specs=[pl.BlockSpec(memory_space=_VMEM)] * 3,
        out_specs=pl.BlockSpec(memory_space=_VMEM),
        compiler_params=pltpu.CompilerParams(
            vmem_limit_bytes=_vmem_limit(z, wc, gb)),
    )(z, wc, gb)
    # TODO(synk): the head output is lane-sparse (B lanes); it is tiny, so this
    # relayout stays in XLA (review item 10).
    return out.reshape(K, K, ctot, b).transpose(2, 3, 0, 1).reshape(ctot, b * K * K)


def conv_t_s2_bn_relu(xflat, w, gamma, beta, b, h, wsp, *, target_m=1024):
    """ConvTranspose2d(k4,s2,p1) + BatchNorm(training stats) + ReLU.
    xflat: (Cin, b*h*wsp) bf16 channel-major; returns (Cout, b*2h*2wsp) bf16."""
    cin, cout = w.shape[0], w.shape[1]
    m = b * h * wsp
    wp = _parity_weights(w)                               # (4, Cout, 4*Cin) bf16
    gb = jnp.stack([gamma, beta], axis=-1)                # (Cout, 2) f32
    tb = _pick_batch_tile(b, h * wsp, target_m)
    nt = b // tb
    mt = tb * h * wsp
    masks = _boundary_masks(tb, h, wsp)                   # (9, mt) bf16
    vlim = _vmem_limit(xflat, wp, masks, gb)

    in_specs = [
        pl.BlockSpec((cin, mt), lambda j: (0, j)),
        pl.BlockSpec((4, cout, 4 * cin), lambda j: (0, 0, 0)),
        pl.BlockSpec((9, mt), lambda j: (0, 0)),
        pl.BlockSpec((cout, 2), lambda j: (0, 0)),
    ]

    # Pass 1: accumulate per-channel sum / sumsq over every tile and parity,
    # then finalize BN scale/shift (stats span the full (parity, B, H, W) extent).
    stats = pl.pallas_call(
        functools.partial(_convt_stats_kernel, spatial_w=wsp, count=float(4 * m)),
        out_shape=jax.ShapeDtypeStruct((cout, 2), jnp.float32),
        grid=(nt,),
        in_specs=in_specs,
        out_specs=pl.BlockSpec((cout, 2), lambda j: (0, 0)),
        compiler_params=pltpu.CompilerParams(
            dimension_semantics=("arbitrary",), vmem_limit_bytes=vlim),
    )(xflat, wp, masks, gb)

    # Pass 2: recompute the parity matmuls per tile and normalize ("parallel"
    # grid: independent tiles, megacore-ready on v7x).
    out4 = pl.pallas_call(
        functools.partial(_convt_norm_kernel, spatial_w=wsp),
        out_shape=jax.ShapeDtypeStruct((4, cout, m), jnp.bfloat16),
        grid=(nt,),
        in_specs=in_specs,
        out_specs=pl.BlockSpec((4, cout, mt), lambda j: (0, 0, j)),
        compiler_params=pltpu.CompilerParams(
            dimension_semantics=("parallel",), vmem_limit_bytes=vlim),
    )(xflat, wp, masks, stats)

    return _interleave_parity(out4, cout, b, h, wsp).reshape(cout, 4 * m)


def conv_t_s2_tanh(xflat, w, bias, b, h, wsp, *, target_m=1024):
    """Final ConvTranspose2d(k4,s2,p1) + bias + tanh.
    xflat: (Cin, b*h*wsp) bf16; returns (img_channels, b, 2h, 2wsp) f32."""
    cin, cout = w.shape[0], w.shape[1]
    m = b * h * wsp
    wp = _parity_weights(w)
    bcol = bias.reshape(cout, 1).astype(jnp.float32)
    tb = _pick_batch_tile(b, h * wsp, target_m)
    nt = b // tb
    mt = tb * h * wsp
    masks = _boundary_masks(tb, h, wsp)
    cost = pl.CostEstimate(
        flops=2 * 4 * cout * 4 * cin * m,
        transcendentals=4 * cout * m,
        bytes_accessed=int(xflat.size * 2 + wp.size * 2 + masks.size * 2
                           + 4 * cout * m * 4),
    )
    out = pl.pallas_call(
        functools.partial(_convt_tanh_kernel, spatial_w=wsp, cout=cout),
        out_shape=jax.ShapeDtypeStruct((4 * cout, m), jnp.float32),
        grid=(nt,),
        in_specs=[
            pl.BlockSpec((cin, mt), lambda j: (0, j)),
            pl.BlockSpec((4, cout, 4 * cin), lambda j: (0, 0, 0)),
            pl.BlockSpec((9, mt), lambda j: (0, 0)),
            pl.BlockSpec((cout, 1), lambda j: (0, 0)),
        ],
        out_specs=pl.BlockSpec((4 * cout, mt), lambda j: (0, j)),
        compiler_params=pltpu.CompilerParams(
            dimension_semantics=("parallel",),
            vmem_limit_bytes=_vmem_limit(xflat, wp, masks, bcol)),
        cost_estimate=cost,
    )(xflat, wp, masks, bcol)
    return _interleave_parity(out.reshape(4, cout, m), cout, b, h, wsp)


# ----------------------------- parameters & forward ---------------------------

def init_params(key, img_channels=1, d=16):
    """Deterministic synthetic parameters matching the torch module's shapes."""
    def conv_t(k, cin, cout):
        kw_, kb_ = jax.random.split(k)
        bound = 1.0 / jnp.sqrt(cout * K * K)   # fan used by torch ConvTranspose2d
        w = jax.random.uniform(kw_, (cin, cout, K, K), jnp.float32, -bound, bound)
        bb = jax.random.uniform(kb_, (cout,), jnp.float32, -bound, bound)
        return w, bb

    k1, k2, k3, k4, k5 = jax.random.split(key, 5)
    p = {}
    p["W1"], p["b1"] = conv_t(k1, 100, 2 * d)
    p["W2"], p["b2"] = conv_t(k2, 10, 2 * d)
    p["W3"], p["b3"] = conv_t(k3, 4 * d, 2 * d)
    p["W4"], p["b4"] = conv_t(k4, 2 * d, d)
    p["W5"], p["b5"] = conv_t(k5, d, img_channels)
    # BatchNorm affine params: torch default init (gamma=1, beta=0).
    for name, c in (("1", 2 * d), ("2", 2 * d), ("3", 2 * d), ("4", d)):
        p["g" + name] = jnp.ones((c,), jnp.float32)
        p["be" + name] = jnp.zeros((c,), jnp.float32)
    return p


def generator_forward(params, inp, label, *, target_m=1024):
    """Forward pass of the torch Generator (training-mode BatchNorm)."""
    b = inp.shape[0]
    # conv_layer_1 + conv_layer_2 + channel concat (fused head).  ConvT biases
    # b1..b4 are exactly cancelled by the BN mean subtraction and are dropped.
    x = head_layers(inp, label, params["W1"], params["W2"],
                    params["g1"], params["be1"], params["g2"], params["be2"])
    # conv_layer_3 : ConvT(4d -> 2d) + BN + ReLU,  4x4 -> 8x8
    x = conv_t_s2_bn_relu(x, params["W3"], params["g3"], params["be3"],
                          b, 4, 4, target_m=target_m)
    # conv_layer_4 : ConvT(2d -> d) + BN + ReLU,  8x8 -> 16x16
    x = conv_t_s2_bn_relu(x, params["W4"], params["g4"], params["be4"],
                          b, 8, 8, target_m=target_m)
    # final_conv_layer : ConvT(d -> img_channels) + tanh,  16x16 -> 32x32
    out = conv_t_s2_tanh(x, params["W5"], params["b5"], b, 16, 16,
                         target_m=target_m)
    return out.transpose(1, 0, 2, 3)                      # NCHW


# ------------------------------------ main -------------------------------------

if __name__ == "__main__":
    d = 16                 # small d (module default is 128); architecture unchanged
    img_channels = 1
    batch = 4

    key = jax.random.PRNGKey(0)
    k_params, k_noise = jax.random.split(key)
    params = init_params(k_params, img_channels=img_channels, d=d)

    noise = jax.random.normal(k_noise, (batch, 100, 1, 1), jnp.float32)
    label_idx = jnp.array([3, 7, 0, 9], dtype=jnp.int32)
    label = jax.nn.one_hot(label_idx, 10, dtype=jnp.float32).reshape(batch, 10, 1, 1)

    fwd = jax.jit(generator_forward, static_argnames=("target_m",))
    out = jax.block_until_ready(fwd(params, noise, label, target_m=1024))

    assert out.shape == (batch, img_channels, 32, 32), out.shape
    assert bool(jnp.all(jnp.isfinite(out)))
    assert bool(jnp.all(jnp.abs(out) <= 1.0 + 1e-6))      # tanh output range

    # Tile-invariance check: smaller targets exercise the multi-step grids
    # (cross-tile BN stats accumulation, "parallel" normalize / tanh grids);
    # results must agree up to bf16 rounding.
    for tm in (256, 128):
        alt = jax.block_until_ready(fwd(params, noise, label, target_m=tm))
        diff = float(jnp.max(jnp.abs(out - alt)))
        assert diff <= 5e-2, diff

    print("KERNEL_OK")
</pallas_src>

<mosaic_0001>
module attributes {stable_mosaic.version = 11 : i64} {
  func.func @_head_kernel(%arg0: memref<110x4xbf16, #tpu.memory_space<vmem>>, %arg1: memref<1024x110xbf16, #tpu.memory_space<vmem>>, %arg2: memref<1x64x2xf32, #tpu.memory_space<vmem>>, %arg3: memref<16x64x4xbf16, #tpu.memory_space<vmem>>) attributes {dimension_semantics = [], scalar_prefetch = 0 : i64, scratch_operands = 0 : i64, tpu.core_type = #tpu.core_type<tc>} {
    %c0 = arith.constant 0 : index
    %c0_0 = arith.constant 0 : index
    %0 = vector.load %arg1[%c0, %c0_0] : memref<1024x110xbf16, #tpu.memory_space<vmem>>, vector<1024x110xbf16>
    %c0_1 = arith.constant 0 : index
    %c0_2 = arith.constant 0 : index
    %1 = vector.load %arg0[%c0_1, %c0_2] : memref<110x4xbf16, #tpu.memory_space<vmem>>, vector<110x4xbf16>
    %cst = arith.constant dense<0.000000e+00> : vector<1024x4xf32>
    %2 = tpu.matmul %0, %1, %cst {dimension_numbers = #tpu.dot_dimension_numbers<[1], [0], [0], [1], [0, 0, 1, 1], [], []>} : vector<1024x110xbf16>, vector<110x4xbf16>, vector<1024x4xf32> -> vector<1024x4xf32>
    %3 = vector.shape_cast %2 : vector<1024x4xf32> to vector<16x64x4xf32>
    %cst_3 = arith.constant dense<0.000000e+00> : vector<16x64xf32>
    %4 = vector.multi_reduction <add>, %3, %cst_3 [2] : vector<16x64x4xf32> to vector<16x64xf32>
    %5 = vector.shape_cast %4 : vector<16x64xf32> to vector<16x64x1xf32>
    %cst_4 = arith.constant dense<0.000000e+00> : vector<64x1xf32>
    %6 = vector.multi_reduction <add>, %5, %cst_4 [0] : vector<16x64x1xf32> to vector<64x1xf32>
    %7 = vector.shape_cast %6 : vector<64x1xf32> to vector<1x64x1xf32>
    %cst_5 = arith.constant 6.400000e+01 : f32
    %8 = vector.broadcast %cst_5 : f32 to vector<1x64x1xf32>
    %9 = arith.divf %7, %8 : vector<1x64x1xf32>
    %10 = vector.broadcast %9 : vector<1x64x1xf32> to vector<16x64x4xf32>
    %11 = arith.subf %3, %10 : vector<16x64x4xf32>
    %12 = arith.mulf %11, %11 : vector<16x64x4xf32>
    %cst_6 = arith.constant dense<0.000000e+00> : vector<16x64xf32>
    %13 = vector.multi_reduction <add>, %12, %cst_6 [2] : vector<16x64x4xf32> to vector<16x64xf32>
    %14 = vector.shape_cast %13 : vector<16x64xf32> to vector<16x64x1xf32>
    %cst_7 = arith.constant dense<0.000000e+00> : vector<64x1xf32>
    %15 = vector.multi_reduction <add>, %14, %cst_7 [0] : vector<16x64x1xf32> to vector<64x1xf32>
    %16 = vector.shape_cast %15 : vector<64x1xf32> to vector<1x64x1xf32>
    %cst_8 = arith.constant 6.400000e+01 : f32
    %17 = vector.broadcast %cst_8 : f32 to vector<1x64x1xf32>
    %18 = arith.divf %16, %17 : vector<1x64x1xf32>
    %19 = vector.broadcast %9 : vector<1x64x1xf32> to vector<16x64x4xf32>
    %20 = arith.subf %3, %19 : vector<16x64x4xf32>
    %cst_9 = arith.constant 9.99999974E-6 : f32
    %21 = vector.broadcast %cst_9 : f32 to vector<1x64x1xf32>
    %22 = arith.addf %18, %21 : vector<1x64x1xf32>
    %23 = math.rsqrt %22 : vector<1x64x1xf32>
    %24 = vector.broadcast %23 : vector<1x64x1xf32> to vector<16x64x4xf32>
    %25 = arith.mulf %20, %24 : vector<16x64x4xf32>
    %c0_10 = arith.constant 0 : index
    %c0_11 = arith.constant 0 : index
    %c0_12 = arith.constant 0 : index
    %26 = vector.load %arg2[%c0_10, %c0_11, %c0_12] : memref<1x64x2xf32, #tpu.memory_space<vmem>>, vector<1x64x2xf32>
    %27 = vector.extract_strided_slice %26 {offsets = [0, 0, 0], sizes = [1, 64, 1], strides = [1, 1, 1]} : vector<1x64x2xf32> to vector<1x64x1xf32>
    %28 = vector.broadcast %27 : vector<1x64x1xf32> to vector<16x64x4xf32>
    %29 = arith.mulf %25, %28 : vector<16x64x4xf32>
    %30 = vector.extract_strided_slice %26 {offsets = [0, 0, 1], sizes = [1, 64, 1], strides = [1, 1, 1]} : vector<1x64x2xf32> to vector<1x64x1xf32>
    %31 = vector.broadcast %30 : vector<1x64x1xf32> to vector<16x64x4xf32>
    %32 = arith.addf %29, %31 : vector<16x64x4xf32>
    %cst_13 = arith.constant 0.000000e+00 : f32
    %33 = vector.broadcast %cst_13 : f32 to vector<16x64x4xf32>
    %34 = arith.maximumf %32, %33 : vector<16x64x4xf32>
    %35 = arith.truncf %34 : vector<16x64x4xf32> to vector<16x64x4xbf16>
    %c0_14 = arith.constant 0 : index
    %c0_15 = arith.constant 0 : index
    %c0_16 = arith.constant 0 : index
    %36 = vector.load %arg3[%c0_14, %c0_15, %c0_16] : memref<16x64x4xbf16, #tpu.memory_space<vmem>>, vector<16x64x4xbf16>
    tpu.vector_store %arg3[%c0_14, %c0_15, %c0_16], %35 {strides = array<i32>} : memref<16x64x4xbf16, #tpu.memory_space<vmem>>, vector<16x64x4xbf16>,
    return
  }
}

module attributes {stable_mosaic.version = 11 : i64} {
  func.func @_convt_norm_kernel(%arg0: i32, %arg1: memref<64x64xbf16, #tpu.memory_space<vmem>>, %arg2: memref<4x32x256xbf16, #tpu.memory_space<vmem>>, %arg3: memref<9x64xbf16, #tpu.memory_space<vmem>>, %arg4: memref<32x2xf32, #tpu.memory_space<vmem>>, %arg5: memref<4x32x64xbf16, #tpu.memory_space<vmem>>) attributes {dimension_semantics = [#tpu.dimension_semantics<parallel>], iteration_bounds = array<i64: 1>, scalar_prefetch = 0 : i64, scratch_operands = 0 : i64, tpu.core_type = #tpu.core_type<tc>, window_params = [{transform_indices = @transform_0, window_bounds = array<i64: 64, 64>}, {pipeline_mode = #tpu.pipeline_mode<synchronous>, transform_indices = @transform_1, window_bounds = array<i64: 4, 32, 256>}, {pipeline_mode = #tpu.pipeline_mode<synchronous>, transform_indices = @transform_2, window_bounds = array<i64: 9, 64>}, {pipeline_mode = #tpu.pipeline_mode<synchronous>, transform_indices = @transform_3, window_bounds = array<i64: 32, 2>}, {transform_indices = @transform_4, window_bounds = array<i64: 4, 32, 64>}]} {
    %c0 = arith.constant 0 : index
    %c0_0 = arith.constant 0 : index
    %0 = vector.load %arg1[%c0, %c0_0] : memref<64x64xbf16, #tpu.memory_space<vmem>>, vector<64x64xbf16>
    %c0_1 = arith.constant 0 : index
    %c0_2 = arith.constant 0 : index
    %1 = vector.load %arg3[%c0_1, %c0_2] : memref<9x64xbf16, #tpu.memory_space<vmem>>, vector<9x64xbf16>
    %c0_3 = arith.constant 0 : index
    %c0_4 = arith.constant 0 : index
    %2 = vector.load %arg4[%c0_3, %c0_4] : memref<32x2xf32, #tpu.memory_space<vmem>>, vector<32x1xf32>
    %c0_5 = arith.constant 0 : index
    %c1 = arith.constant 1 : index
    %3 = vector.load %arg4[%c0_5, %c1] : memref<32x2xf32, #tpu.memory_space<vmem>>, vector<32x1xf32>
    %4 = vector.extract_strided_slice %1 {offsets = [4, 0], sizes = [1, 64], strides = [1, 1]} : vector<9x64xbf16> to vector<1x64xbf16>
    %5 = vector.broadcast %4 : vector<1x64xbf16> to vector<64x64xbf16>
    %6 = arith.mulf %0, %5 : vector<64x64xbf16>
    %7 = vector.extract_strided_slice %0 {offsets = [0, 63], sizes = [64, 1], strides = [1, 1]} : vector<64x64xbf16> to vector<64x1xbf16>
    %8 = vector.extract_strided_slice %0 {offsets = [0, 0], sizes = [64, 63], strides = [1, 1]} : vector<64x64xbf16> to vector<64x63xbf16>
    %9 = tpu.concatenate %7, %8 in 1 : vector<64x1xbf16>, vector<64x63xbf16> -> vector<64x64xbf16>
    %10 = vector.extract_strided_slice %1 {offsets = [3, 0], sizes = [1, 64], strides = [1, 1]} : vector<9x64xbf16> to vector<1x64xbf16>
    %11 = vector.broadcast %10 : vector<1x64xbf16> to vector<64x64xbf16>
    %12 = arith.mulf %9, %11 : vector<64x64xbf16>
    %13 = vector.extract_strided_slice %0 {offsets = [0, 60], sizes = [64, 4], strides = [1, 1]} : vector<64x64xbf16> to vector<64x4xbf16>
    %14 = vector.extract_strided_slice %0 {offsets = [0, 0], sizes = [64, 60], strides = [1, 1]} : vector<64x64xbf16> to vector<64x60xbf16>
    %15 = tpu.concatenate %13, %14 in 1 : vector<64x4xbf16>, vector<64x60xbf16> -> vector<64x64xbf16>
    %16 = vector.extract_strided_slice %1 {offsets = [1, 0], sizes = [1, 64], strides = [1, 1]} : vector<9x64xbf16> to vector<1x64xbf16>
    %17 = vector.broadcast %16 : vector<1x64xbf16> to vector<64x64xbf16>
    %18 = arith.mulf %15, %17 : vector<64x64xbf16>
    %19 = vector.extract_strided_slice %0 {offsets = [0, 59], sizes = [64, 5], strides = [1, 1]} : vector<64x64xbf16> to vector<64x5xbf16>
    %20 = vector.extract_strided_slice %0 {offsets = [0, 0], sizes = [64, 59], strides = [1, 1]} : vector<64x64xbf16> to vector<64x59xbf16>
    %21 = tpu.concatenate %19, %20 in 1 : vector<64x5xbf16>, vector<64x59xbf16> -> vector<64x64xbf16>
    %22 = vector.extract_strided_slice %1 {offsets = [0, 0], sizes = [1, 64], strides = [1, 1]} : vector<9x64xbf16> to vector<1x64xbf16>
    %23 = vector.broadcast %22 : vector<1x64xbf16> to vector<64x64xbf16>
    %24 = arith.mulf %21, %23 : vector<64x64xbf16>
    %25 = tpu.concatenate %6, %12, %18, %24 in 0 : vector<64x64xbf16>, vector<64x64xbf16>, vector<64x64xbf16>, vector<64x64xbf16> -> vector<256x64xbf16>
    %c0_6 = arith.constant 0 : index
    %c0_7 = arith.constant 0 : index
    %c0_8 = arith.constant 0 : index
    %26 = vector.load %arg2[%c0_6, %c0_7, %c0_8] : memref<4x32x256xbf16, #tpu.memory_space<vmem>>, vector<1x32x256xbf16>
    %27 = vector.shape_cast %26 : vector<1x32x256xbf16> to vector<32x256xbf16>
    %cst = arith.constant dense<0.000000e+00> : vector<32x64xf32>
    %28 = tpu.matmul %27, %25, %cst {dimension_numbers = #tpu.dot_dimension_numbers<[1], [0], [0], [1], [0, 0, 1, 1], [], []>} : vector<32x256xbf16>, vector<256x64xbf16>, vector<32x64xf32> -> vector<32x64xf32>
    %29 = vector.broadcast %2 : vector<32x1xf32> to vector<32x64xf32>
    %30 = arith.mulf %28, %29 : vector<32x64xf32>
    %31 = vector.broadcast %3 : vector<32x1xf32> to vector<32x64xf32>
    %32 = arith.addf %30, %31 : vector<32x64xf32>
    %cst_9 = arith.constant 0.000000e+00 : f32
    %33 = vector.broadcast %cst_9 : f32 to vector<32x64xf32>
    %34 = arith.maximumf %32, %33 : vector<32x64xf32>
    %35 = arith.truncf %34 : vector<32x64xf32> to vector<32x64xbf16>
    %c0_10 = arith.constant 0 : index
    %c0_11 = arith.constant 0 : index
    %c0_12 = arith.constant 0 : index
    %36 = vector.load %arg5[%c0_10, %c0_11, %c0_12] : memref<4x32x64xbf16, #tpu.memory_space<vmem>>, vector<1x32x64xbf16>
    %37 = vector.shape_cast %36 : vector<1x32x64xbf16> to vector<32x64xbf16>
    %38 = vector.shape_cast %35 : vector<32x64xbf16> to vector<1x32x64xbf16>
    tpu.vector_store %arg5[%c0_10, %c0_11, %c0_12], %38 {strides = array<i32>} : memref<4x32x64xbf16, #tpu.memory_space<vmem>>, vector<1x32x64xbf16>,
    %39 = vector.extract_strided_slice %0 {offsets = [0, 1], sizes = [64, 63], strides = [1, 1]} : vector<64x64xbf16> to vector<64x63xbf16>
    %40 = vector.extract_strided_slice %0 {offsets = [0, 0], sizes = [64, 1], strides = [1, 1]} : vector<64x64xbf16> to vector<64x1xbf16>
    %41 = tpu.concatenate %39, %40 in 1 : vector<64x63xbf16>, vector<64x1xbf16> -> vector<64x64xbf16>
    %42 = vector.extract_strided_slice %1 {offsets = [5, 0], sizes = [1, 64], strides = [1, 1]} : vector<9x64xbf16> to vector<1x64xbf16>
    %43 = vector.broadcast %42 : vector<1x64xbf16> to vector<64x64xbf16>
    %44 = arith.mulf %41, %43 : vector<64x64xbf16>
    %45 = vector.extract_strided_slice %1 {offsets = [4, 0], sizes = [1, 64], strides = [1, 1]} : vector<9x64xbf16> to vector<1x64xbf16>
    %46 = vector.broadcast %45 : vector<1x64xbf16> to vector<64x64xbf16>
    %47 = arith.mulf %0, %46 : vector<64x64xbf16>
    %48 = vector.extract_strided_slice %0 {offsets = [0, 61], sizes = [64, 3], strides = [1, 1]} : vector<64x64xbf16> to vector<64x3xbf16>
    %49 = vector.extract_strided_slice %0 {offsets = [0, 0], sizes = [64, 61], strides = [1, 1]} : vector<64x64xbf16> to vector<64x61xbf16>
    %50 = tpu.concatenate %48, %49 in 1 : vector<64x3xbf16>, vector<64x61xbf16> -> vector<64x64xbf16>
    %51 = vector.extract_strided_slice %1 {offsets = [2, 0], sizes = [1, 64], strides = [1, 1]} : vector<9x64xbf16> to vector<1x64xbf16>
    %52 = vector.broadcast %51 : vector<1x64xbf16> to vector<64x64xbf16>
    %53 = arith.mulf %50, %52 : vector<64x64xbf16>
    %54 = vector.extract_strided_slice %0 {offsets = [0, 60], sizes = [64, 4], strides = [1, 1]} : vector<64x64xbf16> to vector<64x4xbf16>
    %55 = vector.extract_strided_slice %0 {offsets = [0, 0], sizes = [64, 60], strides = [1, 1]} : vector<64x64xbf16> to vector<64x60xbf16>
    %56 = tpu.concatenate %54, %55 in 1 : vector<64x4xbf16>, vector<64x60xbf16> -> vector<64x64xbf16>
    %57 = vector.extract_strided_slice %1 {offsets = [1, 0], sizes = [1, 64], strides = [1, 1]} : vector<9x64xbf16> to vector<1x64xbf16>
    %58 = vector.broadcast %57 : vector<1x64xbf16> to vector<64x64xbf16>
    %59 = arith.mulf %56, %58 : vector<64x64xbf16>
    %60 = tpu.concatenate %44, %47, %53, %59 in 0 : vector<64x64xbf16>, vector<64x64xbf16>, vector<64x64xbf16>, vector<64x64xbf16> -> vector<256x64xbf16>
    %c1_13 = arith.constant 1 : index
    %c0_14 = arith.constant 0 : index
    %c0_15 = arith.constant 0 : index
    %61 = vector.load %arg2[%c1_13, %c0_14, %c0_15] : memref<4x32x256xbf16, #tpu.memory_space<vmem>>, vector<1x32x256xbf16>
    %62 = vector.shape_cast %61 : vector<1x32x256xbf16> to vector<32x256xbf16>
    %cst_16 = arith.constant dense<0.000000e+00> : vector<32x64xf32>
    %63 = tpu.matmul %62, %60, %cst_16 {dimension_numbers = #tpu.dot_dimension_numbers<[1], [0], [0], [1], [0, 0, 1, 1], [], []>} : vector<32x256xbf16>, vector<256x64xbf16>, vector<32x64xf32> -> vector<32x64xf32>
    %64 = vector.broadcast %2 : vector<32x1xf32> to vector<32x64xf32>
    %65 = arith.mulf %63, %64 : vector<32x64xf32>
    %66 = vector.broadcast %3 : vector<32x1xf32> to vector<32x64xf32>
    %67 = arith.addf %65, %66 : vector<32x64xf32>
    %cst_17 = arith.constant 0.000000e+00 : f32
    %68 = vector.broadcast %cst_17 : f32 to vector<32x64xf32>
    %69 = arith.maximumf %67, %68 : vector<32x64xf32>
    %70 = arith.truncf %69 : vector<32x64xf32> to vector<32x64xbf16>
    %c1_18 = arith.constant 1 : index
    %c0_19 = arith.constant 0 : index
    %c0_20 = arith.constant 0 : index
    %71 = vector.load %arg5[%c1_18, %c0_19, %c0_20] : memref<4x32x64xbf16, #tpu.memory_space<vmem>>, vector<1x32x64xbf16>
    %72 = vector.shape_cast %71 : vector<1x32x64xbf16> to vector<32x64xbf16>
    %73 = vector.shape_cast %70 : vector<32x64xbf16> to vector<1x32x64xbf16>
    tpu.vector_store %arg5[%c1_18, %c0_19, %c0_20], %73 {strides = array<i32>} : memref<4x32x64xbf16, #tpu.memory_space<vmem>>, vector<1x32x64xbf16>,
    %74 = vector.extract_strided_slice %0 {offsets = [0, 4], sizes = [64, 60], strides = [1, 1]} : vector<64x64xbf16> to vector<64x60xbf16>
    %75 = vector.extract_strided_slice %0 {offsets = [0, 0], sizes = [64, 4], strides = [1, 1]} : vector<64x64xbf16> to vector<64x4xbf16>
    %76 = tpu.concatenate %74, %75 in 1 : vector<64x60xbf16>, vector<64x4xbf16> -> vector<64x64xbf16>
    %77 = vector.extract_strided_slice %1 {offsets = [7, 0], sizes = [1, 64], strides = [1, 1]} : vector<9x64xbf16> to vector<1x64xbf16>
    %78 = vector.broadcast %77 : vector<1x64xbf16> to vector<64x64xbf16>
    %79 = arith.mulf %76, %78 : vector<64x64xbf16>
    %80 = vector.extract_strided_slice %0 {offsets = [0, 3], sizes = [64, 61], strides = [1, 1]} : vector<64x64xbf16> to vector<64x61xbf16>
    %81 = vector.extract_strided_slice %0 {offsets = [0, 0], sizes = [64, 3], strides = [1, 1]} : vector<64x64xbf16> to vector<64x3xbf16>
    %82 = tpu.concatenate %80, %81 in 1 : vector<64x61xbf16>, vector<64x3xbf16> -> vector<64x64xbf16>
    %83 = vector.extract_strided_slice %1 {offsets = [6, 0], sizes = [1, 64], strides = [1, 1]} : vector<9x64xbf16> to vector<1x64xbf16>
    %84 = vector.broadcast %83 : vector<1x64xbf16> to vector<64x64xbf16>
    %85 = arith.mulf %82, %84 : vector<64x64xbf16>
    %86 = vector.extract_strided_slice %1 {offsets = [4, 0], sizes = [1, 64], strides = [1, 1]} : vector<9x64xbf16> to vector<1x64xbf16>
    %87 = vector.broadcast %86 : vector<1x64xbf16> to vector<64x64xbf16>
    %88 = arith.mulf %0, %87 : vector<64x64xbf16>
    %89 = vector.extract_strided_slice %0 {offsets = [0, 63], sizes = [64, 1], strides = [1, 1]} : vector<64x64xbf16> to vector<64x1xbf16>
    %90 = vector.extract_strided_slice %0 {offsets = [0, 0], sizes = [64, 63], strides = [1, 1]} : vector<64x64xbf16> to vector<64x63xbf16>
    %91 = tpu.concatenate %89, %90 in 1 : vector<64x1xbf16>, vector<64x63xbf16> -> vector<64x64xbf16>
    %92 = vector.extract_strided_slice %1 {offsets = [3, 0], sizes = [1, 64], strides = [1, 1]} : vector<9x64xbf16> to vector<1x64xbf16>
    %93 = vector.broadcast %92 : vector<1x64xbf16> to vector<64x64xbf16>
    %94 = arith.mulf %91, %93 : vector<64x64xbf16>
    %95 = tpu.concatenate %79, %85, %88, %94 in 0 : vector<64x64xbf16>, vector<64x64xbf16>, vector<64x64xbf16>, vector<64x64xbf16> -> vector<256x64xbf16>
    %c2 = arith.constant 2 : index
    %c0_21 = arith.constant 0 : index
    %c0_22 = arith.constant 0 : index
    %96 = vector.load %arg2[%c2, %c0_21, %c0_22] : memref<4x32x256xbf16, #tpu.memory_space<vmem>>, vector<1x32x256xbf16>
    %97 = vector.shape_cast %96 : vector<1x32x256xbf16> to vector<32x256xbf16>
    %cst_23 = arith.constant dense<0.000000e+00> : vector<32x64xf32>
    %98 = tpu.matmul %97, %95, %cst_23 {dimension_numbers = #tpu.dot_dimension_numbers<[1], [0], [0], [1], [0, 0, 1, 1], [], []>} : vector<32x256xbf16>, vector<256x64xbf16>, vector<32x64xf32> -> vector<32x64xf32>
    %99 = vector.broadcast %2 : vector<32x1xf32> to vector<32x64xf32>
    %100 = arith.mulf %98, %99 : vector<32x64xf32>
    %101 = vector.broadcast %3 : vector<32x1xf32> to vector<32x64xf32>
    %102 = arith.addf %100, %101 : vector<32x64xf32>
    %cst_24 = arith.constant 0.000000e+00 : f32
    %103 = vector.broadcast %cst_24 : f32 to vector<32x64xf32>
    %104 = arith.maximumf %102, %103 : vector<32x64xf32>
    %105 = arith.truncf %104 : vector<32x64xf32> to vector<32x64xbf16>
    %c2_25 = arith.constant 2 : index
    %c0_26 = arith.constant 0 : index
    %c0_27 = arith.constant 0 : index
    %106 = vector.load %arg5[%c2_25, %c0_26, %c0_27] : memref<4x32x64xbf16, #tpu.memory_space<vmem>>, vector<1x32x64xbf16>
    %107 = vector.shape_cast %106 : vector<1x32x64xbf16> to vector<32x64xbf16>
    %108 = vector.shape_cast %105 : vector<32x64xbf16> to vector<1x32x64xbf16>
    tpu.vector_store %arg5[%c2_25, %c0_26, %c0_27], %108 {strides = array<i32>} : memref<4x32x64xbf16, #tpu.memory_space<vmem>>, vector<1x32x64xbf16>,
    %109 = vector.extract_strided_slice %0 {offsets = [0, 5], sizes = [64, 59], strides = [1, 1]} : vector<64x64xbf16> to vector<64x59xbf16>
    %110 = vector.extract_strided_slice %0 {offsets = [0, 0], sizes = [64, 5], strides = [1, 1]} : vector<64x64xbf16> to vector<64x5xbf16>
    %111 = tpu.concatenate %109, %110 in 1 : vector<64x59xbf16>, vector<64x5xbf16> -> vector<64x64xbf16>
    %112 = vector.extract_strided_slice %1 {offsets = [8, 0], sizes = [1, 64], strides = [1, 1]} : vector<9x64xbf16> to vector<1x64xbf16>
    %113 = vector.broadcast %112 : vector<1x64xbf16> to vector<64x64xbf16>
    %114 = arith.mulf %111, %113 : vector<64x64xbf16>
    %115 = vector.extract_strided_slice %0 {offsets = [0, 4], sizes = [64, 60], strides = [1, 1]} : vector<64x64xbf16> to vector<64x60xbf16>
    %116 = vector.extract_strided_slice %0 {offsets = [0, 0], sizes = [64, 4], strides = [1, 1]} : vector<64x64xbf16> to vector<64x4xbf16>
    %117 = tpu.concatenate %115, %116 in 1 : vector<64x60xbf16>, vector<64x4xbf16> -> vector<64x64xbf16>
    %118 = vector.extract_strided_slice %1 {offsets = [7, 0], sizes = [1, 64], strides = [1, 1]} : vector<9x64xbf16> to vector<1x64xbf16>
    %119 = vector.broadcast %118 : vector<1x64xbf16> to vector<64x64xbf16>
    %120 = arith.mulf %117, %119 : vector<64x64xbf16>
    %121 = vector.extract_strided_slice %0 {offsets = [0, 1], sizes = [64, 63], strides = [1, 1]} : vector<64x64xbf16> to vector<64x63xbf16>
    %122 = vector.extract_strided_slice %0 {offsets = [0, 0], sizes = [64, 1], strides = [1, 1]} : vector<64x64xbf16> to vector<64x1xbf16>
    %123 = tpu.concatenate %121, %122 in 1 : vector<64x63xbf16>, vector<64x1xbf16> -> vector<64x64xbf16>
    %124 = vector.extract_strided_slice %1 {offsets = [5, 0], sizes = [1, 64], strides = [1, 1]} : vector<9x64xbf16> to vector<1x64xbf16>
    %125 = vector.broadcast %124 : vector<1x64xbf16> to vector<64x64xbf16>
    %126 = arith.mulf %123, %125 : vector<64x64xbf16>
    %127 = vector.extract_strided_slice %1 {offsets = [4, 0], sizes = [1, 64], strides = [1, 1]} : vector<9x64xbf16> to vector<1x64xbf16>
    %128 = vector.broadcast %127 : vector<1x64xbf16> to vector<64x64xbf16>
    %129 = arith.mulf %0, %128 : vector<64x64xbf16>
    %130 = tpu.concatenate %114, %120, %126, %129 in 0 : vector<64x64xbf16>, vector<64x64xbf16>, vector<64x64xbf16>, vector<64x64xbf16> -> vector<256x64xbf16>
    %c3 = arith.constant 3 : index
    %c0_28 = arith.constant 0 : index
    %c0_29 = arith.constant 0 : index
    %131 = vector.load %arg2[%c3, %c0_28, %c0_29] : memref<4x32x256xbf16, #tpu.memory_space<vmem>>, vector<1x32x256xbf16>
    %132 = vector.shape_cast %131 : vector<1x32x256xbf16> to vector<32x256xbf16>
    %cst_30 = arith.constant dense<0.000000e+00> : vector<32x64xf32>
    %133 = tpu.matmul %132, %130, %cst_30 {dimension_numbers = #tpu.dot_dimension_numbers<[1], [0], [0], [1], [0, 0, 1, 1], [], []>} : vector<32x256xbf16>, vector<256x64xbf16>, vector<32x64xf32> -> vector<32x64xf32>
    %134 = vector.broadcast %2 : vector<32x1xf32> to vector<32x64xf32>
    %135 = arith.mulf %133, %134 : vector<32x64xf32>
    %136 = vector.broadcast %3 : vector<32x1xf32> to vector<32x64xf32>
    %137 = arith.addf %135, %136 : vector<32x64xf32>
    %cst_31 = arith.constant 0.000000e+00 : f32
    %138 = vector.broadcast %cst_31 : f32 to vector<32x64xf32>
    %139 = arith.maximumf %137, %138 : vector<32x64xf32>
    %140 = arith.truncf %139 : vector<32x64xf32> to vector<32x64xbf16>
    %c3_32 = arith.constant 3 : index
    %c0_33 = arith.constant 0 : index
    %c0_34 = arith.constant 0 : index
    %141 = vector.load %arg5[%c3_32, %c0_33, %c0_34] : memref<4x32x64xbf16, #tpu.memory_space<vmem>>, vector<1x32x64xbf16>
    %142 = vector.shape_cast %141 : vector<1x32x64xbf16> to vector<32x64xbf16>
    %143 = vector.shape_cast %140 : vector<32x64xbf16> to vector<1x32x64xbf16>
    tpu.vector_store %arg5[%c3_32, %c0_33, %c0_34], %143 {strides = array<i32>} : memref<4x32x64xbf16, #tpu.memory_space<vmem>>, vector<1x32x64xbf16>,
    return
  }
  func.func @transform_0(%arg0: i32) -> (i32, i32) {
    %c0_i32 = arith.constant 0 : i32
    %c0_i32_0 = arith.constant 0 : i32
    return %c0_i32, %arg0 : i32, i32
  }
  func.func @transform_1(%arg0: i32) -> (i32, i32, i32) {
    %c0_i32 = arith.constant 0 : i32
    %c0_i32_0 = arith.constant 0 : i32
    %c0_i32_1 = arith.constant 0 : i32
    %c0_i32_2 = arith.constant 0 : i32
    return %c0_i32, %c0_i32_0, %c0_i32_1 : i32, i32, i32
  }
  func.func @transform_2(%arg0: i32) -> (i32, i32) {
    %c0_i32 = arith.constant 0 : i32
    %c0_i32_0 = arith.constant 0 : i32
    %c0_i32_1 = arith.constant 0 : i32
    return %c0_i32, %c0_i32_0 : i32, i32
  }
  func.func @transform_3(%arg0: i32) -> (i32, i32) {
    %c0_i32 = arith.constant 0 : i32
    %c0_i32_0 = arith.constant 0 : i32
    %c0_i32_1 = arith.constant 0 : i32
    return %c0_i32, %c0_i32_0 : i32, i32
  }
  func.func @transform_4(%arg0: i32) -> (i32, i32, i32) {
    %c0_i32 = arith.constant 0 : i32
    %c0_i32_0 = arith.constant 0 : i32
    %c0_i32_1 = arith.constant 0 : i32
    return %c0_i32, %c0_i32_0, %arg0 : i32, i32, i32
  }
}

module attributes {stable_mosaic.version = 11 : i64} {
  func.func @_convt_stats_kernel(%arg0: i32, %arg1: memref<64x64xbf16, #tpu.memory_space<vmem>>, %arg2: memref<4x32x256xbf16, #tpu.memory_space<vmem>>, %arg3: memref<9x64xbf16, #tpu.memory_space<vmem>>, %arg4: memref<32x2xf32, #tpu.memory_space<vmem>>, %arg5: memref<32x2xf32, #tpu.memory_space<vmem>>) attributes {dimension_semantics = [#tpu.dimension_semantics<arbitrary>], iteration_bounds = array<i64: 1>, scalar_prefetch = 0 : i64, scratch_operands = 0 : i64, tpu.core_type = #tpu.core_type<tc>, window_params = [{transform_indices = @transform_0, window_bounds = array<i64: 64, 64>}, {pipeline_mode = #tpu.pipeline_mode<synchronous>, transform_indices = @transform_1, window_bounds = array<i64: 4, 32, 256>}, {pipeline_mode = #tpu.pipeline_mode<synchronous>, transform_indices = @transform_2, window_bounds = array<i64: 9, 64>}, {pipeline_mode = #tpu.pipeline_mode<synchronous>, transform_indices = @transform_3, window_bounds = array<i64: 32, 2>}, {pipeline_mode = #tpu.pipeline_mode<synchronous>, transform_indices = @transform_4, window_bounds = array<i64: 32, 2>}]} {
    %c0_i32 = arith.constant 0 : i32
    %0 = arith.cmpi eq, %arg0, %c0_i32 : i32
    %1 = arith.extui %0 : i1 to i32
    %c0_i32_0 = arith.constant 0 : i32
    %2 = arith.cmpi ne, %1, %c0_i32_0 : i32
    scf.if %2 {
      %cst_36 = arith.constant 0.000000e+00 : f32
      %144 = vector.broadcast %cst_36 : f32 to vector<32x2xf32>
      %c0_37 = arith.constant 0 : index
      %c0_38 = arith.constant 0 : index
      %145 = vector.load %arg5[%c0_37, %c0_38] : memref<32x2xf32, #tpu.memory_space<vmem>>, vector<32x2xf32>
      tpu.vector_store %arg5[%c0_37, %c0_38], %144 {strides = array<i32>} : memref<32x2xf32, #tpu.memory_space<vmem>>, vector<32x2xf32>,
    } else {
    }
    %c0 = arith.constant 0 : index
    %c0_1 = arith.constant 0 : index
    %3 = vector.load %arg1[%c0, %c0_1] : memref<64x64xbf16, #tpu.memory_space<vmem>>, vector<64x64xbf16>
    %c0_2 = arith.constant 0 : index
    %c0_3 = arith.constant 0 : index
    %4 = vector.load %arg3[%c0_2, %c0_3] : memref<9x64xbf16, #tpu.memory_space<vmem>>, vector<9x64xbf16>
    %cst = arith.constant 0.000000e+00 : f32
    %5 = vector.broadcast %cst : f32 to vector<32x1xf32>
    %cst_4 = arith.constant 0.000000e+00 : f32
    %6 = vector.broadcast %cst_4 : f32 to vector<32x1xf32>
    %7 = vector.extract_strided_slice %4 {offsets = [4, 0], sizes = [1, 64], strides = [1, 1]} : vector<9x64xbf16> to vector<1x64xbf16>
    %8 = vector.broadcast %7 : vector<1x64xbf16> to vector<64x64xbf16>
    %9 = arith.mulf %3, %8 : vector<64x64xbf16>
    %10 = vector.extract_strided_slice %3 {offsets = [0, 63], sizes = [64, 1], strides = [1, 1]} : vector<64x64xbf16> to vector<64x1xbf16>
    %11 = vector.extract_strided_slice %3 {offsets = [0, 0], sizes = [64, 63], strides = [1, 1]} : vector<64x64xbf16> to vector<64x63xbf16>
    %12 = tpu.concatenate %10, %11 in 1 : vector<64x1xbf16>, vector<64x63xbf16> -> vector<64x64xbf16>
    %13 = vector.extract_strided_slice %4 {offsets = [3, 0], sizes = [1, 64], strides = [1, 1]} : vector<9x64xbf16> to vector<1x64xbf16>
    %14 = vector.broadcast %13 : vector<1x64xbf16> to vector<64x64xbf16>
    %15 = arith.mulf %12, %14 : vector<64x64xbf16>
    %16 = vector.extract_strided_slice %3 {offsets = [0, 60], sizes = [64, 4], strides = [1, 1]} : vector<64x64xbf16> to vector<64x4xbf16>
    %17 = vector.extract_strided_slice %3 {offsets = [0, 0], sizes = [64, 60], strides = [1, 1]} : vector<64x64xbf16> to vector<64x60xbf16>
    %18 = tpu.concatenate %16, %17 in 1 : vector<64x4xbf16>, vector<64x60xbf16> -> vector<64x64xbf16>
    %19 = vector.extract_strided_slice %4 {offsets = [1, 0], sizes = [1, 64], strides = [1, 1]} : vector<9x64xbf16> to vector<1x64xbf16>
    %20 = vector.broadcast %19 : vector<1x64xbf16> to vector<64x64xbf16>
    %21 = arith.mulf %18, %20 : vector<64x64xbf16>
    %22 = vector.extract_strided_slice %3 {offsets = [0, 59], sizes = [64, 5], strides = [1, 1]} : vector<64x64xbf16> to vector<64x5xbf16>
    %23 = vector.extract_strided_slice %3 {offsets = [0, 0], sizes = [64, 59], strides = [1, 1]} : vector<64x64xbf16> to vector<64x59xbf16>
    %24 = tpu.concatenate %22, %23 in 1 : vector<64x5xbf16>, vector<64x59xbf16> -> vector<64x64xbf16>
    %25 = vector.extract_strided_slice %4 {offsets = [0, 0], sizes = [1, 64], strides = [1, 1]} : vector<9x64xbf16> to vector<1x64xbf16>
    %26 = vector.broadcast %25 : vector<1x64xbf16> to vector<64x64xbf16>
    %27 = arith.mulf %24, %26 : vector<64x64xbf16>
    %28 = tpu.concatenate %9, %15, %21, %27 in 0 : vector<64x64xbf16>, vector<64x64xbf16>, vector<64x64xbf16>, vector<64x64xbf16> -> vector<256x64xbf16>
    %c0_5 = arith.constant 0 : index
    %c0_6 = arith.constant 0 : index
    %c0_7 = arith.constant 0 : index
    %29 = vector.load %arg2[%c0_5, %c0_6, %c0_7] : memref<4x32x256xbf16, #tpu.memory_space<vmem>>, vector<1x32x256xbf16>
    %30 = vector.shape_cast %29 : vector<1x32x256xbf16> to vector<32x256xbf16>
    %cst_8 = arith.constant dense<0.000000e+00> : vector<32x64xf32>
    %31 = tpu.matmul %30, %28, %cst_8 {dimension_numbers = #tpu.dot_dimension_numbers<[1], [0], [0], [1], [0, 0, 1, 1], [], []>} : vector<32x256xbf16>, vector<256x64xbf16>, vector<32x64xf32> -> vector<32x64xf32>
    %cst_9 = arith.constant dense<0.000000e+00> : vector<32xf32>
    %32 = vector.multi_reduction <add>, %31, %cst_9 [1] : vector<32x64xf32> to vector<32xf32>
    %33 = vector.shape_cast %32 : vector<32xf32> to vector<32x1xf32>
    %34 = arith.addf %5, %33 : vector<32x1xf32>
    %35 = arith.mulf %31, %31 : vector<32x64xf32>
    %cst_10 = arith.constant dense<0.000000e+00> : vector<32xf32>
    %36 = vector.multi_reduction <add>, %35, %cst_10 [1] : vector<32x64xf32> to vector<32xf32>
    %37 = vector.shape_cast %36 : vector<32xf32> to vector<32x1xf32>
    %38 = arith.addf %6, %37 : vector<32x1xf32>
    %39 = vector.extract_strided_slice %3 {offsets = [0, 1], sizes = [64, 63], strides = [1, 1]} : vector<64x64xbf16> to vector<64x63xbf16>
    %40 = vector.extract_strided_slice %3 {offsets = [0, 0], sizes = [64, 1], strides = [1, 1]} : vector<64x64xbf16> to vector<64x1xbf16>
    %41 = tpu.concatenate %39, %40 in 1 : vector<64x63xbf16>, vector<64x1xbf16> -> vector<64x64xbf16>
    %42 = vector.extract_strided_slice %4 {offsets = [5, 0], sizes = [1, 64], strides = [1, 1]} : vector<9x64xbf16> to vector<1x64xbf16>
    %43 = vector.broadcast %42 : vector<1x64xbf16> to vector<64x64xbf16>
    %44 = arith.mulf %41, %43 : vector<64x64xbf16>
    %45 = vector.extract_strided_slice %4 {offsets = [4, 0], sizes = [1, 64], strides = [1, 1]} : vector<9x64xbf16> to vector<1x64xbf16>
    %46 = vector.broadcast %45 : vector<1x64xbf16> to vector<64x64xbf16>
    %47 = arith.mulf %3, %46 : vector<64x64xbf16>
    %48 = vector.extract_strided_slice %3 {offsets = [0, 61], sizes = [64, 3], strides = [1, 1]} : vector<64x64xbf16> to vector<64x3xbf16>
    %49 = vector.extract_strided_slice %3 {offsets = [0, 0], sizes = [64, 61], strides = [1, 1]} : vector<64x64xbf16> to vector<64x61xbf16>
    %50 = tpu.concatenate %48, %49 in 1 : vector<64x3xbf16>, vector<64x61xbf16> -> vector<64x64xbf16>
    %51 = vector.extract_strided_slice %4 {offsets = [2, 0], sizes = [1, 64], strides = [1, 1]} : vector<9x64xbf16> to vector<1x64xbf16>
    %52 = vector.broadcast %51 : vector<1x64xbf16> to vector<64x64xbf16>
    %53 = arith.mulf %50, %52 : vector<64x64xbf16>
    %54 = vector.extract_strided_slice %3 {offsets = [0, 60], sizes = [64, 4], strides = [1, 1]} : vector<64x64xbf16> to vector<64x4xbf16>
    %55 = vector.extract_strided_slice %3 {offsets = [0, 0], sizes = [64, 60], strides = [1, 1]} : vector<64x64xbf16> to vector<64x60xbf16>
    %56 = tpu.concatenate %54, %55 in 1 : vector<64x4xbf16>, vector<64x60xbf16> -> vector<64x64xbf16>
    %57 = vector.extract_strided_slice %4 {offsets = [1, 0], sizes = [1, 64], strides = [1, 1]} : vector<9x64xbf16> to vector<1x64xbf16>
    %58 = vector.broadcast %57 : vector<1x64xbf16> to vector<64x64xbf16>
    %59 = arith.mulf %56, %58 : vector<64x64xbf16>
    %60 = tpu.concatenate %44, %47, %53, %59 in 0 : vector<64x64xbf16>, vector<64x64xbf16>, vector<64x64xbf16>, vector<64x64xbf16> -> vector<256x64xbf16>
    %c1 = arith.constant 1 : index
    %c0_11 = arith.constant 0 : index
    %c0_12 = arith.constant 0 : index
    %61 = vector.load %arg2[%c1, %c0_11, %c0_12] : memref<4x32x256xbf16, #tpu.memory_space<vmem>>, vector<1x32x256xbf16>
    %62 = vector.shape_cast %61 : vector<1x32x256xbf16> to vector<32x256xbf16>
    %cst_13 = arith.constant dense<0.000000e+00> : vector<32x64xf32>
    %63 = tpu.matmul %62, %60, %cst_13 {dimension_numbers = #tpu.dot_dimension_numbers<[1], [0], [0], [1], [0, 0, 1, 1], [], []>} : vector<32x256xbf16>, vector<256x64xbf16>, vector<32x64xf32> -> vector<32x64xf32>
    %cst_14 = arith.constant dense<0.000000e+00> : vector<32xf32>
    %64 = vector.multi_reduction <add>, %63, %cst_14 [1] : vector<32x64xf32> to vector<32xf32>
    %65 = vector.shape_cast %64 : vector<32xf32> to vector<32x1xf32>
    %66 = arith.addf %34, %65 : vector<32x1xf32>
    %67 = arith.mulf %63, %63 : vector<32x64xf32>
    %cst_15 = arith.constant dense<0.000000e+00> : vector<32xf32>
    %68 = vector.multi_reduction <add>, %67, %cst_15 [1] : vector<32x64xf32> to vector<32xf32>
    %69 = vector.shape_cast %68 : vector<32xf32> to vector<32x1xf32>
    %70 = arith.addf %38, %69 : vector<32x1xf32>
    %71 = vector.extract_strided_slice %3 {offsets = [0, 4], sizes = [64, 60], strides = [1, 1]} : vector<64x64xbf16> to vector<64x60xbf16>
    %72 = vector.extract_strided_slice %3 {offsets = [0, 0], sizes = [64, 4], strides = [1, 1]} : vector<64x64xbf16> to vector<64x4xbf16>
    %73 = tpu.concatenate %71, %72 in 1 : vector<64x60xbf16>, vector<64x4xbf16> -> vector<64x64xbf16>
    %74 = vector.extract_strided_slice %4 {offsets = [7, 0], sizes = [1, 64], strides = [1, 1]} : vector<9x64xbf16> to vector<1x64xbf16>
    %75 = vector.broadcast %74 : vector<1x64xbf16> to vector<64x64xbf16>
    %76 = arith.mulf %73, %75 : vector<64x64xbf16>
    %77 = vector.extract_strided_slice %3 {offsets = [0, 3], sizes = [64, 61], strides = [1, 1]} : vector<64x64xbf16> to vector<64x61xbf16>
    %78 = vector.extract_strided_slice %3 {offsets = [0, 0], sizes = [64, 3], strides = [1, 1]} : vector<64x64xbf16> to vector<64x3xbf16>
    %79 = tpu.concatenate %77, %78 in 1 : vector<64x61xbf16>, vector<64x3xbf16> -> vector<64x64xbf16>
    %80 = vector.extract_strided_slice %4 {offsets = [6, 0], sizes = [1, 64], strides = [1, 1]} : vector<9x64xbf16> to vector<1x64xbf16>
    %81 = vector.broadcast %80 : vector<1x64xbf16> to vector<64x64xbf16>
    %82 = arith.mulf %79, %81 : vector<64x64xbf16>
    %83 = vector.extract_strided_slice %4 {offsets = [4, 0], sizes = [1, 64], strides = [1, 1]} : vector<9x64xbf16> to vector<1x64xbf16>
    %84 = vector.broadcast %83 : vector<1x64xbf16> to vector<64x64xbf16>
    %85 = arith.mulf %3, %84 : vector<64x64xbf16>
    %86 = vector.extract_strided_slice %3 {offsets = [0, 63], sizes = [64, 1], strides = [1, 1]} : vector<64x64xbf16> to vector<64x1xbf16>
    %87 = vector.extract_strided_slice %3 {offsets = [0, 0], sizes = [64, 63], strides = [1, 1]} : vector<64x64xbf16> to vector<64x63xbf16>
    %88 = tpu.concatenate %86, %87 in 1 : vector<64x1xbf16>, vector<64x63xbf16> -> vector<64x64xbf16>
    %89 = vector.extract_strided_slice %4 {offsets = [3, 0], sizes = [1, 64], strides = [1, 1]} : vector<9x64xbf16> to vector<1x64xbf16>
    %90 = vector.broadcast %89 : vector<1x64xbf16> to vector<64x64xbf16>
    %91 = arith.mulf %88, %90 : vector<64x64xbf16>
    %92 = tpu.concatenate %76, %82, %85, %91 in 0 : vector<64x64xbf16>, vector<64x64xbf16>, vector<64x64xbf16>, vector<64x64xbf16> -> vector<256x64xbf16>
    %c2 = arith.constant 2 : index
    %c0_16 = arith.constant 0 : index
    %c0_17 = arith.constant 0 : index
    %93 = vector.load %arg2[%c2, %c0_16, %c0_17] : memref<4x32x256xbf16, #tpu.memory_space<vmem>>, vector<1x32x256xbf16>
    %94 = vector.shape_cast %93 : vector<1x32x256xbf16> to vector<32x256xbf16>
    %cst_18 = arith.constant dense<0.000000e+00> : vector<32x64xf32>
    %95 = tpu.matmul %94, %92, %cst_18 {dimension_numbers = #tpu.dot_dimension_numbers<[1], [0], [0], [1], [0, 0, 1, 1], [], []>} : vector<32x256xbf16>, vector<256x64xbf16>, vector<32x64xf32> -> vector<32x64xf32>
    %cst_19 = arith.constant dense<0.000000e+00> : vector<32xf32>
    %96 = vector.multi_reduction <add>, %95, %cst_19 [1] : vector<32x64xf32> to vector<32xf32>
    %97 = vector.shape_cast %96 : vector<32xf32> to vector<32x1xf32>
    %98 = arith.addf %66, %97 : vector<32x1xf32>
    %99 = arith.mulf %95, %95 : vector<32x64xf32>
    %cst_20 = arith.constant dense<0.000000e+00> : vector<32xf32>
    %100 = vector.multi_reduction <add>, %99, %cst_20 [1] : vector<32x64xf32> to vector<32xf32>
    %101 = vector.shape_cast %100 : vector<32xf32> to vector<32x1xf32>
    %102 = arith.addf %70, %101 : vector<32x1xf32>
    %103 = vector.extract_strided_slice %3 {offsets = [0, 5], sizes = [64, 59], strides = [1, 1]} : vector<64x64xbf16> to vector<64x59xbf16>
    %104 = vector.extract_strided_slice %3 {offsets = [0, 0], sizes = [64, 5], strides = [1, 1]} : vector<64x64xbf16> to vector<64x5xbf16>
    %105 = tpu.concatenate %103, %104 in 1 : vector<64x59xbf16>, vector<64x5xbf16> -> vector<64x64xbf16>
    %106 = vector.extract_strided_slice %4 {offsets = [8, 0], sizes = [1, 64], strides = [1, 1]} : vector<9x64xbf16> to vector<1x64xbf16>
    %107 = vector.broadcast %106 : vector<1x64xbf16> to vector<64x64xbf16>
    %108 = arith.mulf %105, %107 : vector<64x64xbf16>
    %109 = vector.extract_strided_slice %3 {offsets = [0, 4], sizes = [64, 60], strides = [1, 1]} : vector<64x64xbf16> to vector<64x60xbf16>
    %110 = vector.extract_strided_slice %3 {offsets = [0, 0], sizes = [64, 4], strides = [1, 1]} : vector<64x64xbf16> to vector<64x4xbf16>
    %111 = tpu.concatenate %109, %110 in 1 : vector<64x60xbf16>, vector<64x4xbf16> -> vector<64x64xbf16>
    %112 = vector.extract_strided_slice %4 {offsets = [7, 0], sizes = [1, 64], strides = [1, 1]} : vector<9x64xbf16> to vector<1x64xbf16>
    %113 = vector.broadcast %112 : vector<1x64xbf16> to vector<64x64xbf16>
    %114 = arith.mulf %111, %113 : vector<64x64xbf16>
    %115 = vector.extract_strided_slice %3 {offsets = [0, 1], sizes = [64, 63], strides = [1, 1]} : vector<64x64xbf16> to vector<64x63xbf16>
    %116 = vector.extract_strided_slice %3 {offsets = [0, 0], sizes = [64, 1], strides = [1, 1]} : vector<64x64xbf16> to vector<64x1xbf16>
    %117 = tpu.concatenate %115, %116 in 1 : vector<64x63xbf16>, vector<64x1xbf16> -> vector<64x64xbf16>
    %118 = vector.extract_strided_slice %4 {offsets = [5, 0], sizes = [1, 64], strides = [1, 1]} : vector<9x64xbf16> to vector<1x64xbf16>
    %119 = vector.broadcast %118 : vector<1x64xbf16> to vector<64x64xbf16>
    %120 = arith.mulf %117, %119 : vector<64x64xbf16>
    %121 = vector.extract_strided_slice %4 {offsets = [4, 0], sizes = [1, 64], strides = [1, 1]} : vector<9x64xbf16> to vector<1x64xbf16>
    %122 = vector.broadcast %121 : vector<1x64xbf16> to vector<64x64xbf16>
    %123 = arith.mulf %3, %122 : vector<64x64xbf16>
    %124 = tpu.concatenate %108, %114, %120, %123 in 0 : vector<64x64xbf16>, vector<64x64xbf16>, vector<64x64xbf16>, vector<64x64xbf16> -> vector<256x64xbf16>
    %c3 = arith.constant 3 : index
    %c0_21 = arith.constant 0 : index
    %c0_22 = arith.constant 0 : index
    %125 = vector.load %arg2[%c3, %c0_21, %c0_22] : memref<4x32x256xbf16, #tpu.memory_space<vmem>>, vector<1x32x256xbf16>
    %126 = vector.shape_cast %125 : vector<1x32x256xbf16> to vector<32x256xbf16>
    %cst_23 = arith.constant dense<0.000000e+00> : vector<32x64xf32>
    %127 = tpu.matmul %126, %124, %cst_23 {dimension_numbers = #tpu.dot_dimension_numbers<[1], [0], [0], [1], [0, 0, 1, 1], [], []>} : vector<32x256xbf16>, vector<256x64xbf16>, vector<32x64xf32> -> vector<32x64xf32>
    %cst_24 = arith.constant dense<0.000000e+00> : vector<32xf32>
    %128 = vector.multi_reduction <add>, %127, %cst_24 [1] : vector<32x64xf32> to vector<32xf32>
    %129 = vector.shape_cast %128 : vector<32xf32> to vector<32x1xf32>
    %130 = arith.addf %98, %129 : vector<32x1xf32>
    %131 = arith.mulf %127, %127 : vector<32x64xf32>
    %cst_25 = arith.constant dense<0.000000e+00> : vector<32xf32>
    %132 = vector.multi_reduction <add>, %131, %cst_25 [1] : vector<32x64xf32> to vector<32xf32>
    %133 = vector.shape_cast %132 : vector<32xf32> to vector<32x1xf32>
    %134 = arith.addf %102, %133 : vector<32x1xf32>
    %c0_26 = arith.constant 0 : index
    %c0_27 = arith.constant 0 : index
    %135 = vector.load %arg5[%c0_26, %c0_27] : memref<32x2xf32, #tpu.memory_space<vmem>>, vector<32x1xf32>
    %136 = arith.addf %135, %130 : vector<32x1xf32>
    %c0_28 = arith.constant 0 : index
    %c0_29 = arith.constant 0 : index
    %137 = vector.load %arg5[%c0_28, %c0_29] : memref<32x2xf32, #tpu.memory_space<vmem>>, vector<32x1xf32>
    tpu.vector_store %arg5[%c0_28, %c0_29], %136 {strides = array<i32>} : memref<32x2xf32, #tpu.memory_space<vmem>>, vector<32x1xf32>,
    %c0_30 = arith.constant 0 : index
    %c1_31 = arith.constant 1 : index
    %138 = vector.load %arg5[%c0_30, %c1_31] : memref<32x2xf32, #tpu.memory_space<vmem>>, vector<32x1xf32>
    %139 = arith.addf %138, %134 : vector<32x1xf32>
    %c0_32 = arith.constant 0 : index
    %c1_33 = arith.constant 1 : index
    %140 = vector.load %arg5[%c0_32, %c1_33] : memref<32x2xf32, #tpu.memory_space<vmem>>, vector<32x1xf32>
    tpu.vector_store %arg5[%c0_32, %c1_33], %139 {strides = array<i32>} : memref<32x2xf32, #tpu.memory_space<vmem>>, vector<32x1xf32>,
    %c0_i32_34 = arith.constant 0 : i32
    %141 = arith.cmpi eq, %arg0, %c0_i32_34 : i32
    %142 = arith.extui %141 : i1 to i32
    %c0_i32_35 = arith.constant 0 : i32
    %143 = arith.cmpi ne, %142, %c0_i32_35 : i32
    scf.if %143 {
      %c0_36 = arith.constant 0 : index
      %c0_37 = arith.constant 0 : index
      %144 = vector.load %arg5[%c0_36, %c0_37] : memref<32x2xf32, #tpu.memory_space<vmem>>, vector<32x1xf32>
      %cst_38 = arith.constant 2.560000e+02 : f32
      %145 = vector.broadcast %cst_38 : f32 to vector<32x1xf32>
      %146 = arith.divf %144, %145 : vector<32x1xf32>
      %c0_39 = arith.constant 0 : index
      %c1_40 = arith.constant 1 : index
      %147 = vector.load %arg5[%c0_39, %c1_40] : memref<32x2xf32, #tpu.memory_space<vmem>>, vector<32x1xf32>
      %cst_41 = arith.constant 2.560000e+02 : f32
      %148 = vector.broadcast %cst_41 : f32 to vector<32x1xf32>
      %149 = arith.divf %147, %148 : vector<32x1xf32>
      %150 = arith.mulf %146, %146 : vector<32x1xf32>
      %151 = arith.subf %149, %150 : vector<32x1xf32>
      %c0_42 = arith.constant 0 : index
      %c0_43 = arith.constant 0 : index
      %152 = vector.load %arg4[%c0_42, %c0_43] : memref<32x2xf32, #tpu.memory_space<vmem>>, vector<32x1xf32>
      %cst_44 = arith.constant 9.99999974E-6 : f32
      %153 = vector.broadcast %cst_44 : f32 to vector<32x1xf32>
      %154 = arith.addf %151, %153 : vector<32x1xf32>
      %155 = math.rsqrt %154 : vector<32x1xf32>
      %156 = arith.mulf %152, %155 : vector<32x1xf32>
      %c0_45 = arith.constant 0 : index
      %c1_46 = arith.constant 1 : index
      %157 = vector.load %arg4[%c0_45, %c1_46] : memref<32x2xf32, #tpu.memory_space<vmem>>, vector<32x1xf32>
      %158 = arith.mulf %146, %156 : vector<32x1xf32>
      %159 = arith.subf %157, %158 : vector<32x1xf32>
      %c0_47 = arith.constant 0 : index
      %c0_48 = arith.constant 0 : index
      %160 = vector.load %arg5[%c0_47, %c0_48] : memref<32x2xf32, #tpu.memory_space<vmem>>, vector<32x1xf32>
      tpu.vector_store %arg5[%c0_47, %c0_48], %156 {strides = array<i32>} : memref<32x2xf32, #tpu.memory_space<vmem>>, vector<32x1xf32>,
      %c0_49 = arith.constant 0 : index
      %c1_50 = arith.constant 1 : index
      %161 = vector.load %arg5[%c0_49, %c1_50] : memref<32x2xf32, #tpu.memory_space<vmem>>, vector<32x1xf32>
      tpu.vector_store %arg5[%c0_49, %c1_50], %159 {strides = array<i32>} : memref<32x2xf32, #tpu.memory_space<vmem>>, vector<32x1xf32>,
    } else {
    }
    return
  }
  func.func @transform_0(%arg0: i32) -> (i32, i32) {
    %c0_i32 = arith.constant 0 : i32
    %c0_i32_0 = arith.constant 0 : i32
    return %c0_i32, %arg0 : i32, i32
  }
  func.func @transform_1(%arg0: i32) -> (i32, i32, i32) {
    %c0_i32 = arith.constant 0 : i32
    %c0_i32_0 = arith.constant 0 : i32
    %c0_i32_1 = arith.constant 0 : i32
    %c0_i32_2 = arith.constant 0 : i32
    return %c0_i32, %c0_i32_0, %c0_i32_1 : i32, i32, i32
  }
  func.func @transform_2(%arg0: i32) -> (i32, i32) {
    %c0_i32 = arith.constant 0 : i32
    %c0_i32_0 = arith.constant 0 : i32
    %c0_i32_1 = arith.constant 0 : i32
    return %c0_i32, %c0_i32_0 : i32, i32
  }
  func.func @transform_3(%arg0: i32) -> (i32, i32) {
    %c0_i32 = arith.constant 0 : i32
    %c0_i32_0 = arith.constant 0 : i32
    %c0_i32_1 = arith.constant 0 : i32
    return %c0_i32, %c0_i32_0 : i32, i32
  }
  func.func @transform_4(%arg0: i32) -> (i32, i32) {
    %c0_i32 = arith.constant 0 : i32
    %c0_i32_0 = arith.constant 0 : i32
    %c0_i32_1 = arith.constant 0 : i32
    return %c0_i32, %c0_i32_0 : i32, i32
  }
}

module attributes {stable_mosaic.version = 11 : i64} {
  func.func @_convt_stats_kernel(%arg0: i32, %arg1: memref<32x256xbf16, #tpu.memory_space<vmem>>, %arg2: memref<4x16x128xbf16, #tpu.memory_space<vmem>>, %arg3: memref<9x256xbf16, #tpu.memory_space<vmem>>, %arg4: memref<16x2xf32, #tpu.memory_space<vmem>>, %arg5: memref<16x2xf32, #tpu.memory_space<vmem>>) attributes {dimension_semantics = [#tpu.dimension_semantics<arbitrary>], iteration_bounds = array<i64: 1>, scalar_prefetch = 0 : i64, scratch_operands = 0 : i64, tpu.core_type = #tpu.core_type<tc>, window_params = [{transform_indices = @transform_0, window_bounds = array<i64: 32, 256>}, {pipeline_mode = #tpu.pipeline_mode<synchronous>, transform_indices = @transform_1, window_bounds = array<i64: 4, 16, 128>}, {pipeline_mode = #tpu.pipeline_mode<synchronous>, transform_indices = @transform_2, window_bounds = array<i64: 9, 256>}, {pipeline_mode = #tpu.pipeline_mode<synchronous>, transform_indices = @transform_3, window_bounds = array<i64: 16, 2>}, {pipeline_mode = #tpu.pipeline_mode<synchronous>, transform_indices = @transform_4, window_bounds = array<i64: 16, 2>}]} {
    %c0_i32 = arith.constant 0 : i32
    %0 = arith.cmpi eq, %arg0, %c0_i32 : i32
    %1 = arith.extui %0 : i1 to i32
    %c0_i32_0 = arith.constant 0 : i32
    %2 = arith.cmpi ne, %1, %c0_i32_0 : i32
    scf.if %2 {
      %cst_36 = arith.constant 0.000000e+00 : f32
      %144 = vector.broadcast %cst_36 : f32 to vector<16x2xf32>
      %c0_37 = arith.constant 0 : index
      %c0_38 = arith.constant 0 : index
      %145 = vector.load %arg5[%c0_37, %c0_38] : memref<16x2xf32, #tpu.memory_space<vmem>>, vector<16x2xf32>
      tpu.vector_store %arg5[%c0_37, %c0_38], %144 {strides = array<i32>} : memref<16x2xf32, #tpu.memory_space<vmem>>, vector<16x2xf32>,
    } else {
    }
    %c0 = arith.constant 0 : index
    %c0_1 = arith.constant 0 : index
    %3 = vector.load %arg1[%c0, %c0_1] : memref<32x256xbf16, #tpu.memory_space<vmem>>, vector<32x256xbf16>
    %c0_2 = arith.constant 0 : index
    %c0_3 = arith.constant 0 : index
    %4 = vector.load %arg3[%c0_2, %c0_3] : memref<9x256xbf16, #tpu.memory_space<vmem>>, vector<9x256xbf16>
    %cst = arith.constant 0.000000e+00 : f32
    %5 = vector.broadcast %cst : f32 to vector<16x1xf32>
    %cst_4 = arith.constant 0.000000e+00 : f32
    %6 = vector.broadcast %cst_4 : f32 to vector<16x1xf32>
    %7 = vector.extract_strided_slice %4 {offsets = [4, 0], sizes = [1, 256], strides = [1, 1]} : vector<9x256xbf16> to vector<1x256xbf16>
    %8 = vector.broadcast %7 : vector<1x256xbf16> to vector<32x256xbf16>
    %9 = arith.mulf %3, %8 : vector<32x256xbf16>
    %10 = vector.extract_strided_slice %3 {offsets = [0, 255], sizes = [32, 1], strides = [1, 1]} : vector<32x256xbf16> to vector<32x1xbf16>
    %11 = vector.extract_strided_slice %3 {offsets = [0, 0], sizes = [32, 255], strides = [1, 1]} : vector<32x256xbf16> to vector<32x255xbf16>
    %12 = tpu.concatenate %10, %11 in 1 : vector<32x1xbf16>, vector<32x255xbf16> -> vector<32x256xbf16>
    %13 = vector.extract_strided_slice %4 {offsets = [3, 0], sizes = [1, 256], strides = [1, 1]} : vector<9x256xbf16> to vector<1x256xbf16>
    %14 = vector.broadcast %13 : vector<1x256xbf16> to vector<32x256xbf16>
    %15 = arith.mulf %12, %14 : vector<32x256xbf16>
    %16 = vector.extract_strided_slice %3 {offsets = [0, 248], sizes = [32, 8], strides = [1, 1]} : vector<32x256xbf16> to vector<32x8xbf16>
    %17 = vector.extract_strided_slice %3 {offsets = [0, 0], sizes = [32, 248], strides = [1, 1]} : vector<32x256xbf16> to vector<32x248xbf16>
    %18 = tpu.concatenate %16, %17 in 1 : vector<32x8xbf16>, vector<32x248xbf16> -> vector<32x256xbf16>
    %19 = vector.extract_strided_slice %4 {offsets = [1, 0], sizes = [1, 256], strides = [1, 1]} : vector<9x256xbf16> to vector<1x256xbf16>
    %20 = vector.broadcast %19 : vector<1x256xbf16> to vector<32x256xbf16>
    %21 = arith.mulf %18, %20 : vector<32x256xbf16>
    %22 = vector.extract_strided_slice %3 {offsets = [0, 247], sizes = [32, 9], strides = [1, 1]} : vector<32x256xbf16> to vector<32x9xbf16>
    %23 = vector.extract_strided_slice %3 {offsets = [0, 0], sizes = [32, 247], strides = [1, 1]} : vector<32x256xbf16> to vector<32x247xbf16>
    %24 = tpu.concatenate %22, %23 in 1 : vector<32x9xbf16>, vector<32x247xbf16> -> vector<32x256xbf16>
    %25 = vector.extract_strided_slice %4 {offsets = [0, 0], sizes = [1, 256], strides = [1, 1]} : vector<9x256xbf16> to vector<1x256xbf16>
    %26 = vector.broadcast %25 : vector<1x256xbf16> to vector<32x256xbf16>
    %27 = arith.mulf %24, %26 : vector<32x256xbf16>
    %28 = tpu.concatenate %9, %15, %21, %27 in 0 : vector<32x256xbf16>, vector<32x256xbf16>, vector<32x256xbf16>, vector<32x256xbf16> -> vector<128x256xbf16>
    %c0_5 = arith.constant 0 : index
    %c0_6 = arith.constant 0 : index
    %c0_7 = arith.constant 0 : index
    %29 = vector.load %arg2[%c0_5, %c0_6, %c0_7] : memref<4x16x128xbf16, #tpu.memory_space<vmem>>, vector<1x16x128xbf16>
    %30 = vector.shape_cast %29 : vector<1x16x128xbf16> to vector<16x128xbf16>
    %cst_8 = arith.constant dense<0.000000e+00> : vector<16x256xf32>
    %31 = tpu.matmul %30, %28, %cst_8 {dimension_numbers = #tpu.dot_dimension_numbers<[1], [0], [0], [1], [0, 0, 1, 1], [], []>} : vector<16x128xbf16>, vector<128x256xbf16>, vector<16x256xf32> -> vector<16x256xf32>
    %cst_9 = arith.constant dense<0.000000e+00> : vector<16xf32>
    %32 = vector.multi_reduction <add>, %31, %cst_9 [1] : vector<16x256xf32> to vector<16xf32>
    %33 = vector.shape_cast %32 : vector<16xf32> to vector<16x1xf32>
    %34 = arith.addf %5, %33 : vector<16x1xf32>
    %35 = arith.mulf %31, %31 : vector<16x256xf32>
    %cst_10 = arith.constant dense<0.000000e+00> : vector<16xf32>
    %36 = vector.multi_reduction <add>, %35, %cst_10 [1] : vector<16x256xf32> to vector<16xf32>
    %37 = vector.shape_cast %36 : vector<16xf32> to vector<16x1xf32>
    %38 = arith.addf %6, %37 : vector<16x1xf32>
    %39 = vector.extract_strided_slice %3 {offsets = [0, 1], sizes = [32, 255], strides = [1, 1]} : vector<32x256xbf16> to vector<32x255xbf16>
    %40 = vector.extract_strided_slice %3 {offsets = [0, 0], sizes = [32, 1], strides = [1, 1]} : vector<32x256xbf16> to vector<32x1xbf16>
    %41 = tpu.concatenate %39, %40 in 1 : vector<32x255xbf16>, vector<32x1xbf16> -> vector<32x256xbf16>
    %42 = vector.extract_strided_slice %4 {offsets = [5, 0], sizes = [1, 256], strides = [1, 1]} : vector<9x256xbf16> to vector<1x256xbf16>
    %43 = vector.broadcast %42 : vector<1x256xbf16> to vector<32x256xbf16>
    %44 = arith.mulf %41, %43 : vector<32x256xbf16>
    %45 = vector.extract_strided_slice %4 {offsets = [4, 0], sizes = [1, 256], strides = [1, 1]} : vector<9x256xbf16> to vector<1x256xbf16>
    %46 = vector.broadcast %45 : vector<1x256xbf16> to vector<32x256xbf16>
    %47 = arith.mulf %3, %46 : vector<32x256xbf16>
    %48 = vector.extract_strided_slice %3 {offsets = [0, 249], sizes = [32, 7], strides = [1, 1]} : vector<32x256xbf16> to vector<32x7xbf16>
    %49 = vector.extract_strided_slice %3 {offsets = [0, 0], sizes = [32, 249], strides = [1, 1]} : vector<32x256xbf16> to vector<32x249xbf16>
    %50 = tpu.concatenate %48, %49 in 1 : vector<32x7xbf16>, vector<32x249xbf16> -> vector<32x256xbf16>
    %51 = vector.extract_strided_slice %4 {offsets = [2, 0], sizes = [1, 256], strides = [1, 1]} : vector<9x256xbf16> to vector<1x256xbf16>
    %52 = vector.broadcast %51 : vector<1x256xbf16> to vector<32x256xbf16>
    %53 = arith.mulf %50, %52 : vector<32x256xbf16>
    %54 = vector.extract_strided_slice %3 {offsets = [0, 248], sizes = [32, 8], strides = [1, 1]} : vector<32x256xbf16> to vector<32x8xbf16>
    %55 = vector.extract_strided_slice %3 {offsets = [0, 0], sizes = [32, 248], strides = [1, 1]} : vector<32x256xbf16> to vector<32x248xbf16>
    %56 = tpu.concatenate %54, %55 in 1 : vector<32x8xbf16>, vector<32x248xbf16> -> vector<32x256xbf16>
    %57 = vector.extract_strided_slice %4 {offsets = [1, 0], sizes = [1, 256], strides = [1, 1]} : vector<9x256xbf16> to vector<1x256xbf16>
    %58 = vector.broadcast %57 : vector<1x256xbf16> to vector<32x256xbf16>
    %59 = arith.mulf %56, %58 : vector<32x256xbf16>
    %60 = tpu.concatenate %44, %47, %53, %59 in 0 : vector<32x256xbf16>, vector<32x256xbf16>, vector<32x256xbf16>, vector<32x256xbf16> -> vector<128x256xbf16>
    %c1 = arith.constant 1 : index
    %c0_11 = arith.constant 0 : index
    %c0_12 = arith.constant 0 : index
    %61 = vector.load %arg2[%c1, %c0_11, %c0_12] : memref<4x16x128xbf16, #tpu.memory_space<vmem>>, vector<1x16x128xbf16>
    %62 = vector.shape_cast %61 : vector<1x16x128xbf16> to vector<16x128xbf16>
    %cst_13 = arith.constant dense<0.000000e+00> : vector<16x256xf32>
    %63 = tpu.matmul %62, %60, %cst_13 {dimension_numbers = #tpu.dot_dimension_numbers<[1], [0], [0], [1], [0, 0, 1, 1], [], []>} : vector<16x128xbf16>, vector<128x256xbf16>, vector<16x256xf32> -> vector<16x256xf32>
    %cst_14 = arith.constant dense<0.000000e+00> : vector<16xf32>
    %64 = vector.multi_reduction <add>, %63, %cst_14 [1] : vector<16x256xf32> to vector<16xf32>
    %65 = vector.shape_cast %64 : vector<16xf32> to vector<16x1xf32>
    %66 = arith.addf %34, %65 : vector<16x1xf32>
    %67 = arith.mulf %63, %63 : vector<16x256xf32>
    %cst_15 = arith.constant dense<0.000000e+00> : vector<16xf32>
    %68 = vector.multi_reduction <add>, %67, %cst_15 [1] : vector<16x256xf32> to vector<16xf32>
    %69 = vector.shape_cast %68 : vector<16xf32> to vector<16x1xf32>
    %70 = arith.addf %38, %69 : vector<16x1xf32>
    %71 = vector.extract_strided_slice %3 {offsets = [0, 8], sizes = [32, 248], strides = [1, 1]} : vector<32x256xbf16> to vector<32x248xbf16>
    %72 = vector.extract_strided_slice %3 {offsets = [0, 0], sizes = [32, 8], strides = [1, 1]} : vector<32x256xbf16> to vector<32x8xbf16>
    %73 = tpu.concatenate %71, %72 in 1 : vector<32x248xbf16>, vector<32x8xbf16> -> vector<32x256xbf16>
    %74 = vector.extract_strided_slice %4 {offsets = [7, 0], sizes = [1, 256], strides = [1, 1]} : vector<9x256xbf16> to vector<1x256xbf16>
    %75 = vector.broadcast %74 : vector<1x256xbf16> to vector<32x256xbf16>
    %76 = arith.mulf %73, %75 : vector<32x256xbf16>
    %77 = vector.extract_strided_slice %3 {offsets = [0, 7], sizes = [32, 249], strides = [1, 1]} : vector<32x256xbf16> to vector<32x249xbf16>
    %78 = vector.extract_strided_slice %3 {offsets = [0, 0], sizes = [32, 7], strides = [1, 1]} : vector<32x256xbf16> to vector<32x7xbf16>
    %79 = tpu.concatenate %77, %78 in 1 : vector<32x249xbf16>, vector<32x7xbf16> -> vector<32x256xbf16>
    %80 = vector.extract_strided_slice %4 {offsets = [6, 0], sizes = [1, 256], strides = [1, 1]} : vector<9x256xbf16> to vector<1x256xbf16>
    %81 = vector.broadcast %80 : vector<1x256xbf16> to vector<32x256xbf16>
    %82 = arith.mulf %79, %81 : vector<32x256xbf16>
    %83 = vector.extract_strided_slice %4 {offsets = [4, 0], sizes = [1, 256], strides = [1, 1]} : vector<9x256xbf16> to vector<1x256xbf16>
    %84 = vector.broadcast %83 : vector<1x256xbf16> to vector<32x256xbf16>
    %85 = arith.mulf %3, %84 : vector<32x256xbf16>
    %86 = vector.extract_strided_slice %3 {offsets = [0, 255], sizes = [32, 1], strides = [1, 1]} : vector<32x256xbf16> to vector<32x1xbf16>
    %87 = vector.extract_strided_slice %3 {offsets = [0, 0], sizes = [32, 255], strides = [1, 1]} : vector<32x256xbf16> to vector<32x255xbf16>
    %88 = tpu.concatenate %86, %87 in 1 : vector<32x1xbf16>, vector<32x255xbf16> -> vector<32x256xbf16>
    %89 = vector.extract_strided_slice %4 {offsets = [3, 0], sizes = [1, 256], strides = [1, 1]} : vector<9x256xbf16> to vector<1x256xbf16>
    %90 = vector.broadcast %89 : vector<1x256xbf16> to vector<32x256xbf16>
    %91 = arith.mulf %88, %90 : vector<32x256xbf16>
    %92 = tpu.concatenate %76, %82, %85, %91 in 0 : vector<32x256xbf16>, vector<32x256xbf16>, vector<32x256xbf16>, vector<32x256xbf16> -> vector<128x256xbf16>
    %c2 = arith.constant 2 : index
    %c0_16 = arith.constant 0 : index
    %c0_17 = arith.constant 0 : index
    %93 = vector.load %arg2[%c2, %c0_16, %c0_17] : memref<4x16x128xbf16, #tpu.memory_space<vmem>>, vector<1x16x128xbf16>
    %94 = vector.shape_cast %93 : vector<1x16x128xbf16> to vector<16x128xbf16>
    %cst_18 = arith.constant dense<0.000000e+00> : vector<16x256xf32>
    %95 = tpu.matmul %94, %92, %cst_18 {dimension_numbers = #tpu.dot_dimension_numbers<[1], [0], [0], [1], [0, 0, 1, 1], [], []>} : vector<16x128xbf16>, vector<128x256xbf16>, vector<16x256xf32> -> vector<16x256xf32>
    %cst_19 = arith.constant dense<0.000000e+00> : vector<16xf32>
    %96 = vector.multi_reduction <add>, %95, %cst_19 [1] : vector<16x256xf32> to vector<16xf32>
    %97 = vector.shape_cast %96 : vector<16xf32> to vector<16x1xf32>
    %98 = arith.addf %66, %97 : vector<16x1xf32>
    %99 = arith.mulf %95, %95 : vector<16x256xf32>
    %cst_20 = arith.constant dense<0.000000e+00> : vector<16xf32>
    %100 = vector.multi_reduction <add>, %99, %cst_20 [1] : vector<16x256xf32> to vector<16xf32>
    %101 = vector.shape_cast %100 : vector<16xf32> to vector<16x1xf32>
    %102 = arith.addf %70, %101 : vector<16x1xf32>
    %103 = vector.extract_strided_slice %3 {offsets = [0, 9], sizes = [32, 247], strides = [1, 1]} : vector<32x256xbf16> to vector<32x247xbf16>
    %104 = vector.extract_strided_slice %3 {offsets = [0, 0], sizes = [32, 9], strides = [1, 1]} : vector<32x256xbf16> to vector<32x9xbf16>
    %105 = tpu.concatenate %103, %104 in 1 : vector<32x247xbf16>, vector<32x9xbf16> -> vector<32x256xbf16>
    %106 = vector.extract_strided_slice %4 {offsets = [8, 0], sizes = [1, 256], strides = [1, 1]} : vector<9x256xbf16> to vector<1x256xbf16>
    %107 = vector.broadcast %106 : vector<1x256xbf16> to vector<32x256xbf16>
    %108 = arith.mulf %105, %107 : vector<32x256xbf16>
    %109 = vector.extract_strided_slice %3 {offsets = [0, 8], sizes = [32, 248], strides = [1, 1]} : vector<32x256xbf16> to vector<32x248xbf16>
    %110 = vector.extract_strided_slice %3 {offsets = [0, 0], sizes = [32, 8], strides = [1, 1]} : vector<32x256xbf16> to vector<32x8xbf16>
    %111 = tpu.concatenate %109, %110 in 1 : vector<32x248xbf16>, vector<32x8xbf16> -> vector<32x256xbf16>
    %112 = vector.extract_strided_slice %4 {offsets = [7, 0], sizes = [1, 256], strides = [1, 1]} : vector<9x256xbf16> to vector<1x256xbf16>
    %113 = vector.broadcast %112 : vector<1x256xbf16> to vector<32x256xbf16>
    %114 = arith.mulf %111, %113 : vector<32x256xbf16>
    %115 = vector.extract_strided_slice %3 {offsets = [0, 1], sizes = [32, 255], strides = [1, 1]} : vector<32x256xbf16> to vector<32x255xbf16>
    %116 = vector.extract_strided_slice %3 {offsets = [0, 0], sizes = [32, 1], strides = [1, 1]} : vector<32x256xbf16> to vector<32x1xbf16>
    %117 = tpu.concatenate %115, %116 in 1 : vector<32x255xbf16>, vector<32x1xbf16> -> vector<32x256xbf16>
    %118 = vector.extract_strided_slice %4 {offsets = [5, 0], sizes = [1, 256], strides = [1, 1]} : vector<9x256xbf16> to vector<1x256xbf16>
    %119 = vector.broadcast %118 : vector<1x256xbf16> to vector<32x256xbf16>
    %120 = arith.mulf %117, %119 : vector<32x256xbf16>
    %121 = vector.extract_strided_slice %4 {offsets = [4, 0], sizes = [1, 256], strides = [1, 1]} : vector<9x256xbf16> to vector<1x256xbf16>
    %122 = vector.broadcast %121 : vector<1x256xbf16> to vector<32x256xbf16>
    %123 = arith.mulf %3, %122 : vector<32x256xbf16>
    %124 = tpu.concatenate %108, %114, %120, %123 in 0 : vector<32x256xbf16>, vector<32x256xbf16>, vector<32x256xbf16>, vector<32x256xbf16> -> vector<128x256xbf16>
    %c3 = arith.constant 3 : index
    %c0_21 = arith.constant 0 : index
    %c0_22 = arith.constant 0 : index
    %125 = vector.load %arg2[%c3, %c0_21, %c0_22] : memref<4x16x128xbf16, #tpu.memory_space<vmem>>, vector<1x16x128xbf16>
    %126 = vector.shape_cast %125 : vector<1x16x128xbf16> to vector<16x128xbf16>
    %cst_23 = arith.constant dense<0.000000e+00> : vector<16x256xf32>
    %127 = tpu.matmul %126, %124, %cst_23 {dimension_numbers = #tpu.dot_dimension_numbers<[1], [0], [0], [1], [0, 0, 1, 1], [], []>} : vector<16x128xbf16>, vector<128x256xbf16>, vector<16x256xf32> -> vector<16x256xf32>
    %cst_24 = arith.constant dense<0.000000e+00> : vector<16xf32>
    %128 = vector.multi_reduction <add>, %127, %cst_24 [1] : vector<16x256xf32> to vector<16xf32>
    %129 = vector.shape_cast %128 : vector<16xf32> to vector<16x1xf32>
    %130 = arith.addf %98, %129 : vector<16x1xf32>
    %131 = arith.mulf %127, %127 : vector<16x256xf32>
    %cst_25 = arith.constant dense<0.000000e+00> : vector<16xf32>
    %132 = vector.multi_reduction <add>, %131, %cst_25 [1] : vector<16x256xf32> to vector<16xf32>
    %133 = vector.shape_cast %132 : vector<16xf32> to vector<16x1xf32>
    %134 = arith.addf %102, %133 : vector<16x1xf32>
    %c0_26 = arith.constant 0 : index
    %c0_27 = arith.constant 0 : index
    %135 = vector.load %arg5[%c0_26, %c0_27] : memref<16x2xf32, #tpu.memory_space<vmem>>, vector<16x1xf32>
    %136 = arith.addf %135, %130 : vector<16x1xf32>
    %c0_28 = arith.constant 0 : index
    %c0_29 = arith.constant 0 : index
    %137 = vector.load %arg5[%c0_28, %c0_29] : memref<16x2xf32, #tpu.memory_space<vmem>>, vector<16x1xf32>
    tpu.vector_store %arg5[%c0_28, %c0_29], %136 {strides = array<i32>} : memref<16x2xf32, #tpu.memory_space<vmem>>, vector<16x1xf32>,
    %c0_30 = arith.constant 0 : index
    %c1_31 = arith.constant 1 : index
    %138 = vector.load %arg5[%c0_30, %c1_31] : memref<16x2xf32, #tpu.memory_space<vmem>>, vector<16x1xf32>
    %139 = arith.addf %138, %134 : vector<16x1xf32>
    %c0_32 = arith.constant 0 : index
    %c1_33 = arith.constant 1 : index
    %140 = vector.load %arg5[%c0_32, %c1_33] : memref<16x2xf32, #tpu.memory_space<vmem>>, vector<16x1xf32>
    tpu.vector_store %arg5[%c0_32, %c1_33], %139 {strides = array<i32>} : memref<16x2xf32, #tpu.memory_space<vmem>>, vector<16x1xf32>,
    %c0_i32_34 = arith.constant 0 : i32
    %141 = arith.cmpi eq, %arg0, %c0_i32_34 : i32
    %142 = arith.extui %141 : i1 to i32
    %c0_i32_35 = arith.constant 0 : i32
    %143 = arith.cmpi ne, %142, %c0_i32_35 : i32
    scf.if %143 {
      %c0_36 = arith.constant 0 : index
      %c0_37 = arith.constant 0 : index
      %144 = vector.load %arg5[%c0_36, %c0_37] : memref<16x2xf32, #tpu.memory_space<vmem>>, vector<16x1xf32>
      %cst_38 = arith.constant 1.024000e+03 : f32
      %145 = vector.broadcast %cst_38 : f32 to vector<16x1xf32>
      %146 = arith.divf %144, %145 : vector<16x1xf32>
      %c0_39 = arith.constant 0 : index
      %c1_40 = arith.constant 1 : index
      %147 = vector.load %arg5[%c0_39, %c1_40] : memref<16x2xf32, #tpu.memory_space<vmem>>, vector<16x1xf32>
      %cst_41 = arith.constant 1.024000e+03 : f32
      %148 = vector.broadcast %cst_41 : f32 to vector<16x1xf32>
      %149 = arith.divf %147, %148 : vector<16x1xf32>
      %150 = arith.mulf %146, %146 : vector<16x1xf32>
      %151 = arith.subf %149, %150 : vector<16x1xf32>
      %c0_42 = arith.constant 0 : index
      %c0_43 = arith.constant 0 : index
      %152 = vector.load %arg4[%c0_42, %c0_43] : memref<16x2xf32, #tpu.memory_space<vmem>>, vector<16x1xf32>
      %cst_44 = arith.constant 9.99999974E-6 : f32
      %153 = vector.broadcast %cst_44 : f32 to vector<16x1xf32>
      %154 = arith.addf %151, %153 : vector<16x1xf32>
      %155 = math.rsqrt %154 : vector<16x1xf32>
      %156 = arith.mulf %152, %155 : vector<16x1xf32>
      %c0_45 = arith.constant 0 : index
      %c1_46 = arith.constant 1 : index
      %157 = vector.load %arg4[%c0_45, %c1_46] : memref<16x2xf32, #tpu.memory_space<vmem>>, vector<16x1xf32>
      %158 = arith.mulf %146, %156 : vector<16x1xf32>
      %159 = arith.subf %157, %158 : vector<16x1xf32>
      %c0_47 = arith.constant 0 : index
      %c0_48 = arith.constant 0 : index
      %160 = vector.load %arg5[%c0_47, %c0_48] : memref<16x2xf32, #tpu.memory_space<vmem>>, vector<16x1xf32>
      tpu.vector_store %arg5[%c0_47, %c0_48], %156 {strides = array<i32>} : memref<16x2xf32, #tpu.memory_space<vmem>>, vector<16x1xf32>,
      %c0_49 = arith.constant 0 : index
      %c1_50 = arith.constant 1 : index
      %161 = vector.load %arg5[%c0_49, %c1_50] : memref<16x2xf32, #tpu.memory_space<vmem>>, vector<16x1xf32>
      tpu.vector_store %arg5[%c0_49, %c1_50], %159 {strides = array<i32>} : memref<16x2xf32, #tpu.memory_space<vmem>>, vector<16x1xf32>,
    } else {
    }
    return
  }
  func.func @transform_0(%arg0: i32) -> (i32, i32) {
    %c0_i32 = arith.constant 0 : i32
    %c0_i32_0 = arith.constant 0 : i32
    return %c0_i32, %arg0 : i32, i32
  }
  func.func @transform_1(%arg0: i32) -> (i32, i32, i32) {
    %c0_i32 = arith.constant 0 : i32
    %c0_i32_0 = arith.constant 0 : i32
    %c0_i32_1 = arith.constant 0 : i32
    %c0_i32_2 = arith.constant 0 : i32
    return %c0_i32, %c0_i32_0, %c0_i32_1 : i32, i32, i32
  }
  func.func @transform_2(%arg0: i32) -> (i32, i32) {
    %c0_i32 = arith.constant 0 : i32
    %c0_i32_0 = arith.constant 0 : i32
    %c0_i32_1 = arith.constant 0 : i32
    return %c0_i32, %c0_i32_0 : i32, i32
  }
  func.func @transform_3(%arg0: i32) -> (i32, i32) {
    %c0_i32 = arith.constant 0 : i32
    %c0_i32_0 = arith.constant 0 : i32
    %c0_i32_1 = arith.constant 0 : i32
    return %c0_i32, %c0_i32_0 : i32, i32
  }
  func.func @transform_4(%arg0: i32) -> (i32, i32) {
    %c0_i32 = arith.constant 0 : i32
    %c0_i32_0 = arith.constant 0 : i32
    %c0_i32_1 = arith.constant 0 : i32
    return %c0_i32, %c0_i32_0 : i32, i32
  }
}

module attributes {stable_mosaic.version = 11 : i64} {
  func.func @_convt_norm_kernel(%arg0: i32, %arg1: memref<32x256xbf16, #tpu.memory_space<vmem>>, %arg2: memref<4x16x128xbf16, #tpu.memory_space<vmem>>, %arg3: memref<9x256xbf16, #tpu.memory_space<vmem>>, %arg4: memref<16x2xf32, #tpu.memory_space<vmem>>, %arg5: memref<4x16x256xbf16, #tpu.memory_space<vmem>>) attributes {dimension_semantics = [#tpu.dimension_semantics<parallel>], iteration_bounds = array<i64: 1>, scalar_prefetch = 0 : i64, scratch_operands = 0 : i64, tpu.core_type = #tpu.core_type<tc>, window_params = [{transform_indices = @transform_0, window_bounds = array<i64: 32, 256>}, {pipeline_mode = #tpu.pipeline_mode<synchronous>, transform_indices = @transform_1, window_bounds = array<i64: 4, 16, 128>}, {pipeline_mode = #tpu.pipeline_mode<synchronous>, transform_indices = @transform_2, window_bounds = array<i64: 9, 256>}, {pipeline_mode = #tpu.pipeline_mode<synchronous>, transform_indices = @transform_3, window_bounds = array<i64: 16, 2>}, {transform_indices = @transform_4, window_bounds = array<i64: 4, 16, 256>}]} {
    %c0 = arith.constant 0 : index
    %c0_0 = arith.constant 0 : index
    %0 = vector.load %arg1[%c0, %c0_0] : memref<32x256xbf16, #tpu.memory_space<vmem>>, vector<32x256xbf16>
    %c0_1 = arith.constant 0 : index
    %c0_2 = arith.constant 0 : index
    %1 = vector.load %arg3[%c0_1, %c0_2] : memref<9x256xbf16, #tpu.memory_space<vmem>>, vector<9x256xbf16>
    %c0_3 = arith.constant 0 : index
    %c0_4 = arith.constant 0 : index
    %2 = vector.load %arg4[%c0_3, %c0_4] : memref<16x2xf32, #tpu.memory_space<vmem>>, vector<16x1xf32>
    %c0_5 = arith.constant 0 : index
    %c1 = arith.constant 1 : index
    %3 = vector.load %arg4[%c0_5, %c1] : memref<16x2xf32, #tpu.memory_space<vmem>>, vector<16x1xf32>
    %4 = vector.extract_strided_slice %1 {offsets = [4, 0], sizes = [1, 256], strides = [1, 1]} : vector<9x256xbf16> to vector<1x256xbf16>
    %5 = vector.broadcast %4 : vector<1x256xbf16> to vector<32x256xbf16>
    %6 = arith.mulf %0, %5 : vector<32x256xbf16>
    %7 = vector.extract_strided_slice %0 {offsets = [0, 255], sizes = [32, 1], strides = [1, 1]} : vector<32x256xbf16> to vector<32x1xbf16>
    %8 = vector.extract_strided_slice %0 {offsets = [0, 0], sizes = [32, 255], strides = [1, 1]} : vector<32x256xbf16> to vector<32x255xbf16>
    %9 = tpu.concatenate %7, %8 in 1 : vector<32x1xbf16>, vector<32x255xbf16> -> vector<32x256xbf16>
    %10 = vector.extract_strided_slice %1 {offsets = [3, 0], sizes = [1, 256], strides = [1, 1]} : vector<9x256xbf16> to vector<1x256xbf16>
    %11 = vector.broadcast %10 : vector<1x256xbf16> to vector<32x256xbf16>
    %12 = arith.mulf %9, %11 : vector<32x256xbf16>
    %13 = vector.extract_strided_slice %0 {offsets = [0, 248], sizes = [32, 8], strides = [1, 1]} : vector<32x256xbf16> to vector<32x8xbf16>
    %14 = vector.extract_strided_slice %0 {offsets = [0, 0], sizes = [32, 248], strides = [1, 1]} : vector<32x256xbf16> to vector<32x248xbf16>
    %15 = tpu.concatenate %13, %14 in 1 : vector<32x8xbf16>, vector<32x248xbf16> -> vector<32x256xbf16>
    %16 = vector.extract_strided_slice %1 {offsets = [1, 0], sizes = [1, 256], strides = [1, 1]} : vector<9x256xbf16> to vector<1x256xbf16>
    %17 = vector.broadcast %16 : vector<1x256xbf16> to vector<32x256xbf16>
    %18 = arith.mulf %15, %17 : vector<32x256xbf16>
    %19 = vector.extract_strided_slice %0 {offsets = [0, 247], sizes = [32, 9], strides = [1, 1]} : vector<32x256xbf16> to vector<32x9xbf16>
    %20 = vector.extract_strided_slice %0 {offsets = [0, 0], sizes = [32, 247], strides = [1, 1]} : vector<32x256xbf16> to vector<32x247xbf16>
    %21 = tpu.concatenate %19, %20 in 1 : vector<32x9xbf16>, vector<32x247xbf16> -> vector<32x256xbf16>
    %22 = vector.extract_strided_slice %1 {offsets = [0, 0], sizes = [1, 256], strides = [1, 1]} : vector<9x256xbf16> to vector<1x256xbf16>
    %23 = vector.broadcast %22 : vector<1x256xbf16> to vector<32x256xbf16>
    %24 = arith.mulf %21, %23 : vector<32x256xbf16>
    %25 = tpu.concatenate %6, %12, %18, %24 in 0 : vector<32x256xbf16>, vector<32x256xbf16>, vector<32x256xbf16>, vector<32x256xbf16> -> vector<128x256xbf16>
    %c0_6 = arith.constant 0 : index
    %c0_7 = arith.constant 0 : index
    %c0_8 = arith.constant 0 : index
    %26 = vector.load %arg2[%c0_6, %c0_7, %c0_8] : memref<4x16x128xbf16, #tpu.memory_space<vmem>>, vector<1x16x128xbf16>
    %27 = vector.shape_cast %26 : vector<1x16x128xbf16> to vector<16x128xbf16>
    %cst = arith.constant dense<0.000000e+00> : vector<16x256xf32>
    %28 = tpu.matmul %27, %25, %cst {dimension_numbers = #tpu.dot_dimension_numbers<[1], [0], [0], [1], [0, 0, 1, 1], [], []>} : vector<16x128xbf16>, vector<128x256xbf16>, vector<16x256xf32> -> vector<16x256xf32>
    %29 = vector.broadcast %2 : vector<16x1xf32> to vector<16x256xf32>
    %30 = arith.mulf %28, %29 : vector<16x256xf32>
    %31 = vector.broadcast %3 : vector<16x1xf32> to vector<16x256xf32>
    %32 = arith.addf %30, %31 : vector<16x256xf32>
    %cst_9 = arith.constant 0.000000e+00 : f32
    %33 = vector.broadcast %cst_9 : f32 to vector<16x256xf32>
    %34 = arith.maximumf %32, %33 : vector<16x256xf32>
    %35 = arith.truncf %34 : vector<16x256xf32> to vector<16x256xbf16>
    %c0_10 = arith.constant 0 : index
    %c0_11 = arith.constant 0 : index
    %c0_12 = arith.constant 0 : index
    %36 = vector.load %arg5[%c0_10, %c0_11, %c0_12] : memref<4x16x256xbf16, #tpu.memory_space<vmem>>, vector<1x16x256xbf16>
    %37 = vector.shape_cast %36 : vector<1x16x256xbf16> to vector<16x256xbf16>
    %38 = vector.shape_cast %35 : vector<16x256xbf16> to vector<1x16x256xbf16>
    tpu.vector_store %arg5[%c0_10, %c0_11, %c0_12], %38 {strides = array<i32>} : memref<4x16x256xbf16, #tpu.memory_space<vmem>>, vector<1x16x256xbf16>,
    %39 = vector.extract_strided_slice %0 {offsets = [0, 1], sizes = [32, 255], strides = [1, 1]} : vector<32x256xbf16> to vector<32x255xbf16>
    %40 = vector.extract_strided_slice %0 {offsets = [0, 0], sizes = [32, 1], strides = [1, 1]} : vector<32x256xbf16> to vector<32x1xbf16>
    %41 = tpu.concatenate %39, %40 in 1 : vector<32x255xbf16>, vector<32x1xbf16> -> vector<32x256xbf16>
    %42 = vector.extract_strided_slice %1 {offsets = [5, 0], sizes = [1, 256], strides = [1, 1]} : vector<9x256xbf16> to vector<1x256xbf16>
    %43 = vector.broadcast %42 : vector<1x256xbf16> to vector<32x256xbf16>
    %44 = arith.mulf %41, %43 : vector<32x256xbf16>
    %45 = vector.extract_strided_slice %1 {offsets = [4, 0], sizes = [1, 256], strides = [1, 1]} : vector<9x256xbf16> to vector<1x256xbf16>
    %46 = vector.broadcast %45 : vector<1x256xbf16> to vector<32x256xbf16>
    %47 = arith.mulf %0, %46 : vector<32x256xbf16>
    %48 = vector.extract_strided_slice %0 {offsets = [0, 249], sizes = [32, 7], strides = [1, 1]} : vector<32x256xbf16> to vector<32x7xbf16>
    %49 = vector.extract_strided_slice %0 {offsets = [0, 0], sizes = [32, 249], strides = [1, 1]} : vector<32x256xbf16> to vector<32x249xbf16>
    %50 = tpu.concatenate %48, %49 in 1 : vector<32x7xbf16>, vector<32x249xbf16> -> vector<32x256xbf16>
    %51 = vector.extract_strided_slice %1 {offsets = [2, 0], sizes = [1, 256], strides = [1, 1]} : vector<9x256xbf16> to vector<1x256xbf16>
    %52 = vector.broadcast %51 : vector<1x256xbf16> to vector<32x256xbf16>
    %53 = arith.mulf %50, %52 : vector<32x256xbf16>
    %54 = vector.extract_strided_slice %0 {offsets = [0, 248], sizes = [32, 8], strides = [1, 1]} : vector<32x256xbf16> to vector<32x8xbf16>
    %55 = vector.extract_strided_slice %0 {offsets = [0, 0], sizes = [32, 248], strides = [1, 1]} : vector<32x256xbf16> to vector<32x248xbf16>
    %56 = tpu.concatenate %54, %55 in 1 : vector<32x8xbf16>, vector<32x248xbf16> -> vector<32x256xbf16>
    %57 = vector.extract_strided_slice %1 {offsets = [1, 0], sizes = [1, 256], strides = [1, 1]} : vector<9x256xbf16> to vector<1x256xbf16>
    %58 = vector.broadcast %57 : vector<1x256xbf16> to vector<32x256xbf16>
    %59 = arith.mulf %56, %58 : vector<32x256xbf16>
    %60 = tpu.concatenate %44, %47, %53, %59 in 0 : vector<32x256xbf16>, vector<32x256xbf16>, vector<32x256xbf16>, vector<32x256xbf16> -> vector<128x256xbf16>
    %c1_13 = arith.constant 1 : index
    %c0_14 = arith.constant 0 : index
    %c0_15 = arith.constant 0 : index
    %61 = vector.load %arg2[%c1_13, %c0_14, %c0_15] : memref<4x16x128xbf16, #tpu.memory_space<vmem>>, vector<1x16x128xbf16>
    %62 = vector.shape_cast %61 : vector<1x16x128xbf16> to vector<16x128xbf16>
    %cst_16 = arith.constant dense<0.000000e+00> : vector<16x256xf32>
    %63 = tpu.matmul %62, %60, %cst_16 {dimension_numbers = #tpu.dot_dimension_numbers<[1], [0], [0], [1], [0, 0, 1, 1], [], []>} : vector<16x128xbf16>, vector<128x256xbf16>, vector<16x256xf32> -> vector<16x256xf32>
    %64 = vector.broadcast %2 : vector<16x1xf32> to vector<16x256xf32>
    %65 = arith.mulf %63, %64 : vector<16x256xf32>
    %66 = vector.broadcast %3 : vector<16x1xf32> to vector<16x256xf32>
    %67 = arith.addf %65, %66 : vector<16x256xf32>
    %cst_17 = arith.constant 0.000000e+00 : f32
    %68 = vector.broadcast %cst_17 : f32 to vector<16x256xf32>
    %69 = arith.maximumf %67, %68 : vector<16x256xf32>
    %70 = arith.truncf %69 : vector<16x256xf32> to vector<16x256xbf16>
    %c1_18 = arith.constant 1 : index
    %c0_19 = arith.constant 0 : index
    %c0_20 = arith.constant 0 : index
    %71 = vector.load %arg5[%c1_18, %c0_19, %c0_20] : memref<4x16x256xbf16, #tpu.memory_space<vmem>>, vector<1x16x256xbf16>
    %72 = vector.shape_cast %71 : vector<1x16x256xbf16> to vector<16x256xbf16>
    %73 = vector.shape_cast %70 : vector<16x256xbf16> to vector<1x16x256xbf16>
    tpu.vector_store %arg5[%c1_18, %c0_19, %c0_20], %73 {strides = array<i32>} : memref<4x16x256xbf16, #tpu.memory_space<vmem>>, vector<1x16x256xbf16>,
    %74 = vector.extract_strided_slice %0 {offsets = [0, 8], sizes = [32, 248], strides = [1, 1]} : vector<32x256xbf16> to vector<32x248xbf16>
    %75 = vector.extract_strided_slice %0 {offsets = [0, 0], sizes = [32, 8], strides = [1, 1]} : vector<32x256xbf16> to vector<32x8xbf16>
    %76 = tpu.concatenate %74, %75 in 1 : vector<32x248xbf16>, vector<32x8xbf16> -> vector<32x256xbf16>
    %77 = vector.extract_strided_slice %1 {offsets = [7, 0], sizes = [1, 256], strides = [1, 1]} : vector<9x256xbf16> to vector<1x256xbf16>
    %78 = vector.broadcast %77 : vector<1x256xbf16> to vector<32x256xbf16>
    %79 = arith.mulf %76, %78 : vector<32x256xbf16>
    %80 = vector.extract_strided_slice %0 {offsets = [0, 7], sizes = [32, 249], strides = [1, 1]} : vector<32x256xbf16> to vector<32x249xbf16>
    %81 = vector.extract_strided_slice %0 {offsets = [0, 0], sizes = [32, 7], strides = [1, 1]} : vector<32x256xbf16> to vector<32x7xbf16>
    %82 = tpu.concatenate %80, %81 in 1 : vector<32x249xbf16>, vector<32x7xbf16> -> vector<32x256xbf16>
    %83 = vector.extract_strided_slice %1 {offsets = [6, 0], sizes = [1, 256], strides = [1, 1]} : vector<9x256xbf16> to vector<1x256xbf16>
    %84 = vector.broadcast %83 : vector<1x256xbf16> to vector<32x256xbf16>
    %85 = arith.mulf %82, %84 : vector<32x256xbf16>
    %86 = vector.extract_strided_slice %1 {offsets = [4, 0], sizes = [1, 256], strides = [1, 1]} : vector<9x256xbf16> to vector<1x256xbf16>
    %87 = vector.broadcast %86 : vector<1x256xbf16> to vector<32x256xbf16>
    %88 = arith.mulf %0, %87 : vector<32x256xbf16>
    %89 = vector.extract_strided_slice %0 {offsets = [0, 255], sizes = [32, 1], strides = [1, 1]} : vector<32x256xbf16> to vector<32x1xbf16>
    %90 = vector.extract_strided_slice %0 {offsets = [0, 0], sizes = [32, 255], strides = [1, 1]} : vector<32x256xbf16> to vector<32x255xbf16>
    %91 = tpu.concatenate %89, %90 in 1 : vector<32x1xbf16>, vector<32x255xbf16> -> vector<32x256xbf16>
    %92 = vector.extract_strided_slice %1 {offsets = [3, 0], sizes = [1, 256], strides = [1, 1]} : vector<9x256xbf16> to vector<1x256xbf16>
    %93 = vector.broadcast %92 : vector<1x256xbf16> to vector<32x256xbf16>
    %94 = arith.mulf %91, %93 : vector<32x256xbf16>
    %95 = tpu.concatenate %79, %85, %88, %94 in 0 : vector<32x256xbf16>, vector<32x256xbf16>, vector<32x256xbf16>, vector<32x256xbf16> -> vector<128x256xbf16>
    %c2 = arith.constant 2 : index
    %c0_21 = arith.constant 0 : index
    %c0_22 = arith.constant 0 : index
    %96 = vector.load %arg2[%c2, %c0_21, %c0_22] : memref<4x16x128xbf16, #tpu.memory_space<vmem>>, vector<1x16x128xbf16>
    %97 = vector.shape_cast %96 : vector<1x16x128xbf16> to vector<16x128xbf16>
    %cst_23 = arith.constant dense<0.000000e+00> : vector<16x256xf32>
    %98 = tpu.matmul %97, %95, %cst_23 {dimension_numbers = #tpu.dot_dimension_numbers<[1], [0], [0], [1], [0, 0, 1, 1], [], []>} : vector<16x128xbf16>, vector<128x256xbf16>, vector<16x256xf32> -> vector<16x256xf32>
    %99 = vector.broadcast %2 : vector<16x1xf32> to vector<16x256xf32>
    %100 = arith.mulf %98, %99 : vector<16x256xf32>
    %101 = vector.broadcast %3 : vector<16x1xf32> to vector<16x256xf32>
    %102 = arith.addf %100, %101 : vector<16x256xf32>
    %cst_24 = arith.constant 0.000000e+00 : f32
    %103 = vector.broadcast %cst_24 : f32 to vector<16x256xf32>
    %104 = arith.maximumf %102, %103 : vector<16x256xf32>
    %105 = arith.truncf %104 : vector<16x256xf32> to vector<16x256xbf16>
    %c2_25 = arith.constant 2 : index
    %c0_26 = arith.constant 0 : index
    %c0_27 = arith.constant 0 : index
    %106 = vector.load %arg5[%c2_25, %c0_26, %c0_27] : memref<4x16x256xbf16, #tpu.memory_space<vmem>>, vector<1x16x256xbf16>
    %107 = vector.shape_cast %106 : vector<1x16x256xbf16> to vector<16x256xbf16>
    %108 = vector.shape_cast %105 : vector<16x256xbf16> to vector<1x16x256xbf16>
    tpu.vector_store %arg5[%c2_25, %c0_26, %c0_27], %108 {strides = array<i32>} : memref<4x16x256xbf16, #tpu.memory_space<vmem>>, vector<1x16x256xbf16>,
    %109 = vector.extract_strided_slice %0 {offsets = [0, 9], sizes = [32, 247], strides = [1, 1]} : vector<32x256xbf16> to vector<32x247xbf16>
    %110 = vector.extract_strided_slice %0 {offsets = [0, 0], sizes = [32, 9], strides = [1, 1]} : vector<32x256xbf16> to vector<32x9xbf16>
    %111 = tpu.concatenate %109, %110 in 1 : vector<32x247xbf16>, vector<32x9xbf16> -> vector<32x256xbf16>
    %112 = vector.extract_strided_slice %1 {offsets = [8, 0], sizes = [1, 256], strides = [1, 1]} : vector<9x256xbf16> to vector<1x256xbf16>
    %113 = vector.broadcast %112 : vector<1x256xbf16> to vector<32x256xbf16>
    %114 = arith.mulf %111, %113 : vector<32x256xbf16>
    %115 = vector.extract_strided_slice %0 {offsets = [0, 8], sizes = [32, 248], strides = [1, 1]} : vector<32x256xbf16> to vector<32x248xbf16>
    %116 = vector.extract_strided_slice %0 {offsets = [0, 0], sizes = [32, 8], strides = [1, 1]} : vector<32x256xbf16> to vector<32x8xbf16>
    %117 = tpu.concatenate %115, %116 in 1 : vector<32x248xbf16>, vector<32x8xbf16> -> vector<32x256xbf16>
    %118 = vector.extract_strided_slice %1 {offsets = [7, 0], sizes = [1, 256], strides = [1, 1]} : vector<9x256xbf16> to vector<1x256xbf16>
    %119 = vector.broadcast %118 : vector<1x256xbf16> to vector<32x256xbf16>
    %120 = arith.mulf %117, %119 : vector<32x256xbf16>
    %121 = vector.extract_strided_slice %0 {offsets = [0, 1], sizes = [32, 255], strides = [1, 1]} : vector<32x256xbf16> to vector<32x255xbf16>
    %122 = vector.extract_strided_slice %0 {offsets = [0, 0], sizes = [32, 1], strides = [1, 1]} : vector<32x256xbf16> to vector<32x1xbf16>
    %123 = tpu.concatenate %121, %122 in 1 : vector<32x255xbf16>, vector<32x1xbf16> -> vector<32x256xbf16>
    %124 = vector.extract_strided_slice %1 {offsets = [5, 0], sizes = [1, 256], strides = [1, 1]} : vector<9x256xbf16> to vector<1x256xbf16>
    %125 = vector.broadcast %124 : vector<1x256xbf16> to vector<32x256xbf16>
    %126 = arith.mulf %123, %125 : vector<32x256xbf16>
    %127 = vector.extract_strided_slice %1 {offsets = [4, 0], sizes = [1, 256], strides = [1, 1]} : vector<9x256xbf16> to vector<1x256xbf16>
    %128 = vector.broadcast %127 : vector<1x256xbf16> to vector<32x256xbf16>
    %129 = arith.mulf %0, %128 : vector<32x256xbf16>
    %130 = tpu.concatenate %114, %120, %126, %129 in 0 : vector<32x256xbf16>, vector<32x256xbf16>, vector<32x256xbf16>, vector<32x256xbf16> -> vector<128x256xbf16>
    %c3 = arith.constant 3 : index
    %c0_28 = arith.constant 0 : index
    %c0_29 = arith.constant 0 : index
    %131 = vector.load %arg2[%c3, %c0_28, %c0_29] : memref<4x16x128xbf16, #tpu.memory_space<vmem>>, vector<1x16x128xbf16>
    %132 = vector.shape_cast %131 : vector<1x16x128xbf16> to vector<16x128xbf16>
    %cst_30 = arith.constant dense<0.000000e+00> : vector<16x256xf32>
    %133 = tpu.matmul %132, %130, %cst_30 {dimension_numbers = #tpu.dot_dimension_numbers<[1], [0], [0], [1], [0, 0, 1, 1], [], []>} : vector<16x128xbf16>, vector<128x256xbf16>, vector<16x256xf32> -> vector<16x256xf32>
    %134 = vector.broadcast %2 : vector<16x1xf32> to vector<16x256xf32>
    %135 = arith.mulf %133, %134 : vector<16x256xf32>
    %136 = vector.broadcast %3 : vector<16x1xf32> to vector<16x256xf32>
    %137 = arith.addf %135, %136 : vector<16x256xf32>
    %cst_31 = arith.constant 0.000000e+00 : f32
    %138 = vector.broadcast %cst_31 : f32 to vector<16x256xf32>
    %139 = arith.maximumf %137, %138 : vector<16x256xf32>
    %140 = arith.truncf %139 : vector<16x256xf32> to vector<16x256xbf16>
    %c3_32 = arith.constant 3 : index
    %c0_33 = arith.constant 0 : index
    %c0_34 = arith.constant 0 : index
    %141 = vector.load %arg5[%c3_32, %c0_33, %c0_34] : memref<4x16x256xbf16, #tpu.memory_space<vmem>>, vector<1x16x256xbf16>
    %142 = vector.shape_cast %141 : vector<1x16x256xbf16> to vector<16x256xbf16>
    %143 = vector.shape_cast %140 : vector<16x256xbf16> to vector<1x16x256xbf16>
    tpu.vector_store %arg5[%c3_32, %c0_33, %c0_34], %143 {strides = array<i32>} : memref<4x16x256xbf16, #tpu.memory_space<vmem>>, vector<1x16x256xbf16>,
    return
  }
  func.func @transform_0(%arg0: i32) -> (i32, i32) {
    %c0_i32 = arith.constant 0 : i32
    %c0_i32_0 = arith.constant 0 : i32
    return %c0_i32, %arg0 : i32, i32
  }
  func.func @transform_1(%arg0: i32) -> (i32, i32, i32) {
    %c0_i32 = arith.constant 0 : i32
    %c0_i32_0 = arith.constant 0 : i32
    %c0_i32_1 = arith.constant 0 : i32
    %c0_i32_2 = arith.constant 0 : i32
    return %c0_i32, %c0_i32_0, %c0_i32_1 : i32, i32, i32
  }
  func.func @transform_2(%arg0: i32) -> (i32, i32) {
    %c0_i32 = arith.constant 0 : i32
    %c0_i32_0 = arith.constant 0 : i32
    %c0_i32_1 = arith.constant 0 : i32
    return %c0_i32, %c0_i32_0 : i32, i32
  }
  func.func @transform_3(%arg0: i32) -> (i32, i32) {
    %c0_i32 = arith.constant 0 : i32
    %c0_i32_0 = arith.constant 0 : i32
    %c0_i32_1 = arith.constant 0 : i32
    return %c0_i32, %c0_i32_0 : i32, i32
  }
  func.func @transform_4(%arg0: i32) -> (i32, i32, i32) {
    %c0_i32 = arith.constant 0 : i32
    %c0_i32_0 = arith.constant 0 : i32
    %c0_i32_1 = arith.constant 0 : i32
    return %c0_i32, %c0_i32_0, %arg0 : i32, i32, i32
  }
}

module attributes {stable_mosaic.version = 11 : i64} {
  func.func @_convt_tanh_kernel(%arg0: i32, %arg1: memref<16x1024xbf16, #tpu.memory_space<vmem>>, %arg2: memref<4x1x64xbf16, #tpu.memory_space<vmem>>, %arg3: memref<9x1024xbf16, #tpu.memory_space<vmem>>, %arg4: memref<1x1xf32, #tpu.memory_space<vmem>>, %arg5: memref<4x1024xf32, #tpu.memory_space<vmem>>) attributes {dimension_semantics = [#tpu.dimension_semantics<parallel>], iteration_bounds = array<i64: 1>, scalar_prefetch = 0 : i64, scratch_operands = 0 : i64, tpu.core_type = #tpu.core_type<tc>, window_params = [{transform_indices = @transform_0, window_bounds = array<i64: 16, 1024>}, {pipeline_mode = #tpu.pipeline_mode<synchronous>, transform_indices = @transform_1, window_bounds = array<i64: 4, 1, 64>}, {pipeline_mode = #tpu.pipeline_mode<synchronous>, transform_indices = @transform_2, window_bounds = array<i64: 9, 1024>}, {pipeline_mode = #tpu.pipeline_mode<synchronous>, transform_indices = @transform_3, window_bounds = array<i64: 1, 1>}, {transform_indices = @transform_4, window_bounds = array<i64: 4, 1024>}]} {
    %c0 = arith.constant 0 : index
    %c0_0 = arith.constant 0 : index
    %0 = vector.load %arg1[%c0, %c0_0] : memref<16x1024xbf16, #tpu.memory_space<vmem>>, vector<16x1024xbf16>
    %c0_1 = arith.constant 0 : index
    %c0_2 = arith.constant 0 : index
    %1 = vector.load %arg3[%c0_1, %c0_2] : memref<9x1024xbf16, #tpu.memory_space<vmem>>, vector<9x1024xbf16>
    %c0_3 = arith.constant 0 : index
    %c0_4 = arith.constant 0 : index
    %2 = vector.load %arg4[%c0_3, %c0_4] : memref<1x1xf32, #tpu.memory_space<vmem>>, vector<1x1xf32>
    %3 = vector.extract_strided_slice %1 {offsets = [4, 0], sizes = [1, 1024], strides = [1, 1]} : vector<9x1024xbf16> to vector<1x1024xbf16>
    %4 = vector.broadcast %3 : vector<1x1024xbf16> to vector<16x1024xbf16>
    %5 = arith.mulf %0, %4 : vector<16x1024xbf16>
    %6 = vector.extract_strided_slice %0 {offsets = [0, 1023], sizes = [16, 1], strides = [1, 1]} : vector<16x1024xbf16> to vector<16x1xbf16>
    %7 = vector.extract_strided_slice %0 {offsets = [0, 0], sizes = [16, 1023], strides = [1, 1]} : vector<16x1024xbf16> to vector<16x1023xbf16>
    %8 = tpu.concatenate %6, %7 in 1 : vector<16x1xbf16>, vector<16x1023xbf16> -> vector<16x1024xbf16>
    %9 = vector.extract_strided_slice %1 {offsets = [3, 0], sizes = [1, 1024], strides = [1, 1]} : vector<9x1024xbf16> to vector<1x1024xbf16>
    %10 = vector.broadcast %9 : vector<1x1024xbf16> to vector<16x1024xbf16>
    %11 = arith.mulf %8, %10 : vector<16x1024xbf16>
    %12 = vector.extract_strided_slice %0 {offsets = [0, 1008], sizes = [16, 16], strides = [1, 1]} : vector<16x1024xbf16> to vector<16x16xbf16>
    %13 = vector.extract_strided_slice %0 {offsets = [0, 0], sizes = [16, 1008], strides = [1, 1]} : vector<16x1024xbf16> to vector<16x1008xbf16>
    %14 = tpu.concatenate %12, %13 in 1 : vector<16x16xbf16>, vector<16x1008xbf16> -> vector<16x1024xbf16>
    %15 = vector.extract_strided_slice %1 {offsets = [1, 0], sizes = [1, 1024], strides = [1, 1]} : vector<9x1024xbf16> to vector<1x1024xbf16>
    %16 = vector.broadcast %15 : vector<1x1024xbf16> to vector<16x1024xbf16>
    %17 = arith.mulf %14, %16 : vector<16x1024xbf16>
    %18 = vector.extract_strided_slice %0 {offsets = [0, 1007], sizes = [16, 17], strides = [1, 1]} : vector<16x1024xbf16> to vector<16x17xbf16>
    %19 = vector.extract_strided_slice %0 {offsets = [0, 0], sizes = [16, 1007], strides = [1, 1]} : vector<16x1024xbf16> to vector<16x1007xbf16>
    %20 = tpu.concatenate %18, %19 in 1 : vector<16x17xbf16>, vector<16x1007xbf16> -> vector<16x1024xbf16>
    %21 = vector.extract_strided_slice %1 {offsets = [0, 0], sizes = [1, 1024], strides = [1, 1]} : vector<9x1024xbf16> to vector<1x1024xbf16>
    %22 = vector.broadcast %21 : vector<1x1024xbf16> to vector<16x1024xbf16>
    %23 = arith.mulf %20, %22 : vector<16x1024xbf16>
    %24 = tpu.concatenate %5, %11, %17, %23 in 0 : vector<16x1024xbf16>, vector<16x1024xbf16>, vector<16x1024xbf16>, vector<16x1024xbf16> -> vector<64x1024xbf16>
    %c0_5 = arith.constant 0 : index
    %c0_6 = arith.constant 0 : index
    %c0_7 = arith.constant 0 : index
    %25 = vector.load %arg2[%c0_5, %c0_6, %c0_7] : memref<4x1x64xbf16, #tpu.memory_space<vmem>>, vector<1x1x64xbf16>
    %26 = vector.shape_cast %25 : vector<1x1x64xbf16> to vector<1x64xbf16>
    %cst = arith.constant dense<0.000000e+00> : vector<1x1024xf32>
    %27 = tpu.matmul %26, %24, %cst {dimension_numbers = #tpu.dot_dimension_numbers<[1], [0], [0], [1], [0, 0, 1, 1], [], []>} : vector<1x64xbf16>, vector<64x1024xbf16>, vector<1x1024xf32> -> vector<1x1024xf32>
    %28 = vector.broadcast %2 : vector<1x1xf32> to vector<1x1024xf32>
    %29 = arith.addf %27, %28 : vector<1x1024xf32>
    %30 = math.tanh %29 : vector<1x1024xf32>
    %c0_8 = arith.constant 0 : index
    %c0_9 = arith.constant 0 : index
    %31 = vector.load %arg5[%c0_8, %c0_9] : memref<4x1024xf32, #tpu.memory_space<vmem>>, vector<1x1024xf32>
    tpu.vector_store %arg5[%c0_8, %c0_9], %30 {strides = array<i32>} : memref<4x1024xf32, #tpu.memory_space<vmem>>, vector<1x1024xf32>,
    %32 = vector.extract_strided_slice %0 {offsets = [0, 1], sizes = [16, 1023], strides = [1, 1]} : vector<16x1024xbf16> to vector<16x1023xbf16>
    %33 = vector.extract_strided_slice %0 {offsets = [0, 0], sizes = [16, 1], strides = [1, 1]} : vector<16x1024xbf16> to vector<16x1xbf16>
    %34 = tpu.concatenate %32, %33 in 1 : vector<16x1023xbf16>, vector<16x1xbf16> -> vector<16x1024xbf16>
    %35 = vector.extract_strided_slice %1 {offsets = [5, 0], sizes = [1, 1024], strides = [1, 1]} : vector<9x1024xbf16> to vector<1x1024xbf16>
    %36 = vector.broadcast %35 : vector<1x1024xbf16> to vector<16x1024xbf16>
    %37 = arith.mulf %34, %36 : vector<16x1024xbf16>
    %38 = vector.extract_strided_slice %1 {offsets = [4, 0], sizes = [1, 1024], strides = [1, 1]} : vector<9x1024xbf16> to vector<1x1024xbf16>
    %39 = vector.broadcast %38 : vector<1x1024xbf16> to vector<16x1024xbf16>
    %40 = arith.mulf %0, %39 : vector<16x1024xbf16>
    %41 = vector.extract_strided_slice %0 {offsets = [0, 1009], sizes = [16, 15], strides = [1, 1]} : vector<16x1024xbf16> to vector<16x15xbf16>
    %42 = vector.extract_strided_slice %0 {offsets = [0, 0], sizes = [16, 1009], strides = [1, 1]} : vector<16x1024xbf16> to vector<16x1009xbf16>
    %43 = tpu.concatenate %41, %42 in 1 : vector<16x15xbf16>, vector<16x1009xbf16> -> vector<16x1024xbf16>
    %44 = vector.extract_strided_slice %1 {offsets = [2, 0], sizes = [1, 1024], strides = [1, 1]} : vector<9x1024xbf16> to vector<1x1024xbf16>
    %45 = vector.broadcast %44 : vector<1x1024xbf16> to vector<16x1024xbf16>
    %46 = arith.mulf %43, %45 : vector<16x1024xbf16>
    %47 = vector.extract_strided_slice %0 {offsets = [0, 1008], sizes = [16, 16], strides = [1, 1]} : vector<16x1024xbf16> to vector<16x16xbf16>
    %48 = vector.extract_strided_slice %0 {offsets = [0, 0], sizes = [16, 1008], strides = [1, 1]} : vector<16x1024xbf16> to vector<16x1008xbf16>
    %49 = tpu.concatenate %47, %48 in 1 : vector<16x16xbf16>, vector<16x1008xbf16> -> vector<16x1024xbf16>
    %50 = vector.extract_strided_slice %1 {offsets = [1, 0], sizes = [1, 1024], strides = [1, 1]} : vector<9x1024xbf16> to vector<1x1024xbf16>
    %51 = vector.broadcast %50 : vector<1x1024xbf16> to vector<16x1024xbf16>
    %52 = arith.mulf %49, %51 : vector<16x1024xbf16>
    %53 = tpu.concatenate %37, %40, %46, %52 in 0 : vector<16x1024xbf16>, vector<16x1024xbf16>, vector<16x1024xbf16>, vector<16x1024xbf16> -> vector<64x1024xbf16>
    %c1 = arith.constant 1 : index
    %c0_10 = arith.constant 0 : index
    %c0_11 = arith.constant 0 : index
    %54 = vector.load %arg2[%c1, %c0_10, %c0_11] : memref<4x1x64xbf16, #tpu.memory_space<vmem>>, vector<1x1x64xbf16>
    %55 = vector.shape_cast %54 : vector<1x1x64xbf16> to vector<1x64xbf16>
    %cst_12 = arith.constant dense<0.000000e+00> : vector<1x1024xf32>
    %56 = tpu.matmul %55, %53, %cst_12 {dimension_numbers = #tpu.dot_dimension_numbers<[1], [0], [0], [1], [0, 0, 1, 1], [], []>} : vector<1x64xbf16>, vector<64x1024xbf16>, vector<1x1024xf32> -> vector<1x1024xf32>
    %57 = vector.broadcast %2 : vector<1x1xf32> to vector<1x1024xf32>
    %58 = arith.addf %56, %57 : vector<1x1024xf32>
    %59 = math.tanh %58 : vector<1x1024xf32>
    %c1_13 = arith.constant 1 : index
    %c0_14 = arith.constant 0 : index
    %60 = vector.load %arg5[%c1_13, %c0_14] : memref<4x1024xf32, #tpu.memory_space<vmem>>, vector<1x1024xf32>
    tpu.vector_store %arg5[%c1_13, %c0_14], %59 {strides = array<i32>} : memref<4x1024xf32, #tpu.memory_space<vmem>>, vector<1x1024xf32>,
    %61 = vector.extract_strided_slice %0 {offsets = [0, 16], sizes = [16, 1008], strides = [1, 1]} : vector<16x1024xbf16> to vector<16x1008xbf16>
    %62 = vector.extract_strided_slice %0 {offsets = [0, 0], sizes = [16, 16], strides = [1, 1]} : vector<16x1024xbf16> to vector<16x16xbf16>
    %63 = tpu.concatenate %61, %62 in 1 : vector<16x1008xbf16>, vector<16x16xbf16> -> vector<16x1024xbf16>
    %64 = vector.extract_strided_slice %1 {offsets = [7, 0], sizes = [1, 1024], strides = [1, 1]} : vector<9x1024xbf16> to vector<1x1024xbf16>
    %65 = vector.broadcast %64 : vector<1x1024xbf16> to vector<16x1024xbf16>
    %66 = arith.mulf %63, %65 : vector<16x1024xbf16>
    %67 = vector.extract_strided_slice %0 {offsets = [0, 15], sizes = [16, 1009], strides = [1, 1]} : vector<16x1024xbf16> to vector<16x1009xbf16>
    %68 = vector.extract_strided_slice %0 {offsets = [0, 0], sizes = [16, 15], strides = [1, 1]} : vector<16x1024xbf16> to vector<16x15xbf16>
    %69 = tpu.concatenate %67, %68 in 1 : vector<16x1009xbf16>, vector<16x15xbf16> -> vector<16x1024xbf16>
    %70 = vector.extract_strided_slice %1 {offsets = [6, 0], sizes = [1, 1024], strides = [1, 1]} : vector<9x1024xbf16> to vector<1x1024xbf16>
    %71 = vector.broadcast %70 : vector<1x1024xbf16> to vector<16x1024xbf16>
    %72 = arith.mulf %69, %71 : vector<16x1024xbf16>
    %73 = vector.extract_strided_slice %1 {offsets = [4, 0], sizes = [1, 1024], strides = [1, 1]} : vector<9x1024xbf16> to vector<1x1024xbf16>
    %74 = vector.broadcast %73 : vector<1x1024xbf16> to vector<16x1024xbf16>
    %75 = arith.mulf %0, %74 : vector<16x1024xbf16>
    %76 = vector.extract_strided_slice %0 {offsets = [0, 1023], sizes = [16, 1], strides = [1, 1]} : vector<16x1024xbf16> to vector<16x1xbf16>
    %77 = vector.extract_strided_slice %0 {offsets = [0, 0], sizes = [16, 1023], strides = [1, 1]} : vector<16x1024xbf16> to vector<16x1023xbf16>
    %78 = tpu.concatenate %76, %77 in 1 : vector<16x1xbf16>, vector<16x1023xbf16> -> vector<16x1024xbf16>
    %79 = vector.extract_strided_slice %1 {offsets = [3, 0], sizes = [1, 1024], strides = [1, 1]} : vector<9x1024xbf16> to vector<1x1024xbf16>
    %80 = vector.broadcast %79 : vector<1x1024xbf16> to vector<16x1024xbf16>
    %81 = arith.mulf %78, %80 : vector<16x1024xbf16>
    %82 = tpu.concatenate %66, %72, %75, %81 in 0 : vector<16x1024xbf16>, vector<16x1024xbf16>, vector<16x1024xbf16>, vector<16x1024xbf16> -> vector<64x1024xbf16>
    %c2 = arith.constant 2 : index
    %c0_15 = arith.constant 0 : index
    %c0_16 = arith.constant 0 : index
    %83 = vector.load %arg2[%c2, %c0_15, %c0_16] : memref<4x1x64xbf16, #tpu.memory_space<vmem>>, vector<1x1x64xbf16>
    %84 = vector.shape_cast %83 : vector<1x1x64xbf16> to vector<1x64xbf16>
    %cst_17 = arith.constant dense<0.000000e+00> : vector<1x1024xf32>
    %85 = tpu.matmul %84, %82, %cst_17 {dimension_numbers = #tpu.dot_dimension_numbers<[1], [0], [0], [1], [0, 0, 1, 1], [], []>} : vector<1x64xbf16>, vector<64x1024xbf16>, vector<1x1024xf32> -> vector<1x1024xf32>
    %86 = vector.broadcast %2 : vector<1x1xf32> to vector<1x1024xf32>
    %87 = arith.addf %85, %86 : vector<1x1024xf32>
    %88 = math.tanh %87 : vector<1x1024xf32>
    %c2_18 = arith.constant 2 : index
    %c0_19 = arith.constant 0 : index
    %89 = vector.load %arg5[%c2_18, %c0_19] : memref<4x1024xf32, #tpu.memory_space<vmem>>, vector<1x1024xf32>
    tpu.vector_store %arg5[%c2_18, %c0_19], %88 {strides = array<i32>} : memref<4x1024xf32, #tpu.memory_space<vmem>>, vector<1x1024xf32>,
    %90 = vector.extract_strided_slice %0 {offsets = [0, 17], sizes = [16, 1007], strides = [1, 1]} : vector<16x1024xbf16> to vector<16x1007xbf16>
    %91 = vector.extract_strided_slice %0 {offsets = [0, 0], sizes = [16, 17], strides = [1, 1]} : vector<16x1024xbf16> to vector<16x17xbf16>
    %92 = tpu.concatenate %90, %91 in 1 : vector<16x1007xbf16>, vector<16x17xbf16> -> vector<16x1024xbf16>
    %93 = vector.extract_strided_slice %1 {offsets = [8, 0], sizes = [1, 1024], strides = [1, 1]} : vector<9x1024xbf16> to vector<1x1024xbf16>
    %94 = vector.broadcast %93 : vector<1x1024xbf16> to vector<16x1024xbf16>
    %95 = arith.mulf %92, %94 : vector<16x1024xbf16>
    %96 = vector.extract_strided_slice %0 {offsets = [0, 16], sizes = [16, 1008], strides = [1, 1]} : vector<16x1024xbf16> to vector<16x1008xbf16>
    %97 = vector.extract_strided_slice %0 {offsets = [0, 0], sizes = [16, 16], strides = [1, 1]} : vector<16x1024xbf16> to vector<16x16xbf16>
    %98 = tpu.concatenate %96, %97 in 1 : vector<16x1008xbf16>, vector<16x16xbf16> -> vector<16x1024xbf16>
    %99 = vector.extract_strided_slice %1 {offsets = [7, 0], sizes = [1, 1024], strides = [1, 1]} : vector<9x1024xbf16> to vector<1x1024xbf16>
    %100 = vector.broadcast %99 : vector<1x1024xbf16> to vector<16x1024xbf16>
    %101 = arith.mulf %98, %100 : vector<16x1024xbf16>
    %102 = vector.extract_strided_slice %0 {offsets = [0, 1], sizes = [16, 1023], strides = [1, 1]} : vector<16x1024xbf16> to vector<16x1023xbf16>
    %103 = vector.extract_strided_slice %0 {offsets = [0, 0], sizes = [16, 1], strides = [1, 1]} : vector<16x1024xbf16> to vector<16x1xbf16>
    %104 = tpu.concatenate %102, %103 in 1 : vector<16x1023xbf16>, vector<16x1xbf16> -> vector<16x1024xbf16>
    %105 = vector.extract_strided_slice %1 {offsets = [5, 0], sizes = [1, 1024], strides = [1, 1]} : vector<9x1024xbf16> to vector<1x1024xbf16>
    %106 = vector.broadcast %105 : vector<1x1024xbf16> to vector<16x1024xbf16>
    %107 = arith.mulf %104, %106 : vector<16x1024xbf16>
    %108 = vector.extract_strided_slice %1 {offsets = [4, 0], sizes = [1, 1024], strides = [1, 1]} : vector<9x1024xbf16> to vector<1x1024xbf16>
    %109 = vector.broadcast %108 : vector<1x1024xbf16> to vector<16x1024xbf16>
    %110 = arith.mulf %0, %109 : vector<16x1024xbf16>
    %111 = tpu.concatenate %95, %101, %107, %110 in 0 : vector<16x1024xbf16>, vector<16x1024xbf16>, vector<16x1024xbf16>, vector<16x1024xbf16> -> vector<64x1024xbf16>
    %c3 = arith.constant 3 : index
    %c0_20 = arith.constant 0 : index
    %c0_21 = arith.constant 0 : index
    %112 = vector.load %arg2[%c3, %c0_20, %c0_21] : memref<4x1x64xbf16, #tpu.memory_space<vmem>>, vector<1x1x64xbf16>
    %113 = vector.shape_cast %112 : vector<1x1x64xbf16> to vector<1x64xbf16>
    %cst_22 = arith.constant dense<0.000000e+00> : vector<1x1024xf32>
    %114 = tpu.matmul %113, %111, %cst_22 {dimension_numbers = #tpu.dot_dimension_numbers<[1], [0], [0], [1], [0, 0, 1, 1], [], []>} : vector<1x64xbf16>, vector<64x1024xbf16>, vector<1x1024xf32> -> vector<1x1024xf32>
    %115 = vector.broadcast %2 : vector<1x1xf32> to vector<1x1024xf32>
    %116 = arith.addf %114, %115 : vector<1x1024xf32>
    %117 = math.tanh %116 : vector<1x1024xf32>
    %c3_23 = arith.constant 3 : index
    %c0_24 = arith.constant 0 : index
    %118 = vector.load %arg5[%c3_23, %c0_24] : memref<4x1024xf32, #tpu.memory_space<vmem>>, vector<1x1024xf32>
    tpu.vector_store %arg5[%c3_23, %c0_24], %117 {strides = array<i32>} : memref<4x1024xf32, #tpu.memory_space<vmem>>, vector<1x1024xf32>,
    return
  }
  func.func @transform_0(%arg0: i32) -> (i32, i32) {
    %c0_i32 = arith.constant 0 : i32
    %c0_i32_0 = arith.constant 0 : i32
    return %c0_i32, %arg0 : i32, i32
  }
  func.func @transform_1(%arg0: i32) -> (i32, i32, i32) {
    %c0_i32 = arith.constant 0 : i32
    %c0_i32_0 = arith.constant 0 : i32
    %c0_i32_1 = arith.constant 0 : i32
    %c0_i32_2 = arith.constant 0 : i32
    return %c0_i32, %c0_i32_0, %c0_i32_1 : i32, i32, i32
  }
  func.func @transform_2(%arg0: i32) -> (i32, i32) {
    %c0_i32 = arith.constant 0 : i32
    %c0_i32_0 = arith.constant 0 : i32
    %c0_i32_1 = arith.constant 0 : i32
    return %c0_i32, %c0_i32_0 : i32, i32
  }
  func.func @transform_3(%arg0: i32) -> (i32, i32) {
    %c0_i32 = arith.constant 0 : i32
    %c0_i32_0 = arith.constant 0 : i32
    %c0_i32_1 = arith.constant 0 : i32
    return %c0_i32, %c0_i32_0 : i32, i32
  }
  func.func @transform_4(%arg0: i32) -> (i32, i32) {
    %c0_i32 = arith.constant 0 : i32
    %c0_i32_0 = arith.constant 0 : i32
    return %c0_i32, %arg0 : i32, i32
  }
}

</mosaic_0001>

<llo_original>
// kernel: generator_forward.6
$region0: #{generator_forward.6}
  #allocation0 [shape = 'u32[]', space=smem, size = 0x4, offset = 0x4, fixed_abs, tag = 'smem constant byte address 0x4 - core index']
  #allocation1 [shape = 'u32[144,128]{1,0:T(1,128)}', space=vmem, size = 0x12000, scoped, tag = 'internal scratch']
  %s0 = inlined_call_operand.vmem [shape: bf16[110,4], index: 0, kind: input, shape index: {}]
  %s1 = inlined_call_operand.vmem [shape: bf16[1024,110], index: 1, kind: input, shape index: {}]
  %s2 = inlined_call_operand.vmem [shape: f32[1,64,2], index: 2, kind: input, shape index: {}]
  %s3 = inlined_call_operand.vmem [shape: bf16[16,64,4], index: 3, kind: output, shape index: {}]
  %s4 = sld [smem:[#allocation0]]
  $region22: #{generator_forward.6} parent=0
    _
  %s6 = ssub.s32 1, %s4
  %s7 = scalar_select 0, %s6, %s4
  // Predicated region
  $region2: #{generator_forward.6} parent=0 // pred_check
    _
  $region3: #{generator_forward.6} parent=0 // pred_check_branch
    %9 = sbr.rel (0) target = $region5
  $region4: #{generator_forward.6} parent=0 // pred_region
    _
  $region5: #{generator_forward.6} parent=0 // pred_fallthru
    _
  // Predicated region
  $region6: #{generator_forward.6} parent=0 // pred_check
    _
  $region7: #{generator_forward.6} parent=0 // pred_check_branch
    %11 = sbr.rel (0) target = $region9
  $region8: #{generator_forward.6} parent=0 // pred_region
    _
  $region9: #{generator_forward.6} parent=0 // pred_fallthru
    _
  // Predicated region
  $region10: #{generator_forward.6} parent=0 // pred_check
    _
  $region11: #{generator_forward.6} parent=0 // pred_check_branch
    %13 = sbr.rel (0) target = $region13
  $region12: #{generator_forward.6} parent=0 // pred_region
    _
  $region13: #{generator_forward.6} parent=0 // pred_fallthru
    _
  %v15 = vld [vmem:[%s1] sm:$0xf]
  %v16 = vld [vmem:[%s1 + $0x4] sm:$0xf]
  %v17 = vld [vmem:[%s1 + $0x8] sm:$0xf]
  %v18 = vld [vmem:[%s1 + $0xc] sm:$0xf]
  %v19 = vld [vmem:[%s1 + $0x10] sm:$0xf]
  %v20 = vld [vmem:[%s1 + $0x14] sm:$0xf]
  %v21 = vld [vmem:[%s1 + $0x18] sm:$0xf]
  %v22 = vld [vmem:[%s1 + $0x1c] sm:$0xf]
  %v23 = vld [vmem:[%s1 + $0x20] sm:$0xf]
  %v24 = vld [vmem:[%s1 + $0x24] sm:$0xf]
  %v25 = vld [vmem:[%s1 + $0x28] sm:$0xf]
  %v26 = vld [vmem:[%s1 + $0x2c] sm:$0xf]
  %v27 = vld [vmem:[%s1 + $0x30] sm:$0xf]
  %v28 = vld [vmem:[%s1 + $0x34] sm:$0xf]
  %v29 = vld [vmem:[%s1 + $0x38] sm:$0xf]
  %v30 = vld [vmem:[%s1 + $0x3c] sm:$0xf]
  %v31 = vld [vmem:[%s1 + $0x40] sm:$0xf]
  %v32 = vld [vmem:[%s1 + $0x44] sm:$0xf]
  %v33 = vld [vmem:[%s1 + $0x48] sm:$0xf]
  %v34 = vld [vmem:[%s1 + $0x4c] sm:$0xf]
  %v35 = vld [vmem:[%s1 + $0x50] sm:$0xf]
  %v36 = vld [vmem:[%s1 + $0x54] sm:$0xf]
  %v37 = vld [vmem:[%s1 + $0x58] sm:$0xf]
  %v38 = vld [vmem:[%s1 + $0x5c] sm:$0xf]
  %v39 = vld [vmem:[%s1 + $0x60] sm:$0xf]
  %v40 = vld [vmem:[%s1 + $0x64] sm:$0xf]
  %v41 = vld [vmem:[%s1 + $0x68] sm:$0xf]
  %v42 = vld [vmem:[%s1 + $0x6c] sm:$0xf]
  %v43 = vld [vmem:[%s1 + $0x70] sm:$0xf]
  %v44 = vld [vmem:[%s1 + $0x74] sm:$0xf]
  %v45 = vld [vmem:[%s1 + $0x78] sm:$0xf]
  %v46 = vld [vmem:[%s1 + $0x7c] sm:$0xf]
  %v47 = vld [vmem:[%s1 + $0x80] sm:$0xf]
  %v48 = vld [vmem:[%s1 + $0x84] sm:$0xf]
  %v49 = vld [vmem:[%s1 + $0x88] sm:$0xf]
  %v50 = vld [vmem:[%s1 + $0x8c] sm:$0xf]
  %v51 = vld [vmem:[%s1 + $0x90] sm:$0xf]
  %v52 = vld [vmem:[%s1 + $0x94] sm:$0xf]
  %v53 = vld [vmem:[%s1 + $0x98] sm:$0xf]
  %v54 = vld [vmem:[%s1 + $0x9c] sm:$0xf]
  %v55 = vld [vmem:[%s1 + $0xa0] sm:$0xf]
  %v56 = vld [vmem:[%s1 + $0xa4] sm:$0xf]
  %v57 = vld [vmem:[%s1 + $0xa8] sm:$0xf]
  %v58 = vld [vmem:[%s1 + $0xac] sm:$0xf]
  %v59 = vld [vmem:[%s1 + $0xb0] sm:$0xf]
  %v60 = vld [vmem:[%s1 + $0xb4] sm:$0xf]
  %v61 = vld [vmem:[%s1 + $0xb8] sm:$0xf]
  %v62 = vld [vmem:[%s1 + $0xbc] sm:$0xf]
  %v63 = vld [vmem:[%s1 + $0xc0] sm:$0xf]
  %v64 = vld [vmem:[%s1 + $0xc4] sm:$0xf]
  %v65 = vld [vmem:[%s1 + $0xc8] sm:$0xf]
  %v66 = vld [vmem:[%s1 + $0xcc] sm:$0xf]
  %v67 = vld [vmem:[%s1 + $0xd0] sm:$0xf]
  %v68 = vld [vmem:[%s1 + $0xd4] sm:$0xf]
  %v69 = vld [vmem:[%s1 + $0xd8] sm:$0xf]
  %v70 = vld [vmem:[%s1 + $0xdc] sm:$0xf]
  %v71 = vld [vmem:[%s1 + $0xe0] sm:$0xf]
  %v72 = vld [vmem:[%s1 + $0xe4] sm:$0xf]
  %v73 = vld [vmem:[%s1 + $0xe8] sm:$0xf]
  %v74 = vld [vmem:[%s1 + $0xec] sm:$0xf]
  %v75 = vld [vmem:[%s1 + $0xf0] sm:$0xf]
  %v76 = vld [vmem:[%s1 + $0xf4] sm:$0xf]
  %v77 = vld [vmem:[%s1 + $0xf8] sm:$0xf]
  %v78 = vld [vmem:[%s1 + $0xfc] sm:$0xf]
  %v79 = vld [vmem:[%s1 + $0x100] sm:$0xf]
  %v80 = vld [vmem:[%s1 + $0x104] sm:$0xf]
  %v81 = vld [vmem:[%s1 + $0x108] sm:$0xf]
  %v82 = vld [vmem:[%s1 + $0x10c] sm:$0xf]
  %v83 = vld [vmem:[%s1 + $0x110] sm:$0xf]
  %v84 = vld [vmem:[%s1 + $0x114] sm:$0xf]
  %v85 = vld [vmem:[%s1 + $0x118] sm:$0xf]
  %v86 = vld [vmem:[%s1 + $0x11c] sm:$0xf]
  %v87 = vld [vmem:[%s1 + $0x120] sm:$0xf]
  %v88 = vld [vmem:[%s1 + $0x124] sm:$0xf]
  %v89 = vld [vmem:[%s1 + $0x128] sm:$0xf]
  %v90 = vld [vmem:[%s1 + $0x12c] sm:$0xf]
  %v91 = vld [vmem:[%s1 + $0x130] sm:$0xf]
  %v92 = vld [vmem:[%s1 + $0x134] sm:$0xf]
  %v93 = vld [vmem:[%s1 + $0x138] sm:$0xf]
  %v94 = vld [vmem:[%s1 + $0x13c] sm:$0xf]
  %v95 = vld [vmem:[%s1 + $0x140] sm:$0xf]
  %v96 = vld [vmem:[%s1 + $0x144] sm:$0xf]
  %v97 = vld [vmem:[%s1 + $0x148] sm:$0xf]
  %v98 = vld [vmem:[%s1 + $0x14c] sm:$0xf]
  %v99 = vld [vmem:[%s1 + $0x150] sm:$0xf]
  %v100 = vld [vmem:[%s1 + $0x154] sm:$0xf]
  %v101 = vld [vmem:[%s1 + $0x158] sm:$0xf]
  %v102 = vld [vmem:[%s1 + $0x15c] sm:$0xf]
  %v103 = vld [vmem:[%s1 + $0x160] sm:$0xf]
  %v104 = vld [vmem:[%s1 + $0x164] sm:$0xf]
  %v105 = vld [vmem:[%s1 + $0x168] sm:$0xf]
  %v106 = vld [vmem:[%s1 + $0x16c] sm:$0xf]
  %v107 = vld [vmem:[%s1 + $0x170] sm:$0xf]
  %v108 = vld [vmem:[%s1 + $0x174] sm:$0xf]
  %v109 = vld [vmem:[%s1 + $0x178] sm:$0xf]
  %v110 = vld [vmem:[%s1 + $0x17c] sm:$0xf]
  %v111 = vld [vmem:[%s1 + $0x180] sm:$0xf]
  %v112 = vld [vmem:[%s1 + $0x184] sm:$0xf]
  %v113 = vld [vmem:[%s1 + $0x188] sm:$0xf]
  %v114 = vld [vmem:[%s1 + $0x18c] sm:$0xf]
  %v115 = vld [vmem:[%s1 + $0x190] sm:$0xf]
  %v116 = vld [vmem:[%s1 + $0x194] sm:$0xf]
  %v117 = vld [vmem:[%s1 + $0x198] sm:$0xf]
  %v118 = vld [vmem:[%s1 + $0x19c] sm:$0xf]
  %v119 = vld [vmem:[%s1 + $0x1a0] sm:$0xf]
  %v120 = vld [vmem:[%s1 + $0x1a4] sm:$0xf]
  %v121 = vld [vmem:[%s1 + $0x1a8] sm:$0xf]
  %v122 = vld [vmem:[%s1 + $0x1ac] sm:$0xf]
  %v123 = vld [vmem:[%s1 + $0x1b0] sm:$0xf]
  %v124 = vld [vmem:[%s1 + $0x1b4] sm:$0xf]
  %v125 = vld [vmem:[%s1 + $0x1b8] sm:$0xf]
  %v126 = vld [vmem:[%s1 + $0x1bc] sm:$0xf]
  %v127 = vld [vmem:[%s1 + $0x1c0] sm:$0xf]
  %v128 = vld [vmem:[%s1 + $0x1c4] sm:$0xf]
  %v129 = vld [vmem:[%s1 + $0x1c8] sm:$0xf]
  %v130 = vld [vmem:[%s1 + $0x1cc] sm:$0xf]
  %v131 = vld [vmem:[%s1 + $0x1d0] sm:$0xf]
  %v132 = vld [vmem:[%s1 + $0x1d4] sm:$0xf]
  %v133 = vld [vmem:[%s1 + $0x1d8] sm:$0xf]
  %v134 = vld [vmem:[%s1 + $0x1dc] sm:$0xf]
  %v135 = vld [vmem:[%s1 + $0x1e0] sm:$0xf]
  %v136 = vld [vmem:[%s1 + $0x1e4] sm:$0xf]
  %v137 = vld [vmem:[%s1 + $0x1e8] sm:$0xf]
  %v138 = vld [vmem:[%s1 + $0x1ec] sm:$0xf]
  %v139 = vld [vmem:[%s1 + $0x1f0] sm:$0xf]
  %v140 = vld [vmem:[%s1 + $0x1f4] sm:$0xf]
  %v141 = vld [vmem:[%s1 + $0x1f8] sm:$0xf]
  %v142 = vld [vmem:[%s1 + $0x1fc] sm:$0xf]
  %v143 = vld [vmem:[%s0] sm:$0xf]
  %v144 = vld [vmem:[%s0 + $0x4] sm:$0xf]
  %v145 = vld [vmem:[%s0 + $0x8] sm:$0xf]
  %v146 = vld [vmem:[%s0 + $0xc] sm:$0xf]
  %v147 = vld [vmem:[%s0 + $0x10] sm:$0xf]
  %v148 = vld [vmem:[%s0 + $0x14] sm:$0xf]
  %v149 = vld [vmem:[%s0 + $0x18] sm:$0xf]
  %v150 = vld [vmem:[%s0 + $0x1c] sm:$0xf]
  %v151 = vld [vmem:[%s0 + $0x20] sm:$0xf]
  %v152 = vld [vmem:[%s0 + $0x24] sm:$0xf]
  %v153 = vld [vmem:[%s0 + $0x28] sm:$0xf]
  %v154 = vld [vmem:[%s0 + $0x2c] sm:$0xf]
  %v155 = vld [vmem:[%s0 + $0x30] sm:$0xf]
  %v156 = vld [vmem:[%s0 + $0x34] sm:$0x7]
  %v285 = vunpack.c.l.b16 %v15
  %v286 = vunpack.c.l.b16 %v16
  %v287 = vunpack.c.l.b16 %v17
  %v288 = vunpack.c.l.b16 %v18
  %v289 = vunpack.c.l.b16 %v19
  %v290 = vunpack.c.l.b16 %v20
  %v291 = vunpack.c.l.b16 %v21
  %v292 = vunpack.c.l.b16 %v22
  %v293 = vunpack.c.l.b16 %v23
  %v294 = vunpack.c.l.b16 %v24
  %v295 = vunpack.c.l.b16 %v25
  %v296 = vunpack.c.l.b16 %v26
  %v297 = vunpack.c.l.b16 %v27
  %v298 = vunpack.c.l.b16 %v28
  %v299 = vunpack.c.l.b16 %v29
  %v300 = vunpack.c.l.b16 %v30
  %v301 = vunpack.c.l.b16 %v31
  %v302 = vunpack.c.l.b16 %v32
  %v303 = vunpack.c.l.b16 %v33
  %v304 = vunpack.c.l.b16 %v34
  %v305 = vunpack.c.l.b16 %v35
  %v306 = vunpack.c.l.b16 %v36
  %v307 = vunpack.c.l.b16 %v37
  %v308 = vunpack.c.l.b16 %v38
  %v309 = vunpack.c.l.b16 %v39
  %v310 = vunpack.c.l.b16 %v40
  %v311 = vunpack.c.l.b16 %v41
  %v312 = vunpack.c.l.b16 %v42
  %v313 = vunpack.c.l.b16 %v43
  %v314 = vunpack.c.l.b16 %v44
  %v315 = vunpack.c.l.b16 %v45
  %v316 = vunpack.c.l.b16 %v46
  %v317 = vunpack.c.l.b16 %v47
  %v318 = vunpack.c.l.b16 %v48
  %v319 = vunpack.c.l.b16 %v49
  %v320 = vunpack.c.l.b16 %v50
  %v321 = vunpack.c.l.b16 %v51
  %v322 = vunpack.c.l.b16 %v52
  %v323 = vunpack.c.l.b16 %v53
  %v324 = vunpack.c.l.b16 %v54
  %v325 = vunpack.c.l.b16 %v55
  %v326 = vunpack.c.l.b16 %v56
  %v327 = vunpack.c.l.b16 %v57
  %v328 = vunpack.c.l.b16 %v58
  %v329 = vunpack.c.l.b16 %v59
  %v330 = vunpack.c.l.b16 %v60
  %v331 = vunpack.c.l.b16 %v61
  %v332 = vunpack.c.l.b16 %v62
  %v333 = vunpack.c.l.b16 %v63
  %v334 = vunpack.c.l.b16 %v64
  %v335 = vunpack.c.l.b16 %v65
  %v336 = vunpack.c.l.b16 %v66
  %v337 = vunpack.c.l.b16 %v67
  %v338 = vunpack.c.l.b16 %v68
  %v339 = vunpack.c.l.b16 %v69
  %v340 = vunpack.c.l.b16 %v70
  %v341 = vunpack.c.l.b16 %v71
  %v342 = vunpack.c.l.b16 %v72
  %v343 = vunpack.c.l.b16 %v73
  %v344 = vunpack.c.l.b16 %v74
  %v345 = vunpack.c.l.b16 %v75
  %v346 = vunpack.c.l.b16 %v76
  %v347 = vunpack.c.l.b16 %v77
  %v348 = vunpack.c.l.b16 %v78
  %v349 = vunpack.c.l.b16 %v79
  %v350 = vunpack.c.l.b16 %v80
  %v351 = vunpack.c.l.b16 %v81
  %v352 = vunpack.c.l.b16 %v82
  %v353 = vunpack.c.l.b16 %v83
  %v354 = vunpack.c.l.b16 %v84
  %v355 = vunpack.c.l.b16 %v85
  %v356 = vunpack.c.l.b16 %v86
  %v357 = vunpack.c.l.b16 %v87
  %v358 = vunpack.c.l.b16 %v88
  %v359 = vunpack.c.l.b16 %v89
  %v360 = vunpack.c.l.b16 %v90
  %v361 = vunpack.c.l.b16 %v91
  %v362 = vunpack.c.l.b16 %v92
  %v363 = vunpack.c.l.b16 %v93
  %v364 = vunpack.c.l.b16 %v94
  %v365 = vunpack.c.l.b16 %v95
  %v366 = vunpack.c.l.b16 %v96
  %v367 = vunpack.c.l.b16 %v97
  %v368 = vunpack.c.l.b16 %v98
  %v369 = vunpack.c.l.b16 %v99
  %v370 = vunpack.c.l.b16 %v100
  %v371 = vunpack.c.l.b16 %v101
  %v372 = vunpack.c.l.b16 %v102
  %v373 = vunpack.c.l.b16 %v103
  %v374 = vunpack.c.l.b16 %v104
  %v375 = vunpack.c.l.b16 %v105
  %v376 = vunpack.c.l.b16 %v106
  %v377 = vunpack.c.l.b16 %v107
  %v378 = vunpack.c.l.b16 %v108
  %v379 = vunpack.c.l.b16 %v109
  %v380 = vunpack.c.l.b16 %v110
  %v381 = vunpack.c.l.b16 %v111
  %v382 = vunpack.c.l.b16 %v112
  %v383 = vunpack.c.l.b16 %v113
  %v384 = vunpack.c.l.b16 %v114
  %v385 = vunpack.c.l.b16 %v115
  %v386 = vunpack.c.l.b16 %v116
  %v387 = vunpack.c.l.b16 %v117
  %v388 = vunpack.c.l.b16 %v118
  %v389 = vunpack.c.l.b16 %v119
  %v390 = vunpack.c.l.b16 %v120
  %v391 = vunpack.c.l.b16 %v121
  %v392 = vunpack.c.l.b16 %v122
  %v393 = vunpack.c.l.b16 %v123
  %v394 = vunpack.c.l.b16 %v124
  %v395 = vunpack.c.l.b16 %v125
  %v396 = vunpack.c.l.b16 %v126
  %v397 = vunpack.c.l.b16 %v127
  %v398 = vunpack.c.l.b16 %v128
  %v399 = vunpack.c.l.b16 %v129
  %v400 = vunpack.c.l.b16 %v130
  %v401 = vunpack.c.l.b16 %v131
  %v402 = vunpack.c.l.b16 %v132
  %v403 = vunpack.c.l.b16 %v133
  %v404 = vunpack.c.l.b16 %v134
  %v405 = vunpack.c.l.b16 %v135
  %v406 = vunpack.c.l.b16 %v136
  %v407 = vunpack.c.l.b16 %v137
  %v408 = vunpack.c.l.b16 %v138
  %v409 = vunpack.c.l.b16 %v139
  %v410 = vunpack.c.l.b16 %v140
  %v411 = vunpack.c.l.b16 %v141
  %v412 = vunpack.c.l.b16 %v142
  %v413 = vpack.c.b16 %v286, %v285
  %v414 = vpack.c.b16 %v288, %v287
  %v415 = vpack.c.b16 %v290, %v289
  %v416 = vpack.c.b16 %v292, %v291
  %v417 = vpack.c.b16 %v294, %v293
  %v418 = vpack.c.b16 %v296, %v295
  %v419 = vpack.c.b16 %v298, %v297
  %v420 = vpack.c.b16 %v300, %v299
  %v421 = vpack.c.b16 %v302, %v301
  %v422 = vpack.c.b16 %v304, %v303
  %v423 = vpack.c.b16 %v306, %v305
  %v424 = vpack.c.b16 %v308, %v307
  %v425 = vpack.c.b16 %v310, %v309
  %v426 = vpack.c.b16 %v312, %v311
  %v427 = vpack.c.b16 %v314, %v313
  %v428 = vpack.c.b16 %v316, %v315
  %v429 = vpack.c.b16 %v318, %v317
  %v430 = vpack.c.b16 %v320, %v319
  %v431 = vpack.c.b16 %v322, %v321
  %v432 = vpack.c.b16 %v324, %v323
  %v433 = vpack.c.b16 %v326, %v325
  %v434 = vpack.c.b16 %v328, %v327
  %v435 = vpack.c.b16 %v330, %v329
  %v436 = vpack.c.b16 %v332, %v331
  %v437 = vpack.c.b16 %v334, %v333
  %v438 = vpack.c.b16 %v336, %v335
  %v439 = vpack.c.b16 %v338, %v337
  %v440 = vpack.c.b16 %v340, %v339
  %v441 = vpack.c.b16 %v342, %v341
  %v442 = vpack.c.b16 %v344, %v343
  %v443 = vpack.c.b16 %v346, %v345
  %v444 = vpack.c.b16 %v348, %v347
  %v445 = vpack.c.b16 %v350, %v349
  %v446 = vpack.c.b16 %v352, %v351
  %v447 = vpack.c.b16 %v354, %v353
  %v448 = vpack.c.b16 %v356, %v355
  %v449 = vpack.c.b16 %v358, %v357
  %v450 = vpack.c.b16 %v360, %v359
  %v451 = vpack.c.b16 %v362, %v361
  %v452 = vpack.c.b16 %v364, %v363
  %v453 = vpack.c.b16 %v366, %v365
  %v454 = vpack.c.b16 %v368, %v367
  %v455 = vpack.c.b16 %v370, %v369
  %v456 = vpack.c.b16 %v372, %v371
  %v457 = vpack.c.b16 %v374, %v373
  %v458 = vpack.c.b16 %v376, %v375
  %v459 = vpack.c.b16 %v378, %v377
  %v460 = vpack.c.b16 %v380, %v379
  %v461 = vpack.c.b16 %v382, %v381
  %v462 = vpack.c.b16 %v384, %v383
  %v463 = vpack.c.b16 %v386, %v385
  %v464 = vpack.c.b16 %v388, %v387
  %v465 = vpack.c.b16 %v390, %v389
  %v466 = vpack.c.b16 %v392, %v391
  %v467 = vpack.c.b16 %v394, %v393
  %v468 = vpack.c.b16 %v396, %v395
  %v469 = vpack.c.b16 %v398, %v397
  %v470 = vpack.c.b16 %v400, %v399
  %v471 = vpack.c.b16 %v402, %v401
  %v472 = vpack.c.b16 %v404, %v403
  %v473 = vpack.c.b16 %v406, %v405
  %v474 = vpack.c.b16 %v408, %v407
  %v475 = vpack.c.b16 %v410, %v409
  %v476 = vpack.c.b16 %v412, %v411
  %v491 = vunpack.c.l.b16 %v143
  %v492 = vunpack.c.l.b16 %v144
  %v493 = vunpack.c.l.b16 %v145
  %v494 = vunpack.c.l.b16 %v146
  %v495 = vunpack.c.l.b16 %v147
  %v496 = vunpack.c.l.b16 %v148
  %v497 = vunpack.c.l.b16 %v149
  %v498 = vunpack.c.l.b16 %v150
  %v499 = vunpack.c.l.b16 %v151
  %v500 = vunpack.c.l.b16 %v152
  %v501 = vunpack.c.l.b16 %v153
  %v502 = vunpack.c.l.b16 %v154
  %v503 = vunpack.c.l.b16 %v155
  %v504 = vunpack.c.l.b16 %v156
  %v505 = vpack.c.b16 %v492, %v491
  %v506 = vpack.c.b16 %v494, %v493
  %v507 = vpack.c.b16 %v496, %v495
  %v508 = vpack.c.b16 %v498, %v497
  %v509 = vpack.c.b16 %v500, %v499
  %v510 = vpack.c.b16 %v502, %v501
  %v511 = vpack.c.b16 %v504, %v503
  %vm518 = vcmask 900096
  %v520 = vsel %vm518, %v413, 0
  %v523 = vsel %vm518, %v414, 0
  %v526 = vsel %vm518, %v415, 0
  %v529 = vsel %vm518, %v416, 0
  %v532 = vsel %vm518, %v417, 0
  %v535 = vsel %vm518, %v418, 0
  %v538 = vsel %vm518, %v419, 0
  %v541 = vsel %vm518, %v420, 0
  %v544 = vsel %vm518, %v421, 0
  %v547 = vsel %vm518, %v422, 0
  %v550 = vsel %vm518, %v423, 0
  %v553 = vsel %vm518, %v424, 0
  %v556 = vsel %vm518, %v425, 0
  %v559 = vsel %vm518, %v426, 0
  %v562 = vsel %vm518, %v427, 0
  %v565 = vsel %vm518, %v428, 0
  %v568 = vsel %vm518, %v429, 0
  %v571 = vsel %vm518, %v430, 0
  %v574 = vsel %vm518, %v431, 0
  %v577 = vsel %vm518, %v432, 0
  %v580 = vsel %vm518, %v433, 0
  %v583 = vsel %vm518, %v434, 0
  %v586 = vsel %vm518, %v435, 0
  %v589 = vsel %vm518, %v436, 0
  %v592 = vsel %vm518, %v437, 0
  %v595 = vsel %vm518, %v438, 0
  %v598 = vsel %vm518, %v439, 0
  %v601 = vsel %vm518, %v440, 0
  %v604 = vsel %vm518, %v441, 0
  %v607 = vsel %vm518, %v442, 0
  %v610 = vsel %vm518, %v443, 0
  %v613 = vsel %vm518, %v444, 0
  %v616 = vsel %vm518, %v445, 0
  %v619 = vsel %vm518, %v446, 0
  %v622 = vsel %vm518, %v447, 0
  %v625 = vsel %vm518, %v448, 0
  %v628 = vsel %vm518, %v449, 0
  %v631 = vsel %vm518, %v450, 0
  %v634 = vsel %vm518, %v451, 0
  %v637 = vsel %vm518, %v452, 0
  %v640 = vsel %vm518, %v453, 0
  %v643 = vsel %vm518, %v454, 0
  %v646 = vsel %vm518, %v455, 0
  %v649 = vsel %vm518, %v456, 0
  %v652 = vsel %vm518, %v457, 0
  %v655 = vsel %vm518, %v458, 0
  %v658 = vsel %vm518, %v459, 0
  %v661 = vsel %vm518, %v460, 0
  %v664 = vsel %vm518, %v461, 0
  %v667 = vsel %vm518, %v462, 0
  %v670 = vsel %vm518, %v463, 0
  %v673 = vsel %vm518, %v464, 0
  %v676 = vsel %vm518, %v465, 0
  %v679 = vsel %vm518, %v466, 0
  %v682 = vsel %vm518, %v467, 0
  %v685 = vsel %vm518, %v468, 0
  %v688 = vsel %vm518, %v469, 0
  %v691 = vsel %vm518, %v470, 0
  %v694 = vsel %vm518, %v471, 0
  %v697 = vsel %vm518, %v472, 0
  %v700 = vsel %vm518, %v473, 0
  %v703 = vsel %vm518, %v474, 0
  %v706 = vsel %vm518, %v475, 0
  %v709 = vsel %vm518, %v476, 0
  %vm711 = vcmask 1046528
  %v713 = vsel %vm711, %v511, 0
  %715 = vmatprep.subr.bf16.mxu0 0
  %716 = vmatpush1.bf16.msra.mxu0 %v505
  %717 = vmatprep.subr.bf16.mxu0 0
  %718 = vmatpush1.bf16.msra.mxu0 %v506
  %719 = vmatprep.subr.bf16.mxu0 0
  %720 = vmatpush1.bf16.msra.mxu0 %v507
  %721 = vmatprep.subr.bf16.mxu0 0
  %722 = vmatpush1.bf16.msra.mxu0 %v508
  %723 = vmatprep.subr.bf16.mxu0 0
  %724 = vmatpush1.bf16.msra.mxu0 %v509
  %725 = vmatprep.subr.bf16.mxu0 0
  %726 = vmatpush1.bf16.msra.mxu0 %v510
  %727 = vmatprep.subr.bf16.mxu0 0
  %728 = vmatpush1.bf16.msra.mxu0 %v713
  %729 = vmatprep.subr.bf16.mxu0 0
  %730 = vmatpush1.bf16.msra.mxu0 0
  %731 = vmatprep.subr.bf16.mxu0 0
  %732 = vmatpush1.bf16.msra.mxu0 0
  %733 = vmatprep.subr.bf16.mxu0 0
  %734 = vmatpush1.bf16.msra.mxu0 0
  %735 = vmatprep.subr.bf16.mxu0 0
  %736 = vmatpush1.bf16.msra.mxu0 0
  %737 = vmatprep.subr.bf16.mxu0 0
  %738 = vmatpush1.bf16.msra.mxu0 0
  %739 = vmatprep.subr.bf16.mxu0 0
  %740 = vmatpush1.bf16.msra.mxu0 0
  %741 = vmatprep.subr.bf16.mxu0 0
  %742 = vmatpush1.bf16.msra.mxu0 0
  %743 = vmatprep.subr.bf16.mxu0 0
  %744 = vmatpush1.bf16.msra.mxu0 0
  %745 = vmatprep.subr.bf16.mxu0 0
  %746 = vmatpush1.bf16.msra.mxu0 0
  %747 = vmatprep.mubr.bf16.mxu0 0
  %748 = vmatmul.mubr.bf16.gmra.mrb[0].mxu0 %v520
  %v749 = vpop.f32.mrb[0].mxu0
  %v750 = vadd.f32 0.0, %v749
  %v751 = vpop.f32.mrb[0].mxu0
  %v752 = vpop.f32.mrb[0].mxu0
  %v753 = vadd.f32 0.0, %v752
  %v754 = vpop.f32.mrb[0].mxu0
  %755 = vmatprep.mubr.bf16.mxu0 0
  %756 = vmatmul.mubr.bf16.gmra.mrb[0].mxu0 %v523
  %v757 = vpop.f32.mrb[0].mxu0
  %v758 = vadd.f32 0.0, %v757
  %v759 = vpop.f32.mrb[0].mxu0
  %v760 = vpop.f32.mrb[0].mxu0
  %v761 = vadd.f32 0.0, %v760
  %v762 = vpop.f32.mrb[0].mxu0
  %763 = vmatprep.mubr.bf16.mxu0 0
  %764 = vmatmul.mubr.bf16.gmra.mrb[0].mxu0 %v526
  %v765 = vpop.f32.mrb[0].mxu0
  %v766 = vadd.f32 0.0, %v765
  %v767 = vpop.f32.mrb[0].mxu0
  %v768 = vpop.f32.mrb[0].mxu0
  %v769 = vadd.f32 0.0, %v768
  %v770 = vpop.f32.mrb[0].mxu0
  %771 = vmatprep.mubr.bf16.mxu0 0
  %772 = vmatmul.mubr.bf16.gmra.mrb[0].mxu0 %v529
  %v773 = vpop.f32.mrb[0].mxu0
  %v774 = vadd.f32 0.0, %v773
  %v775 = vpop.f32.mrb[0].mxu0
  %v776 = vpop.f32.mrb[0].mxu0
  %v777 = vadd.f32 0.0, %v776
  %v778 = vpop.f32.mrb[0].mxu0
  %779 = vmatprep.mubr.bf16.mxu0 0
  %780 = vmatmul.mubr.bf16.gmra.mrb[0].mxu0 %v532
  %v781 = vpop.f32.mrb[0].mxu0
  %v782 = vadd.f32 0.0, %v781
  %v783 = vpop.f32.mrb[0].mxu0
  %v784 = vpop.f32.mrb[0].mxu0
  %v785 = vadd.f32 0.0, %v784
  %v786 = vpop.f32.mrb[0].mxu0
  %787 = vmatprep.mubr.bf16.mxu0 0
  %788 = vmatmul.mubr.bf16.gmra.mrb[0].mxu0 %v535
  %v789 = vpop.f32.mrb[0].mxu0
  %v790 = vadd.f32 0.0, %v789
  %v791 = vpop.f32.mrb[0].mxu0
  %v792 = vpop.f32.mrb[0].mxu0
  %v793 = vadd.f32 0.0, %v792
  %v794 = vpop.f32.mrb[0].mxu0
  %795 = vmatprep.mubr.bf16.mxu0 0
  %796 = vmatmul.mubr.bf16.gmra.mrb[0].mxu0 %v538
  %v797 = vpop.f32.mrb[0].mxu0
  %v798 = vadd.f32 0.0, %v797
  %v799 = vpop.f32.mrb[0].mxu0
  %v800 = vpop.f32.mrb[0].mxu0
  %v801 = vadd.f32 0.0, %v800
  %v802 = vpop.f32.mrb[0].mxu0
  %803 = vmatprep.mubr.bf16.mxu0 0
  %804 = vmatmul.mubr.bf16.gmra.mrb[0].mxu0 %v541
  %v805 = vpop.f32.mrb[0].mxu0
  %v806 = vadd.f32 0.0, %v805
  %v807 = vpop.f32.mrb[0].mxu0
  %v808 = vpop.f32.mrb[0].mxu0
  %v809 = vadd.f32 0.0, %v808
  %v810 = vpop.f32.mrb[0].mxu0
  %811 = vmatprep.mubr.bf16.mxu0 0
  %812 = vmatmul.mubr.bf16.gmra.mrb[0].mxu0 %v544
  %v813 = vpop.f32.mrb[0].mxu0
  %v814 = vadd.f32 0.0, %v813
  %v815 = vpop.f32.mrb[0].mxu0
  %v816 = vpop.f32.mrb[0].mxu0
  %v817 = vadd.f32 0.0, %v816
  %v818 = vpop.f32.mrb[0].mxu0
  %819 = vmatprep.mubr.bf16.mxu0 0
  %820 = vmatmul.mubr.bf16.gmra.mrb[0].mxu0 %v547
  %v821 = vpop.f32.mrb[0].mxu0
  %v822 = vadd.f32 0.0, %v821
  %v823 = vpop.f32.mrb[0].mxu0
  %v824 = vpop.f32.mrb[0].mxu0
  %v825 = vadd.f32 0.0, %v824
  %v826 = vpop.f32.mrb[0].mxu0
  %827 = vmatprep.mubr.bf16.mxu0 0
  %828 = vmatmul.mubr.bf16.gmra.mrb[0].mxu0 %v550
  %v829 = vpop.f32.mrb[0].mxu0
  %v830 = vadd.f32 0.0, %v829
  %v831 = vpop.f32.mrb[0].mxu0
  %v832 = vpop.f32.mrb[0].mxu0
  %v833 = vadd.f32 0.0, %v832
  %v834 = vpop.f32.mrb[0].mxu0
  %835 = vmatprep.mubr.bf16.mxu0 0
  %836 = vmatmul.mubr.bf16.gmra.mrb[0].mxu0 %v553
  %v837 = vpop.f32.mrb[0].mxu0
  %v838 = vadd.f32 0.0, %v837
  %v839 = vpop.f32.mrb[0].mxu0
  %v840 = vpop.f32.mrb[0].mxu0
  %v841 = vadd.f32 0.0, %v840
  %v842 = vpop.f32.mrb[0].mxu0
  %843 = vmatprep.mubr.bf16.mxu0 0
  %844 = vmatmul.mubr.bf16.gmra.mrb[0].mxu0 %v556
  %v845 = vpop.f32.mrb[0].mxu0
  %v846 = vadd.f32 0.0, %v845
  %v847 = vpop.f32.mrb[0].mxu0
  %v848 = vpop.f32.mrb[0].mxu0
  %v849 = vadd.f32 0.0, %v848
  %v850 = vpop.f32.mrb[0].mxu0
  %851 = vmatprep.mubr.bf16.mxu0 0
  %852 = vmatmul.mubr.bf16.gmra.mrb[0].mxu0 %v559
  %v853 = vpop.f32.mrb[0].mxu0
  %v854 = vadd.f32 0.0, %v853
  %v855 = vpop.f32.mrb[0].mxu0
  %v856 = vpop.f32.mrb[0].mxu0
  %v857 = vadd.f32 0.0, %v856
  %v858 = vpop.f32.mrb[0].mxu0
  %859 = vmatprep.mubr.bf16.mxu0 0
  %860 = vmatmul.mubr.bf16.gmra.mrb[0].mxu0 %v562
  %v861 = vpop.f32.mrb[0].mxu0
  %v862 = vadd.f32 0.0, %v861
  %v863 = vpop.f32.mrb[0].mxu0
  %v864 = vpop.f32.mrb[0].mxu0
  %v865 = vadd.f32 0.0, %v864
  %v866 = vpop.f32.mrb[0].mxu0
  %867 = vmatprep.mubr.bf16.mxu0 0
  %868 = vmatmul.mubr.bf16.gmra.mrb[0].mxu0 %v565
  %v869 = vpop.f32.mrb[0].mxu0
  %v870 = vadd.f32 0.0, %v869
  %v871 = vpop.f32.mrb[0].mxu0
  %v872 = vpop.f32.mrb[0].mxu0
  %v873 = vadd.f32 0.0, %v872
  %v874 = vpop.f32.mrb[0].mxu0
  %875 = vmatprep.mubr.bf16.mxu0 0
  %876 = vmatmul.mubr.bf16.gmra.mrb[0].mxu0 %v568
  %v877 = vpop.f32.mrb[0].mxu0
  %v878 = vadd.f32 0.0, %v877
  %v879 = vpop.f32.mrb[0].mxu0
  %v880 = vpop.f32.mrb[0].mxu0
  %v881 = vadd.f32 0.0, %v880
  %v882 = vpop.f32.mrb[0].mxu0
  %883 = vmatprep.mubr.bf16.mxu0 0
  %884 = vmatmul.mubr.bf16.gmra.mrb[0].mxu0 %v571
  %v885 = vpop.f32.mrb[0].mxu0
  %v886 = vadd.f32 0.0, %v885
  %v887 = vpop.f32.mrb[0].mxu0
  %v888 = vpop.f32.mrb[0].mxu0
  %v889 = vadd.f32 0.0, %v888
  %v890 = vpop.f32.mrb[0].mxu0
  %891 = vmatprep.mubr.bf16.mxu0 0
  %892 = vmatmul.mubr.bf16.gmra.mrb[0].mxu0 %v574
  %v893 = vpop.f32.mrb[0].mxu0
  %v894 = vadd.f32 0.0, %v893
  %v895 = vpop.f32.mrb[0].mxu0
  %v896 = vpop.f32.mrb[0].mxu0
  %v897 = vadd.f32 0.0, %v896
  %v898 = vpop.f32.mrb[0].mxu0
  %899 = vmatprep.mubr.bf16.mxu0 0
  %900 = vmatmul.mubr.bf16.gmra.mrb[0].mxu0 %v577
  %v901 = vpop.f32.mrb[0].mxu0
  %v902 = vadd.f32 0.0, %v901
  %v903 = vpop.f32.mrb[0].mxu0
  %v904 = vpop.f32.mrb[0].mxu0
  %v905 = vadd.f32 0.0, %v904
  %v906 = vpop.f32.mrb[0].mxu0
  %907 = vmatprep.mubr.bf16.mxu0 0
  %908 = vmatmul.mubr.bf16.gmra.mrb[0].mxu0 %v580
  %v909 = vpop.f32.mrb[0].mxu0
  %v910 = vadd.f32 0.0, %v909
  %v911 = vpop.f32.mrb[0].mxu0
  %v912 = vpop.f32.mrb[0].mxu0
  %v913 = vadd.f32 0.0, %v912
  %v914 = vpop.f32.mrb[0].mxu0
  %915 = vmatprep.mubr.bf16.mxu0 0
  %916 = vmatmul.mubr.bf16.gmra.mrb[0].mxu0 %v583
  %v917 = vpop.f32.mrb[0].mxu0
  %v918 = vadd.f32 0.0, %v917
  %v919 = vpop.f32.mrb[0].mxu0
  %v920 = vpop.f32.mrb[0].mxu0
  %v921 = vadd.f32 0.0, %v920
  %v922 = vpop.f32.mrb[0].mxu0
  %923 = vmatprep.mubr.bf16.mxu0 0
  %924 = vmatmul.mubr.bf16.gmra.mrb[0].mxu0 %v586
  %v925 = vpop.f32.mrb[0].mxu0
  %v926 = vadd.f32 0.0, %v925
  %v927 = vpop.f32.mrb[0].mxu0
  %v928 = vpop.f32.mrb[0].mxu0
  %v929 = vadd.f32 0.0, %v928
  %v930 = vpop.f32.mrb[0].mxu0
  %931 = vmatprep.mubr.bf16.mxu0 0
  %932 = vmatmul.mubr.bf16.gmra.mrb[0].mxu0 %v589
  %v933 = vpop.f32.mrb[0].mxu0
  %v934 = vadd.f32 0.0, %v933
  %v935 = vpop.f32.mrb[0].mxu0
  %v936 = vpop.f32.mrb[0].mxu0
  %v937 = vadd.f32 0.0, %v936
  %v938 = vpop.f32.mrb[0].mxu0
  %939 = vmatprep.mubr.bf16.mxu0 0
  %940 = vmatmul.mubr.bf16.gmra.mrb[0].mxu0 %v592
  %v941 = vpop.f32.mrb[0].mxu0
  %v942 = vadd.f32 0.0, %v941
  %v943 = vpop.f32.mrb[0].mxu0
  %v944 = vpop.f32.mrb[0].mxu0
  %v945 = vadd.f32 0.0, %v944
  %v946 = vpop.f32.mrb[0].mxu0
  %947 = vmatprep.mubr.bf16.mxu0 0
  %948 = vmatmul.mubr.bf16.gmra.mrb[0].mxu0 %v595
  %v949 = vpop.f32.mrb[0].mxu0
  %v950 = vadd.f32 0.0, %v949
  %v951 = vpop.f32.mrb[0].mxu0
  %v952 = vpop.f32.mrb[0].mxu0
  %v953 = vadd.f32 0.0, %v952
  %v954 = vpop.f32.mrb[0].mxu0
  %955 = vmatprep.mubr.bf16.mxu0 0
  %956 = vmatmul.mubr.bf16.gmra.mrb[0].mxu0 %v598
  %v957 = vpop.f32.mrb[0].mxu0
  %v958 = vadd.f32 0.0, %v957
  %v959 = vpop.f32.mrb[0].mxu0
  %v960 = vpop.f32.mrb[0].mxu0
  %v961 = vadd.f32 0.0, %v960
  %v962 = vpop.f32.mrb[0].mxu0
  %963 = vmatprep.mubr.bf16.mxu0 0
  %964 = vmatmul.mubr.bf16.gmra.mrb[0].mxu0 %v601
  %v965 = vpop.f32.mrb[0].mxu0
  %v966 = vadd.f32 0.0, %v965
  %v967 = vpop.f32.mrb[0].mxu0
  %v968 = vpop.f32.mrb[0].mxu0
  %v969 = vadd.f32 0.0, %v968
  %v970 = vpop.f32.mrb[0].mxu0
  %971 = vmatprep.mubr.bf16.mxu0 0
  %972 = vmatmul.mubr.bf16.gmra.mrb[0].mxu0 %v604
  %v973 = vpop.f32.mrb[0].mxu0
  %v974 = vadd.f32 0.0, %v973
  %v975 = vpop.f32.mrb[0].mxu0
  %v976 = vpop.f32.mrb[0].mxu0
  %v977 = vadd.f32 0.0, %v976
  %v978 = vpop.f32.mrb[0].mxu0
  %979 = vmatprep.mubr.bf16.mxu0 0
  %980 = vmatmul.mubr.bf16.gmra.mrb[0].mxu0 %v607
  %v981 = vpop.f32.mrb[0].mxu0
  %v982 = vadd.f32 0.0, %v981
  %v983 = vpop.f32.mrb[0].mxu0
  %v984 = vpop.f32.mrb[0].mxu0
  %v985 = vadd.f32 0.0, %v984
  %v986 = vpop.f32.mrb[0].mxu0
  %987 = vmatprep.mubr.bf16.mxu0 0
  %988 = vmatmul.mubr.bf16.gmra.mrb[0].mxu0 %v610
  %v989 = vpop.f32.mrb[0].mxu0
  %v990 = vadd.f32 0.0, %v989
  %v991 = vpop.f32.mrb[0].mxu0
  %v992 = vpop.f32.mrb[0].mxu0
  %v993 = vadd.f32 0.0, %v992
  %v994 = vpop.f32.mrb[0].mxu0
  %995 = vmatprep.mubr.bf16.mxu0 0
  %996 = vmatmul.mubr.bf16.gmra.mrb[0].mxu0 %v613
  %v997 = vpop.f32.mrb[0].mxu0
  %v998 = vadd.f32 0.0, %v997
  %v999 = vpop.f32.mrb[0].mxu0
  %v1000 = vpop.f32.mrb[0].mxu0
  %v1001 = vadd.f32 0.0, %v1000
  %v1002 = vpop.f32.mrb[0].mxu0
  %1003 = vmatprep.mubr.bf16.mxu0 0
  %1004 = vmatmul.mubr.bf16.gmra.mrb[0].mxu0 %v616
  %v1005 = vpop.f32.mrb[0].mxu0
  %v1006 = vadd.f32 0.0, %v1005
  %v1007 = vpop.f32.mrb[0].mxu0
  %v1008 = vpop.f32.mrb[0].mxu0
  %v1009 = vadd.f32 0.0, %v1008
  %v1010 = vpop.f32.mrb[0].mxu0
  %1011 = vmatprep.mubr.bf16.mxu0 0
  %1012 = vmatmul.mubr.bf16.gmra.mrb[0].mxu0 %v619
  %v1013 = vpop.f32.mrb[0].mxu0
  %v1014 = vadd.f32 0.0, %v1013
  %v1015 = vpop.f32.mrb[0].mxu0
  %v1016 = vpop.f32.mrb[0].mxu0
  %v1017 = vadd.f32 0.0, %v1016
  %v1018 = vpop.f32.mrb[0].mxu0
  %1019 = vmatprep.mubr.bf16.mxu0 0
  %1020 = vmatmul.mubr.bf16.gmra.mrb[0].mxu0 %v622
  %v1021 = vpop.f32.mrb[0].mxu0
  %v1022 = vadd.f32 0.0, %v1021
  %v1023 = vpop.f32.mrb[0].mxu0
  %v1024 = vpop.f32.mrb[0].mxu0
  %v1025 = vadd.f32 0.0, %v1024
  %v1026 = vpop.f32.mrb[0].mxu0
  %1027 = vmatprep.mubr.bf16.mxu0 0
  %1028 = vmatmul.mubr.bf16.gmra.mrb[0].mxu0 %v625
  %v1029 = vpop.f32.mrb[0].mxu0
  %v1030 = vadd.f32 0.0, %v1029
  %v1031 = vpop.f32.mrb[0].mxu0
  %v1032 = vpop.f32.mrb[0].mxu0
  %v1033 = vadd.f32 0.0, %v1032
  %v1034 = vpop.f32.mrb[0].mxu0
  %1035 = vmatprep.mubr.bf16.mxu0 0
  %1036 = vmatmul.mubr.bf16.gmra.mrb[0].mxu0 %v628
  %v1037 = vpop.f32.mrb[0].mxu0
  %v1038 = vadd.f32 0.0, %v1037
  %v1039 = vpop.f32.mrb[0].mxu0
  %v1040 = vpop.f32.mrb[0].mxu0
  %v1041 = vadd.f32 0.0, %v1040
  %v1042 = vpop.f32.mrb[0].mxu0
  %1043 = vmatprep.mubr.bf16.mxu0 0
  %1044 = vmatmul.mubr.bf16.gmra.mrb[0].mxu0 %v631
  %v1045 = vpop.f32.mrb[0].mxu0
  %v1046 = vadd.f32 0.0, %v1045
  %v1047 = vpop.f32.mrb[0].mxu0
  %v1048 = vpop.f32.mrb[0].mxu0
  %v1049 = vadd.f32 0.0, %v1048
  %v1050 = vpop.f32.mrb[0].mxu0
  %1051 = vmatprep.mubr.bf16.mxu0 0
  %1052 = vmatmul.mubr.bf16.gmra.mrb[0].mxu0 %v634
  %v1053 = vpop.f32.mrb[0].mxu0
  %v1054 = vadd.f32 0.0, %v1053
  %v1055 = vpop.f32.mrb[0].mxu0
  %v1056 = vpop.f32.mrb[0].mxu0
  %v1057 = vadd.f32 0.0, %v1056
  %v1058 = vpop.f32.mrb[0].mxu0
  %1059 = vmatprep.mubr.bf16.mxu0 0
  %1060 = vmatmul.mubr.bf16.gmra.mrb[0].mxu0 %v637
  %v1061 = vpop.f32.mrb[0].mxu0
  %v1062 = vadd.f32 0.0, %v1061
  %v1063 = vpop.f32.mrb[0].mxu0
  %v1064 = vpop.f32.mrb[0].mxu0
  %v1065 = vadd.f32 0.0, %v1064
  %v1066 = vpop.f32.mrb[0].mxu0
  %1067 = vmatprep.mubr.bf16.mxu0 0
  %1068 = vmatmul.mubr.bf16.gmra.mrb[0].mxu0 %v640
  %v1069 = vpop.f32.mrb[0].mxu0
  %v1070 = vadd.f32 0.0, %v1069
  %v1071 = vpop.f32.mrb[0].mxu0
  %v1072 = vpop.f32.mrb[0].mxu0
  %v1073 = vadd.f32 0.0, %v1072
  %v1074 = vpop.f32.mrb[0].mxu0
  %1075 = vmatprep.mubr.bf16.mxu0 0
  %1076 = vmatmul.mubr.bf16.gmra.mrb[0].mxu0 %v643
  %v1077 = vpop.f32.mrb[0].mxu0
  %v1078 = vadd.f32 0.0, %v1077
  %v1079 = vpop.f32.mrb[0].mxu0
  %v1080 = vpop.f32.mrb[0].mxu0
  %v1081 = vadd.f32 0.0, %v1080
  %v1082 = vpop.f32.mrb[0].mxu0
  %1083 = vmatprep.mubr.bf16.mxu0 0
  %1084 = vmatmul.mubr.bf16.gmra.mrb[0].mxu0 %v646
  %v1085 = vpop.f32.mrb[0].mxu0
  %v1086 = vadd.f32 0.0, %v1085
  %v1087 = vpop.f32.mrb[0].mxu0
  %v1088 = vpop.f32.mrb[0].mxu0
  %v1089 = vadd.f32 0.0, %v1088
  %v1090 = vpop.f32.mrb[0].mxu0
  %1091 = vmatprep.mubr.bf16.mxu0 0
  %1092 = vmatmul.mubr.bf16.gmra.mrb[0].mxu0 %v649
  %v1093 = vpop.f32.mrb[0].mxu0
  %v1094 = vadd.f32 0.0, %v1093
  %v1095 = vpop.f32.mrb[0].mxu0
  %v1096 = vpop.f32.mrb[0].mxu0
  %v1097 = vadd.f32 0.0, %v1096
  %v1098 = vpop.f32.mrb[0].mxu0
  %1099 = vmatprep.mubr.bf16.mxu0 0
  %1100 = vmatmul.mubr.bf16.gmra.mrb[0].mxu0 %v652
  %v1101 = vpop.f32.mrb[0].mxu0
  %v1102 = vadd.f32 0.0, %v1101
  %v1103 = vpop.f32.mrb[0].mxu0
  %v1104 = vpop.f32.mrb[0].mxu0
  %v1105 = vadd.f32 0.0, %v1104
  %v1106 = vpop.f32.mrb[0].mxu0
  %1107 = vmatprep.mubr.bf16.mxu0 0
  %1108 = vmatmul.mubr.bf16.gmra.mrb[0].mxu0 %v655
  %v1109 = vpop.f32.mrb[0].mxu0
  %v1110 = vadd.f32 0.0, %v1109
  %v1111 = vpop.f32.mrb[0].mxu0
  %v1112 = vpop.f32.mrb[0].mxu0
  %v1113 = vadd.f32 0.0, %v1112
  %v1114 = vpop.f32.mrb[0].mxu0
  %1115 = vmatprep.mubr.bf16.mxu0 0
  %1116 = vmatmul.mubr.bf16.gmra.mrb[0].mxu0 %v658
  %v1117 = vpop.f32.mrb[0].mxu0
  %v1118 = vadd.f32 0.0, %v1117
  %v1119 = vpop.f32.mrb[0].mxu0
  %v1120 = vpop.f32.mrb[0].mxu0
  %v1121 = vadd.f32 0.0, %v1120
  %v1122 = vpop.f32.mrb[0].mxu0
  %1123 = vmatprep.mubr.bf16.mxu0 0
  %1124 = vmatmul.mubr.bf16.gmra.mrb[0].mxu0 %v661
  %v1125 = vpop.f32.mrb[0].mxu0
  %v1126 = vadd.f32 0.0, %v1125
  %v1127 = vpop.f32.mrb[0].mxu0
  %v1128 = vpop.f32.mrb[0].mxu0
  %v1129 = vadd.f32 0.0, %v1128
  %v1130 = vpop.f32.mrb[0].mxu0
  %1131 = vmatprep.mubr.bf16.mxu0 0
  %1132 = vmatmul.mubr.bf16.gmra.mrb[0].mxu0 %v664
  %v1133 = vpop.f32.mrb[0].mxu0
  %v1134 = vadd.f32 0.0, %v1133
  %v1135 = vpop.f32.mrb[0].mxu0
  %v1136 = vpop.f32.mrb[0].mxu0
  %v1137 = vadd.f32 0.0, %v1136
  %v1138 = vpop.f32.mrb[0].mxu0
  %1139 = vmatprep.mubr.bf16.mxu0 0
  %1140 = vmatmul.mubr.bf16.gmra.mrb[0].mxu0 %v667
  %v1141 = vpop.f32.mrb[0].mxu0
  %v1142 = vadd.f32 0.0, %v1141
  %v1143 = vpop.f32.mrb[0].mxu0
  %v1144 = vpop.f32.mrb[0].mxu0
  %v1145 = vadd.f32 0.0, %v1144
  %v1146 = vpop.f32.mrb[0].mxu0
  %1147 = vmatprep.mubr.bf16.mxu0 0
  %1148 = vmatmul.mubr.bf16.gmra.mrb[0].mxu0 %v670
  %v1149 = vpop.f32.mrb[0].mxu0
  %v1150 = vadd.f32 0.0, %v1149
  %v1151 = vpop.f32.mrb[0].mxu0
  %v1152 = vpop.f32.mrb[0].mxu0
  %v1153 = vadd.f32 0.0, %v1152
  %v1154 = vpop.f32.mrb[0].mxu0
  %1155 = vmatprep.mubr.bf16.mxu0 0
  %1156 = vmatmul.mubr.bf16.gmra.mrb[0].mxu0 %v673
  %v1157 = vpop.f32.mrb[0].mxu0
  %v1158 = vadd.f32 0.0, %v1157
  %v1159 = vpop.f32.mrb[0].mxu0
  %v1160 = vpop.f32.mrb[0].mxu0
  %v1161 = vadd.f32 0.0, %v1160
  %v1162 = vpop.f32.mrb[0].mxu0
  %1163 = vmatprep.mubr.bf16.mxu0 0
  %1164 = vmatmul.mubr.bf16.gmra.mrb[0].mxu0 %v676
  %v1165 = vpop.f32.mrb[0].mxu0
  %v1166 = vadd.f32 0.0, %v1165
  %v1167 = vpop.f32.mrb[0].mxu0
  %v1168 = vpop.f32.mrb[0].mxu0
  %v1169 = vadd.f32 0.0, %v1168
  %v1170 = vpop.f32.mrb[0].mxu0
  %1171 = vmatprep.mubr.bf16.mxu0 0
  %1172 = vmatmul.mubr.bf16.gmra.mrb[0].mxu0 %v679
  %v1173 = vpop.f32.mrb[0].mxu0
  %v1174 = vadd.f32 0.0, %v1173
  %v1175 = vpop.f32.mrb[0].mxu0
  %v1176 = vpop.f32.mrb[0].mxu0
  %v1177 = vadd.f32 0.0, %v1176
  %v1178 = vpop.f32.mrb[0].mxu0
  %1179 = vmatprep.mubr.bf16.mxu0 0
  %1180 = vmatmul.mubr.bf16.gmra.mrb[0].mxu0 %v682
  %v1181 = vpop.f32.mrb[0].mxu0
  %v1182 = vadd.f32 0.0, %v1181
  %v1183 = vpop.f32.mrb[0].mxu0
  %v1184 = vpop.f32.mrb[0].mxu0
  %v1185 = vadd.f32 0.0, %v1184
  %v1186 = vpop.f32.mrb[0].mxu0
  %1187 = vmatprep.mubr.bf16.mxu0 0
  %1188 = vmatmul.mubr.bf16.gmra.mrb[0].mxu0 %v685
  %v1189 = vpop.f32.mrb[0].mxu0
  %v1190 = vadd.f32 0.0, %v1189
  %v1191 = vpop.f32.mrb[0].mxu0
  %v1192 = vpop.f32.mrb[0].mxu0
  %v1193 = vadd.f32 0.0, %v1192
  %v1194 = vpop.f32.mrb[0].mxu0
  %1195 = vmatprep.mubr.bf16.mxu0 0
  %1196 = vmatmul.mubr.bf16.gmra.mrb[0].mxu0 %v688
  %v1197 = vpop.f32.mrb[0].mxu0
  %v1198 = vadd.f32 0.0, %v1197
  %v1199 = vpop.f32.mrb[0].mxu0
  %v1200 = vpop.f32.mrb[0].mxu0
  %v1201 = vadd.f32 0.0, %v1200
  %v1202 = vpop.f32.mrb[0].mxu0
  %1203 = vmatprep.mubr.bf16.mxu0 0
  %1204 = vmatmul.mubr.bf16.gmra.mrb[0].mxu0 %v691
  %v1205 = vpop.f32.mrb[0].mxu0
  %v1206 = vadd.f32 0.0, %v1205
  %v1207 = vpop.f32.mrb[0].mxu0
  %v1208 = vpop.f32.mrb[0].mxu0
  %v1209 = vadd.f32 0.0, %v1208
  %v1210 = vpop.f32.mrb[0].mxu0
  %1211 = vmatprep.mubr.bf16.mxu0 0
  %1212 = vmatmul.mubr.bf16.gmra.mrb[0].mxu0 %v694
  %v1213 = vpop.f32.mrb[0].mxu0
  %v1214 = vadd.f32 0.0, %v1213
  %v1215 = vpop.f32.mrb[0].mxu0
  %v1216 = vpop.f32.mrb[0].mxu0
  %v1217 = vadd.f32 0.0, %v1216
  %v1218 = vpop.f32.mrb[0].mxu0
  %1219 = vmatprep.mubr.bf16.mxu0 0
  %1220 = vmatmul.mubr.bf16.gmra.mrb[0].mxu0 %v697
  %v1221 = vpop.f32.mrb[0].mxu0
  %v1222 = vadd.f32 0.0, %v1221
  %v1223 = vpop.f32.mrb[0].mxu0
  %v1224 = vpop.f32.mrb[0].mxu0
  %v1225 = vadd.f32 0.0, %v1224
  %v1226 = vpop.f32.mrb[0].mxu0
  %1227 = vmatprep.mubr.bf16.mxu0 0
  %1228 = vmatmul.mubr.bf16.gmra.mrb[0].mxu0 %v700
  %v1229 = vpop.f32.mrb[0].mxu0
  %v1230 = vadd.f32 0.0, %v1229
  %v1231 = vpop.f32.mrb[0].mxu0
  %v1232 = vpop.f32.mrb[0].mxu0
  %v1233 = vadd.f32 0.0, %v1232
  %v1234 = vpop.f32.mrb[0].mxu0
  %1235 = vmatprep.mubr.bf16.mxu0 0
  %1236 = vmatmul.mubr.bf16.gmra.mrb[0].mxu0 %v703
  %v1237 = vpop.f32.mrb[0].mxu0
  %v1238 = vadd.f32 0.0, %v1237
  %v1239 = vpop.f32.mrb[0].mxu0
  %v1240 = vpop.f32.mrb[0].mxu0
  %v1241 = vadd.f32 0.0, %v1240
  %v1242 = vpop.f32.mrb[0].mxu0
  %1243 = vmatprep.mubr.bf16.mxu0 0
  %1244 = vmatmul.mubr.bf16.gmra.mrb[0].mxu0 %v706
  %v1245 = vpop.f32.mrb[0].mxu0
  %v1246 = vadd.f32 0.0, %v1245
  %v1247 = vpop.f32.mrb[0].mxu0
  %v1248 = vpop.f32.mrb[0].mxu0
  %v1249 = vadd.f32 0.0, %v1248
  %v1250 = vpop.f32.mrb[0].mxu0
  %1251 = vmatprep.mubr.bf16.mxu0 0
  %1252 = vmatmul.mubr.bf16.gmra.mrb[0].mxu0 %v709
  %v1253 = vpop.f32.mrb[0].mxu0
  %v1254 = vadd.f32 0.0, %v1253
  %v1255 = vpop.f32.mrb[0].mxu0
  %v1256 = vpop.f32.mrb[0].mxu0
  %v1257 = vadd.f32 0.0, %v1256
  %v1258 = vpop.f32.mrb[0].mxu0
  %1259 = vdwg.mxu0
  %vm1260 = vcmask 31744
  %v1261 = vsel %vm1260, %v750, 0.0
  %1262 = vadd.xlane.f32.xlu0 %v1261
  %v1263 = vpop.xlane.xlu0 %1262
  %v1264 = vsel %vm1260, %v753, 0.0
  %1265 = vadd.xlane.f32.xlu0 %v1264
  %v1266 = vpop.xlane.xlu0 %1265
  %v1267 = vsel %vm1260, %v758, 0.0
  %1268 = vadd.xlane.f32.xlu0 %v1267
  %v1269 = vpop.xlane.xlu0 %1268
  %v1270 = vsel %vm1260, %v761, 0.0
  %1271 = vadd.xlane.f32.xlu0 %v1270
  %v1272 = vpop.xlane.xlu0 %1271
  %v1273 = vsel %vm1260, %v766, 0.0
  %1274 = vadd.xlane.f32.xlu0 %v1273
  %v1275 = vpop.xlane.xlu0 %1274
  %v1276 = vsel %vm1260, %v769, 0.0
  %1277 = vadd.xlane.f32.xlu0 %v1276
  %v1278 = vpop.xlane.xlu0 %1277
  %v1279 = vsel %vm1260, %v774, 0.0
  %1280 = vadd.xlane.f32.xlu0 %v1279
  %v1281 = vpop.xlane.xlu0 %1280
  %v1282 = vsel %vm1260, %v777, 0.0
  %1283 = vadd.xlane.f32.xlu0 %v1282
  %v1284 = vpop.xlane.xlu0 %1283
  %v1285 = vsel %vm1260, %v782, 0.0
  %1286 = vadd.xlane.f32.xlu0 %v1285
  %v1287 = vpop.xlane.xlu0 %1286
  %v1288 = vsel %vm1260, %v785, 0.0
  %1289 = vadd.xlane.f32.xlu0 %v1288
  %v1290 = vpop.xlane.xlu0 %1289
  %v1291 = vsel %vm1260, %v790, 0.0
  %1292 = vadd.xlane.f32.xlu0 %v1291
  %v1293 = vpop.xlane.xlu0 %1292
  %v1294 = vsel %vm1260, %v793, 0.0
  %1295 = vadd.xlane.f32.xlu0 %v1294
  %v1296 = vpop.xlane.xlu0 %1295
  %v1297 = vsel %vm1260, %v798, 0.0
  %1298 = vadd.xlane.f32.xlu0 %v1297
  %v1299 = vpop.xlane.xlu0 %1298
  %v1300 = vsel %vm1260, %v801, 0.0
  %1301 = vadd.xlane.f32.xlu0 %v1300
  %v1302 = vpop.xlane.xlu0 %1301
  %v1303 = vsel %vm1260, %v806, 0.0
  %1304 = vadd.xlane.f32.xlu0 %v1303
  %v1305 = vpop.xlane.xlu0 %1304
  %v1306 = vsel %vm1260, %v809, 0.0
  %1307 = vadd.xlane.f32.xlu0 %v1306
  %v1308 = vpop.xlane.xlu0 %1307
  %v1309 = vsel %vm1260, %v814, 0.0
  %1310 = vadd.xlane.f32.xlu0 %v1309
  %v1311 = vpop.xlane.xlu0 %1310
  %v1312 = vsel %vm1260, %v817, 0.0
  %1313 = vadd.xlane.f32.xlu0 %v1312
  %v1314 = vpop.xlane.xlu0 %1313
  %v1315 = vsel %vm1260, %v822, 0.0
  %1316 = vadd.xlane.f32.xlu0 %v1315
  %v1317 = vpop.xlane.xlu0 %1316
  %v1318 = vsel %vm1260, %v825, 0.0
  %1319 = vadd.xlane.f32.xlu0 %v1318
  %v1320 = vpop.xlane.xlu0 %1319
  %v1321 = vsel %vm1260, %v830, 0.0
  %1322 = vadd.xlane.f32.xlu0 %v1321
  %v1323 = vpop.xlane.xlu0 %1322
  %v1324 = vsel %vm1260, %v833, 0.0
  %1325 = vadd.xlane.f32.xlu0 %v1324
  %v1326 = vpop.xlane.xlu0 %1325
  %v1327 = vsel %vm1260, %v838, 0.0
  %1328 = vadd.xlane.f32.xlu0 %v1327
  %v1329 = vpop.xlane.xlu0 %1328
  %v1330 = vsel %vm1260, %v841, 0.0
  %1331 = vadd.xlane.f32.xlu0 %v1330
  %v1332 = vpop.xlane.xlu0 %1331
  %v1333 = vsel %vm1260, %v846, 0.0
  %1334 = vadd.xlane.f32.xlu0 %v1333
  %v1335 = vpop.xlane.xlu0 %1334
  %v1336 = vsel %vm1260, %v849, 0.0
  %1337 = vadd.xlane.f32.xlu0 %v1336
  %v1338 = vpop.xlane.xlu0 %1337
  %v1339 = vsel %vm1260, %v854, 0.0
  %1340 = vadd.xlane.f32.xlu0 %v1339
  %v1341 = vpop.xlane.xlu0 %1340
  %v1342 = vsel %vm1260, %v857, 0.0
  %1343 = vadd.xlane.f32.xlu0 %v1342
  %v1344 = vpop.xlane.xlu0 %1343
  %v1345 = vsel %vm1260, %v862, 0.0
  %1346 = vadd.xlane.f32.xlu0 %v1345
  %v1347 = vpop.xlane.xlu0 %1346
  %v1348 = vsel %vm1260, %v865, 0.0
  %1349 = vadd.xlane.f32.xlu0 %v1348
  %v1350 = vpop.xlane.xlu0 %1349
  %v1351 = vsel %vm1260, %v870, 0.0
  %1352 = vadd.xlane.f32.xlu0 %v1351
  %v1353 = vpop.xlane.xlu0 %1352
  %v1354 = vsel %vm1260, %v873, 0.0
  %1355 = vadd.xlane.f32.xlu0 %v1354
  %v1356 = vpop.xlane.xlu0 %1355
  %v1357 = vsel %vm1260, %v878, 0.0
  %1358 = vadd.xlane.f32.xlu0 %v1357
  %v1359 = vpop.xlane.xlu0 %1358
  %v1360 = vsel %vm1260, %v881, 0.0
  %1361 = vadd.xlane.f32.xlu0 %v1360
  %v1362 = vpop.xlane.xlu0 %1361
  %v1363 = vsel %vm1260, %v886, 0.0
  %1364 = vadd.xlane.f32.xlu0 %v1363
  %v1365 = vpop.xlane.xlu0 %1364
  %v1366 = vsel %vm1260, %v889, 0.0
  %1367 = vadd.xlane.f32.xlu0 %v1366
  %v1368 = vpop.xlane.xlu0 %1367
  %v1369 = vsel %vm1260, %v894, 0.0
  %1370 = vadd.xlane.f32.xlu0 %v1369
  %v1371 = vpop.xlane.xlu0 %1370
  %v1372 = vsel %vm1260, %v897, 0.0
  %1373 = vadd.xlane.f32.xlu0 %v1372
  %v1374 = vpop.xlane.xlu0 %1373
  %v1375 = vsel %vm1260, %v902, 0.0
  %1376 = vadd.xlane.f32.xlu0 %v1375
  %v1377 = vpop.xlane.xlu0 %1376
  %v1378 = vsel %vm1260, %v905, 0.0
  %1379 = vadd.xlane.f32.xlu0 %v1378
  %v1380 = vpop.xlane.xlu0 %1379
  %v1381 = vsel %vm1260, %v910, 0.0
  %1382 = vadd.xlane.f32.xlu0 %v1381
  %v1383 = vpop.xlane.xlu0 %1382
  %v1384 = vsel %vm1260, %v913, 0.0
  %1385 = vadd.xlane.f32.xlu0 %v1384
  %v1386 = vpop.xlane.xlu0 %1385
  %v1387 = vsel %vm1260, %v918, 0.0
  %1388 = vadd.xlane.f32.xlu0 %v1387
  %v1389 = vpop.xlane.xlu0 %1388
  %v1390 = vsel %vm1260, %v921, 0.0
  %1391 = vadd.xlane.f32.xlu0 %v1390
  %v1392 = vpop.xlane.xlu0 %1391
  %v1393 = vsel %vm1260, %v926, 0.0
  %1394 = vadd.xlane.f32.xlu0 %v1393
  %v1395 = vpop.xlane.xlu0 %1394
  %v1396 = vsel %vm1260, %v929, 0.0
  %1397 = vadd.xlane.f32.xlu0 %v1396
  %v1398 = vpop.xlane.xlu0 %1397
  %v1399 = vsel %vm1260, %v934, 0.0
  %1400 = vadd.xlane.f32.xlu0 %v1399
  %v1401 = vpop.xlane.xlu0 %1400
  %v1402 = vsel %vm1260, %v937, 0.0
  %1403 = vadd.xlane.f32.xlu0 %v1402
  %v1404 = vpop.xlane.xlu0 %1403
  %v1405 = vsel %vm1260, %v942, 0.0
  %1406 = vadd.xlane.f32.xlu0 %v1405
  %v1407 = vpop.xlane.xlu0 %1406
  %v1408 = vsel %vm1260, %v945, 0.0
  %1409 = vadd.xlane.f32.xlu0 %v1408
  %v1410 = vpop.xlane.xlu0 %1409
  %v1411 = vsel %vm1260, %v950, 0.0
  %1412 = vadd.xlane.f32.xlu0 %v1411
  %v1413 = vpop.xlane.xlu0 %1412
  %v1414 = vsel %vm1260, %v953, 0.0
  %1415 = vadd.xlane.f32.xlu0 %v1414
  %v1416 = vpop.xlane.xlu0 %1415
  %v1417 = vsel %vm1260, %v958, 0.0
  %1418 = vadd.xlane.f32.xlu0 %v1417
  %v1419 = vpop.xlane.xlu0 %1418
  %v1420 = vsel %vm1260, %v961, 0.0
  %1421 = vadd.xlane.f32.xlu0 %v1420
  %v1422 = vpop.xlane.xlu0 %1421
  %v1423 = vsel %vm1260, %v966, 0.0
  %1424 = vadd.xlane.f32.xlu0 %v1423
  %v1425 = vpop.xlane.xlu0 %1424
  %v1426 = vsel %vm1260, %v969, 0.0
  %1427 = vadd.xlane.f32.xlu0 %v1426
  %v1428 = vpop.xlane.xlu0 %1427
  %v1429 = vsel %vm1260, %v974, 0.0
  %1430 = vadd.xlane.f32.xlu0 %v1429
  %v1431 = vpop.xlane.xlu0 %1430
  %v1432 = vsel %vm1260, %v977, 0.0
  %1433 = vadd.xlane.f32.xlu0 %v1432
  %v1434 = vpop.xlane.xlu0 %1433
  %v1435 = vsel %vm1260, %v982, 0.0
  %1436 = vadd.xlane.f32.xlu0 %v1435
  %v1437 = vpop.xlane.xlu0 %1436
  %v1438 = vsel %vm1260, %v985, 0.0
  %1439 = vadd.xlane.f32.xlu0 %v1438
  %v1440 = vpop.xlane.xlu0 %1439
  %v1441 = vsel %vm1260, %v990, 0.0
  %1442 = vadd.xlane.f32.xlu0 %v1441
  %v1443 = vpop.xlane.xlu0 %1442
  %v1444 = vsel %vm1260, %v993, 0.0
  %1445 = vadd.xlane.f32.xlu0 %v1444
  %v1446 = vpop.xlane.xlu0 %1445
  %v1447 = vsel %vm1260, %v998, 0.0
  %1448 = vadd.xlane.f32.xlu0 %v1447
  %v1449 = vpop.xlane.xlu0 %1448
  %v1450 = vsel %vm1260, %v1001, 0.0
  %1451 = vadd.xlane.f32.xlu0 %v1450
  %v1452 = vpop.xlane.xlu0 %1451
  %v1453 = vsel %vm1260, %v1006, 0.0
  %1454 = vadd.xlane.f32.xlu0 %v1453
  %v1455 = vpop.xlane.xlu0 %1454
  %v1456 = vsel %vm1260, %v1009, 0.0
  %1457 = vadd.xlane.f32.xlu0 %v1456
  %v1458 = vpop.xlane.xlu0 %1457
  %v1459 = vsel %vm1260, %v1014, 0.0
  %1460 = vadd.xlane.f32.xlu0 %v1459
  %v1461 = vpop.xlane.xlu0 %1460
  %v1462 = vsel %vm1260, %v1017, 0.0
  %1463 = vadd.xlane.f32.xlu0 %v1462
  %v1464 = vpop.xlane.xlu0 %1463
  %v1465 = vsel %vm1260, %v1022, 0.0
  %1466 = vadd.xlane.f32.xlu0 %v1465
  %v1467 = vpop.xlane.xlu0 %1466
  %v1468 = vsel %vm1260, %v1025, 0.0
  %1469 = vadd.xlane.f32.xlu0 %v1468
  %v1470 = vpop.xlane.xlu0 %1469
  %v1471 = vsel %vm1260, %v1030, 0.0
  %1472 = vadd.xlane.f32.xlu0 %v1471
  %v1473 = vpop.xlane.xlu0 %1472
  %v1474 = vsel %vm1260, %v1033, 0.0
  %1475 = vadd.xlane.f32.xlu0 %v1474
  %v1476 = vpop.xlane.xlu0 %1475
  %v1477 = vsel %vm1260, %v1038, 0.0
  %1478 = vadd.xlane.f32.xlu0 %v1477
  %v1479 = vpop.xlane.xlu0 %1478
  %v1480 = vsel %vm1260, %v1041, 0.0
  %1481 = vadd.xlane.f32.xlu0 %v1480
  %v1482 = vpop.xlane.xlu0 %1481
  %v1483 = vsel %vm1260, %v1046, 0.0
  %1484 = vadd.xlane.f32.xlu0 %v1483
  %v1485 = vpop.xlane.xlu0 %1484
  %v1486 = vsel %vm1260, %v1049, 0.0
  %1487 = vadd.xlane.f32.xlu0 %v1486
  %v1488 = vpop.xlane.xlu0 %1487
  %v1489 = vsel %vm1260, %v1054, 0.0
  %1490 = vadd.xlane.f32.xlu0 %v1489
  %v1491 = vpop.xlane.xlu0 %1490
  %v1492 = vsel %vm1260, %v1057, 0.0
  %1493 = vadd.xlane.f32.xlu0 %v1492
  %v1494 = vpop.xlane.xlu0 %1493
  %v1495 = vsel %vm1260, %v1062, 0.0
  %1496 = vadd.xlane.f32.xlu0 %v1495
  %v1497 = vpop.xlane.xlu0 %1496
  %v1498 = vsel %vm1260, %v1065, 0.0
  %1499 = vadd.xlane.f32.xlu0 %v1498
  %v1500 = vpop.xlane.xlu0 %1499
  %v1501 = vsel %vm1260, %v1070, 0.0
  %1502 = vadd.xlane.f32.xlu0 %v1501
  %v1503 = vpop.xlane.xlu0 %1502
  %v1504 = vsel %vm1260, %v1073, 0.0
  %1505 = vadd.xlane.f32.xlu0 %v1504
  %v1506 = vpop.xlane.xlu0 %1505
  %v1507 = vsel %vm1260, %v1078, 0.0
  %1508 = vadd.xlane.f32.xlu0 %v1507
  %v1509 = vpop.xlane.xlu0 %1508
  %v1510 = vsel %vm1260, %v1081, 0.0
  %1511 = vadd.xlane.f32.xlu0 %v1510
  %v1512 = vpop.xlane.xlu0 %1511
  %v1513 = vsel %vm1260, %v1086, 0.0
  %1514 = vadd.xlane.f32.xlu0 %v1513
  %v1515 = vpop.xlane.xlu0 %1514
  %v1516 = vsel %vm1260, %v1089, 0.0
  %1517 = vadd.xlane.f32.xlu0 %v1516
  %v1518 = vpop.xlane.xlu0 %1517
  %v1519 = vsel %vm1260, %v1094, 0.0
  %1520 = vadd.xlane.f32.xlu0 %v1519
  %v1521 = vpop.xlane.xlu0 %1520
  %v1522 = vsel %vm1260, %v1097, 0.0
  %1523 = vadd.xlane.f32.xlu0 %v1522
  %v1524 = vpop.xlane.xlu0 %1523
  %v1525 = vsel %vm1260, %v1102, 0.0
  %1526 = vadd.xlane.f32.xlu0 %v1525
  %v1527 = vpop.xlane.xlu0 %1526
  %v1528 = vsel %vm1260, %v1105, 0.0
  %1529 = vadd.xlane.f32.xlu0 %v1528
  %v1530 = vpop.xlane.xlu0 %1529
  %v1531 = vsel %vm1260, %v1110, 0.0
  %1532 = vadd.xlane.f32.xlu0 %v1531
  %v1533 = vpop.xlane.xlu0 %1532
  %v1534 = vsel %vm1260, %v1113, 0.0
  %1535 = vadd.xlane.f32.xlu0 %v1534
  %v1536 = vpop.xlane.xlu0 %1535
  %v1537 = vsel %vm1260, %v1118, 0.0
  %1538 = vadd.xlane.f32.xlu0 %v1537
  %v1539 = vpop.xlane.xlu0 %1538
  %v1540 = vsel %vm1260, %v1121, 0.0
  %1541 = vadd.xlane.f32.xlu0 %v1540
  %v1542 = vpop.xlane.xlu0 %1541
  %v1543 = vsel %vm1260, %v1126, 0.0
  %1544 = vadd.xlane.f32.xlu0 %v1543
  %v1545 = vpop.xlane.xlu0 %1544
  %v1546 = vsel %vm1260, %v1129, 0.0
  %1547 = vadd.xlane.f32.xlu0 %v1546
  %v1548 = vpop.xlane.xlu0 %1547
  %v1549 = vsel %vm1260, %v1134, 0.0
  %1550 = vadd.xlane.f32.xlu0 %v1549
  %v1551 = vpop.xlane.xlu0 %1550
  %v1552 = vsel %vm1260, %v1137, 0.0
  %1553 = vadd.xlane.f32.xlu0 %v1552
  %v1554 = vpop.xlane.xlu0 %1553
  %v1555 = vsel %vm1260, %v1142, 0.0
  %1556 = vadd.xlane.f32.xlu0 %v1555
  %v1557 = vpop.xlane.xlu0 %1556
  %v1558 = vsel %vm1260, %v1145, 0.0
  %1559 = vadd.xlane.f32.xlu0 %v1558
  %v1560 = vpop.xlane.xlu0 %1559
  %v1561 = vsel %vm1260, %v1150, 0.0
  %1562 = vadd.xlane.f32.xlu0 %v1561
  %v1563 = vpop.xlane.xlu0 %1562
  %v1564 = vsel %vm1260, %v1153, 0.0
  %1565 = vadd.xlane.f32.xlu0 %v1564
  %v1566 = vpop.xlane.xlu0 %1565
  %v1567 = vsel %vm1260, %v1158, 0.0
  %1568 = vadd.xlane.f32.xlu0 %v1567
  %v1569 = vpop.xlane.xlu0 %1568
  %v1570 = vsel %vm1260, %v1161, 0.0
  %1571 = vadd.xlane.f32.xlu0 %v1570
  %v1572 = vpop.xlane.xlu0 %1571
  %v1573 = vsel %vm1260, %v1166, 0.0
  %1574 = vadd.xlane.f32.xlu0 %v1573
  %v1575 = vpop.xlane.xlu0 %1574
  %v1576 = vsel %vm1260, %v1169, 0.0
  %1577 = vadd.xlane.f32.xlu0 %v1576
  %v1578 = vpop.xlane.xlu0 %1577
  %v1579 = vsel %vm1260, %v1174, 0.0
  %1580 = vadd.xlane.f32.xlu0 %v1579
  %v1581 = vpop.xlane.xlu0 %1580
  %v1582 = vsel %vm1260, %v1177, 0.0
  %1583 = vadd.xlane.f32.xlu0 %v1582
  %v1584 = vpop.xlane.xlu0 %1583
  %v1585 = vsel %vm1260, %v1182, 0.0
  %1586 = vadd.xlane.f32.xlu0 %v1585
  %v1587 = vpop.xlane.xlu0 %1586
  %v1588 = vsel %vm1260, %v1185, 0.0
  %1589 = vadd.xlane.f32.xlu0 %v1588
  %v1590 = vpop.xlane.xlu0 %1589
  %v1591 = vsel %vm1260, %v1190, 0.0
  %1592 = vadd.xlane.f32.xlu0 %v1591
  %v1593 = vpop.xlane.xlu0 %1592
  %v1594 = vsel %vm1260, %v1193, 0.0
  %1595 = vadd.xlane.f32.xlu0 %v1594
  %v1596 = vpop.xlane.xlu0 %1595
  %v1597 = vsel %vm1260, %v1198, 0.0
  %1598 = vadd.xlane.f32.xlu0 %v1597
  %v1599 = vpop.xlane.xlu0 %1598
  %v1600 = vsel %vm1260, %v1201, 0.0
  %1601 = vadd.xlane.f32.xlu0 %v1600
  %v1602 = vpop.xlane.xlu0 %1601
  %v1603 = vsel %vm1260, %v1206, 0.0
  %1604 = vadd.xlane.f32.xlu0 %v1603
  %v1605 = vpop.xlane.xlu0 %1604
  %v1606 = vsel %vm1260, %v1209, 0.0
  %1607 = vadd.xlane.f32.xlu0 %v1606
  %v1608 = vpop.xlane.xlu0 %1607
  %v1609 = vsel %vm1260, %v1214, 0.0
  %1610 = vadd.xlane.f32.xlu0 %v1609
  %v1611 = vpop.xlane.xlu0 %1610
  %v1612 = vsel %vm1260, %v1217, 0.0
  %1613 = vadd.xlane.f32.xlu0 %v1612
  %v1614 = vpop.xlane.xlu0 %1613
  %v1615 = vsel %vm1260, %v1222, 0.0
  %1616 = vadd.xlane.f32.xlu0 %v1615
  %v1617 = vpop.xlane.xlu0 %1616
  %v1618 = vsel %vm1260, %v1225, 0.0
  %1619 = vadd.xlane.f32.xlu0 %v1618
  %v1620 = vpop.xlane.xlu0 %1619
  %v1621 = vsel %vm1260, %v1230, 0.0
  %1622 = vadd.xlane.f32.xlu0 %v1621
  %v1623 = vpop.xlane.xlu0 %1622
  %v1624 = vsel %vm1260, %v1233, 0.0
  %1625 = vadd.xlane.f32.xlu0 %v1624
  %v1626 = vpop.xlane.xlu0 %1625
  %v1627 = vsel %vm1260, %v1238, 0.0
  %1628 = vadd.xlane.f32.xlu0 %v1627
  %v1629 = vpop.xlane.xlu0 %1628
  %v1630 = vsel %vm1260, %v1241, 0.0
  %1631 = vadd.xlane.f32.xlu0 %v1630
  %v1632 = vpop.xlane.xlu0 %1631
  %v1633 = vsel %vm1260, %v1246, 0.0
  %1634 = vadd.xlane.f32.xlu0 %v1633
  %v1635 = vpop.xlane.xlu0 %1634
  %v1636 = vsel %vm1260, %v1249, 0.0
  %1637 = vadd.xlane.f32.xlu0 %v1636
  %v1638 = vpop.xlane.xlu0 %1637
  %v1639 = vsel %vm1260, %v1254, 0.0
  %1640 = vadd.xlane.f32.xlu0 %v1639
  %v1641 = vpop.xlane.xlu0 %1640
  %v1642 = vsel %vm1260, %v1257, 0.0
  %1643 = vadd.xlane.f32.xlu0 %v1642
  %v1644 = vpop.xlane.xlu0 %1643
  %v1645 = vadd.f32 %v1263, %v1287
  %v1646 = vadd.f32 %v1645, %v1311
  %v1647 = vadd.f32 %v1646, %v1335
  %v1648 = vadd.f32 %v1647, %v1359
  %v1649 = vadd.f32 %v1648, %v1383
  %v1650 = vadd.f32 %v1649, %v1407
  %v1651 = vadd.f32 %v1650, %v1431
  %v1652 = vadd.f32 %v1651, %v1455
  %v1653 = vadd.f32 %v1652, %v1479
  %v1654 = vadd.f32 %v1653, %v1503
  %v1655 = vadd.f32 %v1654, %v1527
  %v1656 = vadd.f32 %v1655, %v1551
  %v1657 = vadd.f32 %v1656, %v1575
  %v1658 = vadd.f32 %v1657, %v1599
  %v1659 = vadd.f32 %v1658, %v1623
  %v1660 = vadd.f32 %v1266, %v1290
  %v1661 = vadd.f32 %v1660, %v1314
  %v1662 = vadd.f32 %v1661, %v1338
  %v1663 = vadd.f32 %v1662, %v1362
  %v1664 = vadd.f32 %v1663, %v1386
  %v1665 = vadd.f32 %v1664, %v1410
  %v1666 = vadd.f32 %v1665, %v1434
  %v1667 = vadd.f32 %v1666, %v1458
  %v1668 = vadd.f32 %v1667, %v1482
  %v1669 = vadd.f32 %v1668, %v1506
  %v1670 = vadd.f32 %v1669, %v1530
  %v1671 = vadd.f32 %v1670, %v1554
  %v1672 = vadd.f32 %v1671, %v1578
  %v1673 = vadd.f32 %v1672, %v1602
  %v1674 = vadd.f32 %v1673, %v1626
  %v1675 = vadd.f32 %v1269, %v1293
  %v1676 = vadd.f32 %v1675, %v1317
  %v1677 = vadd.f32 %v1676, %v1341
  %v1678 = vadd.f32 %v1677, %v1365
  %v1679 = vadd.f32 %v1678, %v1389
  %v1680 = vadd.f32 %v1679, %v1413
  %v1681 = vadd.f32 %v1680, %v1437
  %v1682 = vadd.f32 %v1681, %v1461
  %v1683 = vadd.f32 %v1682, %v1485
  %v1684 = vadd.f32 %v1683, %v1509
  %v1685 = vadd.f32 %v1684, %v1533
  %v1686 = vadd.f32 %v1685, %v1557
  %v1687 = vadd.f32 %v1686, %v1581
  %v1688 = vadd.f32 %v1687, %v1605
  %v1689 = vadd.f32 %v1688, %v1629
  %v1690 = vadd.f32 %v1272, %v1296
  %v1691 = vadd.f32 %v1690, %v1320
  %v1692 = vadd.f32 %v1691, %v1344
  %v1693 = vadd.f32 %v1692, %v1368
  %v1694 = vadd.f32 %v1693, %v1392
  %v1695 = vadd.f32 %v1694, %v1416
  %v1696 = vadd.f32 %v1695, %v1440
  %v1697 = vadd.f32 %v1696, %v1464
  %v1698 = vadd.f32 %v1697, %v1488
  %v1699 = vadd.f32 %v1698, %v1512
  %v1700 = vadd.f32 %v1699, %v1536
  %v1701 = vadd.f32 %v1700, %v1560
  %v1702 = vadd.f32 %v1701, %v1584
  %v1703 = vadd.f32 %v1702, %v1608
  %v1704 = vadd.f32 %v1703, %v1632
  %v1705 = vadd.f32 %v1275, %v1299
  %v1706 = vadd.f32 %v1705, %v1323
  %v1707 = vadd.f32 %v1706, %v1347
  %v1708 = vadd.f32 %v1707, %v1371
  %v1709 = vadd.f32 %v1708, %v1395
  %v1710 = vadd.f32 %v1709, %v1419
  %v1711 = vadd.f32 %v1710, %v1443
  %v1712 = vadd.f32 %v1711, %v1467
  %v1713 = vadd.f32 %v1712, %v1491
  %v1714 = vadd.f32 %v1713, %v1515
  %v1715 = vadd.f32 %v1714, %v1539
  %v1716 = vadd.f32 %v1715, %v1563
  %v1717 = vadd.f32 %v1716, %v1587
  %v1718 = vadd.f32 %v1717, %v1611
  %v1719 = vadd.f32 %v1718, %v1635
  %v1720 = vadd.f32 %v1278, %v1302
  %v1721 = vadd.f32 %v1720, %v1326
  %v1722 = vadd.f32 %v1721, %v1350
  %v1723 = vadd.f32 %v1722, %v1374
  %v1724 = vadd.f32 %v1723, %v1398
  %v1725 = vadd.f32 %v1724, %v1422
  %v1726 = vadd.f32 %v1725, %v1446
  %v1727 = vadd.f32 %v1726, %v1470
  %v1728 = vadd.f32 %v1727, %v1494
  %v1729 = vadd.f32 %v1728, %v1518
  %v1730 = vadd.f32 %v1729, %v1542
  %v1731 = vadd.f32 %v1730, %v1566
  %v1732 = vadd.f32 %v1731, %v1590
  %v1733 = vadd.f32 %v1732, %v1614
  %v1734 = vadd.f32 %v1733, %v1638
  %v1735 = vadd.f32 %v1281, %v1305
  %v1736 = vadd.f32 %v1735, %v1329
  %v1737 = vadd.f32 %v1736, %v1353
  %v1738 = vadd.f32 %v1737, %v1377
  %v1739 = vadd.f32 %v1738, %v1401
  %v1740 = vadd.f32 %v1739, %v1425
  %v1741 = vadd.f32 %v1740, %v1449
  %v1742 = vadd.f32 %v1741, %v1473
  %v1743 = vadd.f32 %v1742, %v1497
  %v1744 = vadd.f32 %v1743, %v1521
  %v1745 = vadd.f32 %v1744, %v1545
  %v1746 = vadd.f32 %v1745, %v1569
  %v1747 = vadd.f32 %v1746, %v1593
  %v1748 = vadd.f32 %v1747, %v1617
  %v1749 = vadd.f32 %v1748, %v1641
  %v1750 = vadd.f32 %v1284, %v1308
  %v1751 = vadd.f32 %v1750, %v1332
  %v1752 = vadd.f32 %v1751, %v1356
  %v1753 = vadd.f32 %v1752, %v1380
  %v1754 = vadd.f32 %v1753, %v1404
  %v1755 = vadd.f32 %v1754, %v1428
  %v1756 = vadd.f32 %v1755, %v1452
  %v1757 = vadd.f32 %v1756, %v1476
  %v1758 = vadd.f32 %v1757, %v1500
  %v1759 = vadd.f32 %v1758, %v1524
  %v1760 = vadd.f32 %v1759, %v1548
  %v1761 = vadd.f32 %v1760, %v1572
  %v1762 = vadd.f32 %v1761, %v1596
  %v1763 = vadd.f32 %v1762, %v1620
  %v1764 = vadd.f32 %v1763, %v1644
  %v1765 = vrcp.pop 64.0
  %v1766 = vmul.f32 %v1659, %v1765
  %v1767 = vmul.f32 %v1674, %v1765
  %v1768 = vmul.f32 %v1689, %v1765
  %v1769 = vmul.f32 %v1704, %v1765
  %v1770 = vmul.f32 %v1719, %v1765
  %v1771 = vmul.f32 %v1734, %v1765
  %v1772 = vmul.f32 %v1749, %v1765
  %v1773 = vmul.f32 %v1764, %v1765
  %v1774 = vsub.f32 %v750, %v1766
  %v1775 = vsub.f32 %v753, %v1767
  %v1776 = vsub.f32 %v758, %v1768
  %v1777 = vsub.f32 %v761, %v1769
  %v1778 = vsub.f32 %v766, %v1770
  %v1779 = vsub.f32 %v769, %v1771
  %v1780 = vsub.f32 %v774, %v1772
  %v1781 = vsub.f32 %v777, %v1773
  %v1782 = vsub.f32 %v782, %v1766
  %v1783 = vsub.f32 %v785, %v1767
  %v1784 = vsub.f32 %v790, %v1768
  %v1785 = vsub.f32 %v793, %v1769
  %v1786 = vsub.f32 %v798, %v1770
  %v1787 = vsub.f32 %v801, %v1771
  %v1788 = vsub.f32 %v806, %v1772
  %v1789 = vsub.f32 %v809, %v1773
  %v1790 = vsub.f32 %v814, %v1766
  %v1791 = vsub.f32 %v817, %v1767
  %v1792 = vsub.f32 %v822, %v1768
  %v1793 = vsub.f32 %v825, %v1769
  %v1794 = vsub.f32 %v830, %v1770
  %v1795 = vsub.f32 %v833, %v1771
  %v1796 = vsub.f32 %v838, %v1772
  %v1797 = vsub.f32 %v841, %v1773
  %v1798 = vsub.f32 %v846, %v1766
  %v1799 = vsub.f32 %v849, %v1767
  %v1800 = vsub.f32 %v854, %v1768
  %v1801 = vsub.f32 %v857, %v1769
  %v1802 = vsub.f32 %v862, %v1770
  %v1803 = vsub.f32 %v865, %v1771
  %v1804 = vsub.f32 %v870, %v1772
  %v1805 = vsub.f32 %v873, %v1773
  %v1806 = vsub.f32 %v878, %v1766
  %v1807 = vsub.f32 %v881, %v1767
  %v1808 = vsub.f32 %v886, %v1768
  %v1809 = vsub.f32 %v889, %v1769
  %v1810 = vsub.f32 %v894, %v1770
  %v1811 = vsub.f32 %v897, %v1771
  %v1812 = vsub.f32 %v902, %v1772
  %v1813 = vsub.f32 %v905, %v1773
  %v1814 = vsub.f32 %v910, %v1766
  %v1815 = vsub.f32 %v913, %v1767
  %v1816 = vsub.f32 %v918, %v1768
  %v1817 = vsub.f32 %v921, %v1769
  %v1818 = vsub.f32 %v926, %v1770
  %v1819 = vsub.f32 %v929, %v1771
  %v1820 = vsub.f32 %v934, %v1772
  %v1821 = vsub.f32 %v937, %v1773
  %v1822 = vsub.f32 %v942, %v1766
  %v1823 = vsub.f32 %v945, %v1767
  %v1824 = vsub.f32 %v950, %v1768
  %v1825 = vsub.f32 %v953, %v1769
  %v1826 = vsub.f32 %v958, %v1770
  %v1827 = vsub.f32 %v961, %v1771
  %v1828 = vsub.f32 %v966, %v1772
  %v1829 = vsub.f32 %v969, %v1773
  %v1830 = vsub.f32 %v974, %v1766
  %v1831 = vsub.f32 %v977, %v1767
  %v1832 = vsub.f32 %v982, %v1768
  %v1833 = vsub.f32 %v985, %v1769
  %v1834 = vsub.f32 %v990, %v1770
  %v1835 = vsub.f32 %v993, %v1771
  %v1836 = vsub.f32 %v998, %v1772
  %v1837 = vsub.f32 %v1001, %v1773
  %v1838 = vsub.f32 %v1006, %v1766
  %v1839 = vsub.f32 %v1009, %v1767
  %v1840 = vsub.f32 %v1014, %v1768
  %v1841 = vsub.f32 %v1017, %v1769
  %v1842 = vsub.f32 %v1022, %v1770
  %v1843 = vsub.f32 %v1025, %v1771
  %v1844 = vsub.f32 %v1030, %v1772
  %v1845 = vsub.f32 %v1033, %v1773
  %v1846 = vsub.f32 %v1038, %v1766
  %v1847 = vsub.f32 %v1041, %v1767
  %v1848 = vsub.f32 %v1046, %v1768
  %v1849 = vsub.f32 %v1049, %v1769
  %v1850 = vsub.f32 %v1054, %v1770
  %v1851 = vsub.f32 %v1057, %v1771
  %v1852 = vsub.f32 %v1062, %v1772
  %v1853 = vsub.f32 %v1065, %v1773
  %v1854 = vsub.f32 %v1070, %v1766
  %v1855 = vsub.f32 %v1073, %v1767
  %v1856 = vsub.f32 %v1078, %v1768
  %v1857 = vsub.f32 %v1081, %v1769
  %v1858 = vsub.f32 %v1086, %v1770
  %v1859 = vsub.f32 %v1089, %v1771
  %v1860 = vsub.f32 %v1094, %v1772
  %v1861 = vsub.f32 %v1097, %v1773
  %v1862 = vsub.f32 %v1102, %v1766
  %v1863 = vsub.f32 %v1105, %v1767
  %v1864 = vsub.f32 %v1110, %v1768
  %v1865 = vsub.f32 %v1113, %v1769
  %v1866 = vsub.f32 %v1118, %v1770
  %v1867 = vsub.f32 %v1121, %v1771
  %v1868 = vsub.f32 %v1126, %v1772
  %v1869 = vsub.f32 %v1129, %v1773
  %v1870 = vsub.f32 %v1134, %v1766
  %v1871 = vsub.f32 %v1137, %v1767
  %v1872 = vsub.f32 %v1142, %v1768
  %v1873 = vsub.f32 %v1145, %v1769
  %v1874 = vsub.f32 %v1150, %v1770
  %v1875 = vsub.f32 %v1153, %v1771
  %v1876 = vsub.f32 %v1158, %v1772
  %v1877 = vsub.f32 %v1161, %v1773
  %v1878 = vsub.f32 %v1166, %v1766
  %v1879 = vsub.f32 %v1169, %v1767
  %v1880 = vsub.f32 %v1174, %v1768
  %v1881 = vsub.f32 %v1177, %v1769
  %v1882 = vsub.f32 %v1182, %v1770
  %v1883 = vsub.f32 %v1185, %v1771
  %v1884 = vsub.f32 %v1190, %v1772
  %v1885 = vsub.f32 %v1193, %v1773
  %v1886 = vsub.f32 %v1198, %v1766
  %v1887 = vsub.f32 %v1201, %v1767
  %v1888 = vsub.f32 %v1206, %v1768
  %v1889 = vsub.f32 %v1209, %v1769
  %v1890 = vsub.f32 %v1214, %v1770
  %v1891 = vsub.f32 %v1217, %v1771
  %v1892 = vsub.f32 %v1222, %v1772
  %v1893 = vsub.f32 %v1225, %v1773
  %v1894 = vsub.f32 %v1230, %v1766
  %v1895 = vsub.f32 %v1233, %v1767
  %v1896 = vsub.f32 %v1238, %v1768
  %v1897 = vsub.f32 %v1241, %v1769
  %v1898 = vsub.f32 %v1246, %v1770
  %v1899 = vsub.f32 %v1249, %v1771
  %v1900 = vsub.f32 %v1254, %v1772
  %v1901 = vsub.f32 %v1257, %v1773
  %v1902 = vmul.f32 %v1774, %v1774
  %v1903 = vmul.f32 %v1775, %v1775
  %v1904 = vmul.f32 %v1776, %v1776
  %v1905 = vmul.f32 %v1777, %v1777
  %v1906 = vmul.f32 %v1778, %v1778
  %v1907 = vmul.f32 %v1779, %v1779
  %v1908 = vmul.f32 %v1780, %v1780
  %v1909 = vmul.f32 %v1781, %v1781
  %v1910 = vmul.f32 %v1782, %v1782
  %v1911 = vmul.f32 %v1783, %v1783
  %v1912 = vmul.f32 %v1784, %v1784
  %v1913 = vmul.f32 %v1785, %v1785
  %v1914 = vmul.f32 %v1786, %v1786
  %v1915 = vmul.f32 %v1787, %v1787
  %v1916 = vmul.f32 %v1788, %v1788
  %v1917 = vmul.f32 %v1789, %v1789
  %v1918 = vmul.f32 %v1790, %v1790
  %v1919 = vmul.f32 %v1791, %v1791
  %v1920 = vmul.f32 %v1792, %v1792
  %v1921 = vmul.f32 %v1793, %v1793
  %v1922 = vmul.f32 %v1794, %v1794
  %v1923 = vmul.f32 %v1795, %v1795
  %v1924 = vmul.f32 %v1796, %v1796
  %v1925 = vmul.f32 %v1797, %v1797
  %v1926 = vmul.f32 %v1798, %v1798
  %v1927 = vmul.f32 %v1799, %v1799
  %v1928 = vmul.f32 %v1800, %v1800
  %v1929 = vmul.f32 %v1801, %v1801
  %v1930 = vmul.f32 %v1802, %v1802
  %v1931 = vmul.f32 %v1803, %v1803
  %v1932 = vmul.f32 %v1804, %v1804
  %v1933 = vmul.f32 %v1805, %v1805
  %v1934 = vmul.f32 %v1806, %v1806
  %v1935 = vmul.f32 %v1807, %v1807
  %v1936 = vmul.f32 %v1808, %v1808
  %v1937 = vmul.f32 %v1809, %v1809
  %v1938 = vmul.f32 %v1810, %v1810
  %v1939 = vmul.f32 %v1811, %v1811
  %v1940 = vmul.f32 %v1812, %v1812
  %v1941 = vmul.f32 %v1813, %v1813
  %v1942 = vmul.f32 %v1814, %v1814
  %v1943 = vmul.f32 %v1815, %v1815
  %v1944 = vmul.f32 %v1816, %v1816
  %v1945 = vmul.f32 %v1817, %v1817
  %v1946 = vmul.f32 %v1818, %v1818
  %v1947 = vmul.f32 %v1819, %v1819
  %v1948 = vmul.f32 %v1820, %v1820
  %v1949 = vmul.f32 %v1821, %v1821
  %v1950 = vmul.f32 %v1822, %v1822
  %v1951 = vmul.f32 %v1823, %v1823
  %v1952 = vmul.f32 %v1824, %v1824
  %v1953 = vmul.f32 %v1825, %v1825
  %v1954 = vmul.f32 %v1826, %v1826
  %v1955 = vmul.f32 %v1827, %v1827
  %v1956 = vmul.f32 %v1828, %v1828
  %v1957 = vmul.f32 %v1829, %v1829
  %v1958 = vmul.f32 %v1830, %v1830
  %v1959 = vmul.f32 %v1831, %v1831
  %v1960 = vmul.f32 %v1832, %v1832
  %v1961 = vmul.f32 %v1833, %v1833
  %v1962 = vmul.f32 %v1834, %v1834
  %v1963 = vmul.f32 %v1835, %v1835
  %v1964 = vmul.f32 %v1836, %v1836
  %v1965 = vmul.f32 %v1837, %v1837
  %v1966 = vmul.f32 %v1838, %v1838
  %v1967 = vmul.f32 %v1839, %v1839
  %v1968 = vmul.f32 %v1840, %v1840
  %v1969 = vmul.f32 %v1841, %v1841
  %v1970 = vmul.f32 %v1842, %v1842
  %v1971 = vmul.f32 %v1843, %v1843
  %v1972 = vmul.f32 %v1844, %v1844
  %v1973 = vmul.f32 %v1845, %v1845
  %v1974 = vmul.f32 %v1846, %v1846
  %v1975 = vmul.f32 %v1847, %v1847
  %v1976 = vmul.f32 %v1848, %v1848
  %v1977 = vmul.f32 %v1849, %v1849
  %v1978 = vmul.f32 %v1850, %v1850
  %v1979 = vmul.f32 %v1851, %v1851
  %v1980 = vmul.f32 %v1852, %v1852
  %v1981 = vmul.f32 %v1853, %v1853
  %v1982 = vmul.f32 %v1854, %v1854
  %v1983 = vmul.f32 %v1855, %v1855
  %v1984 = vmul.f32 %v1856, %v1856
  %v1985 = vmul.f32 %v1857, %v1857
  %v1986 = vmul.f32 %v1858, %v1858
  %v1987 = vmul.f32 %v1859, %v1859
  %v1988 = vmul.f32 %v1860, %v1860
  %v1989 = vmul.f32 %v1861, %v1861
  %v1990 = vmul.f32 %v1862, %v1862
  %v1991 = vmul.f32 %v1863, %v1863
  %v1992 = vmul.f32 %v1864, %v1864
  %v1993 = vmul.f32 %v1865, %v1865
  %v1994 = vmul.f32 %v1866, %v1866
  %v1995 = vmul.f32 %v1867, %v1867
  %v1996 = vmul.f32 %v1868, %v1868
  %v1997 = vmul.f32 %v1869, %v1869
  %v1998 = vmul.f32 %v1870, %v1870
  %v1999 = vmul.f32 %v1871, %v1871
  %v2000 = vmul.f32 %v1872, %v1872
  %v2001 = vmul.f32 %v1873, %v1873
  %v2002 = vmul.f32 %v1874, %v1874
  %v2003 = vmul.f32 %v1875, %v1875
  %v2004 = vmul.f32 %v1876, %v1876
  %v2005 = vmul.f32 %v1877, %v1877
  %v2006 = vmul.f32 %v1878, %v1878
  %v2007 = vmul.f32 %v1879, %v1879
  %v2008 = vmul.f32 %v1880, %v1880
  %v2009 = vmul.f32 %v1881, %v1881
  %v2010 = vmul.f32 %v1882, %v1882
  %v2011 = vmul.f32 %v1883, %v1883
  %v2012 = vmul.f32 %v1884, %v1884
  %v2013 = vmul.f32 %v1885, %v1885
  %v2014 = vmul.f32 %v1886, %v1886
  %v2015 = vmul.f32 %v1887, %v1887
  %v2016 = vmul.f32 %v1888, %v1888
  %v2017 = vmul.f32 %v1889, %v1889
  %v2018 = vmul.f32 %v1890, %v1890
  %v2019 = vmul.f32 %v1891, %v1891
  %v2020 = vmul.f32 %v1892, %v1892
  %v2021 = vmul.f32 %v1893, %v1893
  %v2022 = vmul.f32 %v1894, %v1894
  %v2023 = vmul.f32 %v1895, %v1895
  %v2024 = vmul.f32 %v1896, %v1896
  %v2025 = vmul.f32 %v1897, %v1897
  %v2026 = vmul.f32 %v1898, %v1898
  %v2027 = vmul.f32 %v1899, %v1899
  %v2028 = vmul.f32 %v1900, %v1900
  %v2029 = vmul.f32 %v1901, %v1901
  %v2030 = vsel %vm1260, %v1902, 0.0
  %2031 = vadd.xlane.f32.xlu0 %v2030
  %v2032 = vpop.xlane.xlu0 %2031
  %v2033 = vsel %vm1260, %v1903, 0.0
  %2034 = vadd.xlane.f32.xlu0 %v2033
  %v2035 = vpop.xlane.xlu0 %2034
  %v2036 = vsel %vm1260, %v1904, 0.0
  %2037 = vadd.xlane.f32.xlu0 %v2036
  %v2038 = vpop.xlane.xlu0 %2037
  %v2039 = vsel %vm1260, %v1905, 0.0
  %2040 = vadd.xlane.f32.xlu0 %v2039
  %v2041 = vpop.xlane.xlu0 %2040
  %v2042 = vsel %vm1260, %v1906, 0.0
  %2043 = vadd.xlane.f32.xlu0 %v2042
  %v2044 = vpop.xlane.xlu0 %2043
  %v2045 = vsel %vm1260, %v1907, 0.0
  %2046 = vadd.xlane.f32.xlu0 %v2045
  %v2047 = vpop.xlane.xlu0 %2046
  %v2048 = vsel %vm1260, %v1908, 0.0
  %2049 = vadd.xlane.f32.xlu0 %v2048
  %v2050 = vpop.xlane.xlu0 %2049
  %v2051 = vsel %vm1260, %v1909, 0.0
  %2052 = vadd.xlane.f32.xlu0 %v2051
  %v2053 = vpop.xlane.xlu0 %2052
  %v2054 = vsel %vm1260, %v1910, 0.0
  %2055 = vadd.xlane.f32.xlu0 %v2054
  %v2056 = vpop.xlane.xlu0 %2055
  %v2057 = vsel %vm1260, %v1911, 0.0
  %2058 = vadd.xlane.f32.xlu0 %v2057
  %v2059 = vpop.xlane.xlu0 %2058
  %v2060 = vsel %vm1260, %v1912, 0.0
  %2061 = vadd.xlane.f32.xlu0 %v2060
  %v2062 = vpop.xlane.xlu0 %2061
  %v2063 = vsel %vm1260, %v1913, 0.0
  %2064 = vadd.xlane.f32.xlu0 %v2063
  %v2065 = vpop.xlane.xlu0 %2064
  %v2066 = vsel %vm1260, %v1914, 0.0
  %2067 = vadd.xlane.f32.xlu0 %v2066
  %v2068 = vpop.xlane.xlu0 %2067
  %v2069 = vsel %vm1260, %v1915, 0.0
  %2070 = vadd.xlane.f32.xlu0 %v2069
  %v2071 = vpop.xlane.xlu0 %2070
  %v2072 = vsel %vm1260, %v1916, 0.0
  %2073 = vadd.xlane.f32.xlu0 %v2072
  %v2074 = vpop.xlane.xlu0 %2073
  %v2075 = vsel %vm1260, %v1917, 0.0
  %2076 = vadd.xlane.f32.xlu0 %v2075
  %v2077 = vpop.xlane.xlu0 %2076
  %v2078 = vsel %vm1260, %v1918, 0.0
  %2079 = vadd.xlane.f32.xlu0 %v2078
  %v2080 = vpop.xlane.xlu0 %2079
  %v2081 = vsel %vm1260, %v1919, 0.0
  %2082 = vadd.xlane.f32.xlu0 %v2081
  %v2083 = vpop.xlane.xlu0 %2082
  %v2084 = vsel %vm1260, %v1920, 0.0
  %2085 = vadd.xlane.f32.xlu0 %v2084
  %v2086 = vpop.xlane.xlu0 %2085
  %v2087 = vsel %vm1260, %v1921, 0.0
  %2088 = vadd.xlane.f32.xlu0 %v2087
  %v2089 = vpop.xlane.xlu0 %2088
  %v2090 = vsel %vm1260, %v1922, 0.0
  %2091 = vadd.xlane.f32.xlu0 %v2090
  %v2092 = vpop.xlane.xlu0 %2091
  %v2093 = vsel %vm1260, %v1923, 0.0
  %2094 = vadd.xlane.f32.xlu0 %v2093
  %v2095 = vpop.xlane.xlu0 %2094
  %v2096 = vsel %vm1260, %v1924, 0.0
  %2097 = vadd.xlane.f32.xlu0 %v2096
  %v2098 = vpop.xlane.xlu0 %2097
  %v2099 = vsel %vm1260, %v1925, 0.0
  %2100 = vadd.xlane.f32.xlu0 %v2099
  %v2101 = vpop.xlane.xlu0 %2100
  %v2102 = vsel %vm1260, %v1926, 0.0
  %2103 = vadd.xlane.f32.xlu0 %v2102
  %v2104 = vpop.xlane.xlu0 %2103
  %v2105 = vsel %vm1260, %v1927, 0.0
  %2106 = vadd.xlane.f32.xlu0 %v2105
  %v2107 = vpop.xlane.xlu0 %2106
  %v2108 = vsel %vm1260, %v1928, 0.0
  %2109 = vadd.xlane.f32.xlu0 %v2108
  %v2110 = vpop.xlane.xlu0 %2109
  %v2111 = vsel %vm1260, %v1929, 0.0
  %2112 = vadd.xlane.f32.xlu0 %v2111
  %v2113 = vpop.xlane.xlu0 %2112
  %v2114 = vsel %vm1260, %v1930, 0.0
  %2115 = vadd.xlane.f32.xlu0 %v2114
  %v2116 = vpop.xlane.xlu0 %2115
  %v2117 = vsel %vm1260, %v1931, 0.0
  %2118 = vadd.xlane.f32.xlu0 %v2117
  %v2119 = vpop.xlane.xlu0 %2118
  %v2120 = vsel %vm1260, %v1932, 0.0
  %2121 = vadd.xlane.f32.xlu0 %v2120
  %v2122 = vpop.xlane.xlu0 %2121
  %v2123 = vsel %vm1260, %v1933, 0.0
  %2124 = vadd.xlane.f32.xlu0 %v2123
  %v2125 = vpop.xlane.xlu0 %2124
  %v2126 = vsel %vm1260, %v1934, 0.0
  %2127 = vadd.xlane.f32.xlu0 %v2126
  %v2128 = vpop.xlane.xlu0 %2127
  %v2129 = vsel %vm1260, %v1935, 0.0
  %2130 = vadd.xlane.f32.xlu0 %v2129
  %v2131 = vpop.xlane.xlu0 %2130
  %v2132 = vsel %vm1260, %v1936, 0.0
  %2133 = vadd.xlane.f32.xlu0 %v2132
  %v2134 = vpop.xlane.xlu0 %2133
  %v2135 = vsel %vm1260, %v1937, 0.0
  %2136 = vadd.xlane.f32.xlu0 %v2135
  %v2137 = vpop.xlane.xlu0 %2136
  %v2138 = vsel %vm1260, %v1938, 0.0
  %2139 = vadd.xlane.f32.xlu0 %v2138
  %v2140 = vpop.xlane.xlu0 %2139
  %v2141 = vsel %vm1260, %v1939, 0.0
  %2142 = vadd.xlane.f32.xlu0 %v2141
  %v2143 = vpop.xlane.xlu0 %2142
  %v2144 = vsel %vm1260, %v1940, 0.0
  %2145 = vadd.xlane.f32.xlu0 %v2144
  %v2146 = vpop.xlane.xlu0 %2145
  %v2147 = vsel %vm1260, %v1941, 0.0
  %2148 = vadd.xlane.f32.xlu0 %v2147
  %v2149 = vpop.xlane.xlu0 %2148
  %v2150 = vsel %vm1260, %v1942, 0.0
  %2151 = vadd.xlane.f32.xlu0 %v2150
  %v2152 = vpop.xlane.xlu0 %2151
  %v2153 = vsel %vm1260, %v1943, 0.0
  %2154 = vadd.xlane.f32.xlu0 %v2153
  %v2155 = vpop.xlane.xlu0 %2154
  %v2156 = vsel %vm1260, %v1944, 0.0
  %2157 = vadd.xlane.f32.xlu0 %v2156
  %v2158 = vpop.xlane.xlu0 %2157
  %v2159 = vsel %vm1260, %v1945, 0.0
  %2160 = vadd.xlane.f32.xlu0 %v2159
  %v2161 = vpop.xlane.xlu0 %2160
  %v2162 = vsel %vm1260, %v1946, 0.0
  %2163 = vadd.xlane.f32.xlu0 %v2162
  %v2164 = vpop.xlane.xlu0 %2163
  %v2165 = vsel %vm1260, %v1947, 0.0
  %2166 = vadd.xlane.f32.xlu0 %v2165
  %v2167 = vpop.xlane.xlu0 %2166
  %v2168 = vsel %vm1260, %v1948, 0.0
  %2169 = vadd.xlane.f32.xlu0 %v2168
  %v2170 = vpop.xlane.xlu0 %2169
  %v2171 = vsel %vm1260, %v1949, 0.0
  %2172 = vadd.xlane.f32.xlu0 %v2171
  %v2173 = vpop.xlane.xlu0 %2172
  %v2174 = vsel %vm1260, %v1950, 0.0
  %2175 = vadd.xlane.f32.xlu0 %v2174
  %v2176 = vpop.xlane.xlu0 %2175
  %v2177 = vsel %vm1260, %v1951, 0.0
  %2178 = vadd.xlane.f32.xlu0 %v2177
  %v2179 = vpop.xlane.xlu0 %2178
  %v2180 = vsel %vm1260, %v1952, 0.0
  %2181 = vadd.xlane.f32.xlu0 %v2180
  %v2182 = vpop.xlane.xlu0 %2181
  %v2183 = vsel %vm1260, %v1953, 0.0
  %2184 = vadd.xlane.f32.xlu0 %v2183
  %v2185 = vpop.xlane.xlu0 %2184
  %v2186 = vsel %vm1260, %v1954, 0.0
  %2187 = vadd.xlane.f32.xlu0 %v2186
  %v2188 = vpop.xlane.xlu0 %2187
  %v2189 = vsel %vm1260, %v1955, 0.0
  %2190 = vadd.xlane.f32.xlu0 %v2189
  %v2191 = vpop.xlane.xlu0 %2190
  %v2192 = vsel %vm1260, %v1956, 0.0
  %2193 = vadd.xlane.f32.xlu0 %v2192
  %v2194 = vpop.xlane.xlu0 %2193
  %v2195 = vsel %vm1260, %v1957, 0.0
  %2196 = vadd.xlane.f32.xlu0 %v2195
  %v2197 = vpop.xlane.xlu0 %2196
  %v2198 = vsel %vm1260, %v1958, 0.0
  %2199 = vadd.xlane.f32.xlu0 %v2198
  %v2200 = vpop.xlane.xlu0 %2199
  %v2201 = vsel %vm1260, %v1959, 0.0
  %2202 = vadd.xlane.f32.xlu0 %v2201
  %v2203 = vpop.xlane.xlu0 %2202
  %v2204 = vsel %vm1260, %v1960, 0.0
  %2205 = vadd.xlane.f32.xlu0 %v2204
  %v2206 = vpop.xlane.xlu0 %2205
  %v2207 = vsel %vm1260, %v1961, 0.0
  %2208 = vadd.xlane.f32.xlu0 %v2207
  %v2209 = vpop.xlane.xlu0 %2208
  %v2210 = vsel %vm1260, %v1962, 0.0
  %2211 = vadd.xlane.f32.xlu0 %v2210
  %v2212 = vpop.xlane.xlu0 %2211
  %v2213 = vsel %vm1260, %v1963, 0.0
  %2214 = vadd.xlane.f32.xlu0 %v2213
  %v2215 = vpop.xlane.xlu0 %2214
  %v2216 = vsel %vm1260, %v1964, 0.0
  %2217 = vadd.xlane.f32.xlu0 %v2216
  %v2218 = vpop.xlane.xlu0 %2217
  %v2219 = vsel %vm1260, %v1965, 0.0
  %2220 = vadd.xlane.f32.xlu0 %v2219
  %v2221 = vpop.xlane.xlu0 %2220
  %v2222 = vsel %vm1260, %v1966, 0.0
  %2223 = vadd.xlane.f32.xlu0 %v2222
  %v2224 = vpop.xlane.xlu0 %2223
  %v2225 = vsel %vm1260, %v1967, 0.0
  %2226 = vadd.xlane.f32.xlu0 %v2225
  %v2227 = vpop.xlane.xlu0 %2226
  %v2228 = vsel %vm1260, %v1968, 0.0
  %2229 = vadd.xlane.f32.xlu0 %v2228
  %v2230 = vpop.xlane.xlu0 %2229
  %v2231 = vsel %vm1260, %v1969, 0.0
  %2232 = vadd.xlane.f32.xlu0 %v2231
  %v2233 = vpop.xlane.xlu0 %2232
  %v2234 = vsel %vm1260, %v1970, 0.0
  %2235 = vadd.xlane.f32.xlu0 %v2234
  %v2236 = vpop.xlane.xlu0 %2235
  %v2237 = vsel %vm1260, %v1971, 0.0
  %2238 = vadd.xlane.f32.xlu0 %v2237
  %v2239 = vpop.xlane.xlu0 %2238
  %v2240 = vsel %vm1260, %v1972, 0.0
  %2241 = vadd.xlane.f32.xlu0 %v2240
  %v2242 = vpop.xlane.xlu0 %2241
  %v2243 = vsel %vm1260, %v1973, 0.0
  %2244 = vadd.xlane.f32.xlu0 %v2243
  %v2245 = vpop.xlane.xlu0 %2244
  %v2246 = vsel %vm1260, %v1974, 0.0
  %2247 = vadd.xlane.f32.xlu0 %v2246
  %v2248 = vpop.xlane.xlu0 %2247
  %v2249 = vsel %vm1260, %v1975, 0.0
  %2250 = vadd.xlane.f32.xlu0 %v2249
  %v2251 = vpop.xlane.xlu0 %2250
  %v2252 = vsel %vm1260, %v1976, 0.0
  %2253 = vadd.xlane.f32.xlu0 %v2252
  %v2254 = vpop.xlane.xlu0 %2253
  %v2255 = vsel %vm1260, %v1977, 0.0
  %2256 = vadd.xlane.f32.xlu0 %v2255
  %v2257 = vpop.xlane.xlu0 %2256
  %v2258 = vsel %vm1260, %v1978, 0.0
  %2259 = vadd.xlane.f32.xlu0 %v2258
  %v2260 = vpop.xlane.xlu0 %2259
  %v2261 = vsel %vm1260, %v1979, 0.0
  %2262 = vadd.xlane.f32.xlu0 %v2261
  %v2263 = vpop.xlane.xlu0 %2262
  %v2264 = vsel %vm1260, %v1980, 0.0
  %2265 = vadd.xlane.f32.xlu0 %v2264
  %v2266 = vpop.xlane.xlu0 %2265
  %v2267 = vsel %vm1260, %v1981, 0.0
  %2268 = vadd.xlane.f32.xlu0 %v2267
  %v2269 = vpop.xlane.xlu0 %2268
  %v2270 = vsel %vm1260, %v1982, 0.0
  %2271 = vadd.xlane.f32.xlu0 %v2270
  %v2272 = vpop.xlane.xlu0 %2271
  %v2273 = vsel %vm1260, %v1983, 0.0
  %2274 = vadd.xlane.f32.xlu0 %v2273
  %v2275 = vpop.xlane.xlu0 %2274
  %v2276 = vsel %vm1260, %v1984, 0.0
  %2277 = vadd.xlane.f32.xlu0 %v2276
  %v2278 = vpop.xlane.xlu0 %2277
  %v2279 = vsel %vm1260, %v1985, 0.0
  %2280 = vadd.xlane.f32.xlu0 %v2279
  %v2281 = vpop.xlane.xlu0 %2280
  %v2282 = vsel %vm1260, %v1986, 0.0
  %2283 = vadd.xlane.f32.xlu0 %v2282
  %v2284 = vpop.xlane.xlu0 %2283
  %v2285 = vsel %vm1260, %v1987, 0.0
  %2286 = vadd.xlane.f32.xlu0 %v2285
  %v2287 = vpop.xlane.xlu0 %2286
  %v2288 = vsel %vm1260, %v1988, 0.0
  %2289 = vadd.xlane.f32.xlu0 %v2288
  %v2290 = vpop.xlane.xlu0 %2289
  %v2291 = vsel %vm1260, %v1989, 0.0
  %2292 = vadd.xlane.f32.xlu0 %v2291
  %v2293 = vpop.xlane.xlu0 %2292
  %v2294 = vsel %vm1260, %v1990, 0.0
  %2295 = vadd.xlane.f32.xlu0 %v2294
  %v2296 = vpop.xlane.xlu0 %2295
  %v2297 = vsel %vm1260, %v1991, 0.0
  %2298 = vadd.xlane.f32.xlu0 %v2297
  %v2299 = vpop.xlane.xlu0 %2298
  %v2300 = vsel %vm1260, %v1992, 0.0
  %2301 = vadd.xlane.f32.xlu0 %v2300
  %v2302 = vpop.xlane.xlu0 %2301
  %v2303 = vsel %vm1260, %v1993, 0.0
  %2304 = vadd.xlane.f32.xlu0 %v2303
  %v2305 = vpop.xlane.xlu0 %2304
  %v2306 = vsel %vm1260, %v1994, 0.0
  %2307 = vadd.xlane.f32.xlu0 %v2306
  %v2308 = vpop.xlane.xlu0 %2307
  %v2309 = vsel %vm1260, %v1995, 0.0
  %2310 = vadd.xlane.f32.xlu0 %v2309
  %v2311 = vpop.xlane.xlu0 %2310
  %v2312 = vsel %vm1260, %v1996, 0.0
  %2313 = vadd.xlane.f32.xlu0 %v2312
  %v2314 = vpop.xlane.xlu0 %2313
  %v2315 = vsel %vm1260, %v1997, 0.0
  %2316 = vadd.xlane.f32.xlu0 %v2315
  %v2317 = vpop.xlane.xlu0 %2316
  %v2318 = vsel %vm1260, %v1998, 0.0
  %2319 = vadd.xlane.f32.xlu0 %v2318
  %v2320 = vpop.xlane.xlu0 %2319
  %v2321 = vsel %vm1260, %v1999, 0.0
  %2322 = vadd.xlane.f32.xlu0 %v2321
  %v2323 = vpop.xlane.xlu0 %2322
  %v2324 = vsel %vm1260, %v2000, 0.0
  %2325 = vadd.xlane.f32.xlu0 %v2324
  %v2326 = vpop.xlane.xlu0 %2325
  %v2327 = vsel %vm1260, %v2001, 0.0
  %2328 = vadd.xlane.f32.xlu0 %v2327
  %v2329 = vpop.xlane.xlu0 %2328
  %v2330 = vsel %vm1260, %v2002, 0.0
  %2331 = vadd.xlane.f32.xlu0 %v2330
  %v2332 = vpop.xlane.xlu0 %2331
  %v2333 = vsel %vm1260, %v2003, 0.0
  %2334 = vadd.xlane.f32.xlu0 %v2333
  %v2335 = vpop.xlane.xlu0 %2334
  %v2336 = vsel %vm1260, %v2004, 0.0
  %2337 = vadd.xlane.f32.xlu0 %v2336
  %v2338 = vpop.xlane.xlu0 %2337
  %v2339 = vsel %vm1260, %v2005, 0.0
  %2340 = vadd.xlane.f32.xlu0 %v2339
  %v2341 = vpop.xlane.xlu0 %2340
  %v2342 = vsel %vm1260, %v2006, 0.0
  %2343 = vadd.xlane.f32.xlu0 %v2342
  %v2344 = vpop.xlane.xlu0 %2343
  %v2345 = vsel %vm1260, %v2007, 0.0
  %2346 = vadd.xlane.f32.xlu0 %v2345
  %v2347 = vpop.xlane.xlu0 %2346
  %v2348 = vsel %vm1260, %v2008, 0.0
  %2349 = vadd.xlane.f32.xlu0 %v2348
  %v2350 = vpop.xlane.xlu0 %2349
  %v2351 = vsel %vm1260, %v2009, 0.0
  %2352 = vadd.xlane.f32.xlu0 %v2351
  %v2353 = vpop.xlane.xlu0 %2352
  %v2354 = vsel %vm1260, %v2010, 0.0
  %2355 = vadd.xlane.f32.xlu0 %v2354
  %v2356 = vpop.xlane.xlu0 %2355
  %v2357 = vsel %vm1260, %v2011, 0.0
  %2358 = vadd.xlane.f32.xlu0 %v2357
  %v2359 = vpop.xlane.xlu0 %2358
  %v2360 = vsel %vm1260, %v2012, 0.0
  %2361 = vadd.xlane.f32.xlu0 %v2360
  %v2362 = vpop.xlane.xlu0 %2361
  %v2363 = vsel %vm1260, %v2013, 0.0
  %2364 = vadd.xlane.f32.xlu0 %v2363
  %v2365 = vpop.xlane.xlu0 %2364
  %v2366 = vsel %vm1260, %v2014, 0.0
  %2367 = vadd.xlane.f32.xlu0 %v2366
  %v2368 = vpop.xlane.xlu0 %2367
  %v2369 = vsel %vm1260, %v2015, 0.0
  %2370 = vadd.xlane.f32.xlu0 %v2369
  %v2371 = vpop.xlane.xlu0 %2370
  %v2372 = vsel %vm1260, %v2016, 0.0
  %2373 = vadd.xlane.f32.xlu0 %v2372
  %v2374 = vpop.xlane.xlu0 %2373
  %v2375 = vsel %vm1260, %v2017, 0.0
  %2376 = vadd.xlane.f32.xlu0 %v2375
  %v2377 = vpop.xlane.xlu0 %2376
  %v2378 = vsel %vm1260, %v2018, 0.0
  %2379 = vadd.xlane.f32.xlu0 %v2378
  %v2380 = vpop.xlane.xlu0 %2379
  %v2381 = vsel %vm1260, %v2019, 0.0
  %2382 = vadd.xlane.f32.xlu0 %v2381
  %v2383 = vpop.xlane.xlu0 %2382
  %v2384 = vsel %vm1260, %v2020, 0.0
  %2385 = vadd.xlane.f32.xlu0 %v2384
  %v2386 = vpop.xlane.xlu0 %2385
  %v2387 = vsel %vm1260, %v2021, 0.0
  %2388 = vadd.xlane.f32.xlu0 %v2387
  %v2389 = vpop.xlane.xlu0 %2388
  %v2390 = vsel %vm1260, %v2022, 0.0
  %2391 = vadd.xlane.f32.xlu0 %v2390
  %v2392 = vpop.xlane.xlu0 %2391
  %v2393 = vsel %vm1260, %v2023, 0.0
  %2394 = vadd.xlane.f32.xlu0 %v2393
  %v2395 = vpop.xlane.xlu0 %2394
  %v2396 = vsel %vm1260, %v2024, 0.0
  %2397 = vadd.xlane.f32.xlu0 %v2396
  %v2398 = vpop.xlane.xlu0 %2397
  %v2399 = vsel %vm1260, %v2025, 0.0
  %2400 = vadd.xlane.f32.xlu0 %v2399
  %v2401 = vpop.xlane.xlu0 %2400
  %v2402 = vsel %vm1260, %v2026, 0.0
  %2403 = vadd.xlane.f32.xlu0 %v2402
  %v2404 = vpop.xlane.xlu0 %2403
  %v2405 = vsel %vm1260, %v2027, 0.0
  %2406 = vadd.xlane.f32.xlu0 %v2405
  %v2407 = vpop.xlane.xlu0 %2406
  %v2408 = vsel %vm1260, %v2028, 0.0
  %2409 = vadd.xlane.f32.xlu0 %v2408
  %v2410 = vpop.xlane.xlu0 %2409
  %v2411 = vsel %vm1260, %v2029, 0.0
  %2412 = vadd.xlane.f32.xlu0 %v2411
  %v2413 = vpop.xlane.xlu0 %2412
  %v2414 = vadd.f32 %v2032, %v2056
  %v2415 = vadd.f32 %v2414, %v2080
  %v2416 = vadd.f32 %v2415, %v2104
  %v2417 = vadd.f32 %v2416, %v2128
  %v2418 = vadd.f32 %v2417, %v2152
  %v2419 = vadd.f32 %v2418, %v2176
  %v2420 = vadd.f32 %v2419, %v2200
  %v2421 = vadd.f32 %v2420, %v2224
  %v2422 = vadd.f32 %v2421, %v2248
  %v2423 = vadd.f32 %v2422, %v2272
  %v2424 = vadd.f32 %v2423, %v2296
  %v2425 = vadd.f32 %v2424, %v2320
  %v2426 = vadd.f32 %v2425, %v2344
  %v2427 = vadd.f32 %v2426, %v2368
  %v2428 = vadd.f32 %v2427, %v2392
  %v2429 = vadd.f32 %v2035, %v2059
  %v2430 = vadd.f32 %v2429, %v2083
  %v2431 = vadd.f32 %v2430, %v2107
  %v2432 = vadd.f32 %v2431, %v2131
  %v2433 = vadd.f32 %v2432, %v2155
  %v2434 = vadd.f32 %v2433, %v2179
  %v2435 = vadd.f32 %v2434, %v2203
  %v2436 = vadd.f32 %v2435, %v2227
  %v2437 = vadd.f32 %v2436, %v2251
  %v2438 = vadd.f32 %v2437, %v2275
  %v2439 = vadd.f32 %v2438, %v2299
  %v2440 = vadd.f32 %v2439, %v2323
  %v2441 = vadd.f32 %v2440, %v2347
  %v2442 = vadd.f32 %v2441, %v2371
  %v2443 = vadd.f32 %v2442, %v2395
  %v2444 = vadd.f32 %v2038, %v2062
  %v2445 = vadd.f32 %v2444, %v2086
  %v2446 = vadd.f32 %v2445, %v2110
  %v2447 = vadd.f32 %v2446, %v2134
  %v2448 = vadd.f32 %v2447, %v2158
  %v2449 = vadd.f32 %v2448, %v2182
  %v2450 = vadd.f32 %v2449, %v2206
  %v2451 = vadd.f32 %v2450, %v2230
  %v2452 = vadd.f32 %v2451, %v2254
  %v2453 = vadd.f32 %v2452, %v2278
  %v2454 = vadd.f32 %v2453, %v2302
  %v2455 = vadd.f32 %v2454, %v2326
  %v2456 = vadd.f32 %v2455, %v2350
  %v2457 = vadd.f32 %v2456, %v2374
  %v2458 = vadd.f32 %v2457, %v2398
  %v2459 = vadd.f32 %v2041, %v2065
  %v2460 = vadd.f32 %v2459, %v2089
  %v2461 = vadd.f32 %v2460, %v2113
  %v2462 = vadd.f32 %v2461, %v2137
  %v2463 = vadd.f32 %v2462, %v2161
  %v2464 = vadd.f32 %v2463, %v2185
  %v2465 = vadd.f32 %v2464, %v2209
  %v2466 = vadd.f32 %v2465, %v2233
  %v2467 = vadd.f32 %v2466, %v2257
  %v2468 = vadd.f32 %v2467, %v2281
  %v2469 = vadd.f32 %v2468, %v2305
  %v2470 = vadd.f32 %v2469, %v2329
  %v2471 = vadd.f32 %v2470, %v2353
  %v2472 = vadd.f32 %v2471, %v2377
  %v2473 = vadd.f32 %v2472, %v2401
  %v2474 = vadd.f32 %v2044, %v2068
  %v2475 = vadd.f32 %v2474, %v2092
  %v2476 = vadd.f32 %v2475, %v2116
  %v2477 = vadd.f32 %v2476, %v2140
  %v2478 = vadd.f32 %v2477, %v2164
  %v2479 = vadd.f32 %v2478, %v2188
  %v2480 = vadd.f32 %v2479, %v2212
  %v2481 = vadd.f32 %v2480, %v2236
  %v2482 = vadd.f32 %v2481, %v2260
  %v2483 = vadd.f32 %v2482, %v2284
  %v2484 = vadd.f32 %v2483, %v2308
  %v2485 = vadd.f32 %v2484, %v2332
  %v2486 = vadd.f32 %v2485, %v2356
  %v2487 = vadd.f32 %v2486, %v2380
  %v2488 = vadd.f32 %v2487, %v2404
  %v2489 = vadd.f32 %v2047, %v2071
  %v2490 = vadd.f32 %v2489, %v2095
  %v2491 = vadd.f32 %v2490, %v2119
  %v2492 = vadd.f32 %v2491, %v2143
  %v2493 = vadd.f32 %v2492, %v2167
  %v2494 = vadd.f32 %v2493, %v2191
  %v2495 = vadd.f32 %v2494, %v2215
  %v2496 = vadd.f32 %v2495, %v2239
  %v2497 = vadd.f32 %v2496, %v2263
  %v2498 = vadd.f32 %v2497, %v2287
  %v2499 = vadd.f32 %v2498, %v2311
  %v2500 = vadd.f32 %v2499, %v2335
  %v2501 = vadd.f32 %v2500, %v2359
  %v2502 = vadd.f32 %v2501, %v2383
  %v2503 = vadd.f32 %v2502, %v2407
  %v2504 = vadd.f32 %v2050, %v2074
  %v2505 = vadd.f32 %v2504, %v2098
  %v2506 = vadd.f32 %v2505, %v2122
  %v2507 = vadd.f32 %v2506, %v2146
  %v2508 = vadd.f32 %v2507, %v2170
  %v2509 = vadd.f32 %v2508, %v2194
  %v2510 = vadd.f32 %v2509, %v2218
  %v2511 = vadd.f32 %v2510, %v2242
  %v2512 = vadd.f32 %v2511, %v2266
  %v2513 = vadd.f32 %v2512, %v2290
  %v2514 = vadd.f32 %v2513, %v2314
  %v2515 = vadd.f32 %v2514, %v2338
  %v2516 = vadd.f32 %v2515, %v2362
  %v2517 = vadd.f32 %v2516, %v2386
  %v2518 = vadd.f32 %v2517, %v2410
  %v2519 = vadd.f32 %v2053, %v2077
  %v2520 = vadd.f32 %v2519, %v2101
  %v2521 = vadd.f32 %v2520, %v2125
  %v2522 = vadd.f32 %v2521, %v2149
  %v2523 = vadd.f32 %v2522, %v2173
  %v2524 = vadd.f32 %v2523, %v2197
  %v2525 = vadd.f32 %v2524, %v2221
  %v2526 = vadd.f32 %v2525, %v2245
  %v2527 = vadd.f32 %v2526, %v2269
  %v2528 = vadd.f32 %v2527, %v2293
  %v2529 = vadd.f32 %v2528, %v2317
  %v2530 = vadd.f32 %v2529, %v2341
  %v2531 = vadd.f32 %v2530, %v2365
  %v2532 = vadd.f32 %v2531, %v2389
  %v2533 = vadd.f32 %v2532, %v2413
  %v2534 = vmul.f32 %v2428, %v1765
  %v2535 = vmul.f32 %v2443, %v1765
  %v2536 = vmul.f32 %v2458, %v1765
  %v2537 = vmul.f32 %v2473, %v1765
  %v2538 = vmul.f32 %v2488, %v1765
  %v2539 = vmul.f32 %v2503, %v1765
  %v2540 = vmul.f32 %v2518, %v1765
  %v2541 = vmul.f32 %v2533, %v1765
  %v2542 = vadd.f32 %v2534, 1e-05
  %v2543 = vadd.f32 %v2535, 1e-05
  %v2544 = vadd.f32 %v2536, 1e-05
  %v2545 = vadd.f32 %v2537, 1e-05
  %v2546 = vadd.f32 %v2538, 1e-05
  %v2547 = vadd.f32 %v2539, 1e-05
  %v2548 = vadd.f32 %v2540, 1e-05
  %v2549 = vadd.f32 %v2541, 1e-05
  %v2550 = vrsqrt.pop %v2542
  %v2551 = vrsqrt.pop %v2543
  %v2552 = vrsqrt.pop %v2544
  %v2553 = vrsqrt.pop %v2545
  %v2554 = vrsqrt.pop %v2546
  %v2555 = vrsqrt.pop %v2547
  %v2556 = vrsqrt.pop %v2548
  %v2557 = vrsqrt.pop %v2549
  %v2558 = vmul.f32 %v1774, %v2550
  %v2559 = vmul.f32 %v1775, %v2551
  %v2560 = vmul.f32 %v1776, %v2552
  %v2561 = vmul.f32 %v1777, %v2553
  %v2562 = vmul.f32 %v1778, %v2554
  %v2563 = vmul.f32 %v1779, %v2555
  %v2564 = vmul.f32 %v1780, %v2556
  %v2565 = vmul.f32 %v1781, %v2557
  %v2566 = vmul.f32 %v1782, %v2550
  %v2567 = vmul.f32 %v1783, %v2551
  %v2568 = vmul.f32 %v1784, %v2552
  %v2569 = vmul.f32 %v1785, %v2553
  %v2570 = vmul.f32 %v1786, %v2554
  %v2571 = vmul.f32 %v1787, %v2555
  %v2572 = vmul.f32 %v1788, %v2556
  %v2573 = vmul.f32 %v1789, %v2557
  %v2574 = vmul.f32 %v1790, %v2550
  %v2575 = vmul.f32 %v1791, %v2551
  %v2576 = vmul.f32 %v1792, %v2552
  %v2577 = vmul.f32 %v1793, %v2553
  %v2578 = vmul.f32 %v1794, %v2554
  %v2579 = vmul.f32 %v1795, %v2555
  %v2580 = vmul.f32 %v1796, %v2556
  %v2581 = vmul.f32 %v1797, %v2557
  %v2582 = vmul.f32 %v1798, %v2550
  %v2583 = vmul.f32 %v1799, %v2551
  %v2584 = vmul.f32 %v1800, %v2552
  %v2585 = vmul.f32 %v1801, %v2553
  %v2586 = vmul.f32 %v1802, %v2554
  %v2587 = vmul.f32 %v1803, %v2555
  %v2588 = vmul.f32 %v1804, %v2556
  %v2589 = vmul.f32 %v1805, %v2557
  %v2590 = vmul.f32 %v1806, %v2550
  %v2591 = vmul.f32 %v1807, %v2551
  %v2592 = vmul.f32 %v1808, %v2552
  %v2593 = vmul.f32 %v1809, %v2553
  %v2594 = vmul.f32 %v1810, %v2554
  %v2595 = vmul.f32 %v1811, %v2555
  %v2596 = vmul.f32 %v1812, %v2556
  %v2597 = vmul.f32 %v1813, %v2557
  %v2598 = vmul.f32 %v1814, %v2550
  %v2599 = vmul.f32 %v1815, %v2551
  %v2600 = vmul.f32 %v1816, %v2552
  %v2601 = vmul.f32 %v1817, %v2553
  %v2602 = vmul.f32 %v1818, %v2554
  %v2603 = vmul.f32 %v1819, %v2555
  %v2604 = vmul.f32 %v1820, %v2556
  %v2605 = vmul.f32 %v1821, %v2557
  %v2606 = vmul.f32 %v1822, %v2550
  %v2607 = vmul.f32 %v1823, %v2551
  %v2608 = vmul.f32 %v1824, %v2552
  %v2609 = vmul.f32 %v1825, %v2553
  %v2610 = vmul.f32 %v1826, %v2554
  %v2611 = vmul.f32 %v1827, %v2555
  %v2612 = vmul.f32 %v1828, %v2556
  %v2613 = vmul.f32 %v1829, %v2557
  %v2614 = vmul.f32 %v1830, %v2550
  %v2615 = vmul.f32 %v1831, %v2551
  %v2616 = vmul.f32 %v1832, %v2552
  %v2617 = vmul.f32 %v1833, %v2553
  %v2618 = vmul.f32 %v1834, %v2554
  %v2619 = vmul.f32 %v1835, %v2555
  %v2620 = vmul.f32 %v1836, %v2556
  %v2621 = vmul.f32 %v1837, %v2557
  %v2622 = vmul.f32 %v1838, %v2550
  %v2623 = vmul.f32 %v1839, %v2551
  %v2624 = vmul.f32 %v1840, %v2552
  %v2625 = vmul.f32 %v1841, %v2553
  %v2626 = vmul.f32 %v1842, %v2554
  %v2627 = vmul.f32 %v1843, %v2555
  %v2628 = vmul.f32 %v1844, %v2556
  %v2629 = vmul.f32 %v1845, %v2557
  %v2630 = vmul.f32 %v1846, %v2550
  %v2631 = vmul.f32 %v1847, %v2551
  %v2632 = vmul.f32 %v1848, %v2552
  %v2633 = vmul.f32 %v1849, %v2553
  %v2634 = vmul.f32 %v1850, %v2554
  %v2635 = vmul.f32 %v1851, %v2555
  %v2636 = vmul.f32 %v1852, %v2556
  %v2637 = vmul.f32 %v1853, %v2557
  %v2638 = vmul.f32 %v1854, %v2550
  %v2639 = vmul.f32 %v1855, %v2551
  %v2640 = vmul.f32 %v1856, %v2552
  %v2641 = vmul.f32 %v1857, %v2553
  %v2642 = vmul.f32 %v1858, %v2554
  %v2643 = vmul.f32 %v1859, %v2555
  %v2644 = vmul.f32 %v1860, %v2556
  %v2645 = vmul.f32 %v1861, %v2557
  %v2646 = vmul.f32 %v1862, %v2550
  %v2647 = vmul.f32 %v1863, %v2551
  %v2648 = vmul.f32 %v1864, %v2552
  %v2649 = vmul.f32 %v1865, %v2553
  %v2650 = vmul.f32 %v1866, %v2554
  %v2651 = vmul.f32 %v1867, %v2555
  %v2652 = vmul.f32 %v1868, %v2556
  %v2653 = vmul.f32 %v1869, %v2557
  %v2654 = vmul.f32 %v1870, %v2550
  %v2655 = vmul.f32 %v1871, %v2551
  %v2656 = vmul.f32 %v1872, %v2552
  %v2657 = vmul.f32 %v1873, %v2553
  %v2658 = vmul.f32 %v1874, %v2554
  %v2659 = vmul.f32 %v1875, %v2555
  %v2660 = vmul.f32 %v1876, %v2556
  %v2661 = vmul.f32 %v1877, %v2557
  %v2662 = vmul.f32 %v1878, %v2550
  %v2663 = vmul.f32 %v1879, %v2551
  %v2664 = vmul.f32 %v1880, %v2552
  %v2665 = vmul.f32 %v1881, %v2553
  %v2666 = vmul.f32 %v1882, %v2554
  %v2667 = vmul.f32 %v1883, %v2555
  %v2668 = vmul.f32 %v1884, %v2556
  %v2669 = vmul.f32 %v1885, %v2557
  %v2670 = vmul.f32 %v1886, %v2550
  %v2671 = vmul.f32 %v1887, %v2551
  %v2672 = vmul.f32 %v1888, %v2552
  %v2673 = vmul.f32 %v1889, %v2553
  %v2674 = vmul.f32 %v1890, %v2554
  %v2675 = vmul.f32 %v1891, %v2555
  %v2676 = vmul.f32 %v1892, %v2556
  %v2677 = vmul.f32 %v1893, %v2557
  %v2678 = vmul.f32 %v1894, %v2550
  %v2679 = vmul.f32 %v1895, %v2551
  %v2680 = vmul.f32 %v1896, %v2552
  %v2681 = vmul.f32 %v1897, %v2553
  %v2682 = vmul.f32 %v1898, %v2554
  %v2683 = vmul.f32 %v1899, %v2555
  %v2684 = vmul.f32 %v1900, %v2556
  %v2685 = vmul.f32 %v1901, %v2557
  %v2686 = vld [vmem:[%s2] sm:$0xff]
  %v2687 = vld [vmem:[%s2 + $0x8] sm:$0xff]
  %v2688 = vld [vmem:[%s2 + $0x10] sm:$0xff]
  %v2689 = vld [vmem:[%s2 + $0x18] sm:$0xff]
  %v2690 = vld [vmem:[%s2 + $0x20] sm:$0xff]
  %v2691 = vld [vmem:[%s2 + $0x28] sm:$0xff]
  %v2692 = vld [vmem:[%s2 + $0x30] sm:$0xff]
  %v2693 = vld [vmem:[%s2 + $0x38] sm:$0xff]
  %2695 = vset.pattern.permute.xlu0 0
  %2696 = vperm.xlu0 %2695, %v2686
  %v2697 = vpop.permute.xlu0 %2696
  %2700 = vset.pattern.permute.xlu0 0
  %2701 = vperm.xlu0 %2700, %v2687
  %v2702 = vpop.permute.xlu0 %2701
  %2705 = vset.pattern.permute.xlu0 0
  %2706 = vperm.xlu0 %2705, %v2688
  %v2707 = vpop.permute.xlu0 %2706
  %2710 = vset.pattern.permute.xlu0 0
  %2711 = vperm.xlu0 %2710, %v2689
  %v2712 = vpop.permute.xlu0 %2711
  %2715 = vset.pattern.permute.xlu0 0
  %2716 = vperm.xlu0 %2715, %v2690
  %v2717 = vpop.permute.xlu0 %2716
  %2720 = vset.pattern.permute.xlu0 0
  %2721 = vperm.xlu0 %2720, %v2691
  %v2722 = vpop.permute.xlu0 %2721
  %2725 = vset.pattern.permute.xlu0 0
  %2726 = vperm.xlu0 %2725, %v2692
  %v2727 = vpop.permute.xlu0 %2726
  %2730 = vset.pattern.permute.xlu0 0
  %2731 = vperm.xlu0 %2730, %v2693
  %v2732 = vpop.permute.xlu0 %2731
  %v2734 = vmul.f32 %v2558, %v2697
  %v2735 = vmul.f32 %v2559, %v2702
  %v2736 = vmul.f32 %v2560, %v2707
  %v2737 = vmul.f32 %v2561, %v2712
  %v2738 = vmul.f32 %v2562, %v2717
  %v2739 = vmul.f32 %v2563, %v2722
  %v2740 = vmul.f32 %v2564, %v2727
  %v2741 = vmul.f32 %v2565, %v2732
  %v2742 = vmul.f32 %v2566, %v2697
  %v2743 = vmul.f32 %v2567, %v2702
  %v2744 = vmul.f32 %v2568, %v2707
  %v2745 = vmul.f32 %v2569, %v2712
  %v2746 = vmul.f32 %v2570, %v2717
  %v2747 = vmul.f32 %v2571, %v2722
  %v2748 = vmul.f32 %v2572, %v2727
  %v2749 = vmul.f32 %v2573, %v2732
  %v2750 = vmul.f32 %v2574, %v2697
  %v2751 = vmul.f32 %v2575, %v2702
  %v2752 = vmul.f32 %v2576, %v2707
  %v2753 = vmul.f32 %v2577, %v2712
  %v2754 = vmul.f32 %v2578, %v2717
  %v2755 = vmul.f32 %v2579, %v2722
  %v2756 = vmul.f32 %v2580, %v2727
  %v2757 = vmul.f32 %v2581, %v2732
  %v2758 = vmul.f32 %v2582, %v2697
  %v2759 = vmul.f32 %v2583, %v2702
  %v2760 = vmul.f32 %v2584, %v2707
  %v2761 = vmul.f32 %v2585, %v2712
  %v2762 = vmul.f32 %v2586, %v2717
  %v2763 = vmul.f32 %v2587, %v2722
  %v2764 = vmul.f32 %v2588, %v2727
  %v2765 = vmul.f32 %v2589, %v2732
  %v2766 = vmul.f32 %v2590, %v2697
  %v2767 = vmul.f32 %v2591, %v2702
  %v2768 = vmul.f32 %v2592, %v2707
  %v2769 = vmul.f32 %v2593, %v2712
  %v2770 = vmul.f32 %v2594, %v2717
  %v2771 = vmul.f32 %v2595, %v2722
  %v2772 = vmul.f32 %v2596, %v2727
  %v2773 = vmul.f32 %v2597, %v2732
  %v2774 = vmul.f32 %v2598, %v2697
  %v2775 = vmul.f32 %v2599, %v2702
  %v2776 = vmul.f32 %v2600, %v2707
  %v2777 = vmul.f32 %v2601, %v2712
  %v2778 = vmul.f32 %v2602, %v2717
  %v2779 = vmul.f32 %v2603, %v2722
  %v2780 = vmul.f32 %v2604, %v2727
  %v2781 = vmul.f32 %v2605, %v2732
  %v2782 = vmul.f32 %v2606, %v2697
  %v2783 = vmul.f32 %v2607, %v2702
  %v2784 = vmul.f32 %v2608, %v2707
  %v2785 = vmul.f32 %v2609, %v2712
  %v2786 = vmul.f32 %v2610, %v2717
  %v2787 = vmul.f32 %v2611, %v2722
  %v2788 = vmul.f32 %v2612, %v2727
  %v2789 = vmul.f32 %v2613, %v2732
  %v2790 = vmul.f32 %v2614, %v2697
  %v2791 = vmul.f32 %v2615, %v2702
  %v2792 = vmul.f32 %v2616, %v2707
  %v2793 = vmul.f32 %v2617, %v2712
  %v2794 = vmul.f32 %v2618, %v2717
  %v2795 = vmul.f32 %v2619, %v2722
  %v2796 = vmul.f32 %v2620, %v2727
  %v2797 = vmul.f32 %v2621, %v2732
  %v2798 = vmul.f32 %v2622, %v2697
  %v2799 = vmul.f32 %v2623, %v2702
  %v2800 = vmul.f32 %v2624, %v2707
  %v2801 = vmul.f32 %v2625, %v2712
  %v2802 = vmul.f32 %v2626, %v2717
  %v2803 = vmul.f32 %v2627, %v2722
  %v2804 = vmul.f32 %v2628, %v2727
  %v2805 = vmul.f32 %v2629, %v2732
  %v2806 = vmul.f32 %v2630, %v2697
  %v2807 = vmul.f32 %v2631, %v2702
  %v2808 = vmul.f32 %v2632, %v2707
  %v2809 = vmul.f32 %v2633, %v2712
  %v2810 = vmul.f32 %v2634, %v2717
  %v2811 = vmul.f32 %v2635, %v2722
  %v2812 = vmul.f32 %v2636, %v2727
  %v2813 = vmul.f32 %v2637, %v2732
  %v2814 = vmul.f32 %v2638, %v2697
  %v2815 = vmul.f32 %v2639, %v2702
  %v2816 = vmul.f32 %v2640, %v2707
  %v2817 = vmul.f32 %v2641, %v2712
  %v2818 = vmul.f32 %v2642, %v2717
  %v2819 = vmul.f32 %v2643, %v2722
  %v2820 = vmul.f32 %v2644, %v2727
  %v2821 = vmul.f32 %v2645, %v2732
  %v2822 = vmul.f32 %v2646, %v2697
  %v2823 = vmul.f32 %v2647, %v2702
  %v2824 = vmul.f32 %v2648, %v2707
  %v2825 = vmul.f32 %v2649, %v2712
  %v2826 = vmul.f32 %v2650, %v2717
  %v2827 = vmul.f32 %v2651, %v2722
  %v2828 = vmul.f32 %v2652, %v2727
  %v2829 = vmul.f32 %v2653, %v2732
  %v2830 = vmul.f32 %v2654, %v2697
  %v2831 = vmul.f32 %v2655, %v2702
  %v2832 = vmul.f32 %v2656, %v2707
  %v2833 = vmul.f32 %v2657, %v2712
  %v2834 = vmul.f32 %v2658, %v2717
  %v2835 = vmul.f32 %v2659, %v2722
  %v2836 = vmul.f32 %v2660, %v2727
  %v2837 = vmul.f32 %v2661, %v2732
  %v2838 = vmul.f32 %v2662, %v2697
  %v2839 = vmul.f32 %v2663, %v2702
  %v2840 = vmul.f32 %v2664, %v2707
  %v2841 = vmul.f32 %v2665, %v2712
  %v2842 = vmul.f32 %v2666, %v2717
  %v2843 = vmul.f32 %v2667, %v2722
  %v2844 = vmul.f32 %v2668, %v2727
  %v2845 = vmul.f32 %v2669, %v2732
  %v2846 = vmul.f32 %v2670, %v2697
  %v2847 = vmul.f32 %v2671, %v2702
  %v2848 = vmul.f32 %v2672, %v2707
  %v2849 = vmul.f32 %v2673, %v2712
  %v2850 = vmul.f32 %v2674, %v2717
  %v2851 = vmul.f32 %v2675, %v2722
  %v2852 = vmul.f32 %v2676, %v2727
  %v2853 = vmul.f32 %v2677, %v2732
  %v2854 = vmul.f32 %v2678, %v2697
  %v2855 = vmul.f32 %v2679, %v2702
  %v2856 = vmul.f32 %v2680, %v2707
  %v2857 = vmul.f32 %v2681, %v2712
  %v2858 = vmul.f32 %v2682, %v2717
  %v2859 = vmul.f32 %v2683, %v2722
  %v2860 = vmul.f32 %v2684, %v2727
  %v2861 = vmul.f32 %v2685, %v2732
  %2862 = vset.pattern.permute.xlu0 1
  %2863 = vperm.xlu0 %2862, %v2686
  %v2864 = vpop.permute.xlu0 %2863
  %2866 = vset.pattern.permute.xlu0 1
  %2867 = vperm.xlu0 %2866, %v2687
  %v2868 = vpop.permute.xlu0 %2867
  %2870 = vset.pattern.permute.xlu0 1
  %2871 = vperm.xlu0 %2870, %v2688
  %v2872 = vpop.permute.xlu0 %2871
  %2874 = vset.pattern.permute.xlu0 1
  %2875 = vperm.xlu0 %2874, %v2689
  %v2876 = vpop.permute.xlu0 %2875
  %2878 = vset.pattern.permute.xlu0 1
  %2879 = vperm.xlu0 %2878, %v2690
  %v2880 = vpop.permute.xlu0 %2879
  %2882 = vset.pattern.permute.xlu0 1
  %2883 = vperm.xlu0 %2882, %v2691
  %v2884 = vpop.permute.xlu0 %2883
  %2886 = vset.pattern.permute.xlu0 1
  %2887 = vperm.xlu0 %2886, %v2692
  %v2888 = vpop.permute.xlu0 %2887
  %2890 = vset.pattern.permute.xlu0 1
  %2891 = vperm.xlu0 %2890, %v2693
  %v2892 = vpop.permute.xlu0 %2891
  %v2894 = vadd.f32 %v2734, %v2864
  %v2895 = vadd.f32 %v2735, %v2868
  %v2896 = vadd.f32 %v2736, %v2872
  %v2897 = vadd.f32 %v2737, %v2876
  %v2898 = vadd.f32 %v2738, %v2880
  %v2899 = vadd.f32 %v2739, %v2884
  %v2900 = vadd.f32 %v2740, %v2888
  %v2901 = vadd.f32 %v2741, %v2892
  %v2902 = vadd.f32 %v2742, %v2864
  %v2903 = vadd.f32 %v2743, %v2868
  %v2904 = vadd.f32 %v2744, %v2872
  %v2905 = vadd.f32 %v2745, %v2876
  %v2906 = vadd.f32 %v2746, %v2880
  %v2907 = vadd.f32 %v2747, %v2884
  %v2908 = vadd.f32 %v2748, %v2888
  %v2909 = vadd.f32 %v2749, %v2892
  %v2910 = vadd.f32 %v2750, %v2864
  %v2911 = vadd.f32 %v2751, %v2868
  %v2912 = vadd.f32 %v2752, %v2872
  %v2913 = vadd.f32 %v2753, %v2876
  %v2914 = vadd.f32 %v2754, %v2880
  %v2915 = vadd.f32 %v2755, %v2884
  %v2916 = vadd.f32 %v2756, %v2888
  %v2917 = vadd.f32 %v2757, %v2892
  %v2918 = vadd.f32 %v2758, %v2864
  %v2919 = vadd.f32 %v2759, %v2868
  %v2920 = vadd.f32 %v2760, %v2872
  %v2921 = vadd.f32 %v2761, %v2876
  %v2922 = vadd.f32 %v2762, %v2880
  %v2923 = vadd.f32 %v2763, %v2884
  %v2924 = vadd.f32 %v2764, %v2888
  %v2925 = vadd.f32 %v2765, %v2892
  %v2926 = vadd.f32 %v2766, %v2864
  %v2927 = vadd.f32 %v2767, %v2868
  %v2928 = vadd.f32 %v2768, %v2872
  %v2929 = vadd.f32 %v2769, %v2876
  %v2930 = vadd.f32 %v2770, %v2880
  %v2931 = vadd.f32 %v2771, %v2884
  %v2932 = vadd.f32 %v2772, %v2888
  %v2933 = vadd.f32 %v2773, %v2892
  %v2934 = vadd.f32 %v2774, %v2864
  %v2935 = vadd.f32 %v2775, %v2868
  %v2936 = vadd.f32 %v2776, %v2872
  %v2937 = vadd.f32 %v2777, %v2876
  %v2938 = vadd.f32 %v2778, %v2880
  %v2939 = vadd.f32 %v2779, %v2884
  %v2940 = vadd.f32 %v2780, %v2888
  %v2941 = vadd.f32 %v2781, %v2892
  %v2942 = vadd.f32 %v2782, %v2864
  %v2943 = vadd.f32 %v2783, %v2868
  %v2944 = vadd.f32 %v2784, %v2872
  %v2945 = vadd.f32 %v2785, %v2876
  %v2946 = vadd.f32 %v2786, %v2880
  %v2947 = vadd.f32 %v2787, %v2884
  %v2948 = vadd.f32 %v2788, %v2888
  %v2949 = vadd.f32 %v2789, %v2892
  %v2950 = vadd.f32 %v2790, %v2864
  %v2951 = vadd.f32 %v2791, %v2868
  %v2952 = vadd.f32 %v2792, %v2872
  %v2953 = vadd.f32 %v2793, %v2876
  %v2954 = vadd.f32 %v2794, %v2880
  %v2955 = vadd.f32 %v2795, %v2884
  %v2956 = vadd.f32 %v2796, %v2888
  %v2957 = vadd.f32 %v2797, %v2892
  %v2958 = vadd.f32 %v2798, %v2864
  %v2959 = vadd.f32 %v2799, %v2868
  %v2960 = vadd.f32 %v2800, %v2872
  %v2961 = vadd.f32 %v2801, %v2876
  %v2962 = vadd.f32 %v2802, %v2880
  %v2963 = vadd.f32 %v2803, %v2884
  %v2964 = vadd.f32 %v2804, %v2888
  %v2965 = vadd.f32 %v2805, %v2892
  %v2966 = vadd.f32 %v2806, %v2864
  %v2967 = vadd.f32 %v2807, %v2868
  %v2968 = vadd.f32 %v2808, %v2872
  %v2969 = vadd.f32 %v2809, %v2876
  %v2970 = vadd.f32 %v2810, %v2880
  %v2971 = vadd.f32 %v2811, %v2884
  %v2972 = vadd.f32 %v2812, %v2888
  %v2973 = vadd.f32 %v2813, %v2892
  %v2974 = vadd.f32 %v2814, %v2864
  %v2975 = vadd.f32 %v2815, %v2868
  %v2976 = vadd.f32 %v2816, %v2872
  %v2977 = vadd.f32 %v2817, %v2876
  %v2978 = vadd.f32 %v2818, %v2880
  %v2979 = vadd.f32 %v2819, %v2884
  %v2980 = vadd.f32 %v2820, %v2888
  %v2981 = vadd.f32 %v2821, %v2892
  %v2982 = vadd.f32 %v2822, %v2864
  %v2983 = vadd.f32 %v2823, %v2868
  %v2984 = vadd.f32 %v2824, %v2872
  %v2985 = vadd.f32 %v2825, %v2876
  %v2986 = vadd.f32 %v2826, %v2880
  %v2987 = vadd.f32 %v2827, %v2884
  %v2988 = vadd.f32 %v2828, %v2888
  %v2989 = vadd.f32 %v2829, %v2892
  %v2990 = vadd.f32 %v2830, %v2864
  %v2991 = vadd.f32 %v2831, %v2868
  %v2992 = vadd.f32 %v2832, %v2872
  %v2993 = vadd.f32 %v2833, %v2876
  %v2994 = vadd.f32 %v2834, %v2880
  %v2995 = vadd.f32 %v2835, %v2884
  %v2996 = vadd.f32 %v2836, %v2888
  %v2997 = vadd.f32 %v2837, %v2892
  %v2998 = vadd.f32 %v2838, %v2864
  %v2999 = vadd.f32 %v2839, %v2868
  %v3000 = vadd.f32 %v2840, %v2872
  %v3001 = vadd.f32 %v2841, %v2876
  %v3002 = vadd.f32 %v2842, %v2880
  %v3003 = vadd.f32 %v2843, %v2884
  %v3004 = vadd.f32 %v2844, %v2888
  %v3005 = vadd.f32 %v2845, %v2892
  %v3006 = vadd.f32 %v2846, %v2864
  %v3007 = vadd.f32 %v2847, %v2868
  %v3008 = vadd.f32 %v2848, %v2872
  %v3009 = vadd.f32 %v2849, %v2876
  %v3010 = vadd.f32 %v2850, %v2880
  %v3011 = vadd.f32 %v2851, %v2884
  %v3012 = vadd.f32 %v2852, %v2888
  %v3013 = vadd.f32 %v2853, %v2892
  %v3014 = vadd.f32 %v2854, %v2864
  %v3015 = vadd.f32 %v2855, %v2868
  %v3016 = vadd.f32 %v2856, %v2872
  %v3017 = vadd.f32 %v2857, %v2876
  %v3018 = vadd.f32 %v2858, %v2880
  %v3019 = vadd.f32 %v2859, %v2884
  %v3020 = vadd.f32 %v2860, %v2888
  %v3021 = vadd.f32 %v2861, %v2892
  %v3022 = vmax.f32 %v2894, 0.0
  %v3023 = vmax.f32 %v2895, 0.0
  %v3024 = vmax.f32 %v2896, 0.0
  %v3025 = vmax.f32 %v2897, 0.0
  %v3026 = vmax.f32 %v2898, 0.0
  %v3027 = vmax.f32 %v2899, 0.0
  %v3028 = vmax.f32 %v2900, 0.0
  %v3029 = vmax.f32 %v2901, 0.0
  %v3030 = vmax.f32 %v2902, 0.0
  %v3031 = vmax.f32 %v2903, 0.0
  %v3032 = vmax.f32 %v2904, 0.0
  %v3033 = vmax.f32 %v2905, 0.0
  %v3034 = vmax.f32 %v2906, 0.0
  %v3035 = vmax.f32 %v2907, 0.0
  %v3036 = vmax.f32 %v2908, 0.0
  %v3037 = vmax.f32 %v2909, 0.0
  %v3038 = vmax.f32 %v2910, 0.0
  %v3039 = vmax.f32 %v2911, 0.0
  %v3040 = vmax.f32 %v2912, 0.0
  %v3041 = vmax.f32 %v2913, 0.0
  %v3042 = vmax.f32 %v2914, 0.0
  %v3043 = vmax.f32 %v2915, 0.0
  %v3044 = vmax.f32 %v2916, 0.0
  %v3045 = vmax.f32 %v2917, 0.0
  %v3046 = vmax.f32 %v2918, 0.0
  %v3047 = vmax.f32 %v2919, 0.0
  %v3048 = vmax.f32 %v2920, 0.0
  %v3049 = vmax.f32 %v2921, 0.0
  %v3050 = vmax.f32 %v2922, 0.0
  %v3051 = vmax.f32 %v2923, 0.0
  %v3052 = vmax.f32 %v2924, 0.0
  %v3053 = vmax.f32 %v2925, 0.0
  %v3054 = vmax.f32 %v2926, 0.0
  %v3055 = vmax.f32 %v2927, 0.0
  %v3056 = vmax.f32 %v2928, 0.0
  %v3057 = vmax.f32 %v2929, 0.0
  %v3058 = vmax.f32 %v2930, 0.0
  %v3059 = vmax.f32 %v2931, 0.0
  %v3060 = vmax.f32 %v2932, 0.0
  %v3061 = vmax.f32 %v2933, 0.0
  %v3062 = vmax.f32 %v2934, 0.0
  %v3063 = vmax.f32 %v2935, 0.0
  %v3064 = vmax.f32 %v2936, 0.0
  %v3065 = vmax.f32 %v2937, 0.0
  %v3066 = vmax.f32 %v2938, 0.0
  %v3067 = vmax.f32 %v2939, 0.0
  %v3068 = vmax.f32 %v2940, 0.0
  %v3069 = vmax.f32 %v2941, 0.0
  %v3070 = vmax.f32 %v2942, 0.0
  %v3071 = vmax.f32 %v2943, 0.0
  %v3072 = vmax.f32 %v2944, 0.0
  %v3073 = vmax.f32 %v2945, 0.0
  %v3074 = vmax.f32 %v2946, 0.0
  %v3075 = vmax.f32 %v2947, 0.0
  %v3076 = vmax.f32 %v2948, 0.0
  %v3077 = vmax.f32 %v2949, 0.0
  %v3078 = vmax.f32 %v2950, 0.0
  %v3079 = vmax.f32 %v2951, 0.0
  %v3080 = vmax.f32 %v2952, 0.0
  %v3081 = vmax.f32 %v2953, 0.0
  %v3082 = vmax.f32 %v2954, 0.0
  %v3083 = vmax.f32 %v2955, 0.0
  %v3084 = vmax.f32 %v2956, 0.0
  %v3085 = vmax.f32 %v2957, 0.0
  %v3086 = vmax.f32 %v2958, 0.0
  %v3087 = vmax.f32 %v2959, 0.0
  %v3088 = vmax.f32 %v2960, 0.0
  %v3089 = vmax.f32 %v2961, 0.0
  %v3090 = vmax.f32 %v2962, 0.0
  %v3091 = vmax.f32 %v2963, 0.0
  %v3092 = vmax.f32 %v2964, 0.0
  %v3093 = vmax.f32 %v2965, 0.0
  %v3094 = vmax.f32 %v2966, 0.0
  %v3095 = vmax.f32 %v2967, 0.0
  %v3096 = vmax.f32 %v2968, 0.0
  %v3097 = vmax.f32 %v2969, 0.0
  %v3098 = vmax.f32 %v2970, 0.0
  %v3099 = vmax.f32 %v2971, 0.0
  %v3100 = vmax.f32 %v2972, 0.0
  %v3101 = vmax.f32 %v2973, 0.0
  %v3102 = vmax.f32 %v2974, 0.0
  %v3103 = vmax.f32 %v2975, 0.0
  %v3104 = vmax.f32 %v2976, 0.0
  %v3105 = vmax.f32 %v2977, 0.0
  %v3106 = vmax.f32 %v2978, 0.0
  %v3107 = vmax.f32 %v2979, 0.0
  %v3108 = vmax.f32 %v2980, 0.0
  %v3109 = vmax.f32 %v2981, 0.0
  %v3110 = vmax.f32 %v2982, 0.0
  %v3111 = vmax.f32 %v2983, 0.0
  %v3112 = vmax.f32 %v2984, 0.0
  %v3113 = vmax.f32 %v2985, 0.0
  %v3114 = vmax.f32 %v2986, 0.0
  %v3115 = vmax.f32 %v2987, 0.0
  %v3116 = vmax.f32 %v2988, 0.0
  %v3117 = vmax.f32 %v2989, 0.0
  %v3118 = vmax.f32 %v2990, 0.0
  %v3119 = vmax.f32 %v2991, 0.0
  %v3120 = vmax.f32 %v2992, 0.0
  %v3121 = vmax.f32 %v2993, 0.0
  %v3122 = vmax.f32 %v2994, 0.0
  %v3123 = vmax.f32 %v2995, 0.0
  %v3124 = vmax.f32 %v2996, 0.0
  %v3125 = vmax.f32 %v2997, 0.0
  %v3126 = vmax.f32 %v2998, 0.0
  %v3127 = vmax.f32 %v2999, 0.0
  %v3128 = vmax.f32 %v3000, 0.0
  %v3129 = vmax.f32 %v3001, 0.0
  %v3130 = vmax.f32 %v3002, 0.0
  %v3131 = vmax.f32 %v3003, 0.0
  %v3132 = vmax.f32 %v3004, 0.0
  %v3133 = vmax.f32 %v3005, 0.0
  %v3134 = vmax.f32 %v3006, 0.0
  %v3135 = vmax.f32 %v3007, 0.0
  %v3136 = vmax.f32 %v3008, 0.0
  %v3137 = vmax.f32 %v3009, 0.0
  %v3138 = vmax.f32 %v3010, 0.0
  %v3139 = vmax.f32 %v3011, 0.0
  %v3140 = vmax.f32 %v3012, 0.0
  %v3141 = vmax.f32 %v3013, 0.0
  %v3142 = vmax.f32 %v3014, 0.0
  %v3143 = vmax.f32 %v3015, 0.0
  %v3144 = vmax.f32 %v3016, 0.0
  %v3145 = vmax.f32 %v3017, 0.0
  %v3146 = vmax.f32 %v3018, 0.0
  %v3147 = vmax.f32 %v3019, 0.0
  %v3148 = vmax.f32 %v3020, 0.0
  %v3149 = vmax.f32 %v3021, 0.0
  %v3150 = vpack.c.bf16 %v3023, %v3022
  %v3151 = vpack.c.bf16 %v3025, %v3024
  %v3152 = vpack.c.bf16 %v3027, %v3026
  %v3153 = vpack.c.bf16 %v3029, %v3028
  %v3154 = vpack.c.bf16 %v3031, %v3030
  %v3155 = vpack.c.bf16 %v3033, %v3032
  %v3156 = vpack.c.bf16 %v3035, %v3034
  %v3157 = vpack.c.bf16 %v3037, %v3036
  %v3158 = vpack.c.bf16 %v3039, %v3038
  %v3159 = vpack.c.bf16 %v3041, %v3040
  %v3160 = vpack.c.bf16 %v3043, %v3042
  %v3161 = vpack.c.bf16 %v3045, %v3044
  %v3162 = vpack.c.bf16 %v3047, %v3046
  %v3163 = vpack.c.bf16 %v3049, %v3048
  %v3164 = vpack.c.bf16 %v3051, %v3050
  %v3165 = vpack.c.bf16 %v3053, %v3052
  %v3166 = vpack.c.bf16 %v3055, %v3054
  %v3167 = vpack.c.bf16 %v3057, %v3056
  %v3168 = vpack.c.bf16 %v3059, %v3058
  %v3169 = vpack.c.bf16 %v3061, %v3060
  %v3170 = vpack.c.bf16 %v3063, %v3062
  %v3171 = vpack.c.bf16 %v3065, %v3064
  %v3172 = vpack.c.bf16 %v3067, %v3066
  %v3173 = vpack.c.bf16 %v3069, %v3068
  %v3174 = vpack.c.bf16 %v3071, %v3070
  %v3175 = vpack.c.bf16 %v3073, %v3072
  %v3176 = vpack.c.bf16 %v3075, %v3074
  %v3177 = vpack.c.bf16 %v3077, %v3076
  %v3178 = vpack.c.bf16 %v3079, %v3078
  %v3179 = vpack.c.bf16 %v3081, %v3080
  %v3180 = vpack.c.bf16 %v3083, %v3082
  %v3181 = vpack.c.bf16 %v3085, %v3084
  %v3182 = vpack.c.bf16 %v3087, %v3086
  %v3183 = vpack.c.bf16 %v3089, %v3088
  %v3184 = vpack.c.bf16 %v3091, %v3090
  %v3185 = vpack.c.bf16 %v3093, %v3092
  %v3186 = vpack.c.bf16 %v3095, %v3094
  %v3187 = vpack.c.bf16 %v3097, %v3096
  %v3188 = vpack.c.bf16 %v3099, %v3098
  %v3189 = vpack.c.bf16 %v3101, %v3100
  %v3190 = vpack.c.bf16 %v3103, %v3102
  %v3191 = vpack.c.bf16 %v3105, %v3104
  %v3192 = vpack.c.bf16 %v3107, %v3106
  %v3193 = vpack.c.bf16 %v3109, %v3108
  %v3194 = vpack.c.bf16 %v3111, %v3110
  %v3195 = vpack.c.bf16 %v3113, %v3112
  %v3196 = vpack.c.bf16 %v3115, %v3114
  %v3197 = vpack.c.bf16 %v3117, %v3116
  %v3198 = vpack.c.bf16 %v3119, %v3118
  %v3199 = vpack.c.bf16 %v3121, %v3120
  %v3200 = vpack.c.bf16 %v3123, %v3122
  %v3201 = vpack.c.bf16 %v3125, %v3124
  %v3202 = vpack.c.bf16 %v3127, %v3126
  %v3203 = vpack.c.bf16 %v3129, %v3128
  %v3204 = vpack.c.bf16 %v3131, %v3130
  %v3205 = vpack.c.bf16 %v3133, %v3132
  %v3206 = vpack.c.bf16 %v3135, %v3134
  %v3207 = vpack.c.bf16 %v3137, %v3136
  %v3208 = vpack.c.bf16 %v3139, %v3138
  %v3209 = vpack.c.bf16 %v3141, %v3140
  %v3210 = vpack.c.bf16 %v3143, %v3142
  %v3211 = vpack.c.bf16 %v3145, %v3144
  %v3212 = vpack.c.bf16 %v3147, %v3146
  %v3213 = vpack.c.bf16 %v3149, %v3148
  %v3278 = vunpack.c.l.b16 %v3150
  %v3279 = vunpack.c.h.b16 %v3150
  %v3280 = vunpack.c.l.b16 %v3151
  %v3281 = vunpack.c.h.b16 %v3151
  %v3282 = vunpack.c.l.b16 %v3152
  %v3283 = vunpack.c.h.b16 %v3152
  %v3284 = vunpack.c.l.b16 %v3153
  %v3285 = vunpack.c.h.b16 %v3153
  %v3286 = vunpack.c.l.b16 %v3154
  %v3287 = vunpack.c.h.b16 %v3154
  %v3288 = vunpack.c.l.b16 %v3155
  %v3289 = vunpack.c.h.b16 %v3155
  %v3290 = vunpack.c.l.b16 %v3156
  %v3291 = vunpack.c.h.b16 %v3156
  %v3292 = vunpack.c.l.b16 %v3157
  %v3293 = vunpack.c.h.b16 %v3157
  %v3294 = vunpack.c.l.b16 %v3158
  %v3295 = vunpack.c.h.b16 %v3158
  %v3296 = vunpack.c.l.b16 %v3159
  %v3297 = vunpack.c.h.b16 %v3159
  %v3298 = vunpack.c.l.b16 %v3160
  %v3299 = vunpack.c.h.b16 %v3160
  %v3300 = vunpack.c.l.b16 %v3161
  %v3301 = vunpack.c.h.b16 %v3161
  %v3302 = vunpack.c.l.b16 %v3162
  %v3303 = vunpack.c.h.b16 %v3162
  %v3304 = vunpack.c.l.b16 %v3163
  %v3305 = vunpack.c.h.b16 %v3163
  %v3306 = vunpack.c.l.b16 %v3164
  %v3307 = vunpack.c.h.b16 %v3164
  %v3308 = vunpack.c.l.b16 %v3165
  %v3309 = vunpack.c.h.b16 %v3165
  %v3310 = vunpack.c.l.b16 %v3166
  %v3311 = vunpack.c.h.b16 %v3166
  %v3312 = vunpack.c.l.b16 %v3167
  %v3313 = vunpack.c.h.b16 %v3167
  %v3314 = vunpack.c.l.b16 %v3168
  %v3315 = vunpack.c.h.b16 %v3168
  %v3316 = vunpack.c.l.b16 %v3169
  %v3317 = vunpack.c.h.b16 %v3169
  %v3318 = vunpack.c.l.b16 %v3170
  %v3319 = vunpack.c.h.b16 %v3170
  %v3320 = vunpack.c.l.b16 %v3171
  %v3321 = vunpack.c.h.b16 %v3171
  %v3322 = vunpack.c.l.b16 %v3172
  %v3323 = vunpack.c.h.b16 %v3172
  %v3324 = vunpack.c.l.b16 %v3173
  %v3325 = vunpack.c.h.b16 %v3173
  %v3326 = vunpack.c.l.b16 %v3174
  %v3327 = vunpack.c.h.b16 %v3174
  %v3328 = vunpack.c.l.b16 %v3175
  %v3329 = vunpack.c.h.b16 %v3175
  %v3330 = vunpack.c.l.b16 %v3176
  %v3331 = vunpack.c.h.b16 %v3176
  %v3332 = vunpack.c.l.b16 %v3177
  %v3333 = vunpack.c.h.b16 %v3177
  %v3334 = vunpack.c.l.b16 %v3178
  %v3335 = vunpack.c.h.b16 %v3178
  %v3336 = vunpack.c.l.b16 %v3179
  %v3337 = vunpack.c.h.b16 %v3179
  %v3338 = vunpack.c.l.b16 %v3180
  %v3339 = vunpack.c.h.b16 %v3180
  %v3340 = vunpack.c.l.b16 %v3181
  %v3341 = vunpack.c.h.b16 %v3181
  %v3342 = vunpack.c.l.b16 %v3182
  %v3343 = vunpack.c.h.b16 %v3182
  %v3344 = vunpack.c.l.b16 %v3183
  %v3345 = vunpack.c.h.b16 %v3183
  %v3346 = vunpack.c.l.b16 %v3184
  %v3347 = vunpack.c.h.b16 %v3184
  %v3348 = vunpack.c.l.b16 %v3185
  %v3349 = vunpack.c.h.b16 %v3185
  %v3350 = vunpack.c.l.b16 %v3186
  %v3351 = vunpack.c.h.b16 %v3186
  %v3352 = vunpack.c.l.b16 %v3187
  %v3353 = vunpack.c.h.b16 %v3187
  %v3354 = vunpack.c.l.b16 %v3188
  %v3355 = vunpack.c.h.b16 %v3188
  %v3356 = vunpack.c.l.b16 %v3189
  %v3357 = vunpack.c.h.b16 %v3189
  %v3358 = vunpack.c.l.b16 %v3190
  %v3359 = vunpack.c.h.b16 %v3190
  %v3360 = vunpack.c.l.b16 %v3191
  %v3361 = vunpack.c.h.b16 %v3191
  %v3362 = vunpack.c.l.b16 %v3192
  %v3363 = vunpack.c.h.b16 %v3192
  %v3364 = vunpack.c.l.b16 %v3193
  %v3365 = vunpack.c.h.b16 %v3193
  %v3366 = vunpack.c.l.b16 %v3194
  %v3367 = vunpack.c.h.b16 %v3194
  %v3368 = vunpack.c.l.b16 %v3195
  %v3369 = vunpack.c.h.b16 %v3195
  %v3370 = vunpack.c.l.b16 %v3196
  %v3371 = vunpack.c.h.b16 %v3196
  %v3372 = vunpack.c.l.b16 %v3197
  %v3373 = vunpack.c.h.b16 %v3197
  %v3374 = vunpack.c.l.b16 %v3198
  %v3375 = vunpack.c.h.b16 %v3198
  %v3376 = vunpack.c.l.b16 %v3199
  %v3377 = vunpack.c.h.b16 %v3199
  %v3378 = vunpack.c.l.b16 %v3200
  %v3379 = vunpack.c.h.b16 %v3200
  %v3380 = vunpack.c.l.b16 %v3201
  %v3381 = vunpack.c.h.b16 %v3201
  %v3382 = vunpack.c.l.b16 %v3202
  %v3383 = vunpack.c.h.b16 %v3202
  %v3384 = vunpack.c.l.b16 %v3203
  %v3385 = vunpack.c.h.b16 %v3203
  %v3386 = vunpack.c.l.b16 %v3204
  %v3387 = vunpack.c.h.b16 %v3204
  %v3388 = vunpack.c.l.b16 %v3205
  %v3389 = vunpack.c.h.b16 %v3205
  %v3390 = vunpack.c.l.b16 %v3206
  %v3391 = vunpack.c.h.b16 %v3206
  %v3392 = vunpack.c.l.b16 %v3207
  %v3393 = vunpack.c.h.b16 %v3207
  %v3394 = vunpack.c.l.b16 %v3208
  %v3395 = vunpack.c.h.b16 %v3208
  %v3396 = vunpack.c.l.b16 %v3209
  %v3397 = vunpack.c.h.b16 %v3209
  %v3398 = vunpack.c.l.b16 %v3210
  %v3399 = vunpack.c.h.b16 %v3210
  %v3400 = vunpack.c.l.b16 %v3211
  %v3401 = vunpack.c.h.b16 %v3211
  %v3402 = vunpack.c.l.b16 %v3212
  %v3403 = vunpack.c.h.b16 %v3212
  %v3404 = vunpack.c.l.b16 %v3213
  %v3405 = vunpack.c.h.b16 %v3213
  %v3406 = vpack.c.b16 %v3278, %v3278
  %v3407 = vpack.c.b16 %v3279, %v3279
  %v3408 = vpack.c.b16 %v3280, %v3280
  %v3409 = vpack.c.b16 %v3281, %v3281
  %v3410 = vpack.c.b16 %v3282, %v3282
  %v3411 = vpack.c.b16 %v3283, %v3283
  %v3412 = vpack.c.b16 %v3284, %v3284
  %v3413 = vpack.c.b16 %v3285, %v3285
  %v3414 = vpack.c.b16 %v3286, %v3286
  %v3415 = vpack.c.b16 %v3287, %v3287
  %v3416 = vpack.c.b16 %v3288, %v3288
  %v3417 = vpack.c.b16 %v3289, %v3289
  %v3418 = vpack.c.b16 %v3290, %v3290
  %v3419 = vpack.c.b16 %v3291, %v3291
  %v3420 = vpack.c.b16 %v3292, %v3292
  %v3421 = vpack.c.b16 %v3293, %v3293
  %v3422 = vpack.c.b16 %v3294, %v3294
  %v3423 = vpack.c.b16 %v3295, %v3295
  %v3424 = vpack.c.b16 %v3296, %v3296
  %v3425 = vpack.c.b16 %v3297, %v3297
  %v3426 = vpack.c.b16 %v3298, %v3298
  %v3427 = vpack.c.b16 %v3299, %v3299
  %v3428 = vpack.c.b16 %v3300, %v3300
  %v3429 = vpack.c.b16 %v3301, %v3301
  %v3430 = vpack.c.b16 %v3302, %v3302
  %v3431 = vpack.c.b16 %v3303, %v3303
  %v3432 = vpack.c.b16 %v3304, %v3304
  %v3433 = vpack.c.b16 %v3305, %v3305
  %v3434 = vpack.c.b16 %v3306, %v3306
  %v3435 = vpack.c.b16 %v3307, %v3307
  %v3436 = vpack.c.b16 %v3308, %v3308
  %v3437 = vpack.c.b16 %v3309, %v3309
  %v3438 = vpack.c.b16 %v3310, %v3310
  %v3439 = vpack.c.b16 %v3311, %v3311
  %v3440 = vpack.c.b16 %v3312, %v3312
  %v3441 = vpack.c.b16 %v3313, %v3313
  %v3442 = vpack.c.b16 %v3314, %v3314
  %v3443 = vpack.c.b16 %v3315, %v3315
  %v3444 = vpack.c.b16 %v3316, %v3316
  %v3445 = vpack.c.b16 %v3317, %v3317
  %v3446 = vpack.c.b16 %v3318, %v3318
  %v3447 = vpack.c.b16 %v3319, %v3319
  %v3448 = vpack.c.b16 %v3320, %v3320
  %v3449 = vpack.c.b16 %v3321, %v3321
  %v3450 = vpack.c.b16 %v3322, %v3322
  %v3451 = vpack.c.b16 %v3323, %v3323
  %v3452 = vpack.c.b16 %v3324, %v3324
  %v3453 = vpack.c.b16 %v3325, %v3325
  %v3454 = vpack.c.b16 %v3326, %v3326
  %v3455 = vpack.c.b16 %v3327, %v3327
  %v3456 = vpack.c.b16 %v3328, %v3328
  %v3457 = vpack.c.b16 %v3329, %v3329
  %v3458 = vpack.c.b16 %v3330, %v3330
  %v3459 = vpack.c.b16 %v3331, %v3331
  %v3460 = vpack.c.b16 %v3332, %v3332
  %v3461 = vpack.c.b16 %v3333, %v3333
  %v3462 = vpack.c.b16 %v3334, %v3334
  %v3463 = vpack.c.b16 %v3335, %v3335
  %v3464 = vpack.c.b16 %v3336, %v3336
  %v3465 = vpack.c.b16 %v3337, %v3337
  %v3466 = vpack.c.b16 %v3338, %v3338
  %v3467 = vpack.c.b16 %v3339, %v3339
  %v3468 = vpack.c.b16 %v3340, %v3340
  %v3469 = vpack.c.b16 %v3341, %v3341
  %v3470 = vpack.c.b16 %v3342, %v3342
  %v3471 = vpack.c.b16 %v3343, %v3343
  %v3472 = vpack.c.b16 %v3344, %v3344
  %v3473 = vpack.c.b16 %v3345, %v3345
  %v3474 = vpack.c.b16 %v3346, %v3346
  %v3475 = vpack.c.b16 %v3347, %v3347
  %v3476 = vpack.c.b16 %v3348, %v3348
  %v3477 = vpack.c.b16 %v3349, %v3349
  %v3478 = vpack.c.b16 %v3350, %v3350
  %v3479 = vpack.c.b16 %v3351, %v3351
  %v3480 = vpack.c.b16 %v3352, %v3352
  %v3481 = vpack.c.b16 %v3353, %v3353
  %v3482 = vpack.c.b16 %v3354, %v3354
  %v3483 = vpack.c.b16 %v3355, %v3355
  %v3484 = vpack.c.b16 %v3356, %v3356
  %v3485 = vpack.c.b16 %v3357, %v3357
  %v3486 = vpack.c.b16 %v3358, %v3358
  %v3487 = vpack.c.b16 %v3359, %v3359
  %v3488 = vpack.c.b16 %v3360, %v3360
  %v3489 = vpack.c.b16 %v3361, %v3361
  %v3490 = vpack.c.b16 %v3362, %v3362
  %v3491 = vpack.c.b16 %v3363, %v3363
  %v3492 = vpack.c.b16 %v3364, %v3364
  %v3493 = vpack.c.b16 %v3365, %v3365
  %v3494 = vpack.c.b16 %v3366, %v3366
  %v3495 = vpack.c.b16 %v3367, %v3367
  %v3496 = vpack.c.b16 %v3368, %v3368
  %v3497 = vpack.c.b16 %v3369, %v3369
  %v3498 = vpack.c.b16 %v3370, %v3370
  %v3499 = vpack.c.b16 %v3371, %v3371
  %v3500 = vpack.c.b16 %v3372, %v3372
  %v3501 = vpack.c.b16 %v3373, %v3373
  %v3502 = vpack.c.b16 %v3374, %v3374
  %v3503 = vpack.c.b16 %v3375, %v3375
  %v3504 = vpack.c.b16 %v3376, %v3376
  %v3505 = vpack.c.b16 %v3377, %v3377
  %v3506 = vpack.c.b16 %v3378, %v3378
  %v3507 = vpack.c.b16 %v3379, %v3379
  %v3508 = vpack.c.b16 %v3380, %v3380
  %v3509 = vpack.c.b16 %v3381, %v3381
  %v3510 = vpack.c.b16 %v3382, %v3382
  %v3511 = vpack.c.b16 %v3383, %v3383
  %v3512 = vpack.c.b16 %v3384, %v3384
  %v3513 = vpack.c.b16 %v3385, %v3385
  %v3514 = vpack.c.b16 %v3386, %v3386
  %v3515 = vpack.c.b16 %v3387, %v3387
  %v3516 = vpack.c.b16 %v3388, %v3388
  %v3517 = vpack.c.b16 %v3389, %v3389
  %v3518 = vpack.c.b16 %v3390, %v3390
  %v3519 = vpack.c.b16 %v3391, %v3391
  %v3520 = vpack.c.b16 %v3392, %v3392
  %v3521 = vpack.c.b16 %v3393, %v3393
  %v3522 = vpack.c.b16 %v3394, %v3394
  %v3523 = vpack.c.b16 %v3395, %v3395
  %v3524 = vpack.c.b16 %v3396, %v3396
  %v3525 = vpack.c.b16 %v3397, %v3397
  %v3526 = vpack.c.b16 %v3398, %v3398
  %v3527 = vpack.c.b16 %v3399, %v3399
  %v3528 = vpack.c.b16 %v3400, %v3400
  %v3529 = vpack.c.b16 %v3401, %v3401
  %v3530 = vpack.c.b16 %v3402, %v3402
  %v3531 = vpack.c.b16 %v3403, %v3403
  %v3532 = vpack.c.b16 %v3404, %v3404
  %v3533 = vpack.c.b16 %v3405, %v3405
  %vm3662 = vcmask 27648
  %3663 = vst.msk [vmem:[%s3] sm:$0xf] %vm3662, %v3406
  %3664 = vst.msk [vmem:[%s3 + $0x4] sm:$0xf] %vm3662, %v3407
  %3665 = vst.msk [vmem:[%s3 + $0x8] sm:$0xf] %vm3662, %v3408
  %3666 = vst.msk [vmem:[%s3 + $0xc] sm:$0xf] %vm3662, %v3409
  %3667 = vst.msk [vmem:[%s3 + $0x10] sm:$0xf] %vm3662, %v3410
  %3668 = vst.msk [vmem:[%s3 + $0x14] sm:$0xf] %vm3662, %v3411
  %3669 = vst.msk [vmem:[%s3 + $0x18] sm:$0xf] %vm3662, %v3412
  %3670 = vst.msk [vmem:[%s3 + $0x1c] sm:$0xf] %vm3662, %v3413
  %3671 = vst.msk [vmem:[%s3 + $0x20] sm:$0xf] %vm3662, %v3414
  %3672 = vst.msk [vmem:[%s3 + $0x24] sm:$0xf] %vm3662, %v3415
  %3673 = vst.msk [vmem:[%s3 + $0x28] sm:$0xf] %vm3662, %v3416
  %3674 = vst.msk [vmem:[%s3 + $0x2c] sm:$0xf] %vm3662, %v3417
  %3675 = vst.msk [vmem:[%s3 + $0x30] sm:$0xf] %vm3662, %v3418
  %3676 = vst.msk [vmem:[%s3 + $0x34] sm:$0xf] %vm3662, %v3419
  %3677 = vst.msk [vmem:[%s3 + $0x38] sm:$0xf] %vm3662, %v3420
  %3678 = vst.msk [vmem:[%s3 + $0x3c] sm:$0xf] %vm3662, %v3421
  %3679 = vst.msk [vmem:[%s3 + $0x40] sm:$0xf] %vm3662, %v3422
  %3680 = vst.msk [vmem:[%s3 + $0x44] sm:$0xf] %vm3662, %v3423
  %3681 = vst.msk [vmem:[%s3 + $0x48] sm:$0xf] %vm3662, %v3424
  %3682 = vst.msk [vmem:[%s3 + $0x4c] sm:$0xf] %vm3662, %v3425
  %3683 = vst.msk [vmem:[%s3 + $0x50] sm:$0xf] %vm3662, %v3426
  %3684 = vst.msk [vmem:[%s3 + $0x54] sm:$0xf] %vm3662, %v3427
  %3685 = vst.msk [vmem:[%s3 + $0x58] sm:$0xf] %vm3662, %v3428
  %3686 = vst.msk [vmem:[%s3 + $0x5c] sm:$0xf] %vm3662, %v3429
  %3687 = vst.msk [vmem:[%s3 + $0x60] sm:$0xf] %vm3662, %v3430
  %3688 = vst.msk [vmem:[%s3 + $0x64] sm:$0xf] %vm3662, %v3431
  %3689 = vst.msk [vmem:[%s3 + $0x68] sm:$0xf] %vm3662, %v3432
  %3690 = vst.msk [vmem:[%s3 + $0x6c] sm:$0xf] %vm3662, %v3433
  %3691 = vst.msk [vmem:[%s3 + $0x70] sm:$0xf] %vm3662, %v3434
  %3692 = vst.msk [vmem:[%s3 + $0x74] sm:$0xf] %vm3662, %v3435
  %3693 = vst.msk [vmem:[%s3 + $0x78] sm:$0xf] %vm3662, %v3436
  %3694 = vst.msk [vmem:[%s3 + $0x7c] sm:$0xf] %vm3662, %v3437
  %3695 = vst.msk [vmem:[%s3 + $0x80] sm:$0xf] %vm3662, %v3438
  %3696 = vst.msk [vmem:[%s3 + $0x84] sm:$0xf] %vm3662, %v3439
  %3697 = vst.msk [vmem:[%s3 + $0x88] sm:$0xf] %vm3662, %v3440
  %3698 = vst.msk [vmem:[%s3 + $0x8c] sm:$0xf] %vm3662, %v3441
  %3699 = vst.msk [vmem:[%s3 + $0x90] sm:$0xf] %vm3662, %v3442
  %3700 = vst.msk [vmem:[%s3 + $0x94] sm:$0xf] %vm3662, %v3443
  %3701 = vst.msk [vmem:[%s3 + $0x98] sm:$0xf] %vm3662, %v3444
  %3702 = vst.msk [vmem:[%s3 + $0x9c] sm:$0xf] %vm3662, %v3445
  %3703 = vst.msk [vmem:[%s3 + $0xa0] sm:$0xf] %vm3662, %v3446
  %3704 = vst.msk [vmem:[%s3 + $0xa4] sm:$0xf] %vm3662, %v3447
  %3705 = vst.msk [vmem:[%s3 + $0xa8] sm:$0xf] %vm3662, %v3448
  %3706 = vst.msk [vmem:[%s3 + $0xac] sm:$0xf] %vm3662, %v3449
  %3707 = vst.msk [vmem:[%s3 + $0xb0] sm:$0xf] %vm3662, %v3450
  %3708 = vst.msk [vmem:[%s3 + $0xb4] sm:$0xf] %vm3662, %v3451
  %3709 = vst.msk [vmem:[%s3 + $0xb8] sm:$0xf] %vm3662, %v3452
  %3710 = vst.msk [vmem:[%s3 + $0xbc] sm:$0xf] %vm3662, %v3453
  %3711 = vst.msk [vmem:[%s3 + $0xc0] sm:$0xf] %vm3662, %v3454
  %3712 = vst.msk [vmem:[%s3 + $0xc4] sm:$0xf] %vm3662, %v3455
  %3713 = vst.msk [vmem:[%s3 + $0xc8] sm:$0xf] %vm3662, %v3456
  %3714 = vst.msk [vmem:[%s3 + $0xcc] sm:$0xf] %vm3662, %v3457
  %3715 = vst.msk [vmem:[%s3 + $0xd0] sm:$0xf] %vm3662, %v3458
  %3716 = vst.msk [vmem:[%s3 + $0xd4] sm:$0xf] %vm3662, %v3459
  %3717 = vst.msk [vmem:[%s3 + $0xd8] sm:$0xf] %vm3662, %v3460
  %3718 = vst.msk [vmem:[%s3 + $0xdc] sm:$0xf] %vm3662, %v3461
  %3719 = vst.msk [vmem:[%s3 + $0xe0] sm:$0xf] %vm3662, %v3462
  %3720 = vst.msk [vmem:[%s3 + $0xe4] sm:$0xf] %vm3662, %v3463
  %3721 = vst.msk [vmem:[%s3 + $0xe8] sm:$0xf] %vm3662, %v3464
  %3722 = vst.msk [vmem:[%s3 + $0xec] sm:$0xf] %vm3662, %v3465
  %3723 = vst.msk [vmem:[%s3 + $0xf0] sm:$0xf] %vm3662, %v3466
  %3724 = vst.msk [vmem:[%s3 + $0xf4] sm:$0xf] %vm3662, %v3467
  %3725 = vst.msk [vmem:[%s3 + $0xf8] sm:$0xf] %vm3662, %v3468
  %3726 = vst.msk [vmem:[%s3 + $0xfc] sm:$0xf] %vm3662, %v3469
  %3727 = vst.msk [vmem:[%s3 + $0x100] sm:$0xf] %vm3662, %v3470
  %3728 = vst.msk [vmem:[%s3 + $0x104] sm:$0xf] %vm3662, %v3471
  %3729 = vst.msk [vmem:[%s3 + $0x108] sm:$0xf] %vm3662, %v3472
  %3730 = vst.msk [vmem:[%s3 + $0x10c] sm:$0xf] %vm3662, %v3473
  %3731 = vst.msk [vmem:[%s3 + $0x110] sm:$0xf] %vm3662, %v3474
  %3732 = vst.msk [vmem:[%s3 + $0x114] sm:$0xf] %vm3662, %v3475
  %3733 = vst.msk [vmem:[%s3 + $0x118] sm:$0xf] %vm3662, %v3476
  %3734 = vst.msk [vmem:[%s3 + $0x11c] sm:$0xf] %vm3662, %v3477
  %3735 = vst.msk [vmem:[%s3 + $0x120] sm:$0xf] %vm3662, %v3478
  %3736 = vst.msk [vmem:[%s3 + $0x124] sm:$0xf] %vm3662, %v3479
  %3737 = vst.msk [vmem:[%s3 + $0x128] sm:$0xf] %vm3662, %v3480
  %3738 = vst.msk [vmem:[%s3 + $0x12c] sm:$0xf] %vm3662, %v3481
  %3739 = vst.msk [vmem:[%s3 + $0x130] sm:$0xf] %vm3662, %v3482
  %3740 = vst.msk [vmem:[%s3 + $0x134] sm:$0xf] %vm3662, %v3483
  %3741 = vst.msk [vmem:[%s3 + $0x138] sm:$0xf] %vm3662, %v3484
  %3742 = vst.msk [vmem:[%s3 + $0x13c] sm:$0xf] %vm3662, %v3485
  %3743 = vst.msk [vmem:[%s3 + $0x140] sm:$0xf] %vm3662, %v3486
  %3744 = vst.msk [vmem:[%s3 + $0x144] sm:$0xf] %vm3662, %v3487
  %3745 = vst.msk [vmem:[%s3 + $0x148] sm:$0xf] %vm3662, %v3488
  %3746 = vst.msk [vmem:[%s3 + $0x14c] sm:$0xf] %vm3662, %v3489
  %3747 = vst.msk [vmem:[%s3 + $0x150] sm:$0xf] %vm3662, %v3490
  %3748 = vst.msk [vmem:[%s3 + $0x154] sm:$0xf] %vm3662, %v3491
  %3749 = vst.msk [vmem:[%s3 + $0x158] sm:$0xf] %vm3662, %v3492
  %3750 = vst.msk [vmem:[%s3 + $0x15c] sm:$0xf] %vm3662, %v3493
  %3751 = vst.msk [vmem:[%s3 + $0x160] sm:$0xf] %vm3662, %v3494
  %3752 = vst.msk [vmem:[%s3 + $0x164] sm:$0xf] %vm3662, %v3495
  %3753 = vst.msk [vmem:[%s3 + $0x168] sm:$0xf] %vm3662, %v3496
  %3754 = vst.msk [vmem:[%s3 + $0x16c] sm:$0xf] %vm3662, %v3497
  %3755 = vst.msk [vmem:[%s3 + $0x170] sm:$0xf] %vm3662, %v3498
  %3756 = vst.msk [vmem:[%s3 + $0x174] sm:$0xf] %vm3662, %v3499
  %3757 = vst.msk [vmem:[%s3 + $0x178] sm:$0xf] %vm3662, %v3500
  %3758 = vst.msk [vmem:[%s3 + $0x17c] sm:$0xf] %vm3662, %v3501
  %3759 = vst.msk [vmem:[%s3 + $0x180] sm:$0xf] %vm3662, %v3502
  %3760 = vst.msk [vmem:[%s3 + $0x184] sm:$0xf] %vm3662, %v3503
  %3761 = vst.msk [vmem:[%s3 + $0x188] sm:$0xf] %vm3662, %v3504
  %3762 = vst.msk [vmem:[%s3 + $0x18c] sm:$0xf] %vm3662, %v3505
  %3763 = vst.msk [vmem:[%s3 + $0x190] sm:$0xf] %vm3662, %v3506
  %3764 = vst.msk [vmem:[%s3 + $0x194] sm:$0xf] %vm3662, %v3507
  %3765 = vst.msk [vmem:[%s3 + $0x198] sm:$0xf] %vm3662, %v3508
  %3766 = vst.msk [vmem:[%s3 + $0x19c] sm:$0xf] %vm3662, %v3509
  %3767 = vst.msk [vmem:[%s3 + $0x1a0] sm:$0xf] %vm3662, %v3510
  %3768 = vst.msk [vmem:[%s3 + $0x1a4] sm:$0xf] %vm3662, %v3511
  %3769 = vst.msk [vmem:[%s3 + $0x1a8] sm:$0xf] %vm3662, %v3512
  %3770 = vst.msk [vmem:[%s3 + $0x1ac] sm:$0xf] %vm3662, %v3513
  %3771 = vst.msk [vmem:[%s3 + $0x1b0] sm:$0xf] %vm3662, %v3514
  %3772 = vst.msk [vmem:[%s3 + $0x1b4] sm:$0xf] %vm3662, %v3515
  %3773 = vst.msk [vmem:[%s3 + $0x1b8] sm:$0xf] %vm3662, %v3516
  %3774 = vst.msk [vmem:[%s3 + $0x1bc] sm:$0xf] %vm3662, %v3517
  %3775 = vst.msk [vmem:[%s3 + $0x1c0] sm:$0xf] %vm3662, %v3518
  %3776 = vst.msk [vmem:[%s3 + $0x1c4] sm:$0xf] %vm3662, %v3519
  %3777 = vst.msk [vmem:[%s3 + $0x1c8] sm:$0xf] %vm3662, %v3520
  %3778 = vst.msk [vmem:[%s3 + $0x1cc] sm:$0xf] %vm3662, %v3521
  %3779 = vst.msk [vmem:[%s3 + $0x1d0] sm:$0xf] %vm3662, %v3522
  %3780 = vst.msk [vmem:[%s3 + $0x1d4] sm:$0xf] %vm3662, %v3523
  %3781 = vst.msk [vmem:[%s3 + $0x1d8] sm:$0xf] %vm3662, %v3524
  %3782 = vst.msk [vmem:[%s3 + $0x1dc] sm:$0xf] %vm3662, %v3525
  %3783 = vst.msk [vmem:[%s3 + $0x1e0] sm:$0xf] %vm3662, %v3526
  %3784 = vst.msk [vmem:[%s3 + $0x1e4] sm:$0xf] %vm3662, %v3527
  %3785 = vst.msk [vmem:[%s3 + $0x1e8] sm:$0xf] %vm3662, %v3528
  %3786 = vst.msk [vmem:[%s3 + $0x1ec] sm:$0xf] %vm3662, %v3529
  %3787 = vst.msk [vmem:[%s3 + $0x1f0] sm:$0xf] %vm3662, %v3530
  %3788 = vst.msk [vmem:[%s3 + $0x1f4] sm:$0xf] %vm3662, %v3531
  %3789 = vst.msk [vmem:[%s3 + $0x1f8] sm:$0xf] %vm3662, %v3532
  %3790 = vst.msk [vmem:[%s3 + $0x1fc] sm:$0xf] %vm3662, %v3533
  // Predicated region
  $region14: #{generator_forward.6} parent=0 // pred_check
    _
  $region15: #{generator_forward.6} parent=0 // pred_check_branch
    %3792 = sbr.rel (0) target = $region17
  $region16: #{generator_forward.6} parent=0 // pred_region
    _
  $region17: #{generator_forward.6} parent=0 // pred_fallthru
    _
  // Predicated region
  $region18: #{generator_forward.6} parent=0 // pred_check
    _
  $region19: #{generator_forward.6} parent=0 // pred_check_branch
    %3794 = sbr.rel (0) target = $region21
  $region20: #{generator_forward.6} parent=0 // pred_region
    _
  $region21: #{generator_forward.6} parent=0 // pred_fallthru
    _

// kernel: generator_forward.8
$region0: #{generator_forward.8}
  #allocation0 [shape = 'u32[]', space=smem, size = 0x4, offset = 0x4, fixed_abs, tag = 'smem constant byte address 0x4 - core index']
  #allocation1 [shape = 'u32[144,128]{1,0:T(1,128)}', space=vmem, size = 0x12000, scoped, tag = 'internal scratch']
  %s0 = inlined_call_operand.vmem [shape: bf16[64,64], index: 0, kind: input, shape index: {}]
  %s1 = inlined_call_operand.vmem [shape: bf16[4,32,256], index: 1, kind: input, shape index: {}]
  %s2 = inlined_call_operand.vmem [shape: bf16[9,64], index: 2, kind: input, shape index: {}]
  %s3 = inlined_call_operand.vmem [shape: f32[32,2], index: 3, kind: input, shape index: {}]
  %s4 = inlined_call_operand.vmem [shape: bf16[4,32,64], index: 4, kind: output, shape index: {}]
  %s5 = sld [smem:[#allocation0]]
  $region26: #{generator_forward.8} parent=0
    _
  %s7 = ssub.s32 1, %s5
  %s8 = scalar_select 0, %s7, %s5
  // Predicated region
  $region2: #{generator_forward.8} parent=0 // pred_check
    _
  $region3: #{generator_forward.8} parent=0 // pred_check_branch
    %10 = sbr.rel (0) target = $region5
  $region4: #{generator_forward.8} parent=0 // pred_region
    _
  $region5: #{generator_forward.8} parent=0 // pred_fallthru
    _
  // Predicated region
  $region6: #{generator_forward.8} parent=0 // pred_check
    _
  $region7: #{generator_forward.8} parent=0 // pred_check_branch
    %12 = sbr.rel (0) target = $region9
  $region8: #{generator_forward.8} parent=0 // pred_region
    _
  $region9: #{generator_forward.8} parent=0 // pred_fallthru
    _
  // Predicated region
  $region10: #{generator_forward.8} parent=0 // pred_check
    _
  $region11: #{generator_forward.8} parent=0 // pred_check_branch
    %14 = sbr.rel (0) target = $region13
  $region12: #{generator_forward.8} parent=0 // pred_region
    _
  $region13: #{generator_forward.8} parent=0 // pred_fallthru
    _
  // Predicated region
  $region14: #{generator_forward.8} parent=0 // pred_check
    _
  $region15: #{generator_forward.8} parent=0 // pred_check_branch
    %16 = sbr.rel (0) target = $region17
  $region16: #{generator_forward.8} parent=0 // pred_region
    _
  $region17: #{generator_forward.8} parent=0 // pred_fallthru
    _
  %v18 = vld [vmem:[%s0] sm:$0xf]
  %v19 = vld [vmem:[%s0 + $0x4] sm:$0xf]
  %v20 = vld [vmem:[%s0 + $0x8] sm:$0xf]
  %v21 = vld [vmem:[%s0 + $0xc] sm:$0xf]
  %v22 = vld [vmem:[%s0 + $0x10] sm:$0xf]
  %v23 = vld [vmem:[%s0 + $0x14] sm:$0xf]
  %v24 = vld [vmem:[%s0 + $0x18] sm:$0xf]
  %v25 = vld [vmem:[%s0 + $0x1c] sm:$0xf]
  %v26 = vld [vmem:[%s2] sm:$0xf]
  %v27 = vld [vmem:[%s2 + $0x4] sm:$0x1]
  %v28 = vld [vmem:[%s3] sm:$0xff]
  %v29 = vld [vmem:[%s3 + $0x8] sm:$0xff]
  %v30 = vld [vmem:[%s3 + $0x10] sm:$0xff]
  %v31 = vld [vmem:[%s3 + $0x18] sm:$0xff]
  %v33 = vpack.i.b16 %v26, %v26
  %v35 = vlaneseq
  %v36 = vshrl.u32 %v35, 7
  %v37 = vsub.s32 2, %v36
  %v38 = vrot.slane %v33, %v37
  %v40 = vunpack.c.l.b16 %v38
  %v41 = vpack.c.b16 %v40, %v40
  %v43 = vmul.bf16 %v18, %v41
  %v44 = vmul.bf16 %v19, %v41
  %v45 = vmul.bf16 %v20, %v41
  %v46 = vmul.bf16 %v21, %v41
  %v47 = vmul.bf16 %v22, %v41
  %v48 = vmul.bf16 %v23, %v41
  %v49 = vmul.bf16 %v24, %v41
  %v50 = vmul.bf16 %v25, %v41
  %v59 = vunpack.c.l.b16 %v18
  %v60 = vunpack.c.l.b16 %v19
  %v61 = vunpack.c.l.b16 %v20
  %v62 = vunpack.c.l.b16 %v21
  %v63 = vunpack.c.l.b16 %v22
  %v64 = vunpack.c.l.b16 %v23
  %v65 = vunpack.c.l.b16 %v24
  %v66 = vunpack.c.l.b16 %v25
  %v67 = vpack.c.b16 %v60, %v59
  %v68 = vpack.c.b16 %v62, %v61
  %v69 = vpack.c.b16 %v64, %v63
  %v70 = vpack.c.b16 %v66, %v65
  %71 = vrot.lane.b32.xlu0 %v67, 65
  %v72 = vpop.permute.xlu0 %71
  %73 = vrot.lane.b32.xlu0 %v68, 65
  %v74 = vpop.permute.xlu0 %73
  %75 = vrot.lane.b32.xlu0 %v69, 65
  %v76 = vpop.permute.xlu0 %75
  %77 = vrot.lane.b32.xlu0 %v70, 65
  %v78 = vpop.permute.xlu0 %77
  %79 = vrot.lane.b32.xlu0 %v67, 1
  %v80 = vpop.permute.xlu0 %79
  %81 = vrot.lane.b32.xlu0 %v68, 1
  %v82 = vpop.permute.xlu0 %81
  %83 = vrot.lane.b32.xlu0 %v69, 1
  %v84 = vpop.permute.xlu0 %83
  %85 = vrot.lane.b32.xlu0 %v70, 1
  %v86 = vpop.permute.xlu0 %85
  %vm87 = vcmask 7168
  %v90 = vsel %vm87, %v72, %v80
  %v94 = vsel %vm87, %v74, %v82
  %v98 = vsel %vm87, %v76, %v84
  %v102 = vsel %vm87, %v78, %v86
  %v104 = vshrl.u32 %v26, 16
  %v105 = vpack.i.b16 %v104, %v104
  %v107 = vlaneseq
  %v108 = vshrl.u32 %v107, 7
  %v109 = vsub.s32 1, %v108
  %v110 = vrot.slane %v105, %v109
  %v111 = vmul.bf16 %v90, %v110
  %v112 = vmul.bf16 %v94, %v110
  %v113 = vmul.bf16 %v98, %v110
  %v114 = vmul.bf16 %v102, %v110
  %115 = vrot.lane.b32.xlu0 %v67, 68
  %v116 = vpop.permute.xlu0 %115
  %117 = vrot.lane.b32.xlu0 %v68, 68
  %v118 = vpop.permute.xlu0 %117
  %119 = vrot.lane.b32.xlu0 %v69, 68
  %v120 = vpop.permute.xlu0 %119
  %121 = vrot.lane.b32.xlu0 %v70, 68
  %v122 = vpop.permute.xlu0 %121
  %123 = vrot.lane.b32.xlu0 %v67, 4
  %v124 = vpop.permute.xlu0 %123
  %125 = vrot.lane.b32.xlu0 %v68, 4
  %v126 = vpop.permute.xlu0 %125
  %127 = vrot.lane.b32.xlu0 %v69, 4
  %v128 = vpop.permute.xlu0 %127
  %129 = vrot.lane.b32.xlu0 %v70, 4
  %v130 = vpop.permute.xlu0 %129
  %vm131 = vcmask 31744
  %v134 = vsel %vm131, %v116, %v124
  %v138 = vsel %vm131, %v118, %v126
  %v142 = vsel %vm131, %v120, %v128
  %v146 = vsel %vm131, %v122, %v130
  %v148 = vlaneseq
  %v149 = vshrl.u32 %v148, 7
  %v150 = vsub.s32 0, %v149
  %v151 = vrot.slane %v105, %v150
  %v152 = vmul.bf16 %v134, %v151
  %v153 = vmul.bf16 %v138, %v151
  %v154 = vmul.bf16 %v142, %v151
  %v155 = vmul.bf16 %v146, %v151
  %156 = vrot.lane.b32.xlu0 %v67, 69
  %v157 = vpop.permute.xlu0 %156
  %158 = vrot.lane.b32.xlu0 %v68, 69
  %v159 = vpop.permute.xlu0 %158
  %160 = vrot.lane.b32.xlu0 %v69, 69
  %v161 = vpop.permute.xlu0 %160
  %162 = vrot.lane.b32.xlu0 %v70, 69
  %v163 = vpop.permute.xlu0 %162
  %164 = vrot.lane.b32.xlu0 %v67, 5
  %v165 = vpop.permute.xlu0 %164
  %166 = vrot.lane.b32.xlu0 %v68, 5
  %v167 = vpop.permute.xlu0 %166
  %168 = vrot.lane.b32.xlu0 %v69, 5
  %v169 = vpop.permute.xlu0 %168
  %170 = vrot.lane.b32.xlu0 %v70, 5
  %v171 = vpop.permute.xlu0 %170
  %vm172 = vcmask 39936
  %v175 = vsel %vm172, %v157, %v165
  %v179 = vsel %vm172, %v159, %v167
  %v183 = vsel %vm172, %v161, %v169
  %v187 = vsel %vm172, %v163, %v171
  %v189 = vlaneseq
  %v190 = vshrl.u32 %v189, 7
  %v191 = vsub.s32 0, %v190
  %v192 = vrot.slane %v33, %v191
  %v193 = vmul.bf16 %v175, %v192
  %v194 = vmul.bf16 %v179, %v192
  %v195 = vmul.bf16 %v183, %v192
  %v196 = vmul.bf16 %v187, %v192
  %v205 = vunpack.c.l.b16 %v43
  %v206 = vunpack.c.l.b16 %v44
  %v207 = vunpack.c.l.b16 %v45
  %v208 = vunpack.c.l.b16 %v46
  %v209 = vunpack.c.l.b16 %v47
  %v210 = vunpack.c.l.b16 %v48
  %v211 = vunpack.c.l.b16 %v49
  %v212 = vunpack.c.l.b16 %v50
  %v213 = vpack.c.b16 %v206, %v205
  %v214 = vpack.c.b16 %v208, %v207
  %v215 = vpack.c.b16 %v210, %v209
  %v216 = vpack.c.b16 %v212, %v211
  %v221 = vld [vmem:[%s1] sm:$0xff]
  %v222 = vld [vmem:[%s1 + $0x8] sm:$0xff]
  %v223 = vld [vmem:[%s1 + $0x10] sm:$0xff]
  %v224 = vld [vmem:[%s1 + $0x18] sm:$0xff]
  %v229 = vunpack.c.l.b16 %v221
  %v230 = vunpack.c.h.b16 %v221
  %v231 = vunpack.c.l.b16 %v222
  %v232 = vunpack.c.h.b16 %v222
  %v233 = vunpack.c.l.b16 %v223
  %v234 = vunpack.c.h.b16 %v223
  %v235 = vunpack.c.l.b16 %v224
  %v236 = vunpack.c.h.b16 %v224
  %v237 = vpack.c.b16 %v231, %v229
  %v238 = vpack.c.b16 %v232, %v230
  %v239 = vpack.c.b16 %v235, %v233
  %v240 = vpack.c.b16 %v236, %v234
  %245 = vmatprep.subr.bf16.mxu0 0
  %246 = vmatpush1.bf16.msra.mxu0 %v213
  %247 = vmatprep.subr.bf16.mxu0 0
  %248 = vmatpush1.bf16.msra.mxu0 %v214
  %249 = vmatprep.subr.bf16.mxu0 0
  %250 = vmatpush1.bf16.msra.mxu0 %v215
  %251 = vmatprep.subr.bf16.mxu0 0
  %252 = vmatpush1.bf16.msra.mxu0 %v216
  %253 = vmatprep.subr.bf16.mxu0 0
  %254 = vmatpush1.bf16.msra.mxu0 %v111
  %255 = vmatprep.subr.bf16.mxu0 0
  %256 = vmatpush1.bf16.msra.mxu0 %v112
  %257 = vmatprep.subr.bf16.mxu0 0
  %258 = vmatpush1.bf16.msra.mxu0 %v113
  %259 = vmatprep.subr.bf16.mxu0 0
  %260 = vmatpush1.bf16.msra.mxu0 %v114
  %261 = vmatprep.subr.bf16.mxu0 0
  %262 = vmatpush1.bf16.msra.mxu0 %v152
  %263 = vmatprep.subr.bf16.mxu0 0
  %264 = vmatpush1.bf16.msra.mxu0 %v153
  %265 = vmatprep.subr.bf16.mxu0 0
  %266 = vmatpush1.bf16.msra.mxu0 %v154
  %267 = vmatprep.subr.bf16.mxu0 0
  %268 = vmatpush1.bf16.msra.mxu0 %v155
  %269 = vmatprep.subr.bf16.mxu0 0
  %270 = vmatpush1.bf16.msra.mxu0 %v193
  %271 = vmatprep.subr.bf16.mxu0 0
  %272 = vmatpush1.bf16.msra.mxu0 %v194
  %273 = vmatprep.subr.bf16.mxu0 0
  %274 = vmatpush1.bf16.msra.mxu0 %v195
  %275 = vmatprep.subr.bf16.mxu0 0
  %276 = vmatpush1.bf16.msra.mxu0 %v196
  %277 = vmatprep.mubr.bf16.mxu0 %v238
  %278 = vmatmul.mubr.bf16.gmra.mrb[0].mxu0 %v237
  %v279 = vpop.f32.mrb[0].mxu0
  %v280 = vadd.f32 0.0, %v279
  %v281 = vpop.f32.mrb[0].mxu0
  %v282 = vpop.f32.mrb[0].mxu0
  %v283 = vadd.f32 0.0, %v282
  %v284 = vpop.f32.mrb[0].mxu0
  %285 = vmatprep.mubr.bf16.mxu0 %v240
  %286 = vmatmul.mubr.bf16.gmra.mrb[0].mxu0 %v239
  %v287 = vpop.f32.mrb[0].mxu0
  %v288 = vadd.f32 0.0, %v287
  %v289 = vpop.f32.mrb[0].mxu0
  %v290 = vpop.f32.mrb[0].mxu0
  %v291 = vadd.f32 0.0, %v290
  %v292 = vpop.f32.mrb[0].mxu0
  %293 = vdwg.mxu0
  %295 = vset.pattern.permute.xlu0 0
  %296 = vperm.xlu0 %295, %v28
  %v297 = vpop.permute.xlu0 %296
  %300 = vset.pattern.permute.xlu0 0
  %301 = vperm.xlu0 %300, %v29
  %v302 = vpop.permute.xlu0 %301
  %305 = vset.pattern.permute.xlu0 0
  %306 = vperm.xlu0 %305, %v30
  %v307 = vpop.permute.xlu0 %306
  %310 = vset.pattern.permute.xlu0 0
  %311 = vperm.xlu0 %310, %v31
  %v312 = vpop.permute.xlu0 %311
  %v314 = vmul.f32 %v280, %v297
  %v315 = vmul.f32 %v283, %v302
  %v316 = vmul.f32 %v288, %v307
  %v317 = vmul.f32 %v291, %v312
  %318 = vset.pattern.permute.xlu0 1
  %319 = vperm.xlu0 %318, %v28
  %v320 = vpop.permute.xlu0 %319
  %322 = vset.pattern.permute.xlu0 1
  %323 = vperm.xlu0 %322, %v29
  %v324 = vpop.permute.xlu0 %323
  %326 = vset.pattern.permute.xlu0 1
  %327 = vperm.xlu0 %326, %v30
  %v328 = vpop.permute.xlu0 %327
  %330 = vset.pattern.permute.xlu0 1
  %331 = vperm.xlu0 %330, %v31
  %v332 = vpop.permute.xlu0 %331
  %v334 = vadd.f32 %v314, %v320
  %v335 = vadd.f32 %v315, %v324
  %v336 = vadd.f32 %v316, %v328
  %v337 = vadd.f32 %v317, %v332
  %v338 = vmax.f32 %v334, 0.0
  %v339 = vmax.f32 %v335, 0.0
  %v340 = vmax.f32 %v336, 0.0
  %v341 = vmax.f32 %v337, 0.0
  %v342 = vpack.c.bf16 %v339, %v338
  %v343 = vpack.c.bf16 %v341, %v340
  %v346 = vunpack.c.l.b16 %v342
  %v347 = vunpack.c.h.b16 %v342
  %v348 = vunpack.c.l.b16 %v343
  %v349 = vunpack.c.h.b16 %v343
  %v350 = vpack.c.b16 %v346, %v346
  %v351 = vpack.c.b16 %v347, %v347
  %v352 = vpack.c.b16 %v348, %v348
  %v353 = vpack.c.b16 %v349, %v349
  %vm358 = vcmask 519168
  %359 = vst.msk [vmem:[%s4] sm:$0xf] %vm358, %v350
  %360 = vst.msk [vmem:[%s4 + $0x4] sm:$0xf] %vm358, %v351
  %361 = vst.msk [vmem:[%s4 + $0x8] sm:$0xf] %vm358, %v352
  %362 = vst.msk [vmem:[%s4 + $0xc] sm:$0xf] %vm358, %v353
  %363 = vrot.lane.b32.xlu0 %v67, 127
  %v364 = vpop.permute.xlu0 %363
  %365 = vrot.lane.b32.xlu0 %v68, 127
  %v366 = vpop.permute.xlu0 %365
  %367 = vrot.lane.b32.xlu0 %v69, 127
  %v368 = vpop.permute.xlu0 %367
  %369 = vrot.lane.b32.xlu0 %v70, 127
  %v370 = vpop.permute.xlu0 %369
  %371 = vrot.lane.b32.xlu0 %v67, 63
  %v372 = vpop.permute.xlu0 %371
  %373 = vrot.lane.b32.xlu0 %v68, 63
  %v374 = vpop.permute.xlu0 %373
  %375 = vrot.lane.b32.xlu0 %v69, 63
  %v376 = vpop.permute.xlu0 %375
  %377 = vrot.lane.b32.xlu0 %v70, 63
  %v378 = vpop.permute.xlu0 %377
  %vm379 = vcmask 515072
  %v382 = vsel %vm379, %v364, %v372
  %v386 = vsel %vm379, %v366, %v374
  %v390 = vsel %vm379, %v368, %v376
  %v394 = vsel %vm379, %v370, %v378
  %v396 = vlaneseq
  %v397 = vshrl.u32 %v396, 7
  %v398 = vsub.s32 2, %v397
  %v399 = vrot.slane %v105, %v398
  %v400 = vmul.bf16 %v382, %v399
  %v401 = vmul.bf16 %v386, %v399
  %v402 = vmul.bf16 %v390, %v399
  %v403 = vmul.bf16 %v394, %v399
  %404 = vrot.lane.b32.xlu0 %v67, 67
  %v405 = vpop.permute.xlu0 %404
  %406 = vrot.lane.b32.xlu0 %v68, 67
  %v407 = vpop.permute.xlu0 %406
  %408 = vrot.lane.b32.xlu0 %v69, 67
  %v409 = vpop.permute.xlu0 %408
  %410 = vrot.lane.b32.xlu0 %v70, 67
  %v411 = vpop.permute.xlu0 %410
  %412 = vrot.lane.b32.xlu0 %v67, 3
  %v413 = vpop.permute.xlu0 %412
  %414 = vrot.lane.b32.xlu0 %v68, 3
  %v415 = vpop.permute.xlu0 %414
  %416 = vrot.lane.b32.xlu0 %v69, 3
  %v417 = vpop.permute.xlu0 %416
  %418 = vrot.lane.b32.xlu0 %v70, 3
  %v419 = vpop.permute.xlu0 %418
  %vm420 = vcmask 23552
  %v423 = vsel %vm420, %v405, %v413
  %v427 = vsel %vm420, %v407, %v415
  %v431 = vsel %vm420, %v409, %v417
  %v435 = vsel %vm420, %v411, %v419
  %v437 = vlaneseq
  %v438 = vshrl.u32 %v437, 7
  %v439 = vsub.s32 1, %v438
  %v440 = vrot.slane %v33, %v439
  %v441 = vmul.bf16 %v423, %v440
  %v442 = vmul.bf16 %v427, %v440
  %v443 = vmul.bf16 %v431, %v440
  %v444 = vmul.bf16 %v435, %v440
  %s445 = scalar_lea.vmem %s1, 32
  %v446 = vld [vmem:[%s445] sm:$0xff]
  %v447 = vld [vmem:[%s445 + $0x8] sm:$0xff]
  %v448 = vld [vmem:[%s445 + $0x10] sm:$0xff]
  %v449 = vld [vmem:[%s445 + $0x18] sm:$0xff]
  %v454 = vunpack.c.l.b16 %v446
  %v455 = vunpack.c.h.b16 %v446
  %v456 = vunpack.c.l.b16 %v447
  %v457 = vunpack.c.h.b16 %v447
  %v458 = vunpack.c.l.b16 %v448
  %v459 = vunpack.c.h.b16 %v448
  %v460 = vunpack.c.l.b16 %v449
  %v461 = vunpack.c.h.b16 %v449
  %v462 = vpack.c.b16 %v456, %v454
  %v463 = vpack.c.b16 %v457, %v455
  %v464 = vpack.c.b16 %v460, %v458
  %v465 = vpack.c.b16 %v461, %v459
  %470 = vmatprep.subr.bf16.mxu0 0
  %471 = vmatpush1.bf16.msra.mxu0 %v400
  %472 = vmatprep.subr.bf16.mxu0 0
  %473 = vmatpush1.bf16.msra.mxu0 %v401
  %474 = vmatprep.subr.bf16.mxu0 0
  %475 = vmatpush1.bf16.msra.mxu0 %v402
  %476 = vmatprep.subr.bf16.mxu0 0
  %477 = vmatpush1.bf16.msra.mxu0 %v403
  %478 = vmatprep.subr.bf16.mxu0 0
  %479 = vmatpush1.bf16.msra.mxu0 %v213
  %480 = vmatprep.subr.bf16.mxu0 0
  %481 = vmatpush1.bf16.msra.mxu0 %v214
  %482 = vmatprep.subr.bf16.mxu0 0
  %483 = vmatpush1.bf16.msra.mxu0 %v215
  %484 = vmatprep.subr.bf16.mxu0 0
  %485 = vmatpush1.bf16.msra.mxu0 %v216
  %486 = vmatprep.subr.bf16.mxu0 0
  %487 = vmatpush1.bf16.msra.mxu0 %v441
  %488 = vmatprep.subr.bf16.mxu0 0
  %489 = vmatpush1.bf16.msra.mxu0 %v442
  %490 = vmatprep.subr.bf16.mxu0 0
  %491 = vmatpush1.bf16.msra.mxu0 %v443
  %492 = vmatprep.subr.bf16.mxu0 0
  %493 = vmatpush1.bf16.msra.mxu0 %v444
  %494 = vmatprep.subr.bf16.mxu0 0
  %495 = vmatpush1.bf16.msra.mxu0 %v152
  %496 = vmatprep.subr.bf16.mxu0 0
  %497 = vmatpush1.bf16.msra.mxu0 %v153
  %498 = vmatprep.subr.bf16.mxu0 0
  %499 = vmatpush1.bf16.msra.mxu0 %v154
  %500 = vmatprep.subr.bf16.mxu0 0
  %501 = vmatpush1.bf16.msra.mxu0 %v155
  %502 = vmatprep.mubr.bf16.mxu0 %v463
  %503 = vmatmul.mubr.bf16.gmra.mrb[0].mxu0 %v462
  %v504 = vpop.f32.mrb[0].mxu0
  %v505 = vadd.f32 0.0, %v504
  %v506 = vpop.f32.mrb[0].mxu0
  %v507 = vpop.f32.mrb[0].mxu0
  %v508 = vadd.f32 0.0, %v507
  %v509 = vpop.f32.mrb[0].mxu0
  %510 = vmatprep.mubr.bf16.mxu0 %v465
  %511 = vmatmul.mubr.bf16.gmra.mrb[0].mxu0 %v464
  %v512 = vpop.f32.mrb[0].mxu0
  %v513 = vadd.f32 0.0, %v512
  %v514 = vpop.f32.mrb[0].mxu0
  %v515 = vpop.f32.mrb[0].mxu0
  %v516 = vadd.f32 0.0, %v515
  %v517 = vpop.f32.mrb[0].mxu0
  %518 = vdwg.mxu0
  %v519 = vmul.f32 %v505, %v297
  %v520 = vmul.f32 %v508, %v302
  %v521 = vmul.f32 %v513, %v307
  %v522 = vmul.f32 %v516, %v312
  %v523 = vadd.f32 %v519, %v320
  %v524 = vadd.f32 %v520, %v324
  %v525 = vadd.f32 %v521, %v328
  %v526 = vadd.f32 %v522, %v332
  %v527 = vmax.f32 %v523, 0.0
  %v528 = vmax.f32 %v524, 0.0
  %v529 = vmax.f32 %v525, 0.0
  %v530 = vmax.f32 %v526, 0.0
  %v531 = vpack.c.bf16 %v528, %v527
  %v532 = vpack.c.bf16 %v530, %v529
  %v535 = vunpack.c.l.b16 %v531
  %v536 = vunpack.c.h.b16 %v531
  %v537 = vunpack.c.l.b16 %v532
  %v538 = vunpack.c.h.b16 %v532
  %v539 = vpack.c.b16 %v535, %v535
  %v540 = vpack.c.b16 %v536, %v536
  %v541 = vpack.c.b16 %v537, %v537
  %v542 = vpack.c.b16 %v538, %v538
  %s547 = scalar_lea.vmem %s4, 16
  %548 = vst.msk [vmem:[%s547] sm:$0xf] %vm358, %v539
  %549 = vst.msk [vmem:[%s547 + $0x4] sm:$0xf] %vm358, %v540
  %550 = vst.msk [vmem:[%s547 + $0x8] sm:$0xf] %vm358, %v541
  %551 = vst.msk [vmem:[%s547 + $0xc] sm:$0xf] %vm358, %v542
  %552 = vrot.lane.b32.xlu0 %v67, 124
  %v553 = vpop.permute.xlu0 %552
  %554 = vrot.lane.b32.xlu0 %v68, 124
  %v555 = vpop.permute.xlu0 %554
  %556 = vrot.lane.b32.xlu0 %v69, 124
  %v557 = vpop.permute.xlu0 %556
  %558 = vrot.lane.b32.xlu0 %v70, 124
  %v559 = vpop.permute.xlu0 %558
  %560 = vrot.lane.b32.xlu0 %v67, 60
  %v561 = vpop.permute.xlu0 %560
  %562 = vrot.lane.b32.xlu0 %v68, 60
  %v563 = vpop.permute.xlu0 %562
  %564 = vrot.lane.b32.xlu0 %v69, 60
  %v565 = vpop.permute.xlu0 %564
  %566 = vrot.lane.b32.xlu0 %v70, 60
  %v567 = vpop.permute.xlu0 %566
  %vm568 = vcmask 490496
  %v571 = vsel %vm568, %v553, %v561
  %v575 = vsel %vm568, %v555, %v563
  %v579 = vsel %vm568, %v557, %v565
  %v583 = vsel %vm568, %v559, %v567
  %v585 = vlaneseq
  %v586 = vshrl.u32 %v585, 7
  %v587 = vsub.s32 3, %v586
  %v588 = vrot.slane %v105, %v587
  %v589 = vmul.bf16 %v571, %v588
  %v590 = vmul.bf16 %v575, %v588
  %v591 = vmul.bf16 %v579, %v588
  %v592 = vmul.bf16 %v583, %v588
  %593 = vrot.lane.b32.xlu0 %v67, 125
  %v594 = vpop.permute.xlu0 %593
  %595 = vrot.lane.b32.xlu0 %v68, 125
  %v596 = vpop.permute.xlu0 %595
  %597 = vrot.lane.b32.xlu0 %v69, 125
  %v598 = vpop.permute.xlu0 %597
  %599 = vrot.lane.b32.xlu0 %v70, 125
  %v600 = vpop.permute.xlu0 %599
  %601 = vrot.lane.b32.xlu0 %v67, 61
  %v602 = vpop.permute.xlu0 %601
  %603 = vrot.lane.b32.xlu0 %v68, 61
  %v604 = vpop.permute.xlu0 %603
  %605 = vrot.lane.b32.xlu0 %v69, 61
  %v606 = vpop.permute.xlu0 %605
  %607 = vrot.lane.b32.xlu0 %v70, 61
  %v608 = vpop.permute.xlu0 %607
  %vm609 = vcmask 498688
  %v612 = vsel %vm609, %v594, %v602
  %v616 = vsel %vm609, %v596, %v604
  %v620 = vsel %vm609, %v598, %v606
  %v624 = vsel %vm609, %v600, %v608
  %v626 = vlaneseq
  %v627 = vshrl.u32 %v626, 7
  %v628 = vsub.s32 3, %v627
  %v629 = vrot.slane %v33, %v628
  %v630 = vmul.bf16 %v612, %v629
  %v631 = vmul.bf16 %v616, %v629
  %v632 = vmul.bf16 %v620, %v629
  %v633 = vmul.bf16 %v624, %v629
  %s634 = scalar_lea.vmem %s1, 64
  %v635 = vld [vmem:[%s634] sm:$0xff]
  %v636 = vld [vmem:[%s634 + $0x8] sm:$0xff]
  %v637 = vld [vmem:[%s634 + $0x10] sm:$0xff]
  %v638 = vld [vmem:[%s634 + $0x18] sm:$0xff]
  %v643 = vunpack.c.l.b16 %v635
  %v644 = vunpack.c.h.b16 %v635
  %v645 = vunpack.c.l.b16 %v636
  %v646 = vunpack.c.h.b16 %v636
  %v647 = vunpack.c.l.b16 %v637
  %v648 = vunpack.c.h.b16 %v637
  %v649 = vunpack.c.l.b16 %v638
  %v650 = vunpack.c.h.b16 %v638
  %v651 = vpack.c.b16 %v645, %v643
  %v652 = vpack.c.b16 %v646, %v644
  %v653 = vpack.c.b16 %v649, %v647
  %v654 = vpack.c.b16 %v650, %v648
  %659 = vmatprep.subr.bf16.mxu0 0
  %660 = vmatpush1.bf16.msra.mxu0 %v589
  %661 = vmatprep.subr.bf16.mxu0 0
  %662 = vmatpush1.bf16.msra.mxu0 %v590
  %663 = vmatprep.subr.bf16.mxu0 0
  %664 = vmatpush1.bf16.msra.mxu0 %v591
  %665 = vmatprep.subr.bf16.mxu0 0
  %666 = vmatpush1.bf16.msra.mxu0 %v592
  %667 = vmatprep.subr.bf16.mxu0 0
  %668 = vmatpush1.bf16.msra.mxu0 %v630
  %669 = vmatprep.subr.bf16.mxu0 0
  %670 = vmatpush1.bf16.msra.mxu0 %v631
  %671 = vmatprep.subr.bf16.mxu0 0
  %672 = vmatpush1.bf16.msra.mxu0 %v632
  %673 = vmatprep.subr.bf16.mxu0 0
  %674 = vmatpush1.bf16.msra.mxu0 %v633
  %675 = vmatprep.subr.bf16.mxu0 0
  %676 = vmatpush1.bf16.msra.mxu0 %v213
  %677 = vmatprep.subr.bf16.mxu0 0
  %678 = vmatpush1.bf16.msra.mxu0 %v214
  %679 = vmatprep.subr.bf16.mxu0 0
  %680 = vmatpush1.bf16.msra.mxu0 %v215
  %681 = vmatprep.subr.bf16.mxu0 0
  %682 = vmatpush1.bf16.msra.mxu0 %v216
  %683 = vmatprep.subr.bf16.mxu0 0
  %684 = vmatpush1.bf16.msra.mxu0 %v111
  %685 = vmatprep.subr.bf16.mxu0 0
  %686 = vmatpush1.bf16.msra.mxu0 %v112
  %687 = vmatprep.subr.bf16.mxu0 0
  %688 = vmatpush1.bf16.msra.mxu0 %v113
  %689 = vmatprep.subr.bf16.mxu0 0
  %690 = vmatpush1.bf16.msra.mxu0 %v114
  %691 = vmatprep.mubr.bf16.mxu0 %v652
  %692 = vmatmul.mubr.bf16.gmra.mrb[0].mxu0 %v651
  %v693 = vpop.f32.mrb[0].mxu0
  %v694 = vadd.f32 0.0, %v693
  %v695 = vpop.f32.mrb[0].mxu0
  %v696 = vpop.f32.mrb[0].mxu0
  %v697 = vadd.f32 0.0, %v696
  %v698 = vpop.f32.mrb[0].mxu0
  %699 = vmatprep.mubr.bf16.mxu0 %v654
  %700 = vmatmul.mubr.bf16.gmra.mrb[0].mxu0 %v653
  %v701 = vpop.f32.mrb[0].mxu0
  %v702 = vadd.f32 0.0, %v701
  %v703 = vpop.f32.mrb[0].mxu0
  %v704 = vpop.f32.mrb[0].mxu0
  %v705 = vadd.f32 0.0, %v704
  %v706 = vpop.f32.mrb[0].mxu0
  %707 = vdwg.mxu0
  %v708 = vmul.f32 %v694, %v297
  %v709 = vmul.f32 %v697, %v302
  %v710 = vmul.f32 %v702, %v307
  %v711 = vmul.f32 %v705, %v312
  %v712 = vadd.f32 %v708, %v320
  %v713 = vadd.f32 %v709, %v324
  %v714 = vadd.f32 %v710, %v328
  %v715 = vadd.f32 %v711, %v332
  %v716 = vmax.f32 %v712, 0.0
  %v717 = vmax.f32 %v713, 0.0
  %v718 = vmax.f32 %v714, 0.0
  %v719 = vmax.f32 %v715, 0.0
  %v720 = vpack.c.bf16 %v717, %v716
  %v721 = vpack.c.bf16 %v719, %v718
  %v724 = vunpack.c.l.b16 %v720
  %v725 = vunpack.c.h.b16 %v720
  %v726 = vunpack.c.l.b16 %v721
  %v727 = vunpack.c.h.b16 %v721
  %v728 = vpack.c.b16 %v724, %v724
  %v729 = vpack.c.b16 %v725, %v725
  %v730 = vpack.c.b16 %v726, %v726
  %v731 = vpack.c.b16 %v727, %v727
  %s736 = scalar_lea.vmem %s4, 32
  %737 = vst.msk [vmem:[%s736] sm:$0xf] %vm358, %v728
  %738 = vst.msk [vmem:[%s736 + $0x4] sm:$0xf] %vm358, %v729
  %739 = vst.msk [vmem:[%s736 + $0x8] sm:$0xf] %vm358, %v730
  %740 = vst.msk [vmem:[%s736 + $0xc] sm:$0xf] %vm358, %v731
  %741 = vrot.lane.b32.xlu0 %v67, 123
  %v742 = vpop.permute.xlu0 %741
  %743 = vrot.lane.b32.xlu0 %v68, 123
  %v744 = vpop.permute.xlu0 %743
  %745 = vrot.lane.b32.xlu0 %v69, 123
  %v746 = vpop.permute.xlu0 %745
  %747 = vrot.lane.b32.xlu0 %v70, 123
  %v748 = vpop.permute.xlu0 %747
  %749 = vrot.lane.b32.xlu0 %v67, 59
  %v750 = vpop.permute.xlu0 %749
  %751 = vrot.lane.b32.xlu0 %v68, 59
  %v752 = vpop.permute.xlu0 %751
  %753 = vrot.lane.b32.xlu0 %v69, 59
  %v754 = vpop.permute.xlu0 %753
  %755 = vrot.lane.b32.xlu0 %v70, 59
  %v756 = vpop.permute.xlu0 %755
  %vm757 = vcmask 482304
  %v760 = vsel %vm757, %v742, %v750
  %v764 = vsel %vm757, %v744, %v752
  %v768 = vsel %vm757, %v746, %v754
  %v772 = vsel %vm757, %v748, %v756
  %v775 = vpack.i.b16 %v27, %v27
  %v777 = vlaneseq
  %v778 = vshrl.u32 %v777, 7
  %v779 = vsub.s32 0, %v778
  %v780 = vrot.slane %v775, %v779
  %v781 = vmul.bf16 %v760, %v780
  %v782 = vmul.bf16 %v764, %v780
  %v783 = vmul.bf16 %v768, %v780
  %v784 = vmul.bf16 %v772, %v780
  %s785 = scalar_lea.vmem %s1, 96
  %v786 = vld [vmem:[%s785] sm:$0xff]
  %v787 = vld [vmem:[%s785 + $0x8] sm:$0xff]
  %v788 = vld [vmem:[%s785 + $0x10] sm:$0xff]
  %v789 = vld [vmem:[%s785 + $0x18] sm:$0xff]
  %v794 = vunpack.c.l.b16 %v786
  %v795 = vunpack.c.h.b16 %v786
  %v796 = vunpack.c.l.b16 %v787
  %v797 = vunpack.c.h.b16 %v787
  %v798 = vunpack.c.l.b16 %v788
  %v799 = vunpack.c.h.b16 %v788
  %v800 = vunpack.c.l.b16 %v789
  %v801 = vunpack.c.h.b16 %v789
  %v802 = vpack.c.b16 %v796, %v794
  %v803 = vpack.c.b16 %v797, %v795
  %v804 = vpack.c.b16 %v800, %v798
  %v805 = vpack.c.b16 %v801, %v799
  %810 = vmatprep.subr.bf16.mxu0 0
  %811 = vmatpush1.bf16.msra.mxu0 %v781
  %812 = vmatprep.subr.bf16.mxu0 0
  %813 = vmatpush1.bf16.msra.mxu0 %v782
  %814 = vmatprep.subr.bf16.mxu0 0
  %815 = vmatpush1.bf16.msra.mxu0 %v783
  %816 = vmatprep.subr.bf16.mxu0 0
  %817 = vmatpush1.bf16.msra.mxu0 %v784
  %818 = vmatprep.subr.bf16.mxu0 0
  %819 = vmatpush1.bf16.msra.mxu0 %v589
  %820 = vmatprep.subr.bf16.mxu0 0
  %821 = vmatpush1.bf16.msra.mxu0 %v590
  %822 = vmatprep.subr.bf16.mxu0 0
  %823 = vmatpush1.bf16.msra.mxu0 %v591
  %824 = vmatprep.subr.bf16.mxu0 0
  %825 = vmatpush1.bf16.msra.mxu0 %v592
  %826 = vmatprep.subr.bf16.mxu0 0
  %827 = vmatpush1.bf16.msra.mxu0 %v400
  %828 = vmatprep.subr.bf16.mxu0 0
  %829 = vmatpush1.bf16.msra.mxu0 %v401
  %830 = vmatprep.subr.bf16.mxu0 0
  %831 = vmatpush1.bf16.msra.mxu0 %v402
  %832 = vmatprep.subr.bf16.mxu0 0
  %833 = vmatpush1.bf16.msra.mxu0 %v403
  %834 = vmatprep.subr.bf16.mxu0 0
  %835 = vmatpush1.bf16.msra.mxu0 %v213
  %836 = vmatprep.subr.bf16.mxu0 0
  %837 = vmatpush1.bf16.msra.mxu0 %v214
  %838 = vmatprep.subr.bf16.mxu0 0
  %839 = vmatpush1.bf16.msra.mxu0 %v215
  %840 = vmatprep.subr.bf16.mxu0 0
  %841 = vmatpush1.bf16.msra.mxu0 %v216
  %842 = vmatprep.mubr.bf16.mxu0 %v803
  %843 = vmatmul.mubr.bf16.gmra.mrb[0].mxu0 %v802
  %v844 = vpop.f32.mrb[0].mxu0
  %v845 = vadd.f32 0.0, %v844
  %v846 = vpop.f32.mrb[0].mxu0
  %v847 = vpop.f32.mrb[0].mxu0
  %v848 = vadd.f32 0.0, %v847
  %v849 = vpop.f32.mrb[0].mxu0
  %850 = vmatprep.mubr.bf16.mxu0 %v805
  %851 = vmatmul.mubr.bf16.gmra.mrb[0].mxu0 %v804
  %v852 = vpop.f32.mrb[0].mxu0
  %v853 = vadd.f32 0.0, %v852
  %v854 = vpop.f32.mrb[0].mxu0
  %v855 = vpop.f32.mrb[0].mxu0
  %v856 = vadd.f32 0.0, %v855
  %v857 = vpop.f32.mrb[0].mxu0
  %858 = vdwg.mxu0
  %v859 = vmul.f32 %v845, %v297
  %v860 = vmul.f32 %v848, %v302
  %v861 = vmul.f32 %v853, %v307
  %v862 = vmul.f32 %v856, %v312
  %v863 = vadd.f32 %v859, %v320
  %v864 = vadd.f32 %v860, %v324
  %v865 = vadd.f32 %v861, %v328
  %v866 = vadd.f32 %v862, %v332
  %v867 = vmax.f32 %v863, 0.0
  %v868 = vmax.f32 %v864, 0.0
  %v869 = vmax.f32 %v865, 0.0
  %v870 = vmax.f32 %v866, 0.0
  %v871 = vpack.c.bf16 %v868, %v867
  %v872 = vpack.c.bf16 %v870, %v869
  %v875 = vunpack.c.l.b16 %v871
  %v876 = vunpack.c.h.b16 %v871
  %v877 = vunpack.c.l.b16 %v872
  %v878 = vunpack.c.h.b16 %v872
  %v879 = vpack.c.b16 %v875, %v875
  %v880 = vpack.c.b16 %v876, %v876
  %v881 = vpack.c.b16 %v877, %v877
  %v882 = vpack.c.b16 %v878, %v878
  %s887 = scalar_lea.vmem %s4, 48
  %888 = vst.msk [vmem:[%s887] sm:$0xf] %vm358, %v879
  %889 = vst.msk [vmem:[%s887 + $0x4] sm:$0xf] %vm358, %v880
  %890 = vst.msk [vmem:[%s887 + $0x8] sm:$0xf] %vm358, %v881
  %891 = vst.msk [vmem:[%s887 + $0xc] sm:$0xf] %vm358, %v882
  // Predicated region
  $region18: #{generator_forward.8} parent=0 // pred_check
    _
  $region19: #{generator_forward.8} parent=0 // pred_check_branch
    %893 = sbr.rel (0) target = $region21
  $region20: #{generator_forward.8} parent=0 // pred_region
    _
  $region21: #{generator_forward.8} parent=0 // pred_fallthru
    _
  // Predicated region
  $region22: #{generator_forward.8} parent=0 // pred_check
    _
  $region23: #{generator_forward.8} parent=0 // pred_check_branch
    %895 = sbr.rel (0) target = $region25
  $region24: #{generator_forward.8} parent=0 // pred_region
    _
  $region25: #{generator_forward.8} parent=0 // pred_fallthru
    _

// kernel: generator_forward.7
$region0: #{generator_forward.7}
  #allocation0 [shape = 'u32[]', space=smem, size = 0x4, offset = 0x4, fixed_abs, tag = 'smem constant byte address 0x4 - core index']
  #allocation1 [shape = 'u32[144,128]{1,0:T(1,128)}', space=vmem, size = 0x12000, scoped, tag = 'internal scratch']
  %s0 = inlined_call_operand.vmem [shape: bf16[64,64], index: 0, kind: input, shape index: {}]
  %s1 = inlined_call_operand.vmem [shape: bf16[4,32,256], index: 1, kind: input, shape index: {}]
  %s2 = inlined_call_operand.vmem [shape: bf16[9,64], index: 2, kind: input, shape index: {}]
  %s3 = inlined_call_operand.vmem [shape: f32[32,2], index: 3, kind: input, shape index: {}]
  %s4 = inlined_call_operand.vmem [shape: f32[32,2], index: 4, kind: output, shape index: {}]
  %s5 = sld [smem:[#allocation0]]
  $region34: #{generator_forward.7} parent=0
    _
  %s7 = ssub.s32 1, %s5
  %s8 = scalar_select 0, %s7, %s5
  // Predicated region
  $region2: #{generator_forward.7} parent=0 // pred_check
    _
  $region3: #{generator_forward.7} parent=0 // pred_check_branch
    %10 = sbr.rel (0) target = $region5
  $region4: #{generator_forward.7} parent=0 // pred_region
    _
  $region5: #{generator_forward.7} parent=0 // pred_fallthru
    _
  // Predicated region
  $region6: #{generator_forward.7} parent=0 // pred_check
    _
  $region7: #{generator_forward.7} parent=0 // pred_check_branch
    %12 = sbr.rel (0) target = $region9
  $region8: #{generator_forward.7} parent=0 // pred_region
    _
  $region9: #{generator_forward.7} parent=0 // pred_fallthru
    _
  // Predicated region
  $region10: #{generator_forward.7} parent=0 // pred_check
    _
  $region11: #{generator_forward.7} parent=0 // pred_check_branch
    %14 = sbr.rel (0) target = $region13
  $region12: #{generator_forward.7} parent=0 // pred_region
    _
  $region13: #{generator_forward.7} parent=0 // pred_fallthru
    _
  // Predicated region
  $region14: #{generator_forward.7} parent=0 // pred_check
    _
  $region15: #{generator_forward.7} parent=0 // pred_check_branch
    %16 = sbr.rel (0) target = $region17
  $region16: #{generator_forward.7} parent=0 // pred_region
    _
  $region17: #{generator_forward.7} parent=0 // pred_fallthru
    _
  %p18 = scmp.eq.s32.totalorder 0, 0
  // Predicated region
  $region18: #{generator_forward.7} parent=0 // pred_check
    %p19 = pneg %p18
  $region19: #{generator_forward.7} parent=0 // pred_check_branch
    %21 = sbr.rel (%p19) target = $region21
  $region20: #{generator_forward.7} parent=0 // pred_region
    %vm22 = vcmask 15360
    %23 = vst.msk [vmem:[%s4] sm:$0xff] %vm22, 0.0
    %24 = vst.msk [vmem:[%s4 + $0x8] sm:$0xff] %vm22, 0.0
    %25 = vst.msk [vmem:[%s4 + $0x10] sm:$0xff] %vm22, 0.0
    %26 = vst.msk [vmem:[%s4 + $0x18] sm:$0xff] %vm22, 0.0
  $region21: #{generator_forward.7} parent=0 // pred_fallthru
    _
  %v27 = vld [vmem:[%s0] sm:$0xf]
  %v28 = vld [vmem:[%s0 + $0x4] sm:$0xf]
  %v29 = vld [vmem:[%s0 + $0x8] sm:$0xf]
  %v30 = vld [vmem:[%s0 + $0xc] sm:$0xf]
  %v31 = vld [vmem:[%s0 + $0x10] sm:$0xf]
  %v32 = vld [vmem:[%s0 + $0x14] sm:$0xf]
  %v33 = vld [vmem:[%s0 + $0x18] sm:$0xf]
  %v34 = vld [vmem:[%s0 + $0x1c] sm:$0xf]
  %v35 = vld [vmem:[%s2] sm:$0xf]
  %v36 = vld [vmem:[%s2 + $0x4] sm:$0x1]
  %v38 = vpack.i.b16 %v35, %v35
  %v40 = vlaneseq
  %v41 = vshrl.u32 %v40, 7
  %v42 = vsub.s32 2, %v41
  %v43 = vrot.slane %v38, %v42
  %v45 = vunpack.c.l.b16 %v43
  %v46 = vpack.c.b16 %v45, %v45
  %v48 = vmul.bf16 %v27, %v46
  %v49 = vmul.bf16 %v28, %v46
  %v50 = vmul.bf16 %v29, %v46
  %v51 = vmul.bf16 %v30, %v46
  %v52 = vmul.bf16 %v31, %v46
  %v53 = vmul.bf16 %v32, %v46
  %v54 = vmul.bf16 %v33, %v46
  %v55 = vmul.bf16 %v34, %v46
  %v64 = vunpack.c.l.b16 %v27
  %v65 = vunpack.c.l.b16 %v28
  %v66 = vunpack.c.l.b16 %v29
  %v67 = vunpack.c.l.b16 %v30
  %v68 = vunpack.c.l.b16 %v31
  %v69 = vunpack.c.l.b16 %v32
  %v70 = vunpack.c.l.b16 %v33
  %v71 = vunpack.c.l.b16 %v34
  %v72 = vpack.c.b16 %v65, %v64
  %v73 = vpack.c.b16 %v67, %v66
  %v74 = vpack.c.b16 %v69, %v68
  %v75 = vpack.c.b16 %v71, %v70
  %76 = vrot.lane.b32.xlu0 %v72, 65
  %v77 = vpop.permute.xlu0 %76
  %78 = vrot.lane.b32.xlu0 %v73, 65
  %v79 = vpop.permute.xlu0 %78
  %80 = vrot.lane.b32.xlu0 %v74, 65
  %v81 = vpop.permute.xlu0 %80
  %82 = vrot.lane.b32.xlu0 %v75, 65
  %v83 = vpop.permute.xlu0 %82
  %84 = vrot.lane.b32.xlu0 %v72, 1
  %v85 = vpop.permute.xlu0 %84
  %86 = vrot.lane.b32.xlu0 %v73, 1
  %v87 = vpop.permute.xlu0 %86
  %88 = vrot.lane.b32.xlu0 %v74, 1
  %v89 = vpop.permute.xlu0 %88
  %90 = vrot.lane.b32.xlu0 %v75, 1
  %v91 = vpop.permute.xlu0 %90
  %vm92 = vcmask 7168
  %v95 = vsel %vm92, %v77, %v85
  %v99 = vsel %vm92, %v79, %v87
  %v103 = vsel %vm92, %v81, %v89
  %v107 = vsel %vm92, %v83, %v91
  %v109 = vshrl.u32 %v35, 16
  %v110 = vpack.i.b16 %v109, %v109
  %v112 = vlaneseq
  %v113 = vshrl.u32 %v112, 7
  %v114 = vsub.s32 1, %v113
  %v115 = vrot.slane %v110, %v114
  %v116 = vmul.bf16 %v95, %v115
  %v117 = vmul.bf16 %v99, %v115
  %v118 = vmul.bf16 %v103, %v115
  %v119 = vmul.bf16 %v107, %v115
  %120 = vrot.lane.b32.xlu0 %v72, 68
  %v121 = vpop.permute.xlu0 %120
  %122 = vrot.lane.b32.xlu0 %v73, 68
  %v123 = vpop.permute.xlu0 %122
  %124 = vrot.lane.b32.xlu0 %v74, 68
  %v125 = vpop.permute.xlu0 %124
  %126 = vrot.lane.b32.xlu0 %v75, 68
  %v127 = vpop.permute.xlu0 %126
  %128 = vrot.lane.b32.xlu0 %v72, 4
  %v129 = vpop.permute.xlu0 %128
  %130 = vrot.lane.b32.xlu0 %v73, 4
  %v131 = vpop.permute.xlu0 %130
  %132 = vrot.lane.b32.xlu0 %v74, 4
  %v133 = vpop.permute.xlu0 %132
  %134 = vrot.lane.b32.xlu0 %v75, 4
  %v135 = vpop.permute.xlu0 %134
  %vm136 = vcmask 31744
  %v139 = vsel %vm136, %v121, %v129
  %v143 = vsel %vm136, %v123, %v131
  %v147 = vsel %vm136, %v125, %v133
  %v151 = vsel %vm136, %v127, %v135
  %v153 = vlaneseq
  %v154 = vshrl.u32 %v153, 7
  %v155 = vsub.s32 0, %v154
  %v156 = vrot.slane %v110, %v155
  %v157 = vmul.bf16 %v139, %v156
  %v158 = vmul.bf16 %v143, %v156
  %v159 = vmul.bf16 %v147, %v156
  %v160 = vmul.bf16 %v151, %v156
  %161 = vrot.lane.b32.xlu0 %v72, 69
  %v162 = vpop.permute.xlu0 %161
  %163 = vrot.lane.b32.xlu0 %v73, 69
  %v164 = vpop.permute.xlu0 %163
  %165 = vrot.lane.b32.xlu0 %v74, 69
  %v166 = vpop.permute.xlu0 %165
  %167 = vrot.lane.b32.xlu0 %v75, 69
  %v168 = vpop.permute.xlu0 %167
  %169 = vrot.lane.b32.xlu0 %v72, 5
  %v170 = vpop.permute.xlu0 %169
  %171 = vrot.lane.b32.xlu0 %v73, 5
  %v172 = vpop.permute.xlu0 %171
  %173 = vrot.lane.b32.xlu0 %v74, 5
  %v174 = vpop.permute.xlu0 %173
  %175 = vrot.lane.b32.xlu0 %v75, 5
  %v176 = vpop.permute.xlu0 %175
  %vm177 = vcmask 39936
  %v180 = vsel %vm177, %v162, %v170
  %v184 = vsel %vm177, %v164, %v172
  %v188 = vsel %vm177, %v166, %v174
  %v192 = vsel %vm177, %v168, %v176
  %v194 = vlaneseq
  %v195 = vshrl.u32 %v194, 7
  %v196 = vsub.s32 0, %v195
  %v197 = vrot.slane %v38, %v196
  %v198 = vmul.bf16 %v180, %v197
  %v199 = vmul.bf16 %v184, %v197
  %v200 = vmul.bf16 %v188, %v197
  %v201 = vmul.bf16 %v192, %v197
  %v210 = vunpack.c.l.b16 %v48
  %v211 = vunpack.c.l.b16 %v49
  %v212 = vunpack.c.l.b16 %v50
  %v213 = vunpack.c.l.b16 %v51
  %v214 = vunpack.c.l.b16 %v52
  %v215 = vunpack.c.l.b16 %v53
  %v216 = vunpack.c.l.b16 %v54
  %v217 = vunpack.c.l.b16 %v55
  %v218 = vpack.c.b16 %v211, %v210
  %v219 = vpack.c.b16 %v213, %v212
  %v220 = vpack.c.b16 %v215, %v214
  %v221 = vpack.c.b16 %v217, %v216
  %v226 = vld [vmem:[%s1] sm:$0xff]
  %v227 = vld [vmem:[%s1 + $0x8] sm:$0xff]
  %v228 = vld [vmem:[%s1 + $0x10] sm:$0xff]
  %v229 = vld [vmem:[%s1 + $0x18] sm:$0xff]
  %v234 = vunpack.c.l.b16 %v226
  %v235 = vunpack.c.h.b16 %v226
  %v236 = vunpack.c.l.b16 %v227
  %v237 = vunpack.c.h.b16 %v227
  %v238 = vunpack.c.l.b16 %v228
  %v239 = vunpack.c.h.b16 %v228
  %v240 = vunpack.c.l.b16 %v229
  %v241 = vunpack.c.h.b16 %v229
  %v242 = vpack.c.b16 %v236, %v234
  %v243 = vpack.c.b16 %v237, %v235
  %v244 = vpack.c.b16 %v240, %v238
  %v245 = vpack.c.b16 %v241, %v239
  %250 = vmatprep.subr.bf16.mxu0 0
  %251 = vmatpush1.bf16.msra.mxu0 %v218
  %252 = vmatprep.subr.bf16.mxu0 0
  %253 = vmatpush1.bf16.msra.mxu0 %v219
  %254 = vmatprep.subr.bf16.mxu0 0
  %255 = vmatpush1.bf16.msra.mxu0 %v220
  %256 = vmatprep.subr.bf16.mxu0 0
  %257 = vmatpush1.bf16.msra.mxu0 %v221
  %258 = vmatprep.subr.bf16.mxu0 0
  %259 = vmatpush1.bf16.msra.mxu0 %v116
  %260 = vmatprep.subr.bf16.mxu0 0
  %261 = vmatpush1.bf16.msra.mxu0 %v117
  %262 = vmatprep.subr.bf16.mxu0 0
  %263 = vmatpush1.bf16.msra.mxu0 %v118
  %264 = vmatprep.subr.bf16.mxu0 0
  %265 = vmatpush1.bf16.msra.mxu0 %v119
  %266 = vmatprep.subr.bf16.mxu0 0
  %267 = vmatpush1.bf16.msra.mxu0 %v157
  %268 = vmatprep.subr.bf16.mxu0 0
  %269 = vmatpush1.bf16.msra.mxu0 %v158
  %270 = vmatprep.subr.bf16.mxu0 0
  %271 = vmatpush1.bf16.msra.mxu0 %v159
  %272 = vmatprep.subr.bf16.mxu0 0
  %273 = vmatpush1.bf16.msra.mxu0 %v160
  %274 = vmatprep.subr.bf16.mxu0 0
  %275 = vmatpush1.bf16.msra.mxu0 %v198
  %276 = vmatprep.subr.bf16.mxu0 0
  %277 = vmatpush1.bf16.msra.mxu0 %v199
  %278 = vmatprep.subr.bf16.mxu0 0
  %279 = vmatpush1.bf16.msra.mxu0 %v200
  %280 = vmatprep.subr.bf16.mxu0 0
  %281 = vmatpush1.bf16.msra.mxu0 %v201
  %282 = vmatprep.mubr.bf16.mxu0 %v243
  %283 = vmatmul.mubr.bf16.gmra.mrb[0].mxu0 %v242
  %v284 = vpop.f32.mrb[0].mxu0
  %v285 = vadd.f32 0.0, %v284
  %v286 = vpop.f32.mrb[0].mxu0
  %v287 = vpop.f32.mrb[0].mxu0
  %v288 = vadd.f32 0.0, %v287
  %v289 = vpop.f32.mrb[0].mxu0
  %290 = vmatprep.mubr.bf16.mxu0 %v245
  %291 = vmatmul.mubr.bf16.gmra.mrb[0].mxu0 %v244
  %v292 = vpop.f32.mrb[0].mxu0
  %v293 = vadd.f32 0.0, %v292
  %v294 = vpop.f32.mrb[0].mxu0
  %v295 = vpop.f32.mrb[0].mxu0
  %v296 = vadd.f32 0.0, %v295
  %v297 = vpop.f32.mrb[0].mxu0
  %298 = vdwg.mxu0
  %vm299 = vcmask 523264
  %v300 = vsel %vm299, %v285, 0.0
  %301 = vadd.xlane.f32.xlu0 %v300
  %v302 = vpop.xlane.xlu0 %301
  %v303 = vsel %vm299, %v288, 0.0
  %304 = vadd.xlane.f32.xlu0 %v303
  %v305 = vpop.xlane.xlu0 %304
  %v306 = vsel %vm299, %v293, 0.0
  %307 = vadd.xlane.f32.xlu0 %v306
  %v308 = vpop.xlane.xlu0 %307
  %v309 = vsel %vm299, %v296, 0.0
  %310 = vadd.xlane.f32.xlu0 %v309
  %v311 = vpop.xlane.xlu0 %310
  %v312 = vadd.f32 %v302, 0.0
  %v313 = vadd.f32 %v305, 0.0
  %v314 = vadd.f32 %v308, 0.0
  %v315 = vadd.f32 %v311, 0.0
  %v316 = vmul.f32 %v285, %v285
  %v317 = vmul.f32 %v288, %v288
  %v318 = vmul.f32 %v293, %v293
  %v319 = vmul.f32 %v296, %v296
  %v320 = vsel %vm299, %v316, 0.0
  %321 = vadd.xlane.f32.xlu0 %v320
  %v322 = vpop.xlane.xlu0 %321
  %v323 = vsel %vm299, %v317, 0.0
  %324 = vadd.xlane.f32.xlu0 %v323
  %v325 = vpop.xlane.xlu0 %324
  %v326 = vsel %vm299, %v318, 0.0
  %327 = vadd.xlane.f32.xlu0 %v326
  %v328 = vpop.xlane.xlu0 %327
  %v329 = vsel %vm299, %v319, 0.0
  %330 = vadd.xlane.f32.xlu0 %v329
  %v331 = vpop.xlane.xlu0 %330
  %v332 = vadd.f32 %v322, 0.0
  %v333 = vadd.f32 %v325, 0.0
  %v334 = vadd.f32 %v328, 0.0
  %v335 = vadd.f32 %v331, 0.0
  %336 = vrot.lane.b32.xlu0 %v72, 127
  %v337 = vpop.permute.xlu0 %336
  %338 = vrot.lane.b32.xlu0 %v73, 127
  %v339 = vpop.permute.xlu0 %338
  %340 = vrot.lane.b32.xlu0 %v74, 127
  %v341 = vpop.permute.xlu0 %340
  %342 = vrot.lane.b32.xlu0 %v75, 127
  %v343 = vpop.permute.xlu0 %342
  %344 = vrot.lane.b32.xlu0 %v72, 63
  %v345 = vpop.permute.xlu0 %344
  %346 = vrot.lane.b32.xlu0 %v73, 63
  %v347 = vpop.permute.xlu0 %346
  %348 = vrot.lane.b32.xlu0 %v74, 63
  %v349 = vpop.permute.xlu0 %348
  %350 = vrot.lane.b32.xlu0 %v75, 63
  %v351 = vpop.permute.xlu0 %350
  %vm352 = vcmask 515072
  %v355 = vsel %vm352, %v337, %v345
  %v359 = vsel %vm352, %v339, %v347
  %v363 = vsel %vm352, %v341, %v349
  %v367 = vsel %vm352, %v343, %v351
  %v369 = vlaneseq
  %v370 = vshrl.u32 %v369, 7
  %v371 = vsub.s32 2, %v370
  %v372 = vrot.slane %v110, %v371
  %v373 = vmul.bf16 %v355, %v372
  %v374 = vmul.bf16 %v359, %v372
  %v375 = vmul.bf16 %v363, %v372
  %v376 = vmul.bf16 %v367, %v372
  %377 = vrot.lane.b32.xlu0 %v72, 67
  %v378 = vpop.permute.xlu0 %377
  %379 = vrot.lane.b32.xlu0 %v73, 67
  %v380 = vpop.permute.xlu0 %379
  %381 = vrot.lane.b32.xlu0 %v74, 67
  %v382 = vpop.permute.xlu0 %381
  %383 = vrot.lane.b32.xlu0 %v75, 67
  %v384 = vpop.permute.xlu0 %383
  %385 = vrot.lane.b32.xlu0 %v72, 3
  %v386 = vpop.permute.xlu0 %385
  %387 = vrot.lane.b32.xlu0 %v73, 3
  %v388 = vpop.permute.xlu0 %387
  %389 = vrot.lane.b32.xlu0 %v74, 3
  %v390 = vpop.permute.xlu0 %389
  %391 = vrot.lane.b32.xlu0 %v75, 3
  %v392 = vpop.permute.xlu0 %391
  %vm393 = vcmask 23552
  %v396 = vsel %vm393, %v378, %v386
  %v400 = vsel %vm393, %v380, %v388
  %v404 = vsel %vm393, %v382, %v390
  %v408 = vsel %vm393, %v384, %v392
  %v410 = vlaneseq
  %v411 = vshrl.u32 %v410, 7
  %v412 = vsub.s32 1, %v411
  %v413 = vrot.slane %v38, %v412
  %v414 = vmul.bf16 %v396, %v413
  %v415 = vmul.bf16 %v400, %v413
  %v416 = vmul.bf16 %v404, %v413
  %v417 = vmul.bf16 %v408, %v413
  %s418 = scalar_lea.vmem %s1, 32
  %v419 = vld [vmem:[%s418] sm:$0xff]
  %v420 = vld [vmem:[%s418 + $0x8] sm:$0xff]
  %v421 = vld [vmem:[%s418 + $0x10] sm:$0xff]
  %v422 = vld [vmem:[%s418 + $0x18] sm:$0xff]
  %v427 = vunpack.c.l.b16 %v419
  %v428 = vunpack.c.h.b16 %v419
  %v429 = vunpack.c.l.b16 %v420
  %v430 = vunpack.c.h.b16 %v420
  %v431 = vunpack.c.l.b16 %v421
  %v432 = vunpack.c.h.b16 %v421
  %v433 = vunpack.c.l.b16 %v422
  %v434 = vunpack.c.h.b16 %v422
  %v435 = vpack.c.b16 %v429, %v427
  %v436 = vpack.c.b16 %v430, %v428
  %v437 = vpack.c.b16 %v433, %v431
  %v438 = vpack.c.b16 %v434, %v432
  %443 = vmatprep.subr.bf16.mxu0 0
  %444 = vmatpush1.bf16.msra.mxu0 %v373
  %445 = vmatprep.subr.bf16.mxu0 0
  %446 = vmatpush1.bf16.msra.mxu0 %v374
  %447 = vmatprep.subr.bf16.mxu0 0
  %448 = vmatpush1.bf16.msra.mxu0 %v375
  %449 = vmatprep.subr.bf16.mxu0 0
  %450 = vmatpush1.bf16.msra.mxu0 %v376
  %451 = vmatprep.subr.bf16.mxu0 0
  %452 = vmatpush1.bf16.msra.mxu0 %v218
  %453 = vmatprep.subr.bf16.mxu0 0
  %454 = vmatpush1.bf16.msra.mxu0 %v219
  %455 = vmatprep.subr.bf16.mxu0 0
  %456 = vmatpush1.bf16.msra.mxu0 %v220
  %457 = vmatprep.subr.bf16.mxu0 0
  %458 = vmatpush1.bf16.msra.mxu0 %v221
  %459 = vmatprep.subr.bf16.mxu0 0
  %460 = vmatpush1.bf16.msra.mxu0 %v414
  %461 = vmatprep.subr.bf16.mxu0 0
  %462 = vmatpush1.bf16.msra.mxu0 %v415
  %463 = vmatprep.subr.bf16.mxu0 0
  %464 = vmatpush1.bf16.msra.mxu0 %v416
  %465 = vmatprep.subr.bf16.mxu0 0
  %466 = vmatpush1.bf16.msra.mxu0 %v417
  %467 = vmatprep.subr.bf16.mxu0 0
  %468 = vmatpush1.bf16.msra.mxu0 %v157
  %469 = vmatprep.subr.bf16.mxu0 0
  %470 = vmatpush1.bf16.msra.mxu0 %v158
  %471 = vmatprep.subr.bf16.mxu0 0
  %472 = vmatpush1.bf16.msra.mxu0 %v159
  %473 = vmatprep.subr.bf16.mxu0 0
  %474 = vmatpush1.bf16.msra.mxu0 %v160
  %475 = vmatprep.mubr.bf16.mxu0 %v436
  %476 = vmatmul.mubr.bf16.gmra.mrb[0].mxu0 %v435
  %v477 = vpop.f32.mrb[0].mxu0
  %v478 = vadd.f32 0.0, %v477
  %v479 = vpop.f32.mrb[0].mxu0
  %v480 = vpop.f32.mrb[0].mxu0
  %v481 = vadd.f32 0.0, %v480
  %v482 = vpop.f32.mrb[0].mxu0
  %483 = vmatprep.mubr.bf16.mxu0 %v438
  %484 = vmatmul.mubr.bf16.gmra.mrb[0].mxu0 %v437
  %v485 = vpop.f32.mrb[0].mxu0
  %v486 = vadd.f32 0.0, %v485
  %v487 = vpop.f32.mrb[0].mxu0
  %v488 = vpop.f32.mrb[0].mxu0
  %v489 = vadd.f32 0.0, %v488
  %v490 = vpop.f32.mrb[0].mxu0
  %491 = vdwg.mxu0
  %v492 = vsel %vm299, %v478, 0.0
  %493 = vadd.xlane.f32.xlu0 %v492
  %v494 = vpop.xlane.xlu0 %493
  %v495 = vsel %vm299, %v481, 0.0
  %496 = vadd.xlane.f32.xlu0 %v495
  %v497 = vpop.xlane.xlu0 %496
  %v498 = vsel %vm299, %v486, 0.0
  %499 = vadd.xlane.f32.xlu0 %v498
  %v500 = vpop.xlane.xlu0 %499
  %v501 = vsel %vm299, %v489, 0.0
  %502 = vadd.xlane.f32.xlu0 %v501
  %v503 = vpop.xlane.xlu0 %502
  %v504 = vadd.f32 %v312, %v494
  %v505 = vadd.f32 %v313, %v497
  %v506 = vadd.f32 %v314, %v500
  %v507 = vadd.f32 %v315, %v503
  %v508 = vmul.f32 %v478, %v478
  %v509 = vmul.f32 %v481, %v481
  %v510 = vmul.f32 %v486, %v486
  %v511 = vmul.f32 %v489, %v489
  %v512 = vsel %vm299, %v508, 0.0
  %513 = vadd.xlane.f32.xlu0 %v512
  %v514 = vpop.xlane.xlu0 %513
  %v515 = vsel %vm299, %v509, 0.0
  %516 = vadd.xlane.f32.xlu0 %v515
  %v517 = vpop.xlane.xlu0 %516
  %v518 = vsel %vm299, %v510, 0.0
  %519 = vadd.xlane.f32.xlu0 %v518
  %v520 = vpop.xlane.xlu0 %519
  %v521 = vsel %vm299, %v511, 0.0
  %522 = vadd.xlane.f32.xlu0 %v521
  %v523 = vpop.xlane.xlu0 %522
  %v524 = vadd.f32 %v332, %v514
  %v525 = vadd.f32 %v333, %v517
  %v526 = vadd.f32 %v334, %v520
  %v527 = vadd.f32 %v335, %v523
  %528 = vrot.lane.b32.xlu0 %v72, 124
  %v529 = vpop.permute.xlu0 %528
  %530 = vrot.lane.b32.xlu0 %v73, 124
  %v531 = vpop.permute.xlu0 %530
  %532 = vrot.lane.b32.xlu0 %v74, 124
  %v533 = vpop.permute.xlu0 %532
  %534 = vrot.lane.b32.xlu0 %v75, 124
  %v535 = vpop.permute.xlu0 %534
  %536 = vrot.lane.b32.xlu0 %v72, 60
  %v537 = vpop.permute.xlu0 %536
  %538 = vrot.lane.b32.xlu0 %v73, 60
  %v539 = vpop.permute.xlu0 %538
  %540 = vrot.lane.b32.xlu0 %v74, 60
  %v541 = vpop.permute.xlu0 %540
  %542 = vrot.lane.b32.xlu0 %v75, 60
  %v543 = vpop.permute.xlu0 %542
  %vm544 = vcmask 490496
  %v547 = vsel %vm544, %v529, %v537
  %v551 = vsel %vm544, %v531, %v539
  %v555 = vsel %vm544, %v533, %v541
  %v559 = vsel %vm544, %v535, %v543
  %v561 = vlaneseq
  %v562 = vshrl.u32 %v561, 7
  %v563 = vsub.s32 3, %v562
  %v564 = vrot.slane %v110, %v563
  %v565 = vmul.bf16 %v547, %v564
  %v566 = vmul.bf16 %v551, %v564
  %v567 = vmul.bf16 %v555, %v564
  %v568 = vmul.bf16 %v559, %v564
  %569 = vrot.lane.b32.xlu0 %v72, 125
  %v570 = vpop.permute.xlu0 %569
  %571 = vrot.lane.b32.xlu0 %v73, 125
  %v572 = vpop.permute.xlu0 %571
  %573 = vrot.lane.b32.xlu0 %v74, 125
  %v574 = vpop.permute.xlu0 %573
  %575 = vrot.lane.b32.xlu0 %v75, 125
  %v576 = vpop.permute.xlu0 %575
  %577 = vrot.lane.b32.xlu0 %v72, 61
  %v578 = vpop.permute.xlu0 %577
  %579 = vrot.lane.b32.xlu0 %v73, 61
  %v580 = vpop.permute.xlu0 %579
  %581 = vrot.lane.b32.xlu0 %v74, 61
  %v582 = vpop.permute.xlu0 %581
  %583 = vrot.lane.b32.xlu0 %v75, 61
  %v584 = vpop.permute.xlu0 %583
  %vm585 = vcmask 498688
  %v588 = vsel %vm585, %v570, %v578
  %v592 = vsel %vm585, %v572, %v580
  %v596 = vsel %vm585, %v574, %v582
  %v600 = vsel %vm585, %v576, %v584
  %v602 = vlaneseq
  %v603 = vshrl.u32 %v602, 7
  %v604 = vsub.s32 3, %v603
  %v605 = vrot.slane %v38, %v604
  %v606 = vmul.bf16 %v588, %v605
  %v607 = vmul.bf16 %v592, %v605
  %v608 = vmul.bf16 %v596, %v605
  %v609 = vmul.bf16 %v600, %v605
  %s610 = scalar_lea.vmem %s1, 64
  %v611 = vld [vmem:[%s610] sm:$0xff]
  %v612 = vld [vmem:[%s610 + $0x8] sm:$0xff]
  %v613 = vld [vmem:[%s610 + $0x10] sm:$0xff]
  %v614 = vld [vmem:[%s610 + $0x18] sm:$0xff]
  %v619 = vunpack.c.l.b16 %v611
  %v620 = vunpack.c.h.b16 %v611
  %v621 = vunpack.c.l.b16 %v612
  %v622 = vunpack.c.h.b16 %v612
  %v623 = vunpack.c.l.b16 %v613
  %v624 = vunpack.c.h.b16 %v613
  %v625 = vunpack.c.l.b16 %v614
  %v626 = vunpack.c.h.b16 %v614
  %v627 = vpack.c.b16 %v621, %v619
  %v628 = vpack.c.b16 %v622, %v620
  %v629 = vpack.c.b16 %v625, %v623
  %v630 = vpack.c.b16 %v626, %v624
  %635 = vmatprep.subr.bf16.mxu0 0
  %636 = vmatpush1.bf16.msra.mxu0 %v565
  %637 = vmatprep.subr.bf16.mxu0 0
  %638 = vmatpush1.bf16.msra.mxu0 %v566
  %639 = vmatprep.subr.bf16.mxu0 0
  %640 = vmatpush1.bf16.msra.mxu0 %v567
  %641 = vmatprep.subr.bf16.mxu0 0
  %642 = vmatpush1.bf16.msra.mxu0 %v568
  %643 = vmatprep.subr.bf16.mxu0 0
  %644 = vmatpush1.bf16.msra.mxu0 %v606
  %645 = vmatprep.subr.bf16.mxu0 0
  %646 = vmatpush1.bf16.msra.mxu0 %v607
  %647 = vmatprep.subr.bf16.mxu0 0
  %648 = vmatpush1.bf16.msra.mxu0 %v608
  %649 = vmatprep.subr.bf16.mxu0 0
  %650 = vmatpush1.bf16.msra.mxu0 %v609
  %651 = vmatprep.subr.bf16.mxu0 0
  %652 = vmatpush1.bf16.msra.mxu0 %v218
  %653 = vmatprep.subr.bf16.mxu0 0
  %654 = vmatpush1.bf16.msra.mxu0 %v219
  %655 = vmatprep.subr.bf16.mxu0 0
  %656 = vmatpush1.bf16.msra.mxu0 %v220
  %657 = vmatprep.subr.bf16.mxu0 0
  %658 = vmatpush1.bf16.msra.mxu0 %v221
  %659 = vmatprep.subr.bf16.mxu0 0
  %660 = vmatpush1.bf16.msra.mxu0 %v116
  %661 = vmatprep.subr.bf16.mxu0 0
  %662 = vmatpush1.bf16.msra.mxu0 %v117
  %663 = vmatprep.subr.bf16.mxu0 0
  %664 = vmatpush1.bf16.msra.mxu0 %v118
  %665 = vmatprep.subr.bf16.mxu0 0
  %666 = vmatpush1.bf16.msra.mxu0 %v119
  %667 = vmatprep.mubr.bf16.mxu0 %v628
  %668 = vmatmul.mubr.bf16.gmra.mrb[0].mxu0 %v627
  %v669 = vpop.f32.mrb[0].mxu0
  %v670 = vadd.f32 0.0, %v669
  %v671 = vpop.f32.mrb[0].mxu0
  %v672 = vpop.f32.mrb[0].mxu0
  %v673 = vadd.f32 0.0, %v672
  %v674 = vpop.f32.mrb[0].mxu0
  %675 = vmatprep.mubr.bf16.mxu0 %v630
  %676 = vmatmul.mubr.bf16.gmra.mrb[0].mxu0 %v629
  %v677 = vpop.f32.mrb[0].mxu0
  %v678 = vadd.f32 0.0, %v677
  %v679 = vpop.f32.mrb[0].mxu0
  %v680 = vpop.f32.mrb[0].mxu0
  %v681 = vadd.f32 0.0, %v680
  %v682 = vpop.f32.mrb[0].mxu0
  %683 = vdwg.mxu0
  %v684 = vsel %vm299, %v670, 0.0
  %685 = vadd.xlane.f32.xlu0 %v684
  %v686 = vpop.xlane.xlu0 %685
  %v687 = vsel %vm299, %v673, 0.0
  %688 = vadd.xlane.f32.xlu0 %v687
  %v689 = vpop.xlane.xlu0 %688
  %v690 = vsel %vm299, %v678, 0.0
  %691 = vadd.xlane.f32.xlu0 %v690
  %v692 = vpop.xlane.xlu0 %691
  %v693 = vsel %vm299, %v681, 0.0
  %694 = vadd.xlane.f32.xlu0 %v693
  %v695 = vpop.xlane.xlu0 %694
  %v696 = vadd.f32 %v504, %v686
  %v697 = vadd.f32 %v505, %v689
  %v698 = vadd.f32 %v506, %v692
  %v699 = vadd.f32 %v507, %v695
  %v700 = vmul.f32 %v670, %v670
  %v701 = vmul.f32 %v673, %v673
  %v702 = vmul.f32 %v678, %v678
  %v703 = vmul.f32 %v681, %v681
  %v704 = vsel %vm299, %v700, 0.0
  %705 = vadd.xlane.f32.xlu0 %v704
  %v706 = vpop.xlane.xlu0 %705
  %v707 = vsel %vm299, %v701, 0.0
  %708 = vadd.xlane.f32.xlu0 %v707
  %v709 = vpop.xlane.xlu0 %708
  %v710 = vsel %vm299, %v702, 0.0
  %711 = vadd.xlane.f32.xlu0 %v710
  %v712 = vpop.xlane.xlu0 %711
  %v713 = vsel %vm299, %v703, 0.0
  %714 = vadd.xlane.f32.xlu0 %v713
  %v715 = vpop.xlane.xlu0 %714
  %v716 = vadd.f32 %v524, %v706
  %v717 = vadd.f32 %v525, %v709
  %v718 = vadd.f32 %v526, %v712
  %v719 = vadd.f32 %v527, %v715
  %720 = vrot.lane.b32.xlu0 %v72, 123
  %v721 = vpop.permute.xlu0 %720
  %722 = vrot.lane.b32.xlu0 %v73, 123
  %v723 = vpop.permute.xlu0 %722
  %724 = vrot.lane.b32.xlu0 %v74, 123
  %v725 = vpop.permute.xlu0 %724
  %726 = vrot.lane.b32.xlu0 %v75, 123
  %v727 = vpop.permute.xlu0 %726
  %728 = vrot.lane.b32.xlu0 %v72, 59
  %v729 = vpop.permute.xlu0 %728
  %730 = vrot.lane.b32.xlu0 %v73, 59
  %v731 = vpop.permute.xlu0 %730
  %732 = vrot.lane.b32.xlu0 %v74, 59
  %v733 = vpop.permute.xlu0 %732
  %734 = vrot.lane.b32.xlu0 %v75, 59
  %v735 = vpop.permute.xlu0 %734
  %vm736 = vcmask 482304
  %v739 = vsel %vm736, %v721, %v729
  %v743 = vsel %vm736, %v723, %v731
  %v747 = vsel %vm736, %v725, %v733
  %v751 = vsel %vm736, %v727, %v735
  %v754 = vpack.i.b16 %v36, %v36
  %v756 = vlaneseq
  %v757 = vshrl.u32 %v756, 7
  %v758 = vsub.s32 0, %v757
  %v759 = vrot.slane %v754, %v758
  %v760 = vmul.bf16 %v739, %v759
  %v761 = vmul.bf16 %v743, %v759
  %v762 = vmul.bf16 %v747, %v759
  %v763 = vmul.bf16 %v751, %v759
  %s764 = scalar_lea.vmem %s1, 96
  %v765 = vld [vmem:[%s764] sm:$0xff]
  %v766 = vld [vmem:[%s764 + $0x8] sm:$0xff]
  %v767 = vld [vmem:[%s764 + $0x10] sm:$0xff]
  %v768 = vld [vmem:[%s764 + $0x18] sm:$0xff]
  %v773 = vunpack.c.l.b16 %v765
  %v774 = vunpack.c.h.b16 %v765
  %v775 = vunpack.c.l.b16 %v766
  %v776 = vunpack.c.h.b16 %v766
  %v777 = vunpack.c.l.b16 %v767
  %v778 = vunpack.c.h.b16 %v767
  %v779 = vunpack.c.l.b16 %v768
  %v780 = vunpack.c.h.b16 %v768
  %v781 = vpack.c.b16 %v775, %v773
  %v782 = vpack.c.b16 %v776, %v774
  %v783 = vpack.c.b16 %v779, %v777
  %v784 = vpack.c.b16 %v780, %v778
  %789 = vmatprep.subr.bf16.mxu0 0
  %790 = vmatpush1.bf16.msra.mxu0 %v760
  %791 = vmatprep.subr.bf16.mxu0 0
  %792 = vmatpush1.bf16.msra.mxu0 %v761
  %793 = vmatprep.subr.bf16.mxu0 0
  %794 = vmatpush1.bf16.msra.mxu0 %v762
  %795 = vmatprep.subr.bf16.mxu0 0
  %796 = vmatpush1.bf16.msra.mxu0 %v763
  %797 = vmatprep.subr.bf16.mxu0 0
  %798 = vmatpush1.bf16.msra.mxu0 %v565
  %799 = vmatprep.subr.bf16.mxu0 0
  %800 = vmatpush1.bf16.msra.mxu0 %v566
  %801 = vmatprep.subr.bf16.mxu0 0
  %802 = vmatpush1.bf16.msra.mxu0 %v567
  %803 = vmatprep.subr.bf16.mxu0 0
  %804 = vmatpush1.bf16.msra.mxu0 %v568
  %805 = vmatprep.subr.bf16.mxu0 0
  %806 = vmatpush1.bf16.msra.mxu0 %v373
  %807 = vmatprep.subr.bf16.mxu0 0
  %808 = vmatpush1.bf16.msra.mxu0 %v374
  %809 = vmatprep.subr.bf16.mxu0 0
  %810 = vmatpush1.bf16.msra.mxu0 %v375
  %811 = vmatprep.subr.bf16.mxu0 0
  %812 = vmatpush1.bf16.msra.mxu0 %v376
  %813 = vmatprep.subr.bf16.mxu0 0
  %814 = vmatpush1.bf16.msra.mxu0 %v218
  %815 = vmatprep.subr.bf16.mxu0 0
  %816 = vmatpush1.bf16.msra.mxu0 %v219
  %817 = vmatprep.subr.bf16.mxu0 0
  %818 = vmatpush1.bf16.msra.mxu0 %v220
  %819 = vmatprep.subr.bf16.mxu0 0
  %820 = vmatpush1.bf16.msra.mxu0 %v221
  %821 = vmatprep.mubr.bf16.mxu0 %v782
  %822 = vmatmul.mubr.bf16.gmra.mrb[0].mxu0 %v781
  %v823 = vpop.f32.mrb[0].mxu0
  %v824 = vadd.f32 0.0, %v823
  %v825 = vpop.f32.mrb[0].mxu0
  %v826 = vpop.f32.mrb[0].mxu0
  %v827 = vadd.f32 0.0, %v826
  %v828 = vpop.f32.mrb[0].mxu0
  %829 = vmatprep.mubr.bf16.mxu0 %v784
  %830 = vmatmul.mubr.bf16.gmra.mrb[0].mxu0 %v783
  %v831 = vpop.f32.mrb[0].mxu0
  %v832 = vadd.f32 0.0, %v831
  %v833 = vpop.f32.mrb[0].mxu0
  %v834 = vpop.f32.mrb[0].mxu0
  %v835 = vadd.f32 0.0, %v834
  %v836 = vpop.f32.mrb[0].mxu0
  %837 = vdwg.mxu0
  %v838 = vsel %vm299, %v824, 0.0
  %839 = vadd.xlane.f32.xlu0 %v838
  %v840 = vpop.xlane.xlu0 %839
  %v841 = vsel %vm299, %v827, 0.0
  %842 = vadd.xlane.f32.xlu0 %v841
  %v843 = vpop.xlane.xlu0 %842
  %v844 = vsel %vm299, %v832, 0.0
  %845 = vadd.xlane.f32.xlu0 %v844
  %v846 = vpop.xlane.xlu0 %845
  %v847 = vsel %vm299, %v835, 0.0
  %848 = vadd.xlane.f32.xlu0 %v847
  %v849 = vpop.xlane.xlu0 %848
  %v850 = vadd.f32 %v696, %v840
  %v851 = vadd.f32 %v697, %v843
  %v852 = vadd.f32 %v698, %v846
  %v853 = vadd.f32 %v699, %v849
  %v854 = vmul.f32 %v824, %v824
  %v855 = vmul.f32 %v827, %v827
  %v856 = vmul.f32 %v832, %v832
  %v857 = vmul.f32 %v835, %v835
  %v858 = vsel %vm299, %v854, 0.0
  %859 = vadd.xlane.f32.xlu0 %v858
  %v860 = vpop.xlane.xlu0 %859
  %v861 = vsel %vm299, %v855, 0.0
  %862 = vadd.xlane.f32.xlu0 %v861
  %v863 = vpop.xlane.xlu0 %862
  %v864 = vsel %vm299, %v856, 0.0
  %865 = vadd.xlane.f32.xlu0 %v864
  %v866 = vpop.xlane.xlu0 %865
  %v867 = vsel %vm299, %v857, 0.0
  %868 = vadd.xlane.f32.xlu0 %v867
  %v869 = vpop.xlane.xlu0 %868
  %v870 = vadd.f32 %v716, %v860
  %v871 = vadd.f32 %v717, %v863
  %v872 = vadd.f32 %v718, %v866
  %v873 = vadd.f32 %v719, %v869
  %v874 = vld [vmem:[%s4] sm:$0xff]
  %v875 = vld [vmem:[%s4 + $0x8] sm:$0xff]
  %v876 = vld [vmem:[%s4 + $0x10] sm:$0xff]
  %v877 = vld [vmem:[%s4 + $0x18] sm:$0xff]
  %v878 = vadd.f32 %v874, %v850
  %v879 = vadd.f32 %v875, %v851
  %v880 = vadd.f32 %v876, %v852
  %v881 = vadd.f32 %v877, %v853
  %882 = vst.msk [vmem:[%s4] sm:$0xff] %vm92, %v878
  %883 = vst.msk [vmem:[%s4 + $0x8] sm:$0xff] %vm92, %v879
  %884 = vst.msk [vmem:[%s4 + $0x10] sm:$0xff] %vm92, %v880
  %885 = vst.msk [vmem:[%s4 + $0x18] sm:$0xff] %vm92, %v881
  %v886 = vld [vmem:[%s4] sm:$0xff]
  %v887 = vld [vmem:[%s4 + $0x8] sm:$0xff]
  %v888 = vld [vmem:[%s4 + $0x10] sm:$0xff]
  %v889 = vld [vmem:[%s4 + $0x18] sm:$0xff]
  %v890 = vadd.f32 %v886, %v870
  %v891 = vadd.f32 %v887, %v871
  %v892 = vadd.f32 %v888, %v872
  %v893 = vadd.f32 %v889, %v873
  %vm894 = vcmask 15368
  %895 = vst.msk [vmem:[%s4] sm:$0xff] %vm894, %v890
  %896 = vst.msk [vmem:[%s4 + $0x8] sm:$0xff] %vm894, %v891
  %897 = vst.msk [vmem:[%s4 + $0x10] sm:$0xff] %vm894, %v892
  %898 = vst.msk [vmem:[%s4 + $0x18] sm:$0xff] %vm894, %v893
  // Predicated region
  $region22: #{generator_forward.7} parent=0 // pred_check
    %p899 = pneg %p18
  $region23: #{generator_forward.7} parent=0 // pred_check_branch
    %901 = sbr.rel (%p899) target = $region25
  $region24: #{generator_forward.7} parent=0 // pred_region
    %v902 = vld [vmem:[%s4] sm:$0xff]
    %v903 = vld [vmem:[%s4 + $0x8] sm:$0xff]
    %v904 = vld [vmem:[%s4 + $0x10] sm:$0xff]
    %v905 = vld [vmem:[%s4 + $0x18] sm:$0xff]
    %v906 = vrcp.pop 256.0
    %v907 = vmul.f32 %v902, %v906
    %v908 = vmul.f32 %v903, %v906
    %v909 = vmul.f32 %v904, %v906
    %v910 = vmul.f32 %v905, %v906
    %v911 = vmul.f32 %v907, %v907
    %v912 = vmul.f32 %v908, %v908
    %v913 = vmul.f32 %v909, %v909
    %v914 = vmul.f32 %v910, %v910
    %919 = vrot.lane.b32.xlu0 %v911, 1
    %v920 = vpop.permute.xlu0 %919
    %921 = vrot.lane.b32.xlu0 %v912, 1
    %v922 = vpop.permute.xlu0 %921
    %923 = vrot.lane.b32.xlu0 %v913, 1
    %v924 = vpop.permute.xlu0 %923
    %925 = vrot.lane.b32.xlu0 %v914, 1
    %v926 = vpop.permute.xlu0 %925
    %v931 = vsub.f32 %v907, %v920
    %v932 = vsub.f32 %v908, %v922
    %v933 = vsub.f32 %v909, %v924
    %v934 = vsub.f32 %v910, %v926
    %v935 = vld [vmem:[%s3] sm:$0xff]
    %v936 = vld [vmem:[%s3 + $0x8] sm:$0xff]
    %v937 = vld [vmem:[%s3 + $0x10] sm:$0xff]
    %v938 = vld [vmem:[%s3 + $0x18] sm:$0xff]
    %v939 = vadd.f32 %v931, 1e-05
    %v940 = vadd.f32 %v932, 1e-05
    %v941 = vadd.f32 %v933, 1e-05
    %v942 = vadd.f32 %v934, 1e-05
    %v943 = vrsqrt.pop %v939
    %v944 = vrsqrt.pop %v940
    %v945 = vrsqrt.pop %v941
    %v946 = vrsqrt.pop %v942
    %951 = vrot.lane.b32.xlu0 %v943, 127
    %v952 = vpop.permute.xlu0 %951
    %953 = vrot.lane.b32.xlu0 %v944, 127
    %v954 = vpop.permute.xlu0 %953
    %955 = vrot.lane.b32.xlu0 %v945, 127
    %v956 = vpop.permute.xlu0 %955
    %957 = vrot.lane.b32.xlu0 %v946, 127
    %v958 = vpop.permute.xlu0 %957
    %v963 = vmul.f32 %v935, %v952
    %v964 = vmul.f32 %v936, %v954
    %v965 = vmul.f32 %v937, %v956
    %v966 = vmul.f32 %v938, %v958
    %v967 = vmul.f32 %v907, %v963
    %v968 = vmul.f32 %v908, %v964
    %v969 = vmul.f32 %v909, %v965
    %v970 = vmul.f32 %v910, %v966
    %975 = vrot.lane.b32.xlu0 %v967, 1
    %v976 = vpop.permute.xlu0 %975
    %977 = vrot.lane.b32.xlu0 %v968, 1
    %v978 = vpop.permute.xlu0 %977
    %979 = vrot.lane.b32.xlu0 %v969, 1
    %v980 = vpop.permute.xlu0 %979
    %981 = vrot.lane.b32.xlu0 %v970, 1
    %v982 = vpop.permute.xlu0 %981
    %v987 = vsub.f32 %v935, %v976
    %v988 = vsub.f32 %v936, %v978
    %v989 = vsub.f32 %v937, %v980
    %v990 = vsub.f32 %v938, %v982
    %991 = vst.msk [vmem:[%s4] sm:$0xff] %vm92, %v963
    %992 = vst.msk [vmem:[%s4 + $0x8] sm:$0xff] %vm92, %v964
    %993 = vst.msk [vmem:[%s4 + $0x10] sm:$0xff] %vm92, %v965
    %994 = vst.msk [vmem:[%s4 + $0x18] sm:$0xff] %vm92, %v966
    %995 = vst.msk [vmem:[%s4] sm:$0xff] %vm894, %v987
    %996 = vst.msk [vmem:[%s4 + $0x8] sm:$0xff] %vm894, %v988
    %997 = vst.msk [vmem:[%s4 + $0x10] sm:$0xff] %vm894, %v989
    %998 = vst.msk [vmem:[%s4 + $0x18] sm:$0xff] %vm894, %v990
  $region25: #{generator_forward.7} parent=0 // pred_fallthru
    _
  // Predicated region
  $region26: #{generator_forward.7} parent=0 // pred_check
    _
  $region27: #{generator_forward.7} parent=0 // pred_check_branch
    %1000 = sbr.rel (0) target = $region29
  $region28: #{generator_forward.7} parent=0 // pred_region
    _
  $region29: #{generator_forward.7} parent=0 // pred_fallthru
    _
  // Predicated region
  $region30: #{generator_forward.7} parent=0 // pred_check
    _
  $region31: #{generator_forward.7} parent=0 // pred_check_branch
    %1002 = sbr.rel (0) target = $region33
  $region32: #{generator_forward.7} parent=0 // pred_region
    _
  $region33: #{generator_forward.7} parent=0 // pred_fallthru
    _

// kernel: generator_forward.10
$region0: #{generator_forward.10}
  #allocation0 [shape = 'u32[]', space=smem, size = 0x4, offset = 0x4, fixed_abs, tag = 'smem constant byte address 0x4 - core index']
  #allocation1 [shape = 'u32[144,128]{1,0:T(1,128)}', space=vmem, size = 0x12000, scoped, tag = 'internal scratch']
  %s0 = inlined_call_operand.vmem [shape: bf16[32,256], index: 0, kind: input, shape index: {}]
  %s1 = inlined_call_operand.vmem [shape: bf16[4,16,128], index: 1, kind: input, shape index: {}]
  %s2 = inlined_call_operand.vmem [shape: bf16[9,256], index: 2, kind: input, shape index: {}]
  %s3 = inlined_call_operand.vmem [shape: f32[16,2], index: 3, kind: input, shape index: {}]
  %s4 = inlined_call_operand.vmem [shape: bf16[4,16,256], index: 4, kind: output, shape index: {}]
  %s5 = sld [smem:[#allocation0]]
  $region26: #{generator_forward.10} parent=0
    _
  %s7 = ssub.s32 1, %s5
  %s8 = scalar_select 0, %s7, %s5
  // Predicated region
  $region2: #{generator_forward.10} parent=0 // pred_check
    _
  $region3: #{generator_forward.10} parent=0 // pred_check_branch
    %10 = sbr.rel (0) target = $region5
  $region4: #{generator_forward.10} parent=0 // pred_region
    _
  $region5: #{generator_forward.10} parent=0 // pred_fallthru
    _
  // Predicated region
  $region6: #{generator_forward.10} parent=0 // pred_check
    _
  $region7: #{generator_forward.10} parent=0 // pred_check_branch
    %12 = sbr.rel (0) target = $region9
  $region8: #{generator_forward.10} parent=0 // pred_region
    _
  $region9: #{generator_forward.10} parent=0 // pred_fallthru
    _
  // Predicated region
  $region10: #{generator_forward.10} parent=0 // pred_check
    _
  $region11: #{generator_forward.10} parent=0 // pred_check_branch
    %14 = sbr.rel (0) target = $region13
  $region12: #{generator_forward.10} parent=0 // pred_region
    _
  $region13: #{generator_forward.10} parent=0 // pred_fallthru
    _
  // Predicated region
  $region14: #{generator_forward.10} parent=0 // pred_check
    _
  $region15: #{generator_forward.10} parent=0 // pred_check_branch
    %16 = sbr.rel (0) target = $region17
  $region16: #{generator_forward.10} parent=0 // pred_region
    _
  $region17: #{generator_forward.10} parent=0 // pred_fallthru
    _
  %v18 = vld [vmem:[%s0] sm:$0xff]
  %v19 = vld [vmem:[%s0 + $0x8] sm:$0xff]
  %v20 = vld [vmem:[%s0 + $0x10] sm:$0xff]
  %v21 = vld [vmem:[%s0 + $0x18] sm:$0xff]
  %v22 = vld [vmem:[%s2] sm:$0xff]
  %v23 = vld [vmem:[%s2 + $0x8] sm:$0x11]
  %v24 = vld [vmem:[%s3] sm:$0xff]
  %v25 = vld [vmem:[%s3 + $0x8] sm:$0xff]
  %v27 = vunpack.c.l.b16 %v22
  %v28 = vunpack.c.h.b16 %v22
  %v29 = vpack.c.b16 %v27, %v27
  %v30 = vpack.c.b16 %v28, %v28
  %v32 = vpack.i.b16 %v29, %v29
  %v34 = vlaneseq
  %v35 = vshrl.u32 %v34, 7
  %v36 = vsub.s32 2, %v35
  %v37 = vrot.slane %v32, %v36
  %v39 = vpack.i.b16 %v30, %v30
  %v41 = vlaneseq
  %v42 = vshrl.u32 %v41, 7
  %v43 = vsub.s32 2, %v42
  %v44 = vrot.slane %v39, %v43
  %v47 = vunpack.c.l.b16 %v37
  %v48 = vunpack.c.l.b16 %v44
  %v49 = vpack.c.b16 %v48, %v47
  %v51 = vmul.bf16 %v18, %v49
  %v52 = vmul.bf16 %v19, %v49
  %v53 = vmul.bf16 %v20, %v49
  %v54 = vmul.bf16 %v21, %v49
  %v59 = vunpack.c.h.b16 %v18
  %v60 = vunpack.c.h.b16 %v19
  %v61 = vunpack.c.h.b16 %v20
  %v62 = vunpack.c.h.b16 %v21
  %v63 = vpack.c.b16 %v60, %v59
  %v64 = vpack.c.b16 %v62, %v61
  %65 = vrot.lane.b32.xlu0 %v63, 1
  %v66 = vpop.permute.xlu0 %65
  %67 = vrot.lane.b32.xlu0 %v64, 1
  %v68 = vpop.permute.xlu0 %67
  %v69 = vunpack.c.l.b16 %v18
  %v70 = vunpack.c.l.b16 %v19
  %v71 = vunpack.c.l.b16 %v20
  %v72 = vunpack.c.l.b16 %v21
  %v73 = vpack.c.b16 %v70, %v69
  %v74 = vpack.c.b16 %v72, %v71
  %75 = vrot.lane.b32.xlu0 %v73, 1
  %v76 = vpop.permute.xlu0 %75
  %77 = vrot.lane.b32.xlu0 %v74, 1
  %v78 = vpop.permute.xlu0 %77
  %vm79 = vcmask 7168
  %v80 = vsel %vm79, %v76, %v66
  %v81 = vsel %vm79, %v78, %v68
  %vm84 = vcmask 7168
  %v87 = vsel %vm84, %v66, %v76
  %v91 = vsel %vm84, %v68, %v78
  %v93 = vshrl.u32 %v29, 16
  %v94 = vpack.i.b16 %v93, %v93
  %v96 = vlaneseq
  %v97 = vshrl.u32 %v96, 7
  %v98 = vsub.s32 1, %v97
  %v99 = vrot.slane %v94, %v98
  %v100 = vshrl.u32 %v30, 16
  %v101 = vpack.i.b16 %v100, %v100
  %v103 = vlaneseq
  %v104 = vshrl.u32 %v103, 7
  %v105 = vsub.s32 1, %v104
  %v106 = vrot.slane %v101, %v105
  %v107 = vmul.bf16 %v87, %v99
  %v108 = vmul.bf16 %v80, %v106
  %v109 = vmul.bf16 %v91, %v99
  %v110 = vmul.bf16 %v81, %v106
  %111 = vrot.lane.b32.xlu0 %v63, 8
  %v112 = vpop.permute.xlu0 %111
  %113 = vrot.lane.b32.xlu0 %v64, 8
  %v114 = vpop.permute.xlu0 %113
  %115 = vrot.lane.b32.xlu0 %v73, 8
  %v116 = vpop.permute.xlu0 %115
  %117 = vrot.lane.b32.xlu0 %v74, 8
  %v118 = vpop.permute.xlu0 %117
  %vm119 = vcmask 64512
  %v120 = vsel %vm119, %v116, %v112
  %v121 = vsel %vm119, %v118, %v114
  %vm124 = vcmask 64512
  %v127 = vsel %vm124, %v112, %v116
  %v131 = vsel %vm124, %v114, %v118
  %v133 = vlaneseq
  %v134 = vshrl.u32 %v133, 7
  %v135 = vsub.s32 0, %v134
  %v136 = vrot.slane %v94, %v135
  %v137 = vlaneseq
  %v138 = vshrl.u32 %v137, 7
  %v139 = vsub.s32 0, %v138
  %v140 = vrot.slane %v101, %v139
  %v141 = vmul.bf16 %v127, %v136
  %v142 = vmul.bf16 %v120, %v140
  %v143 = vmul.bf16 %v131, %v136
  %v144 = vmul.bf16 %v121, %v140
  %145 = vrot.lane.b32.xlu0 %v63, 9
  %v146 = vpop.permute.xlu0 %145
  %147 = vrot.lane.b32.xlu0 %v64, 9
  %v148 = vpop.permute.xlu0 %147
  %149 = vrot.lane.b32.xlu0 %v73, 9
  %v150 = vpop.permute.xlu0 %149
  %151 = vrot.lane.b32.xlu0 %v74, 9
  %v152 = vpop.permute.xlu0 %151
  %vm153 = vcmask 72704
  %v154 = vsel %vm153, %v150, %v146
  %v155 = vsel %vm153, %v152, %v148
  %vm158 = vcmask 72704
  %v161 = vsel %vm158, %v146, %v150
  %v165 = vsel %vm158, %v148, %v152
  %v167 = vlaneseq
  %v168 = vshrl.u32 %v167, 7
  %v169 = vsub.s32 0, %v168
  %v170 = vrot.slane %v32, %v169
  %v171 = vlaneseq
  %v172 = vshrl.u32 %v171, 7
  %v173 = vsub.s32 0, %v172
  %v174 = vrot.slane %v39, %v173
  %v175 = vmul.bf16 %v161, %v170
  %v176 = vmul.bf16 %v154, %v174
  %v177 = vmul.bf16 %v165, %v170
  %v178 = vmul.bf16 %v155, %v174
  %v183 = vunpack.c.l.b16 %v51
  %v184 = vunpack.c.h.b16 %v51
  %v185 = vunpack.c.l.b16 %v52
  %v186 = vunpack.c.h.b16 %v52
  %v187 = vunpack.c.l.b16 %v53
  %v188 = vunpack.c.h.b16 %v53
  %v189 = vunpack.c.l.b16 %v54
  %v190 = vunpack.c.h.b16 %v54
  %v191 = vpack.c.b16 %v185, %v183
  %v192 = vpack.c.b16 %v186, %v184
  %v193 = vpack.c.b16 %v189, %v187
  %v194 = vpack.c.b16 %v190, %v188
  %v199 = vld [vmem:[%s1] sm:$0xf]
  %v200 = vld [vmem:[%s1 + $0x4] sm:$0xf]
  %v203 = vunpack.c.l.b16 %v199
  %v204 = vunpack.c.l.b16 %v200
  %v205 = vpack.c.b16 %v204, %v203
  %207 = vmatprep.subr.bf16.mxu0 %v192
  %208 = vmatpush1.bf16.msra.mxu0 %v191
  %209 = vmatprep.subr.bf16.mxu0 %v194
  %210 = vmatpush1.bf16.msra.mxu0 %v193
  %211 = vmatprep.subr.bf16.mxu0 %v108
  %212 = vmatpush1.bf16.msra.mxu0 %v107
  %213 = vmatprep.subr.bf16.mxu0 %v110
  %214 = vmatpush1.bf16.msra.mxu0 %v109
  %215 = vmatprep.subr.bf16.mxu0 %v142
  %216 = vmatpush1.bf16.msra.mxu0 %v141
  %217 = vmatprep.subr.bf16.mxu0 %v144
  %218 = vmatpush1.bf16.msra.mxu0 %v143
  %219 = vmatprep.subr.bf16.mxu0 %v176
  %220 = vmatpush1.bf16.msra.mxu0 %v175
  %221 = vmatprep.subr.bf16.mxu0 %v178
  %222 = vmatpush1.bf16.msra.mxu0 %v177
  %223 = vmatprep.subr.bf16.mxu0 0
  %224 = vmatpush1.bf16.msra.mxu0 0
  %225 = vmatprep.subr.bf16.mxu0 0
  %226 = vmatpush1.bf16.msra.mxu0 0
  %227 = vmatprep.subr.bf16.mxu0 0
  %228 = vmatpush1.bf16.msra.mxu0 0
  %229 = vmatprep.subr.bf16.mxu0 0
  %230 = vmatpush1.bf16.msra.mxu0 0
  %231 = vmatprep.subr.bf16.mxu0 0
  %232 = vmatpush1.bf16.msra.mxu0 0
  %233 = vmatprep.subr.bf16.mxu0 0
  %234 = vmatpush1.bf16.msra.mxu0 0
  %235 = vmatprep.subr.bf16.mxu0 0
  %236 = vmatpush1.bf16.msra.mxu0 0
  %237 = vmatprep.subr.bf16.mxu0 0
  %238 = vmatpush1.bf16.msra.mxu0 0
  %239 = vmatprep.mubr.bf16.mxu0 0
  %240 = vmatmul.mubr.bf16.gmra.mrb[0].mxu0 %v205
  %v241 = vpop.f32.mrb[0].mxu0
  %v242 = vadd.f32 0.0, %v241
  %v243 = vpop.f32.mrb[0].mxu0
  %v244 = vadd.f32 0.0, %v243
  %v245 = vpop.f32.mrb[0].mxu0
  %v246 = vadd.f32 0.0, %v245
  %v247 = vpop.f32.mrb[0].mxu0
  %v248 = vadd.f32 0.0, %v247
  %249 = vdwg.mxu0
  %251 = vset.pattern.permute.xlu0 0
  %252 = vperm.xlu0 %251, %v24
  %v253 = vpop.permute.xlu0 %252
  %256 = vset.pattern.permute.xlu0 0
  %257 = vperm.xlu0 %256, %v25
  %v258 = vpop.permute.xlu0 %257
  %v260 = vmul.f32 %v242, %v253
  %v261 = vmul.f32 %v244, %v253
  %v262 = vmul.f32 %v246, %v258
  %v263 = vmul.f32 %v248, %v258
  %264 = vset.pattern.permute.xlu0 1
  %265 = vperm.xlu0 %264, %v24
  %v266 = vpop.permute.xlu0 %265
  %268 = vset.pattern.permute.xlu0 1
  %269 = vperm.xlu0 %268, %v25
  %v270 = vpop.permute.xlu0 %269
  %v272 = vadd.f32 %v260, %v266
  %v273 = vadd.f32 %v261, %v266
  %v274 = vadd.f32 %v262, %v270
  %v275 = vadd.f32 %v263, %v270
  %v276 = vmax.f32 %v272, 0.0
  %v277 = vmax.f32 %v273, 0.0
  %v278 = vmax.f32 %v274, 0.0
  %v279 = vmax.f32 %v275, 0.0
  %v280 = vpack.c.bf16 %v278, %v276
  %v281 = vpack.c.bf16 %v279, %v277
  %v284 = vunpack.c.l.b16 %v280
  %v285 = vunpack.c.l.b16 %v281
  %v286 = vunpack.c.h.b16 %v280
  %v287 = vunpack.c.h.b16 %v281
  %v288 = vpack.c.b16 %v285, %v284
  %v289 = vpack.c.b16 %v287, %v286
  %292 = vst [vmem:[%s4] sm:$0xff] %v288
  %293 = vst [vmem:[%s4 + $0x8] sm:$0xff] %v289
  %294 = vrot.lane.b32.xlu0 %v73, 127
  %v295 = vpop.permute.xlu0 %294
  %296 = vrot.lane.b32.xlu0 %v63, 127
  %v297 = vpop.permute.xlu0 %296
  %298 = vrot.lane.b32.xlu0 %v74, 127
  %v299 = vpop.permute.xlu0 %298
  %300 = vrot.lane.b32.xlu0 %v64, 127
  %v301 = vpop.permute.xlu0 %300
  %vm302 = vcmask 1039360
  %v303 = vsel %vm302, %v295, %v297
  %v304 = vsel %vm302, %v299, %v301
  %vm307 = vcmask 1039360
  %v310 = vsel %vm307, %v297, %v295
  %v314 = vsel %vm307, %v301, %v299
  %v316 = vlaneseq
  %v317 = vshrl.u32 %v316, 7
  %v318 = vsub.s32 2, %v317
  %v319 = vrot.slane %v94, %v318
  %v320 = vlaneseq
  %v321 = vshrl.u32 %v320, 7
  %v322 = vsub.s32 2, %v321
  %v323 = vrot.slane %v101, %v322
  %v324 = vmul.bf16 %v303, %v319
  %v325 = vmul.bf16 %v310, %v323
  %v326 = vmul.bf16 %v304, %v319
  %v327 = vmul.bf16 %v314, %v323
  %328 = vrot.lane.b32.xlu0 %v63, 7
  %v329 = vpop.permute.xlu0 %328
  %330 = vrot.lane.b32.xlu0 %v64, 7
  %v331 = vpop.permute.xlu0 %330
  %332 = vrot.lane.b32.xlu0 %v73, 7
  %v333 = vpop.permute.xlu0 %332
  %334 = vrot.lane.b32.xlu0 %v74, 7
  %v335 = vpop.permute.xlu0 %334
  %vm336 = vcmask 56320
  %v337 = vsel %vm336, %v333, %v329
  %v338 = vsel %vm336, %v335, %v331
  %vm341 = vcmask 56320
  %v344 = vsel %vm341, %v329, %v333
  %v348 = vsel %vm341, %v331, %v335
  %v350 = vlaneseq
  %v351 = vshrl.u32 %v350, 7
  %v352 = vsub.s32 1, %v351
  %v353 = vrot.slane %v32, %v352
  %v354 = vlaneseq
  %v355 = vshrl.u32 %v354, 7
  %v356 = vsub.s32 1, %v355
  %v357 = vrot.slane %v39, %v356
  %v358 = vmul.bf16 %v344, %v353
  %v359 = vmul.bf16 %v337, %v357
  %v360 = vmul.bf16 %v348, %v353
  %v361 = vmul.bf16 %v338, %v357
  %s362 = scalar_lea.vmem %s1, 8
  %v363 = vld [vmem:[%s362] sm:$0xf]
  %v364 = vld [vmem:[%s362 + $0x4] sm:$0xf]
  %v367 = vunpack.c.l.b16 %v363
  %v368 = vunpack.c.l.b16 %v364
  %v369 = vpack.c.b16 %v368, %v367
  %371 = vmatprep.subr.bf16.mxu0 %v325
  %372 = vmatpush1.bf16.msra.mxu0 %v324
  %373 = vmatprep.subr.bf16.mxu0 %v327
  %374 = vmatpush1.bf16.msra.mxu0 %v326
  %375 = vmatprep.subr.bf16.mxu0 %v192
  %376 = vmatpush1.bf16.msra.mxu0 %v191
  %377 = vmatprep.subr.bf16.mxu0 %v194
  %378 = vmatpush1.bf16.msra.mxu0 %v193
  %379 = vmatprep.subr.bf16.mxu0 %v359
  %380 = vmatpush1.bf16.msra.mxu0 %v358
  %381 = vmatprep.subr.bf16.mxu0 %v361
  %382 = vmatpush1.bf16.msra.mxu0 %v360
  %383 = vmatprep.subr.bf16.mxu0 %v142
  %384 = vmatpush1.bf16.msra.mxu0 %v141
  %385 = vmatprep.subr.bf16.mxu0 %v144
  %386 = vmatpush1.bf16.msra.mxu0 %v143
  %387 = vmatprep.subr.bf16.mxu0 0
  %388 = vmatpush1.bf16.msra.mxu0 0
  %389 = vmatprep.subr.bf16.mxu0 0
  %390 = vmatpush1.bf16.msra.mxu0 0
  %391 = vmatprep.subr.bf16.mxu0 0
  %392 = vmatpush1.bf16.msra.mxu0 0
  %393 = vmatprep.subr.bf16.mxu0 0
  %394 = vmatpush1.bf16.msra.mxu0 0
  %395 = vmatprep.subr.bf16.mxu0 0
  %396 = vmatpush1.bf16.msra.mxu0 0
  %397 = vmatprep.subr.bf16.mxu0 0
  %398 = vmatpush1.bf16.msra.mxu0 0
  %399 = vmatprep.subr.bf16.mxu0 0
  %400 = vmatpush1.bf16.msra.mxu0 0
  %401 = vmatprep.subr.bf16.mxu0 0
  %402 = vmatpush1.bf16.msra.mxu0 0
  %403 = vmatprep.mubr.bf16.mxu0 0
  %404 = vmatmul.mubr.bf16.gmra.mrb[0].mxu0 %v369
  %v405 = vpop.f32.mrb[0].mxu0
  %v406 = vadd.f32 0.0, %v405
  %v407 = vpop.f32.mrb[0].mxu0
  %v408 = vadd.f32 0.0, %v407
  %v409 = vpop.f32.mrb[0].mxu0
  %v410 = vadd.f32 0.0, %v409
  %v411 = vpop.f32.mrb[0].mxu0
  %v412 = vadd.f32 0.0, %v411
  %413 = vdwg.mxu0
  %v414 = vmul.f32 %v406, %v253
  %v415 = vmul.f32 %v408, %v253
  %v416 = vmul.f32 %v410, %v258
  %v417 = vmul.f32 %v412, %v258
  %v418 = vadd.f32 %v414, %v266
  %v419 = vadd.f32 %v415, %v266
  %v420 = vadd.f32 %v416, %v270
  %v421 = vadd.f32 %v417, %v270
  %v422 = vmax.f32 %v418, 0.0
  %v423 = vmax.f32 %v419, 0.0
  %v424 = vmax.f32 %v420, 0.0
  %v425 = vmax.f32 %v421, 0.0
  %v426 = vpack.c.bf16 %v424, %v422
  %v427 = vpack.c.bf16 %v425, %v423
  %v430 = vunpack.c.l.b16 %v426
  %v431 = vunpack.c.l.b16 %v427
  %v432 = vunpack.c.h.b16 %v426
  %v433 = vunpack.c.h.b16 %v427
  %v434 = vpack.c.b16 %v431, %v430
  %v435 = vpack.c.b16 %v433, %v432
  %s438 = scalar_lea.vmem %s4, 16
  %439 = vst [vmem:[%s438] sm:$0xff] %v434
  %440 = vst [vmem:[%s438 + $0x8] sm:$0xff] %v435
  %441 = vrot.lane.b32.xlu0 %v73, 120
  %v442 = vpop.permute.xlu0 %441
  %443 = vrot.lane.b32.xlu0 %v63, 120
  %v444 = vpop.permute.xlu0 %443
  %445 = vrot.lane.b32.xlu0 %v74, 120
  %v446 = vpop.permute.xlu0 %445
  %447 = vrot.lane.b32.xlu0 %v64, 120
  %v448 = vpop.permute.xlu0 %447
  %vm449 = vcmask 982016
  %v450 = vsel %vm449, %v442, %v444
  %v451 = vsel %vm449, %v446, %v448
  %vm454 = vcmask 982016
  %v457 = vsel %vm454, %v444, %v442
  %v461 = vsel %vm454, %v448, %v446
  %v463 = vlaneseq
  %v464 = vshrl.u32 %v463, 7
  %v465 = vsub.s32 3, %v464
  %v466 = vrot.slane %v94, %v465
  %v467 = vlaneseq
  %v468 = vshrl.u32 %v467, 7
  %v469 = vsub.s32 3, %v468
  %v470 = vrot.slane %v101, %v469
  %v471 = vmul.bf16 %v450, %v466
  %v472 = vmul.bf16 %v457, %v470
  %v473 = vmul.bf16 %v451, %v466
  %v474 = vmul.bf16 %v461, %v470
  %475 = vrot.lane.b32.xlu0 %v73, 121
  %v476 = vpop.permute.xlu0 %475
  %477 = vrot.lane.b32.xlu0 %v63, 121
  %v478 = vpop.permute.xlu0 %477
  %479 = vrot.lane.b32.xlu0 %v74, 121
  %v480 = vpop.permute.xlu0 %479
  %481 = vrot.lane.b32.xlu0 %v64, 121
  %v482 = vpop.permute.xlu0 %481
  %vm483 = vcmask 990208
  %v484 = vsel %vm483, %v476, %v478
  %v485 = vsel %vm483, %v480, %v482
  %vm488 = vcmask 990208
  %v491 = vsel %vm488, %v478, %v476
  %v495 = vsel %vm488, %v482, %v480
  %v497 = vlaneseq
  %v498 = vshrl.u32 %v497, 7
  %v499 = vsub.s32 3, %v498
  %v500 = vrot.slane %v32, %v499
  %v501 = vlaneseq
  %v502 = vshrl.u32 %v501, 7
  %v503 = vsub.s32 3, %v502
  %v504 = vrot.slane %v39, %v503
  %v505 = vmul.bf16 %v484, %v500
  %v506 = vmul.bf16 %v491, %v504
  %v507 = vmul.bf16 %v485, %v500
  %v508 = vmul.bf16 %v495, %v504
  %s509 = scalar_lea.vmem %s1, 16
  %v510 = vld [vmem:[%s509] sm:$0xf]
  %v511 = vld [vmem:[%s509 + $0x4] sm:$0xf]
  %v514 = vunpack.c.l.b16 %v510
  %v515 = vunpack.c.l.b16 %v511
  %v516 = vpack.c.b16 %v515, %v514
  %518 = vmatprep.subr.bf16.mxu0 %v472
  %519 = vmatpush1.bf16.msra.mxu0 %v471
  %520 = vmatprep.subr.bf16.mxu0 %v474
  %521 = vmatpush1.bf16.msra.mxu0 %v473
  %522 = vmatprep.subr.bf16.mxu0 %v506
  %523 = vmatpush1.bf16.msra.mxu0 %v505
  %524 = vmatprep.subr.bf16.mxu0 %v508
  %525 = vmatpush1.bf16.msra.mxu0 %v507
  %526 = vmatprep.subr.bf16.mxu0 %v192
  %527 = vmatpush1.bf16.msra.mxu0 %v191
  %528 = vmatprep.subr.bf16.mxu0 %v194
  %529 = vmatpush1.bf16.msra.mxu0 %v193
  %530 = vmatprep.subr.bf16.mxu0 %v108
  %531 = vmatpush1.bf16.msra.mxu0 %v107
  %532 = vmatprep.subr.bf16.mxu0 %v110
  %533 = vmatpush1.bf16.msra.mxu0 %v109
  %534 = vmatprep.subr.bf16.mxu0 0
  %535 = vmatpush1.bf16.msra.mxu0 0
  %536 = vmatprep.subr.bf16.mxu0 0
  %537 = vmatpush1.bf16.msra.mxu0 0
  %538 = vmatprep.subr.bf16.mxu0 0
  %539 = vmatpush1.bf16.msra.mxu0 0
  %540 = vmatprep.subr.bf16.mxu0 0
  %541 = vmatpush1.bf16.msra.mxu0 0
  %542 = vmatprep.subr.bf16.mxu0 0
  %543 = vmatpush1.bf16.msra.mxu0 0
  %544 = vmatprep.subr.bf16.mxu0 0
  %545 = vmatpush1.bf16.msra.mxu0 0
  %546 = vmatprep.subr.bf16.mxu0 0
  %547 = vmatpush1.bf16.msra.mxu0 0
  %548 = vmatprep.subr.bf16.mxu0 0
  %549 = vmatpush1.bf16.msra.mxu0 0
  %550 = vmatprep.mubr.bf16.mxu0 0
  %551 = vmatmul.mubr.bf16.gmra.mrb[0].mxu0 %v516
  %v552 = vpop.f32.mrb[0].mxu0
  %v553 = vadd.f32 0.0, %v552
  %v554 = vpop.f32.mrb[0].mxu0
  %v555 = vadd.f32 0.0, %v554
  %v556 = vpop.f32.mrb[0].mxu0
  %v557 = vadd.f32 0.0, %v556
  %v558 = vpop.f32.mrb[0].mxu0
  %v559 = vadd.f32 0.0, %v558
  %560 = vdwg.mxu0
  %v561 = vmul.f32 %v553, %v253
  %v562 = vmul.f32 %v555, %v253
  %v563 = vmul.f32 %v557, %v258
  %v564 = vmul.f32 %v559, %v258
  %v565 = vadd.f32 %v561, %v266
  %v566 = vadd.f32 %v562, %v266
  %v567 = vadd.f32 %v563, %v270
  %v568 = vadd.f32 %v564, %v270
  %v569 = vmax.f32 %v565, 0.0
  %v570 = vmax.f32 %v566, 0.0
  %v571 = vmax.f32 %v567, 0.0
  %v572 = vmax.f32 %v568, 0.0
  %v573 = vpack.c.bf16 %v571, %v569
  %v574 = vpack.c.bf16 %v572, %v570
  %v577 = vunpack.c.l.b16 %v573
  %v578 = vunpack.c.l.b16 %v574
  %v579 = vunpack.c.h.b16 %v573
  %v580 = vunpack.c.h.b16 %v574
  %v581 = vpack.c.b16 %v578, %v577
  %v582 = vpack.c.b16 %v580, %v579
  %s585 = scalar_lea.vmem %s4, 32
  %586 = vst [vmem:[%s585] sm:$0xff] %v581
  %587 = vst [vmem:[%s585 + $0x8] sm:$0xff] %v582
  %588 = vrot.lane.b32.xlu0 %v73, 119
  %v589 = vpop.permute.xlu0 %588
  %590 = vrot.lane.b32.xlu0 %v63, 119
  %v591 = vpop.permute.xlu0 %590
  %592 = vrot.lane.b32.xlu0 %v74, 119
  %v593 = vpop.permute.xlu0 %592
  %594 = vrot.lane.b32.xlu0 %v64, 119
  %v595 = vpop.permute.xlu0 %594
  %vm596 = vcmask 973824
  %v597 = vsel %vm596, %v589, %v591
  %v598 = vsel %vm596, %v593, %v595
  %vm601 = vcmask 973824
  %v604 = vsel %vm601, %v591, %v589
  %v608 = vsel %vm601, %v595, %v593
  %v611 = vunpack.c.l.b16 %v23
  %v612 = vunpack.c.h.b16 %v23
  %v613 = vpack.c.b16 %v611, %v611
  %v614 = vpack.c.b16 %v612, %v612
  %v616 = vpack.i.b16 %v613, %v613
  %v618 = vlaneseq
  %v619 = vshrl.u32 %v618, 7
  %v620 = vsub.s32 0, %v619
  %v621 = vrot.slane %v616, %v620
  %v623 = vpack.i.b16 %v614, %v614
  %v625 = vlaneseq
  %v626 = vshrl.u32 %v625, 7
  %v627 = vsub.s32 0, %v626
  %v628 = vrot.slane %v623, %v627
  %v629 = vmul.bf16 %v597, %v621
  %v630 = vmul.bf16 %v604, %v628
  %v631 = vmul.bf16 %v598, %v621
  %v632 = vmul.bf16 %v608, %v628
  %s633 = scalar_lea.vmem %s1, 24
  %v634 = vld [vmem:[%s633] sm:$0xf]
  %v635 = vld [vmem:[%s633 + $0x4] sm:$0xf]
  %v638 = vunpack.c.l.b16 %v634
  %v639 = vunpack.c.l.b16 %v635
  %v640 = vpack.c.b16 %v639, %v638
  %642 = vmatprep.subr.bf16.mxu0 %v630
  %643 = vmatpush1.bf16.msra.mxu0 %v629
  %644 = vmatprep.subr.bf16.mxu0 %v632
  %645 = vmatpush1.bf16.msra.mxu0 %v631
  %646 = vmatprep.subr.bf16.mxu0 %v472
  %647 = vmatpush1.bf16.msra.mxu0 %v471
  %648 = vmatprep.subr.bf16.mxu0 %v474
  %649 = vmatpush1.bf16.msra.mxu0 %v473
  %650 = vmatprep.subr.bf16.mxu0 %v325
  %651 = vmatpush1.bf16.msra.mxu0 %v324
  %652 = vmatprep.subr.bf16.mxu0 %v327
  %653 = vmatpush1.bf16.msra.mxu0 %v326
  %654 = vmatprep.subr.bf16.mxu0 %v192
  %655 = vmatpush1.bf16.msra.mxu0 %v191
  %656 = vmatprep.subr.bf16.mxu0 %v194
  %657 = vmatpush1.bf16.msra.mxu0 %v193
  %658 = vmatprep.subr.bf16.mxu0 0
  %659 = vmatpush1.bf16.msra.mxu0 0
  %660 = vmatprep.subr.bf16.mxu0 0
  %661 = vmatpush1.bf16.msra.mxu0 0
  %662 = vmatprep.subr.bf16.mxu0 0
  %663 = vmatpush1.bf16.msra.mxu0 0
  %664 = vmatprep.subr.bf16.mxu0 0
  %665 = vmatpush1.bf16.msra.mxu0 0
  %666 = vmatprep.subr.bf16.mxu0 0
  %667 = vmatpush1.bf16.msra.mxu0 0
  %668 = vmatprep.subr.bf16.mxu0 0
  %669 = vmatpush1.bf16.msra.mxu0 0
  %670 = vmatprep.subr.bf16.mxu0 0
  %671 = vmatpush1.bf16.msra.mxu0 0
  %672 = vmatprep.subr.bf16.mxu0 0
  %673 = vmatpush1.bf16.msra.mxu0 0
  %674 = vmatprep.mubr.bf16.mxu0 0
  %675 = vmatmul.mubr.bf16.gmra.mrb[0].mxu0 %v640
  %v676 = vpop.f32.mrb[0].mxu0
  %v677 = vadd.f32 0.0, %v676
  %v678 = vpop.f32.mrb[0].mxu0
  %v679 = vadd.f32 0.0, %v678
  %v680 = vpop.f32.mrb[0].mxu0
  %v681 = vadd.f32 0.0, %v680
  %v682 = vpop.f32.mrb[0].mxu0
  %v683 = vadd.f32 0.0, %v682
  %684 = vdwg.mxu0
  %v685 = vmul.f32 %v677, %v253
  %v686 = vmul.f32 %v679, %v253
  %v687 = vmul.f32 %v681, %v258
  %v688 = vmul.f32 %v683, %v258
  %v689 = vadd.f32 %v685, %v266
  %v690 = vadd.f32 %v686, %v266
  %v691 = vadd.f32 %v687, %v270
  %v692 = vadd.f32 %v688, %v270
  %v693 = vmax.f32 %v689, 0.0
  %v694 = vmax.f32 %v690, 0.0
  %v695 = vmax.f32 %v691, 0.0
  %v696 = vmax.f32 %v692, 0.0
  %v697 = vpack.c.bf16 %v695, %v693
  %v698 = vpack.c.bf16 %v696, %v694
  %v701 = vunpack.c.l.b16 %v697
  %v702 = vunpack.c.l.b16 %v698
  %v703 = vunpack.c.h.b16 %v697
  %v704 = vunpack.c.h.b16 %v698
  %v705 = vpack.c.b16 %v702, %v701
  %v706 = vpack.c.b16 %v704, %v703
  %s709 = scalar_lea.vmem %s4, 48
  %710 = vst [vmem:[%s709] sm:$0xff] %v705
  %711 = vst [vmem:[%s709 + $0x8] sm:$0xff] %v706
  // Predicated region
  $region18: #{generator_forward.10} parent=0 // pred_check
    _
  $region19: #{generator_forward.10} parent=0 // pred_check_branch
    %713 = sbr.rel (0) target = $region21
  $region20: #{generator_forward.10} parent=0 // pred_region
    _
  $region21: #{generator_forward.10} parent=0 // pred_fallthru
    _
  // Predicated region
  $region22: #{generator_forward.10} parent=0 // pred_check
    _
  $region23: #{generator_forward.10} parent=0 // pred_check_branch
    %715 = sbr.rel (0) target = $region25
  $region24: #{generator_forward.10} parent=0 // pred_region
    _
  $region25: #{generator_forward.10} parent=0 // pred_fallthru
    _

// kernel: generator_forward.9
$region0: #{generator_forward.9}
  #allocation0 [shape = 'u32[]', space=smem, size = 0x4, offset = 0x4, fixed_abs, tag = 'smem constant byte address 0x4 - core index']
  #allocation1 [shape = 'u32[144,128]{1,0:T(1,128)}', space=vmem, size = 0x12000, scoped, tag = 'internal scratch']
  %s0 = inlined_call_operand.vmem [shape: bf16[32,256], index: 0, kind: input, shape index: {}]
  %s1 = inlined_call_operand.vmem [shape: bf16[4,16,128], index: 1, kind: input, shape index: {}]
  %s2 = inlined_call_operand.vmem [shape: bf16[9,256], index: 2, kind: input, shape index: {}]
  %s3 = inlined_call_operand.vmem [shape: f32[16,2], index: 3, kind: input, shape index: {}]
  %s4 = inlined_call_operand.vmem [shape: f32[16,2], index: 4, kind: output, shape index: {}]
  %s5 = sld [smem:[#allocation0]]
  $region34: #{generator_forward.9} parent=0
    _
  %s7 = ssub.s32 1, %s5
  %s8 = scalar_select 0, %s7, %s5
  // Predicated region
  $region2: #{generator_forward.9} parent=0 // pred_check
    _
  $region3: #{generator_forward.9} parent=0 // pred_check_branch
    %10 = sbr.rel (0) target = $region5
  $region4: #{generator_forward.9} parent=0 // pred_region
    _
  $region5: #{generator_forward.9} parent=0 // pred_fallthru
    _
  // Predicated region
  $region6: #{generator_forward.9} parent=0 // pred_check
    _
  $region7: #{generator_forward.9} parent=0 // pred_check_branch
    %12 = sbr.rel (0) target = $region9
  $region8: #{generator_forward.9} parent=0 // pred_region
    _
  $region9: #{generator_forward.9} parent=0 // pred_fallthru
    _
  // Predicated region
  $region10: #{generator_forward.9} parent=0 // pred_check
    _
  $region11: #{generator_forward.9} parent=0 // pred_check_branch
    %14 = sbr.rel (0) target = $region13
  $region12: #{generator_forward.9} parent=0 // pred_region
    _
  $region13: #{generator_forward.9} parent=0 // pred_fallthru
    _
  // Predicated region
  $region14: #{generator_forward.9} parent=0 // pred_check
    _
  $region15: #{generator_forward.9} parent=0 // pred_check_branch
    %16 = sbr.rel (0) target = $region17
  $region16: #{generator_forward.9} parent=0 // pred_region
    _
  $region17: #{generator_forward.9} parent=0 // pred_fallthru
    _
  %p18 = scmp.eq.s32.totalorder 0, 0
  // Predicated region
  $region18: #{generator_forward.9} parent=0 // pred_check
    %p19 = pneg %p18
  $region19: #{generator_forward.9} parent=0 // pred_check_branch
    %21 = sbr.rel (%p19) target = $region21
  $region20: #{generator_forward.9} parent=0 // pred_region
    %vm22 = vcmask 15360
    %23 = vst.msk [vmem:[%s4] sm:$0xff] %vm22, 0.0
    %24 = vst.msk [vmem:[%s4 + $0x8] sm:$0xff] %vm22, 0.0
  $region21: #{generator_forward.9} parent=0 // pred_fallthru
    _
  %v25 = vld [vmem:[%s0] sm:$0xff]
  %v26 = vld [vmem:[%s0 + $0x8] sm:$0xff]
  %v27 = vld [vmem:[%s0 + $0x10] sm:$0xff]
  %v28 = vld [vmem:[%s0 + $0x18] sm:$0xff]
  %v29 = vld [vmem:[%s2] sm:$0xff]
  %v30 = vld [vmem:[%s2 + $0x8] sm:$0x11]
  %v32 = vunpack.c.l.b16 %v29
  %v33 = vunpack.c.h.b16 %v29
  %v34 = vpack.c.b16 %v32, %v32
  %v35 = vpack.c.b16 %v33, %v33
  %v37 = vpack.i.b16 %v34, %v34
  %v39 = vlaneseq
  %v40 = vshrl.u32 %v39, 7
  %v41 = vsub.s32 2, %v40
  %v42 = vrot.slane %v37, %v41
  %v44 = vpack.i.b16 %v35, %v35
  %v46 = vlaneseq
  %v47 = vshrl.u32 %v46, 7
  %v48 = vsub.s32 2, %v47
  %v49 = vrot.slane %v44, %v48
  %v52 = vunpack.c.l.b16 %v42
  %v53 = vunpack.c.l.b16 %v49
  %v54 = vpack.c.b16 %v53, %v52
  %v56 = vmul.bf16 %v25, %v54
  %v57 = vmul.bf16 %v26, %v54
  %v58 = vmul.bf16 %v27, %v54
  %v59 = vmul.bf16 %v28, %v54
  %v64 = vunpack.c.h.b16 %v25
  %v65 = vunpack.c.h.b16 %v26
  %v66 = vunpack.c.h.b16 %v27
  %v67 = vunpack.c.h.b16 %v28
  %v68 = vpack.c.b16 %v65, %v64
  %v69 = vpack.c.b16 %v67, %v66
  %70 = vrot.lane.b32.xlu0 %v68, 1
  %v71 = vpop.permute.xlu0 %70
  %72 = vrot.lane.b32.xlu0 %v69, 1
  %v73 = vpop.permute.xlu0 %72
  %v74 = vunpack.c.l.b16 %v25
  %v75 = vunpack.c.l.b16 %v26
  %v76 = vunpack.c.l.b16 %v27
  %v77 = vunpack.c.l.b16 %v28
  %v78 = vpack.c.b16 %v75, %v74
  %v79 = vpack.c.b16 %v77, %v76
  %80 = vrot.lane.b32.xlu0 %v78, 1
  %v81 = vpop.permute.xlu0 %80
  %82 = vrot.lane.b32.xlu0 %v79, 1
  %v83 = vpop.permute.xlu0 %82
  %vm84 = vcmask 7168
  %v85 = vsel %vm84, %v81, %v71
  %v86 = vsel %vm84, %v83, %v73
  %vm89 = vcmask 7168
  %v92 = vsel %vm89, %v71, %v81
  %v96 = vsel %vm89, %v73, %v83
  %v98 = vshrl.u32 %v34, 16
  %v99 = vpack.i.b16 %v98, %v98
  %v101 = vlaneseq
  %v102 = vshrl.u32 %v101, 7
  %v103 = vsub.s32 1, %v102
  %v104 = vrot.slane %v99, %v103
  %v105 = vshrl.u32 %v35, 16
  %v106 = vpack.i.b16 %v105, %v105
  %v108 = vlaneseq
  %v109 = vshrl.u32 %v108, 7
  %v110 = vsub.s32 1, %v109
  %v111 = vrot.slane %v106, %v110
  %v112 = vmul.bf16 %v92, %v104
  %v113 = vmul.bf16 %v85, %v111
  %v114 = vmul.bf16 %v96, %v104
  %v115 = vmul.bf16 %v86, %v111
  %116 = vrot.lane.b32.xlu0 %v68, 8
  %v117 = vpop.permute.xlu0 %116
  %118 = vrot.lane.b32.xlu0 %v69, 8
  %v119 = vpop.permute.xlu0 %118
  %120 = vrot.lane.b32.xlu0 %v78, 8
  %v121 = vpop.permute.xlu0 %120
  %122 = vrot.lane.b32.xlu0 %v79, 8
  %v123 = vpop.permute.xlu0 %122
  %vm124 = vcmask 64512
  %v125 = vsel %vm124, %v121, %v117
  %v126 = vsel %vm124, %v123, %v119
  %vm129 = vcmask 64512
  %v132 = vsel %vm129, %v117, %v121
  %v136 = vsel %vm129, %v119, %v123
  %v138 = vlaneseq
  %v139 = vshrl.u32 %v138, 7
  %v140 = vsub.s32 0, %v139
  %v141 = vrot.slane %v99, %v140
  %v142 = vlaneseq
  %v143 = vshrl.u32 %v142, 7
  %v144 = vsub.s32 0, %v143
  %v145 = vrot.slane %v106, %v144
  %v146 = vmul.bf16 %v132, %v141
  %v147 = vmul.bf16 %v125, %v145
  %v148 = vmul.bf16 %v136, %v141
  %v149 = vmul.bf16 %v126, %v145
  %150 = vrot.lane.b32.xlu0 %v68, 9
  %v151 = vpop.permute.xlu0 %150
  %152 = vrot.lane.b32.xlu0 %v69, 9
  %v153 = vpop.permute.xlu0 %152
  %154 = vrot.lane.b32.xlu0 %v78, 9
  %v155 = vpop.permute.xlu0 %154
  %156 = vrot.lane.b32.xlu0 %v79, 9
  %v157 = vpop.permute.xlu0 %156
  %vm158 = vcmask 72704
  %v159 = vsel %vm158, %v155, %v151
  %v160 = vsel %vm158, %v157, %v153
  %vm163 = vcmask 72704
  %v166 = vsel %vm163, %v151, %v155
  %v170 = vsel %vm163, %v153, %v157
  %v172 = vlaneseq
  %v173 = vshrl.u32 %v172, 7
  %v174 = vsub.s32 0, %v173
  %v175 = vrot.slane %v37, %v174
  %v176 = vlaneseq
  %v177 = vshrl.u32 %v176, 7
  %v178 = vsub.s32 0, %v177
  %v179 = vrot.slane %v44, %v178
  %v180 = vmul.bf16 %v166, %v175
  %v181 = vmul.bf16 %v159, %v179
  %v182 = vmul.bf16 %v170, %v175
  %v183 = vmul.bf16 %v160, %v179
  %v188 = vunpack.c.l.b16 %v56
  %v189 = vunpack.c.h.b16 %v56
  %v190 = vunpack.c.l.b16 %v57
  %v191 = vunpack.c.h.b16 %v57
  %v192 = vunpack.c.l.b16 %v58
  %v193 = vunpack.c.h.b16 %v58
  %v194 = vunpack.c.l.b16 %v59
  %v195 = vunpack.c.h.b16 %v59
  %v196 = vpack.c.b16 %v190, %v188
  %v197 = vpack.c.b16 %v191, %v189
  %v198 = vpack.c.b16 %v194, %v192
  %v199 = vpack.c.b16 %v195, %v193
  %v204 = vld [vmem:[%s1] sm:$0xf]
  %v205 = vld [vmem:[%s1 + $0x4] sm:$0xf]
  %v208 = vunpack.c.l.b16 %v204
  %v209 = vunpack.c.l.b16 %v205
  %v210 = vpack.c.b16 %v209, %v208
  %212 = vmatprep.subr.bf16.mxu0 %v197
  %213 = vmatpush1.bf16.msra.mxu0 %v196
  %214 = vmatprep.subr.bf16.mxu0 %v199
  %215 = vmatpush1.bf16.msra.mxu0 %v198
  %216 = vmatprep.subr.bf16.mxu0 %v113
  %217 = vmatpush1.bf16.msra.mxu0 %v112
  %218 = vmatprep.subr.bf16.mxu0 %v115
  %219 = vmatpush1.bf16.msra.mxu0 %v114
  %220 = vmatprep.subr.bf16.mxu0 %v147
  %221 = vmatpush1.bf16.msra.mxu0 %v146
  %222 = vmatprep.subr.bf16.mxu0 %v149
  %223 = vmatpush1.bf16.msra.mxu0 %v148
  %224 = vmatprep.subr.bf16.mxu0 %v181
  %225 = vmatpush1.bf16.msra.mxu0 %v180
  %226 = vmatprep.subr.bf16.mxu0 %v183
  %227 = vmatpush1.bf16.msra.mxu0 %v182
  %228 = vmatprep.subr.bf16.mxu0 0
  %229 = vmatpush1.bf16.msra.mxu0 0
  %230 = vmatprep.subr.bf16.mxu0 0
  %231 = vmatpush1.bf16.msra.mxu0 0
  %232 = vmatprep.subr.bf16.mxu0 0
  %233 = vmatpush1.bf16.msra.mxu0 0
  %234 = vmatprep.subr.bf16.mxu0 0
  %235 = vmatpush1.bf16.msra.mxu0 0
  %236 = vmatprep.subr.bf16.mxu0 0
  %237 = vmatpush1.bf16.msra.mxu0 0
  %238 = vmatprep.subr.bf16.mxu0 0
  %239 = vmatpush1.bf16.msra.mxu0 0
  %240 = vmatprep.subr.bf16.mxu0 0
  %241 = vmatpush1.bf16.msra.mxu0 0
  %242 = vmatprep.subr.bf16.mxu0 0
  %243 = vmatpush1.bf16.msra.mxu0 0
  %244 = vmatprep.mubr.bf16.mxu0 0
  %245 = vmatmul.mubr.bf16.gmra.mrb[0].mxu0 %v210
  %v246 = vpop.f32.mrb[0].mxu0
  %v247 = vadd.f32 0.0, %v246
  %v248 = vpop.f32.mrb[0].mxu0
  %v249 = vadd.f32 0.0, %v248
  %v250 = vpop.f32.mrb[0].mxu0
  %v251 = vadd.f32 0.0, %v250
  %v252 = vpop.f32.mrb[0].mxu0
  %v253 = vadd.f32 0.0, %v252
  %254 = vdwg.mxu0
  %v255 = vadd.f32 %v247, %v249
  %256 = vadd.xlane.f32.xlu0 %v255
  %v257 = vpop.xlane.xlu0 %256
  %v258 = vadd.f32 %v251, %v253
  %259 = vadd.xlane.f32.xlu0 %v258
  %v260 = vpop.xlane.xlu0 %259
  %v261 = vadd.f32 %v257, 0.0
  %v262 = vadd.f32 %v260, 0.0
  %v263 = vmul.f32 %v247, %v247
  %v264 = vmul.f32 %v249, %v249
  %v265 = vmul.f32 %v251, %v251
  %v266 = vmul.f32 %v253, %v253
  %v267 = vadd.f32 %v263, %v264
  %268 = vadd.xlane.f32.xlu0 %v267
  %v269 = vpop.xlane.xlu0 %268
  %v270 = vadd.f32 %v265, %v266
  %271 = vadd.xlane.f32.xlu0 %v270
  %v272 = vpop.xlane.xlu0 %271
  %v273 = vadd.f32 %v269, 0.0
  %v274 = vadd.f32 %v272, 0.0
  %275 = vrot.lane.b32.xlu0 %v78, 127
  %v276 = vpop.permute.xlu0 %275
  %277 = vrot.lane.b32.xlu0 %v68, 127
  %v278 = vpop.permute.xlu0 %277
  %279 = vrot.lane.b32.xlu0 %v79, 127
  %v280 = vpop.permute.xlu0 %279
  %281 = vrot.lane.b32.xlu0 %v69, 127
  %v282 = vpop.permute.xlu0 %281
  %vm283 = vcmask 1039360
  %v284 = vsel %vm283, %v276, %v278
  %v285 = vsel %vm283, %v280, %v282
  %vm288 = vcmask 1039360
  %v291 = vsel %vm288, %v278, %v276
  %v295 = vsel %vm288, %v282, %v280
  %v297 = vlaneseq
  %v298 = vshrl.u32 %v297, 7
  %v299 = vsub.s32 2, %v298
  %v300 = vrot.slane %v99, %v299
  %v301 = vlaneseq
  %v302 = vshrl.u32 %v301, 7
  %v303 = vsub.s32 2, %v302
  %v304 = vrot.slane %v106, %v303
  %v305 = vmul.bf16 %v284, %v300
  %v306 = vmul.bf16 %v291, %v304
  %v307 = vmul.bf16 %v285, %v300
  %v308 = vmul.bf16 %v295, %v304
  %309 = vrot.lane.b32.xlu0 %v68, 7
  %v310 = vpop.permute.xlu0 %309
  %311 = vrot.lane.b32.xlu0 %v69, 7
  %v312 = vpop.permute.xlu0 %311
  %313 = vrot.lane.b32.xlu0 %v78, 7
  %v314 = vpop.permute.xlu0 %313
  %315 = vrot.lane.b32.xlu0 %v79, 7
  %v316 = vpop.permute.xlu0 %315
  %vm317 = vcmask 56320
  %v318 = vsel %vm317, %v314, %v310
  %v319 = vsel %vm317, %v316, %v312
  %vm322 = vcmask 56320
  %v325 = vsel %vm322, %v310, %v314
  %v329 = vsel %vm322, %v312, %v316
  %v331 = vlaneseq
  %v332 = vshrl.u32 %v331, 7
  %v333 = vsub.s32 1, %v332
  %v334 = vrot.slane %v37, %v333
  %v335 = vlaneseq
  %v336 = vshrl.u32 %v335, 7
  %v337 = vsub.s32 1, %v336
  %v338 = vrot.slane %v44, %v337
  %v339 = vmul.bf16 %v325, %v334
  %v340 = vmul.bf16 %v318, %v338
  %v341 = vmul.bf16 %v329, %v334
  %v342 = vmul.bf16 %v319, %v338
  %s343 = scalar_lea.vmem %s1, 8
  %v344 = vld [vmem:[%s343] sm:$0xf]
  %v345 = vld [vmem:[%s343 + $0x4] sm:$0xf]
  %v348 = vunpack.c.l.b16 %v344
  %v349 = vunpack.c.l.b16 %v345
  %v350 = vpack.c.b16 %v349, %v348
  %352 = vmatprep.subr.bf16.mxu0 %v306
  %353 = vmatpush1.bf16.msra.mxu0 %v305
  %354 = vmatprep.subr.bf16.mxu0 %v308
  %355 = vmatpush1.bf16.msra.mxu0 %v307
  %356 = vmatprep.subr.bf16.mxu0 %v197
  %357 = vmatpush1.bf16.msra.mxu0 %v196
  %358 = vmatprep.subr.bf16.mxu0 %v199
  %359 = vmatpush1.bf16.msra.mxu0 %v198
  %360 = vmatprep.subr.bf16.mxu0 %v340
  %361 = vmatpush1.bf16.msra.mxu0 %v339
  %362 = vmatprep.subr.bf16.mxu0 %v342
  %363 = vmatpush1.bf16.msra.mxu0 %v341
  %364 = vmatprep.subr.bf16.mxu0 %v147
  %365 = vmatpush1.bf16.msra.mxu0 %v146
  %366 = vmatprep.subr.bf16.mxu0 %v149
  %367 = vmatpush1.bf16.msra.mxu0 %v148
  %368 = vmatprep.subr.bf16.mxu0 0
  %369 = vmatpush1.bf16.msra.mxu0 0
  %370 = vmatprep.subr.bf16.mxu0 0
  %371 = vmatpush1.bf16.msra.mxu0 0
  %372 = vmatprep.subr.bf16.mxu0 0
  %373 = vmatpush1.bf16.msra.mxu0 0
  %374 = vmatprep.subr.bf16.mxu0 0
  %375 = vmatpush1.bf16.msra.mxu0 0
  %376 = vmatprep.subr.bf16.mxu0 0
  %377 = vmatpush1.bf16.msra.mxu0 0
  %378 = vmatprep.subr.bf16.mxu0 0
  %379 = vmatpush1.bf16.msra.mxu0 0
  %380 = vmatprep.subr.bf16.mxu0 0
  %381 = vmatpush1.bf16.msra.mxu0 0
  %382 = vmatprep.subr.bf16.mxu0 0
  %383 = vmatpush1.bf16.msra.mxu0 0
  %384 = vmatprep.mubr.bf16.mxu0 0
  %385 = vmatmul.mubr.bf16.gmra.mrb[0].mxu0 %v350
  %v386 = vpop.f32.mrb[0].mxu0
  %v387 = vadd.f32 0.0, %v386
  %v388 = vpop.f32.mrb[0].mxu0
  %v389 = vadd.f32 0.0, %v388
  %v390 = vpop.f32.mrb[0].mxu0
  %v391 = vadd.f32 0.0, %v390
  %v392 = vpop.f32.mrb[0].mxu0
  %v393 = vadd.f32 0.0, %v392
  %394 = vdwg.mxu0
  %v395 = vadd.f32 %v387, %v389
  %396 = vadd.xlane.f32.xlu0 %v395
  %v397 = vpop.xlane.xlu0 %396
  %v398 = vadd.f32 %v391, %v393
  %399 = vadd.xlane.f32.xlu0 %v398
  %v400 = vpop.xlane.xlu0 %399
  %v401 = vadd.f32 %v261, %v397
  %v402 = vadd.f32 %v262, %v400
  %v403 = vmul.f32 %v387, %v387
  %v404 = vmul.f32 %v389, %v389
  %v405 = vmul.f32 %v391, %v391
  %v406 = vmul.f32 %v393, %v393
  %v407 = vadd.f32 %v403, %v404
  %408 = vadd.xlane.f32.xlu0 %v407
  %v409 = vpop.xlane.xlu0 %408
  %v410 = vadd.f32 %v405, %v406
  %411 = vadd.xlane.f32.xlu0 %v410
  %v412 = vpop.xlane.xlu0 %411
  %v413 = vadd.f32 %v273, %v409
  %v414 = vadd.f32 %v274, %v412
  %415 = vrot.lane.b32.xlu0 %v78, 120
  %v416 = vpop.permute.xlu0 %415
  %417 = vrot.lane.b32.xlu0 %v68, 120
  %v418 = vpop.permute.xlu0 %417
  %419 = vrot.lane.b32.xlu0 %v79, 120
  %v420 = vpop.permute.xlu0 %419
  %421 = vrot.lane.b32.xlu0 %v69, 120
  %v422 = vpop.permute.xlu0 %421
  %vm423 = vcmask 982016
  %v424 = vsel %vm423, %v416, %v418
  %v425 = vsel %vm423, %v420, %v422
  %vm428 = vcmask 982016
  %v431 = vsel %vm428, %v418, %v416
  %v435 = vsel %vm428, %v422, %v420
  %v437 = vlaneseq
  %v438 = vshrl.u32 %v437, 7
  %v439 = vsub.s32 3, %v438
  %v440 = vrot.slane %v99, %v439
  %v441 = vlaneseq
  %v442 = vshrl.u32 %v441, 7
  %v443 = vsub.s32 3, %v442
  %v444 = vrot.slane %v106, %v443
  %v445 = vmul.bf16 %v424, %v440
  %v446 = vmul.bf16 %v431, %v444
  %v447 = vmul.bf16 %v425, %v440
  %v448 = vmul.bf16 %v435, %v444
  %449 = vrot.lane.b32.xlu0 %v78, 121
  %v450 = vpop.permute.xlu0 %449
  %451 = vrot.lane.b32.xlu0 %v68, 121
  %v452 = vpop.permute.xlu0 %451
  %453 = vrot.lane.b32.xlu0 %v79, 121
  %v454 = vpop.permute.xlu0 %453
  %455 = vrot.lane.b32.xlu0 %v69, 121
  %v456 = vpop.permute.xlu0 %455
  %vm457 = vcmask 990208
  %v458 = vsel %vm457, %v450, %v452
  %v459 = vsel %vm457, %v454, %v456
  %vm462 = vcmask 990208
  %v465 = vsel %vm462, %v452, %v450
  %v469 = vsel %vm462, %v456, %v454
  %v471 = vlaneseq
  %v472 = vshrl.u32 %v471, 7
  %v473 = vsub.s32 3, %v472
  %v474 = vrot.slane %v37, %v473
  %v475 = vlaneseq
  %v476 = vshrl.u32 %v475, 7
  %v477 = vsub.s32 3, %v476
  %v478 = vrot.slane %v44, %v477
  %v479 = vmul.bf16 %v458, %v474
  %v480 = vmul.bf16 %v465, %v478
  %v481 = vmul.bf16 %v459, %v474
  %v482 = vmul.bf16 %v469, %v478
  %s483 = scalar_lea.vmem %s1, 16
  %v484 = vld [vmem:[%s483] sm:$0xf]
  %v485 = vld [vmem:[%s483 + $0x4] sm:$0xf]
  %v488 = vunpack.c.l.b16 %v484
  %v489 = vunpack.c.l.b16 %v485
  %v490 = vpack.c.b16 %v489, %v488
  %492 = vmatprep.subr.bf16.mxu0 %v446
  %493 = vmatpush1.bf16.msra.mxu0 %v445
  %494 = vmatprep.subr.bf16.mxu0 %v448
  %495 = vmatpush1.bf16.msra.mxu0 %v447
  %496 = vmatprep.subr.bf16.mxu0 %v480
  %497 = vmatpush1.bf16.msra.mxu0 %v479
  %498 = vmatprep.subr.bf16.mxu0 %v482
  %499 = vmatpush1.bf16.msra.mxu0 %v481
  %500 = vmatprep.subr.bf16.mxu0 %v197
  %501 = vmatpush1.bf16.msra.mxu0 %v196
  %502 = vmatprep.subr.bf16.mxu0 %v199
  %503 = vmatpush1.bf16.msra.mxu0 %v198
  %504 = vmatprep.subr.bf16.mxu0 %v113
  %505 = vmatpush1.bf16.msra.mxu0 %v112
  %506 = vmatprep.subr.bf16.mxu0 %v115
  %507 = vmatpush1.bf16.msra.mxu0 %v114
  %508 = vmatprep.subr.bf16.mxu0 0
  %509 = vmatpush1.bf16.msra.mxu0 0
  %510 = vmatprep.subr.bf16.mxu0 0
  %511 = vmatpush1.bf16.msra.mxu0 0
  %512 = vmatprep.subr.bf16.mxu0 0
  %513 = vmatpush1.bf16.msra.mxu0 0
  %514 = vmatprep.subr.bf16.mxu0 0
  %515 = vmatpush1.bf16.msra.mxu0 0
  %516 = vmatprep.subr.bf16.mxu0 0
  %517 = vmatpush1.bf16.msra.mxu0 0
  %518 = vmatprep.subr.bf16.mxu0 0
  %519 = vmatpush1.bf16.msra.mxu0 0
  %520 = vmatprep.subr.bf16.mxu0 0
  %521 = vmatpush1.bf16.msra.mxu0 0
  %522 = vmatprep.subr.bf16.mxu0 0
  %523 = vmatpush1.bf16.msra.mxu0 0
  %524 = vmatprep.mubr.bf16.mxu0 0
  %525 = vmatmul.mubr.bf16.gmra.mrb[0].mxu0 %v490
  %v526 = vpop.f32.mrb[0].mxu0
  %v527 = vadd.f32 0.0, %v526
  %v528 = vpop.f32.mrb[0].mxu0
  %v529 = vadd.f32 0.0, %v528
  %v530 = vpop.f32.mrb[0].mxu0
  %v531 = vadd.f32 0.0, %v530
  %v532 = vpop.f32.mrb[0].mxu0
  %v533 = vadd.f32 0.0, %v532
  %534 = vdwg.mxu0
  %v535 = vadd.f32 %v527, %v529
  %536 = vadd.xlane.f32.xlu0 %v535
  %v537 = vpop.xlane.xlu0 %536
  %v538 = vadd.f32 %v531, %v533
  %539 = vadd.xlane.f32.xlu0 %v538
  %v540 = vpop.xlane.xlu0 %539
  %v541 = vadd.f32 %v401, %v537
  %v542 = vadd.f32 %v402, %v540
  %v543 = vmul.f32 %v527, %v527
  %v544 = vmul.f32 %v529, %v529
  %v545 = vmul.f32 %v531, %v531
  %v546 = vmul.f32 %v533, %v533
  %v547 = vadd.f32 %v543, %v544
  %548 = vadd.xlane.f32.xlu0 %v547
  %v549 = vpop.xlane.xlu0 %548
  %v550 = vadd.f32 %v545, %v546
  %551 = vadd.xlane.f32.xlu0 %v550
  %v552 = vpop.xlane.xlu0 %551
  %v553 = vadd.f32 %v413, %v549
  %v554 = vadd.f32 %v414, %v552
  %555 = vrot.lane.b32.xlu0 %v78, 119
  %v556 = vpop.permute.xlu0 %555
  %557 = vrot.lane.b32.xlu0 %v68, 119
  %v558 = vpop.permute.xlu0 %557
  %559 = vrot.lane.b32.xlu0 %v79, 119
  %v560 = vpop.permute.xlu0 %559
  %561 = vrot.lane.b32.xlu0 %v69, 119
  %v562 = vpop.permute.xlu0 %561
  %vm563 = vcmask 973824
  %v564 = vsel %vm563, %v556, %v558
  %v565 = vsel %vm563, %v560, %v562
  %vm568 = vcmask 973824
  %v571 = vsel %vm568, %v558, %v556
  %v575 = vsel %vm568, %v562, %v560
  %v578 = vunpack.c.l.b16 %v30
  %v579 = vunpack.c.h.b16 %v30
  %v580 = vpack.c.b16 %v578, %v578
  %v581 = vpack.c.b16 %v579, %v579
  %v583 = vpack.i.b16 %v580, %v580
  %v585 = vlaneseq
  %v586 = vshrl.u32 %v585, 7
  %v587 = vsub.s32 0, %v586
  %v588 = vrot.slane %v583, %v587
  %v590 = vpack.i.b16 %v581, %v581
  %v592 = vlaneseq
  %v593 = vshrl.u32 %v592, 7
  %v594 = vsub.s32 0, %v593
  %v595 = vrot.slane %v590, %v594
  %v596 = vmul.bf16 %v564, %v588
  %v597 = vmul.bf16 %v571, %v595
  %v598 = vmul.bf16 %v565, %v588
  %v599 = vmul.bf16 %v575, %v595
  %s600 = scalar_lea.vmem %s1, 24
  %v601 = vld [vmem:[%s600] sm:$0xf]
  %v602 = vld [vmem:[%s600 + $0x4] sm:$0xf]
  %v605 = vunpack.c.l.b16 %v601
  %v606 = vunpack.c.l.b16 %v602
  %v607 = vpack.c.b16 %v606, %v605
  %609 = vmatprep.subr.bf16.mxu0 %v597
  %610 = vmatpush1.bf16.msra.mxu0 %v596
  %611 = vmatprep.subr.bf16.mxu0 %v599
  %612 = vmatpush1.bf16.msra.mxu0 %v598
  %613 = vmatprep.subr.bf16.mxu0 %v446
  %614 = vmatpush1.bf16.msra.mxu0 %v445
  %615 = vmatprep.subr.bf16.mxu0 %v448
  %616 = vmatpush1.bf16.msra.mxu0 %v447
  %617 = vmatprep.subr.bf16.mxu0 %v306
  %618 = vmatpush1.bf16.msra.mxu0 %v305
  %619 = vmatprep.subr.bf16.mxu0 %v308
  %620 = vmatpush1.bf16.msra.mxu0 %v307
  %621 = vmatprep.subr.bf16.mxu0 %v197
  %622 = vmatpush1.bf16.msra.mxu0 %v196
  %623 = vmatprep.subr.bf16.mxu0 %v199
  %624 = vmatpush1.bf16.msra.mxu0 %v198
  %625 = vmatprep.subr.bf16.mxu0 0
  %626 = vmatpush1.bf16.msra.mxu0 0
  %627 = vmatprep.subr.bf16.mxu0 0
  %628 = vmatpush1.bf16.msra.mxu0 0
  %629 = vmatprep.subr.bf16.mxu0 0
  %630 = vmatpush1.bf16.msra.mxu0 0
  %631 = vmatprep.subr.bf16.mxu0 0
  %632 = vmatpush1.bf16.msra.mxu0 0
  %633 = vmatprep.subr.bf16.mxu0 0
  %634 = vmatpush1.bf16.msra.mxu0 0
  %635 = vmatprep.subr.bf16.mxu0 0
  %636 = vmatpush1.bf16.msra.mxu0 0
  %637 = vmatprep.subr.bf16.mxu0 0
  %638 = vmatpush1.bf16.msra.mxu0 0
  %639 = vmatprep.subr.bf16.mxu0 0
  %640 = vmatpush1.bf16.msra.mxu0 0
  %641 = vmatprep.mubr.bf16.mxu0 0
  %642 = vmatmul.mubr.bf16.gmra.mrb[0].mxu0 %v607
  %v643 = vpop.f32.mrb[0].mxu0
  %v644 = vadd.f32 0.0, %v643
  %v645 = vpop.f32.mrb[0].mxu0
  %v646 = vadd.f32 0.0, %v645
  %v647 = vpop.f32.mrb[0].mxu0
  %v648 = vadd.f32 0.0, %v647
  %v649 = vpop.f32.mrb[0].mxu0
  %v650 = vadd.f32 0.0, %v649
  %651 = vdwg.mxu0
  %v652 = vadd.f32 %v644, %v646
  %653 = vadd.xlane.f32.xlu0 %v652
  %v654 = vpop.xlane.xlu0 %653
  %v655 = vadd.f32 %v648, %v650
  %656 = vadd.xlane.f32.xlu0 %v655
  %v657 = vpop.xlane.xlu0 %656
  %v658 = vadd.f32 %v541, %v654
  %v659 = vadd.f32 %v542, %v657
  %v660 = vmul.f32 %v644, %v644
  %v661 = vmul.f32 %v646, %v646
  %v662 = vmul.f32 %v648, %v648
  %v663 = vmul.f32 %v650, %v650
  %v664 = vadd.f32 %v660, %v661
  %665 = vadd.xlane.f32.xlu0 %v664
  %v666 = vpop.xlane.xlu0 %665
  %v667 = vadd.f32 %v662, %v663
  %668 = vadd.xlane.f32.xlu0 %v667
  %v669 = vpop.xlane.xlu0 %668
  %v670 = vadd.f32 %v553, %v666
  %v671 = vadd.f32 %v554, %v669
  %v672 = vld [vmem:[%s4] sm:$0xff]
  %v673 = vld [vmem:[%s4 + $0x8] sm:$0xff]
  %v674 = vadd.f32 %v672, %v658
  %v675 = vadd.f32 %v673, %v659
  %676 = vst.msk [vmem:[%s4] sm:$0xff] %vm89, %v674
  %677 = vst.msk [vmem:[%s4 + $0x8] sm:$0xff] %vm89, %v675
  %v678 = vld [vmem:[%s4] sm:$0xff]
  %v679 = vld [vmem:[%s4 + $0x8] sm:$0xff]
  %v680 = vadd.f32 %v678, %v670
  %v681 = vadd.f32 %v679, %v671
  %vm682 = vcmask 15368
  %683 = vst.msk [vmem:[%s4] sm:$0xff] %vm682, %v680
  %684 = vst.msk [vmem:[%s4 + $0x8] sm:$0xff] %vm682, %v681
  // Predicated region
  $region22: #{generator_forward.9} parent=0 // pred_check
    %p685 = pneg %p18
  $region23: #{generator_forward.9} parent=0 // pred_check_branch
    %687 = sbr.rel (%p685) target = $region25
  $region24: #{generator_forward.9} parent=0 // pred_region
    %v688 = vld [vmem:[%s4] sm:$0xff]
    %v689 = vld [vmem:[%s4 + $0x8] sm:$0xff]
    %v690 = vrcp.pop 1024.0
    %v691 = vmul.f32 %v688, %v690
    %v692 = vmul.f32 %v689, %v690
    %v693 = vmul.f32 %v691, %v691
    %v694 = vmul.f32 %v692, %v692
    %697 = vrot.lane.b32.xlu0 %v693, 1
    %v698 = vpop.permute.xlu0 %697
    %699 = vrot.lane.b32.xlu0 %v694, 1
    %v700 = vpop.permute.xlu0 %699
    %v703 = vsub.f32 %v691, %v698
    %v704 = vsub.f32 %v692, %v700
    %v705 = vld [vmem:[%s3] sm:$0xff]
    %v706 = vld [vmem:[%s3 + $0x8] sm:$0xff]
    %v707 = vadd.f32 %v703, 1e-05
    %v708 = vadd.f32 %v704, 1e-05
    %v709 = vrsqrt.pop %v707
    %v710 = vrsqrt.pop %v708
    %713 = vrot.lane.b32.xlu0 %v709, 127
    %v714 = vpop.permute.xlu0 %713
    %715 = vrot.lane.b32.xlu0 %v710, 127
    %v716 = vpop.permute.xlu0 %715
    %v719 = vmul.f32 %v705, %v714
    %v720 = vmul.f32 %v706, %v716
    %v721 = vmul.f32 %v691, %v719
    %v722 = vmul.f32 %v692, %v720
    %725 = vrot.lane.b32.xlu0 %v721, 1
    %v726 = vpop.permute.xlu0 %725
    %727 = vrot.lane.b32.xlu0 %v722, 1
    %v728 = vpop.permute.xlu0 %727
    %v731 = vsub.f32 %v705, %v726
    %v732 = vsub.f32 %v706, %v728
    %733 = vst.msk [vmem:[%s4] sm:$0xff] %vm89, %v719
    %734 = vst.msk [vmem:[%s4 + $0x8] sm:$0xff] %vm89, %v720
    %735 = vst.msk [vmem:[%s4] sm:$0xff] %vm682, %v731
    %736 = vst.msk [vmem:[%s4 + $0x8] sm:$0xff] %vm682, %v732
  $region25: #{generator_forward.9} parent=0 // pred_fallthru
    _
  // Predicated region
  $region26: #{generator_forward.9} parent=0 // pred_check
    _
  $region27: #{generator_forward.9} parent=0 // pred_check_branch
    %738 = sbr.rel (0) target = $region29
  $region28: #{generator_forward.9} parent=0 // pred_region
    _
  $region29: #{generator_forward.9} parent=0 // pred_fallthru
    _
  // Predicated region
  $region30: #{generator_forward.9} parent=0 // pred_check
    _
  $region31: #{generator_forward.9} parent=0 // pred_check_branch
    %740 = sbr.rel (0) target = $region33
  $region32: #{generator_forward.9} parent=0 // pred_region
    _
  $region33: #{generator_forward.9} parent=0 // pred_fallthru
    _

// kernel: generator_forward.11
$region0: #{generator_forward.11}
  #allocation0 [shape = 'u32[]', space=smem, size = 0x4, offset = 0x4, fixed_abs, tag = 'smem constant byte address 0x4 - core index']
  #allocation1 [shape = 'u32[144,128]{1,0:T(1,128)}', space=vmem, size = 0x12000, scoped, tag = 'internal scratch']
  #allocation2 [shape = 'f32[1,1]{1,0:T(1,128)S(1)}', space=vmem, size = 0x200, scoped, tag = 'scoped memory for generator_forward.11']
  %s0 = inlined_call_operand.vmem [shape: bf16[16,1024], index: 0, kind: input, shape index: {}]
  %s1 = inlined_call_operand.vmem [shape: bf16[4,1,64], index: 1, kind: input, shape index: {}]
  %s2 = inlined_call_operand.vmem [shape: bf16[9,1024], index: 2, kind: input, shape index: {}]
  %s3 = inlined_call_operand.<no memory space> [shape: f32[1,1], index: 3, kind: input, shape index: {}]
  %s4 = inlined_call_operand.vmem [shape: f32[4,1024], index: 4, kind: output, shape index: {}]
  %s5 = sld [smem:[#allocation0]]
  $region26: #{generator_forward.11} parent=0
    _
  %s7 = ssub.s32 1, %s5
  %s8 = scalar_select 0, %s7, %s5
  %v9 = vstv %s3
  %10 = vst [vmem:[#allocation2] sm:$0x1] %v9
  // Predicated region
  $region2: #{generator_forward.11} parent=0 // pred_check
    _
  $region3: #{generator_forward.11} parent=0 // pred_check_branch
    %12 = sbr.rel (0) target = $region5
  $region4: #{generator_forward.11} parent=0 // pred_region
    _
  $region5: #{generator_forward.11} parent=0 // pred_fallthru
    _
  // Predicated region
  $region6: #{generator_forward.11} parent=0 // pred_check
    _
  $region7: #{generator_forward.11} parent=0 // pred_check_branch
    %14 = sbr.rel (0) target = $region9
  $region8: #{generator_forward.11} parent=0 // pred_region
    _
  $region9: #{generator_forward.11} parent=0 // pred_fallthru
    _
  // Predicated region
  $region10: #{generator_forward.11} parent=0 // pred_check
    _
  $region11: #{generator_forward.11} parent=0 // pred_check_branch
    %16 = sbr.rel (0) target = $region13
  $region12: #{generator_forward.11} parent=0 // pred_region
    _
  $region13: #{generator_forward.11} parent=0 // pred_fallthru
    _
  // Predicated region
  $region14: #{generator_forward.11} parent=0 // pred_check
    _
  $region15: #{generator_forward.11} parent=0 // pred_check_branch
    %18 = sbr.rel (0) target = $region17
  $region16: #{generator_forward.11} parent=0 // pred_region
    _
  $region17: #{generator_forward.11} parent=0 // pred_fallthru
    _
  %v20 = vld [vmem:[%s0] sm:$0xff]
  %v21 = vld [vmem:[%s0 + $0x8] sm:$0xff]
  %v22 = vld [vmem:[%s0 + $0x10] sm:$0xff]
  %v23 = vld [vmem:[%s0 + $0x18] sm:$0xff]
  %v24 = vld [vmem:[%s0 + $0x20] sm:$0xff]
  %v25 = vld [vmem:[%s0 + $0x28] sm:$0xff]
  %v26 = vld [vmem:[%s0 + $0x30] sm:$0xff]
  %v27 = vld [vmem:[%s0 + $0x38] sm:$0xff]
  %v28 = vld [vmem:[%s2] sm:$0xff]
  %v29 = vld [vmem:[%s2 + $0x8] sm:$0xff]
  %v30 = vld [vmem:[%s2 + $0x10] sm:$0xff]
  %v31 = vld [vmem:[%s2 + $0x18] sm:$0xff]
  %v32 = vld [vmem:[%s2 + $0x20] sm:$0x11]
  %v33 = vld [vmem:[%s2 + $0x28] sm:$0x11]
  %v34 = vld [vmem:[%s2 + $0x30] sm:$0x11]
  %v35 = vld [vmem:[%s2 + $0x38] sm:$0x11]
  %v36 = vld [vmem:[#allocation2] sm:$0x1]
  %v41 = vunpack.c.l.b16 %v28
  %v42 = vunpack.c.h.b16 %v28
  %v43 = vunpack.c.l.b16 %v29
  %v44 = vunpack.c.h.b16 %v29
  %v45 = vunpack.c.l.b16 %v30
  %v46 = vunpack.c.h.b16 %v30
  %v47 = vunpack.c.l.b16 %v31
  %v48 = vunpack.c.h.b16 %v31
  %v49 = vpack.c.b16 %v41, %v41
  %v50 = vpack.c.b16 %v42, %v42
  %v51 = vpack.c.b16 %v43, %v43
  %v52 = vpack.c.b16 %v44, %v44
  %v53 = vpack.c.b16 %v45, %v45
  %v54 = vpack.c.b16 %v46, %v46
  %v55 = vpack.c.b16 %v47, %v47
  %v56 = vpack.c.b16 %v48, %v48
  %v58 = vpack.i.b16 %v49, %v49
  %v60 = vlaneseq
  %v61 = vshrl.u32 %v60, 7
  %v62 = vsub.s32 2, %v61
  %v63 = vrot.slane %v58, %v62
  %v65 = vpack.i.b16 %v50, %v50
  %v67 = vlaneseq
  %v68 = vshrl.u32 %v67, 7
  %v69 = vsub.s32 2, %v68
  %v70 = vrot.slane %v65, %v69
  %v72 = vpack.i.b16 %v51, %v51
  %v74 = vlaneseq
  %v75 = vshrl.u32 %v74, 7
  %v76 = vsub.s32 2, %v75
  %v77 = vrot.slane %v72, %v76
  %v79 = vpack.i.b16 %v52, %v52
  %v81 = vlaneseq
  %v82 = vshrl.u32 %v81, 7
  %v83 = vsub.s32 2, %v82
  %v84 = vrot.slane %v79, %v83
  %v86 = vpack.i.b16 %v53, %v53
  %v88 = vlaneseq
  %v89 = vshrl.u32 %v88, 7
  %v90 = vsub.s32 2, %v89
  %v91 = vrot.slane %v86, %v90
  %v93 = vpack.i.b16 %v54, %v54
  %v95 = vlaneseq
  %v96 = vshrl.u32 %v95, 7
  %v97 = vsub.s32 2, %v96
  %v98 = vrot.slane %v93, %v97
  %v100 = vpack.i.b16 %v55, %v55
  %v102 = vlaneseq
  %v103 = vshrl.u32 %v102, 7
  %v104 = vsub.s32 2, %v103
  %v105 = vrot.slane %v100, %v104
  %v107 = vpack.i.b16 %v56, %v56
  %v109 = vlaneseq
  %v110 = vshrl.u32 %v109, 7
  %v111 = vsub.s32 2, %v110
  %v112 = vrot.slane %v107, %v111
  %v121 = vunpack.c.l.b16 %v63
  %v122 = vunpack.c.l.b16 %v70
  %v123 = vunpack.c.l.b16 %v77
  %v124 = vunpack.c.l.b16 %v84
  %v125 = vunpack.c.l.b16 %v91
  %v126 = vunpack.c.l.b16 %v98
  %v127 = vunpack.c.l.b16 %v105
  %v128 = vunpack.c.l.b16 %v112
  %v129 = vpack.c.b16 %v122, %v121
  %v130 = vpack.c.b16 %v124, %v123
  %v131 = vpack.c.b16 %v126, %v125
  %v132 = vpack.c.b16 %v128, %v127
  %v137 = vmul.bf16 %v20, %v129
  %v138 = vmul.bf16 %v21, %v130
  %v139 = vmul.bf16 %v22, %v131
  %v140 = vmul.bf16 %v23, %v132
  %v141 = vmul.bf16 %v24, %v129
  %v142 = vmul.bf16 %v25, %v130
  %v143 = vmul.bf16 %v26, %v131
  %v144 = vmul.bf16 %v27, %v132
  %v147 = vunpack.c.h.b16 %v23
  %v148 = vunpack.c.h.b16 %v27
  %v149 = vpack.c.b16 %v148, %v147
  %150 = vrot.lane.b32.xlu0 %v149, 1
  %v151 = vpop.permute.xlu0 %150
  %v158 = vunpack.c.l.b16 %v20
  %v159 = vunpack.c.h.b16 %v20
  %v160 = vunpack.c.l.b16 %v21
  %v161 = vunpack.c.h.b16 %v21
  %v162 = vunpack.c.l.b16 %v22
  %v163 = vunpack.c.h.b16 %v22
  %v164 = vunpack.c.l.b16 %v23
  %v165 = vunpack.c.l.b16 %v24
  %v166 = vunpack.c.h.b16 %v24
  %v167 = vunpack.c.l.b16 %v25
  %v168 = vunpack.c.h.b16 %v25
  %v169 = vunpack.c.l.b16 %v26
  %v170 = vunpack.c.h.b16 %v26
  %v171 = vunpack.c.l.b16 %v27
  %v172 = vpack.c.b16 %v165, %v158
  %v173 = vpack.c.b16 %v166, %v159
  %v174 = vpack.c.b16 %v167, %v160
  %v175 = vpack.c.b16 %v168, %v161
  %v176 = vpack.c.b16 %v169, %v162
  %v177 = vpack.c.b16 %v170, %v163
  %v178 = vpack.c.b16 %v171, %v164
  %179 = vrot.lane.b32.xlu0 %v172, 1
  %v180 = vpop.permute.xlu0 %179
  %181 = vrot.lane.b32.xlu0 %v173, 1
  %v182 = vpop.permute.xlu0 %181
  %183 = vrot.lane.b32.xlu0 %v174, 1
  %v184 = vpop.permute.xlu0 %183
  %185 = vrot.lane.b32.xlu0 %v175, 1
  %v186 = vpop.permute.xlu0 %185
  %187 = vrot.lane.b32.xlu0 %v176, 1
  %v188 = vpop.permute.xlu0 %187
  %189 = vrot.lane.b32.xlu0 %v177, 1
  %v190 = vpop.permute.xlu0 %189
  %191 = vrot.lane.b32.xlu0 %v178, 1
  %v192 = vpop.permute.xlu0 %191
  %vm193 = vcmask 7168
  %v194 = vsel %vm193, %v180, %v182
  %v195 = vsel %vm193, %v182, %v184
  %v196 = vsel %vm193, %v184, %v186
  %v197 = vsel %vm193, %v186, %v188
  %v198 = vsel %vm193, %v188, %v190
  %v199 = vsel %vm193, %v190, %v192
  %v200 = vsel %vm193, %v192, %v151
  %vm208 = vcmask 7168
  %v211 = vsel %vm208, %v151, %v180
  %v213 = vshrl.u32 %v49, 16
  %v214 = vpack.i.b16 %v213, %v213
  %v216 = vlaneseq
  %v217 = vshrl.u32 %v216, 7
  %v218 = vsub.s32 1, %v217
  %v219 = vrot.slane %v214, %v218
  %v220 = vshrl.u32 %v50, 16
  %v221 = vpack.i.b16 %v220, %v220
  %v223 = vlaneseq
  %v224 = vshrl.u32 %v223, 7
  %v225 = vsub.s32 1, %v224
  %v226 = vrot.slane %v221, %v225
  %v227 = vshrl.u32 %v51, 16
  %v228 = vpack.i.b16 %v227, %v227
  %v230 = vlaneseq
  %v231 = vshrl.u32 %v230, 7
  %v232 = vsub.s32 1, %v231
  %v233 = vrot.slane %v228, %v232
  %v234 = vshrl.u32 %v52, 16
  %v235 = vpack.i.b16 %v234, %v234
  %v237 = vlaneseq
  %v238 = vshrl.u32 %v237, 7
  %v239 = vsub.s32 1, %v238
  %v240 = vrot.slane %v235, %v239
  %v241 = vshrl.u32 %v53, 16
  %v242 = vpack.i.b16 %v241, %v241
  %v244 = vlaneseq
  %v245 = vshrl.u32 %v244, 7
  %v246 = vsub.s32 1, %v245
  %v247 = vrot.slane %v242, %v246
  %v248 = vshrl.u32 %v54, 16
  %v249 = vpack.i.b16 %v248, %v248
  %v251 = vlaneseq
  %v252 = vshrl.u32 %v251, 7
  %v253 = vsub.s32 1, %v252
  %v254 = vrot.slane %v249, %v253
  %v255 = vshrl.u32 %v55, 16
  %v256 = vpack.i.b16 %v255, %v255
  %v258 = vlaneseq
  %v259 = vshrl.u32 %v258, 7
  %v260 = vsub.s32 1, %v259
  %v261 = vrot.slane %v256, %v260
  %v262 = vshrl.u32 %v56, 16
  %v263 = vpack.i.b16 %v262, %v262
  %v265 = vlaneseq
  %v266 = vshrl.u32 %v265, 7
  %v267 = vsub.s32 1, %v266
  %v268 = vrot.slane %v263, %v267
  %v269 = vmul.bf16 %v211, %v219
  %v270 = vmul.bf16 %v194, %v226
  %v271 = vmul.bf16 %v195, %v233
  %v272 = vmul.bf16 %v196, %v240
  %v273 = vmul.bf16 %v197, %v247
  %v274 = vmul.bf16 %v198, %v254
  %v275 = vmul.bf16 %v199, %v261
  %v276 = vmul.bf16 %v200, %v268
  %277 = vrot.lane.b32.xlu0 %v149, 16
  %v278 = vpop.permute.xlu0 %277
  %279 = vrot.lane.b32.xlu0 %v172, 16
  %v280 = vpop.permute.xlu0 %279
  %281 = vrot.lane.b32.xlu0 %v173, 16
  %v282 = vpop.permute.xlu0 %281
  %283 = vrot.lane.b32.xlu0 %v174, 16
  %v284 = vpop.permute.xlu0 %283
  %285 = vrot.lane.b32.xlu0 %v175, 16
  %v286 = vpop.permute.xlu0 %285
  %287 = vrot.lane.b32.xlu0 %v176, 16
  %v288 = vpop.permute.xlu0 %287
  %289 = vrot.lane.b32.xlu0 %v177, 16
  %v290 = vpop.permute.xlu0 %289
  %291 = vrot.lane.b32.xlu0 %v178, 16
  %v292 = vpop.permute.xlu0 %291
  %vm293 = vcmask 130048
  %v294 = vsel %vm293, %v280, %v282
  %v295 = vsel %vm293, %v282, %v284
  %v296 = vsel %vm293, %v284, %v286
  %v297 = vsel %vm293, %v286, %v288
  %v298 = vsel %vm293, %v288, %v290
  %v299 = vsel %vm293, %v290, %v292
  %v300 = vsel %vm293, %v292, %v278
  %vm308 = vcmask 130048
  %v311 = vsel %vm308, %v278, %v280
  %v313 = vlaneseq
  %v314 = vshrl.u32 %v313, 7
  %v315 = vsub.s32 0, %v314
  %v316 = vrot.slane %v214, %v315
  %v317 = vlaneseq
  %v318 = vshrl.u32 %v317, 7
  %v319 = vsub.s32 0, %v318
  %v320 = vrot.slane %v221, %v319
  %v321 = vlaneseq
  %v322 = vshrl.u32 %v321, 7
  %v323 = vsub.s32 0, %v322
  %v324 = vrot.slane %v228, %v323
  %v325 = vlaneseq
  %v326 = vshrl.u32 %v325, 7
  %v327 = vsub.s32 0, %v326
  %v328 = vrot.slane %v235, %v327
  %v329 = vlaneseq
  %v330 = vshrl.u32 %v329, 7
  %v331 = vsub.s32 0, %v330
  %v332 = vrot.slane %v242, %v331
  %v333 = vlaneseq
  %v334 = vshrl.u32 %v333, 7
  %v335 = vsub.s32 0, %v334
  %v336 = vrot.slane %v249, %v335
  %v337 = vlaneseq
  %v338 = vshrl.u32 %v337, 7
  %v339 = vsub.s32 0, %v338
  %v340 = vrot.slane %v256, %v339
  %v341 = vlaneseq
  %v342 = vshrl.u32 %v341, 7
  %v343 = vsub.s32 0, %v342
  %v344 = vrot.slane %v263, %v343
  %v345 = vmul.bf16 %v311, %v316
  %v346 = vmul.bf16 %v294, %v320
  %v347 = vmul.bf16 %v295, %v324
  %v348 = vmul.bf16 %v296, %v328
  %v349 = vmul.bf16 %v297, %v332
  %v350 = vmul.bf16 %v298, %v336
  %v351 = vmul.bf16 %v299, %v340
  %v352 = vmul.bf16 %v300, %v344
  %353 = vrot.lane.b32.xlu0 %v149, 17
  %v354 = vpop.permute.xlu0 %353
  %355 = vrot.lane.b32.xlu0 %v172, 17
  %v356 = vpop.permute.xlu0 %355
  %357 = vrot.lane.b32.xlu0 %v173, 17
  %v358 = vpop.permute.xlu0 %357
  %359 = vrot.lane.b32.xlu0 %v174, 17
  %v360 = vpop.permute.xlu0 %359
  %361 = vrot.lane.b32.xlu0 %v175, 17
  %v362 = vpop.permute.xlu0 %361
  %363 = vrot.lane.b32.xlu0 %v176, 17
  %v364 = vpop.permute.xlu0 %363
  %365 = vrot.lane.b32.xlu0 %v177, 17
  %v366 = vpop.permute.xlu0 %365
  %367 = vrot.lane.b32.xlu0 %v178, 17
  %v368 = vpop.permute.xlu0 %367
  %vm369 = vcmask 138240
  %v370 = vsel %vm369, %v356, %v358
  %v371 = vsel %vm369, %v358, %v360
  %v372 = vsel %vm369, %v360, %v362
  %v373 = vsel %vm369, %v362, %v364
  %v374 = vsel %vm369, %v364, %v366
  %v375 = vsel %vm369, %v366, %v368
  %v376 = vsel %vm369, %v368, %v354
  %vm384 = vcmask 138240
  %v387 = vsel %vm384, %v354, %v356
  %v389 = vlaneseq
  %v390 = vshrl.u32 %v389, 7
  %v391 = vsub.s32 0, %v390
  %v392 = vrot.slane %v58, %v391
  %v393 = vlaneseq
  %v394 = vshrl.u32 %v393, 7
  %v395 = vsub.s32 0, %v394
  %v396 = vrot.slane %v65, %v395
  %v397 = vlaneseq
  %v398 = vshrl.u32 %v397, 7
  %v399 = vsub.s32 0, %v398
  %v400 = vrot.slane %v72, %v399
  %v401 = vlaneseq
  %v402 = vshrl.u32 %v401, 7
  %v403 = vsub.s32 0, %v402
  %v404 = vrot.slane %v79, %v403
  %v405 = vlaneseq
  %v406 = vshrl.u32 %v405, 7
  %v407 = vsub.s32 0, %v406
  %v408 = vrot.slane %v86, %v407
  %v409 = vlaneseq
  %v410 = vshrl.u32 %v409, 7
  %v411 = vsub.s32 0, %v410
  %v412 = vrot.slane %v93, %v411
  %v413 = vlaneseq
  %v414 = vshrl.u32 %v413, 7
  %v415 = vsub.s32 0, %v414
  %v416 = vrot.slane %v100, %v415
  %v417 = vlaneseq
  %v418 = vshrl.u32 %v417, 7
  %v419 = vsub.s32 0, %v418
  %v420 = vrot.slane %v107, %v419
  %v421 = vmul.bf16 %v387, %v392
  %v422 = vmul.bf16 %v370, %v396
  %v423 = vmul.bf16 %v371, %v400
  %v424 = vmul.bf16 %v372, %v404
  %v425 = vmul.bf16 %v373, %v408
  %v426 = vmul.bf16 %v374, %v412
  %v427 = vmul.bf16 %v375, %v416
  %v428 = vmul.bf16 %v376, %v420
  %v437 = vunpack.c.l.b16 %v137
  %v438 = vunpack.c.h.b16 %v137
  %v439 = vunpack.c.l.b16 %v138
  %v440 = vunpack.c.h.b16 %v138
  %v441 = vunpack.c.l.b16 %v139
  %v442 = vunpack.c.h.b16 %v139
  %v443 = vunpack.c.l.b16 %v140
  %v444 = vunpack.c.h.b16 %v140
  %v445 = vunpack.c.l.b16 %v141
  %v446 = vunpack.c.h.b16 %v141
  %v447 = vunpack.c.l.b16 %v142
  %v448 = vunpack.c.h.b16 %v142
  %v449 = vunpack.c.l.b16 %v143
  %v450 = vunpack.c.h.b16 %v143
  %v451 = vunpack.c.l.b16 %v144
  %v452 = vunpack.c.h.b16 %v144
  %v453 = vpack.c.b16 %v445, %v437
  %v454 = vpack.c.b16 %v446, %v438
  %v455 = vpack.c.b16 %v447, %v439
  %v456 = vpack.c.b16 %v448, %v440
  %v457 = vpack.c.b16 %v449, %v441
  %v458 = vpack.c.b16 %v450, %v442
  %v459 = vpack.c.b16 %v451, %v443
  %v460 = vpack.c.b16 %v452, %v444
  %v469 = vld [vmem:[%s1] sm:$0x1]
  %471 = vset.pattern.permute.xlu0 0
  %472 = vperm.xlu0 %471, %v36
  %v473 = vpop.permute.xlu0 %472
  %v475 = vlaneseq
  %v476 = vshrl.u32 %v475, 7
  %v477 = vsub.s32 0, %v476
  %v478 = vrot.slane %v473, %v477
  %vm479 = vcmask 523264
  %v481 = vsel %vm479, %v469, 0
  %483 = vmatprep.subr.bf16.mxu0 %v454
  %484 = vmatpush1.bf16.msra.mxu0 %v453
  %485 = vmatprep.subr.bf16.mxu0 %v270
  %486 = vmatpush1.bf16.msra.mxu0 %v269
  %487 = vmatprep.subr.bf16.mxu0 %v346
  %488 = vmatpush1.bf16.msra.mxu0 %v345
  %489 = vmatprep.subr.bf16.mxu0 %v422
  %490 = vmatpush1.bf16.msra.mxu0 %v421
  %491 = vmatprep.subr.bf16.mxu0 0
  %492 = vmatpush1.bf16.msra.mxu0 0
  %493 = vmatprep.subr.bf16.mxu0 0
  %494 = vmatpush1.bf16.msra.mxu0 0
  %495 = vmatprep.subr.bf16.mxu0 0
  %496 = vmatpush1.bf16.msra.mxu0 0
  %497 = vmatprep.subr.bf16.mxu0 0
  %498 = vmatpush1.bf16.msra.mxu0 0
  %499 = vmatprep.subr.bf16.mxu0 0
  %500 = vmatpush1.bf16.msra.mxu0 0
  %501 = vmatprep.subr.bf16.mxu0 0
  %502 = vmatpush1.bf16.msra.mxu0 0
  %503 = vmatprep.subr.bf16.mxu0 0
  %504 = vmatpush1.bf16.msra.mxu0 0
  %505 = vmatprep.subr.bf16.mxu0 0
  %506 = vmatpush1.bf16.msra.mxu0 0
  %507 = vmatprep.subr.bf16.mxu0 0
  %508 = vmatpush1.bf16.msra.mxu0 0
  %509 = vmatprep.subr.bf16.mxu0 0
  %510 = vmatpush1.bf16.msra.mxu0 0
  %511 = vmatprep.subr.bf16.mxu0 0
  %512 = vmatpush1.bf16.msra.mxu0 0
  %513 = vmatprep.subr.bf16.mxu0 0
  %514 = vmatpush1.bf16.msra.mxu0 0
  %515 = vmatprep.mubr.bf16.mxu0 0
  %516 = vmatmul.mubr.bf16.gmra.mrb[0].mxu0 %v481
  %v517 = vpop.f32.mrb[0].mxu0
  %v518 = vadd.f32 %v478, %v517
  %v519 = vpop.f32.mrb[0].mxu0
  %v520 = vadd.f32 %v478, %v519
  %v521 = vpop.f32.mrb[0].mxu0
  %v522 = vpop.f32.mrb[0].mxu0
  %523 = vdwg.mxu0
  %524 = vmatprep.subr.bf16.mxu0 %v456
  %525 = vmatpush1.bf16.msra.mxu0 %v455
  %526 = vmatprep.subr.bf16.mxu0 %v272
  %527 = vmatpush1.bf16.msra.mxu0 %v271
  %528 = vmatprep.subr.bf16.mxu0 %v348
  %529 = vmatpush1.bf16.msra.mxu0 %v347
  %530 = vmatprep.subr.bf16.mxu0 %v424
  %531 = vmatpush1.bf16.msra.mxu0 %v423
  %532 = vmatprep.subr.bf16.mxu0 0
  %533 = vmatpush1.bf16.msra.mxu0 0
  %534 = vmatprep.subr.bf16.mxu0 0
  %535 = vmatpush1.bf16.msra.mxu0 0
  %536 = vmatprep.subr.bf16.mxu0 0
  %537 = vmatpush1.bf16.msra.mxu0 0
  %538 = vmatprep.subr.bf16.mxu0 0
  %539 = vmatpush1.bf16.msra.mxu0 0
  %540 = vmatprep.subr.bf16.mxu0 0
  %541 = vmatpush1.bf16.msra.mxu0 0
  %542 = vmatprep.subr.bf16.mxu0 0
  %543 = vmatpush1.bf16.msra.mxu0 0
  %544 = vmatprep.subr.bf16.mxu0 0
  %545 = vmatpush1.bf16.msra.mxu0 0
  %546 = vmatprep.subr.bf16.mxu0 0
  %547 = vmatpush1.bf16.msra.mxu0 0
  %548 = vmatprep.subr.bf16.mxu0 0
  %549 = vmatpush1.bf16.msra.mxu0 0
  %550 = vmatprep.subr.bf16.mxu0 0
  %551 = vmatpush1.bf16.msra.mxu0 0
  %552 = vmatprep.subr.bf16.mxu0 0
  %553 = vmatpush1.bf16.msra.mxu0 0
  %554 = vmatprep.subr.bf16.mxu0 0
  %555 = vmatpush1.bf16.msra.mxu0 0
  %556 = vmatprep.mubr.bf16.mxu0 0
  %557 = vmatmul.mubr.bf16.gmra.mrb[0].mxu0 %v481
  %v558 = vpop.f32.mrb[0].mxu0
  %v559 = vadd.f32 %v478, %v558
  %v560 = vpop.f32.mrb[0].mxu0
  %v561 = vadd.f32 %v478, %v560
  %v562 = vpop.f32.mrb[0].mxu0
  %v563 = vpop.f32.mrb[0].mxu0
  %564 = vdwg.mxu0
  %565 = vmatprep.subr.bf16.mxu0 %v458
  %566 = vmatpush1.bf16.msra.mxu0 %v457
  %567 = vmatprep.subr.bf16.mxu0 %v274
  %568 = vmatpush1.bf16.msra.mxu0 %v273
  %569 = vmatprep.subr.bf16.mxu0 %v350
  %570 = vmatpush1.bf16.msra.mxu0 %v349
  %571 = vmatprep.subr.bf16.mxu0 %v426
  %572 = vmatpush1.bf16.msra.mxu0 %v425
  %573 = vmatprep.subr.bf16.mxu0 0
  %574 = vmatpush1.bf16.msra.mxu0 0
  %575 = vmatprep.subr.bf16.mxu0 0
  %576 = vmatpush1.bf16.msra.mxu0 0
  %577 = vmatprep.subr.bf16.mxu0 0
  %578 = vmatpush1.bf16.msra.mxu0 0
  %579 = vmatprep.subr.bf16.mxu0 0
  %580 = vmatpush1.bf16.msra.mxu0 0
  %581 = vmatprep.subr.bf16.mxu0 0
  %582 = vmatpush1.bf16.msra.mxu0 0
  %583 = vmatprep.subr.bf16.mxu0 0
  %584 = vmatpush1.bf16.msra.mxu0 0
  %585 = vmatprep.subr.bf16.mxu0 0
  %586 = vmatpush1.bf16.msra.mxu0 0
  %587 = vmatprep.subr.bf16.mxu0 0
  %588 = vmatpush1.bf16.msra.mxu0 0
  %589 = vmatprep.subr.bf16.mxu0 0
  %590 = vmatpush1.bf16.msra.mxu0 0
  %591 = vmatprep.subr.bf16.mxu0 0
  %592 = vmatpush1.bf16.msra.mxu0 0
  %593 = vmatprep.subr.bf16.mxu0 0
  %594 = vmatpush1.bf16.msra.mxu0 0
  %595 = vmatprep.subr.bf16.mxu0 0
  %596 = vmatpush1.bf16.msra.mxu0 0
  %597 = vmatprep.mubr.bf16.mxu0 0
  %598 = vmatmul.mubr.bf16.gmra.mrb[0].mxu0 %v481
  %v599 = vpop.f32.mrb[0].mxu0
  %v600 = vadd.f32 %v478, %v599
  %v601 = vpop.f32.mrb[0].mxu0
  %v602 = vadd.f32 %v478, %v601
  %v603 = vpop.f32.mrb[0].mxu0
  %v604 = vpop.f32.mrb[0].mxu0
  %605 = vdwg.mxu0
  %606 = vmatprep.subr.bf16.mxu0 %v460
  %607 = vmatpush1.bf16.msra.mxu0 %v459
  %608 = vmatprep.subr.bf16.mxu0 %v276
  %609 = vmatpush1.bf16.msra.mxu0 %v275
  %610 = vmatprep.subr.bf16.mxu0 %v352
  %611 = vmatpush1.bf16.msra.mxu0 %v351
  %612 = vmatprep.subr.bf16.mxu0 %v428
  %613 = vmatpush1.bf16.msra.mxu0 %v427
  %614 = vmatprep.subr.bf16.mxu0 0
  %615 = vmatpush1.bf16.msra.mxu0 0
  %616 = vmatprep.subr.bf16.mxu0 0
  %617 = vmatpush1.bf16.msra.mxu0 0
  %618 = vmatprep.subr.bf16.mxu0 0
  %619 = vmatpush1.bf16.msra.mxu0 0
  %620 = vmatprep.subr.bf16.mxu0 0
  %621 = vmatpush1.bf16.msra.mxu0 0
  %622 = vmatprep.subr.bf16.mxu0 0
  %623 = vmatpush1.bf16.msra.mxu0 0
  %624 = vmatprep.subr.bf16.mxu0 0
  %625 = vmatpush1.bf16.msra.mxu0 0
  %626 = vmatprep.subr.bf16.mxu0 0
  %627 = vmatpush1.bf16.msra.mxu0 0
  %628 = vmatprep.subr.bf16.mxu0 0
  %629 = vmatpush1.bf16.msra.mxu0 0
  %630 = vmatprep.subr.bf16.mxu0 0
  %631 = vmatpush1.bf16.msra.mxu0 0
  %632 = vmatprep.subr.bf16.mxu0 0
  %633 = vmatpush1.bf16.msra.mxu0 0
  %634 = vmatprep.subr.bf16.mxu0 0
  %635 = vmatpush1.bf16.msra.mxu0 0
  %636 = vmatprep.subr.bf16.mxu0 0
  %637 = vmatpush1.bf16.msra.mxu0 0
  %638 = vmatprep.mubr.bf16.mxu0 0
  %639 = vmatmul.mubr.bf16.gmra.mrb[0].mxu0 %v481
  %v640 = vpop.f32.mrb[0].mxu0
  %v641 = vadd.f32 %v478, %v640
  %v642 = vpop.f32.mrb[0].mxu0
  %v643 = vadd.f32 %v478, %v642
  %v644 = vpop.f32.mrb[0].mxu0
  %v645 = vpop.f32.mrb[0].mxu0
  %646 = vdwg.mxu0
  %v647 = vtanh.pop %v518
  %v648 = vtanh.pop %v520
  %v649 = vtanh.pop %v559
  %v650 = vtanh.pop %v561
  %v651 = vtanh.pop %v600
  %v652 = vtanh.pop %v602
  %v653 = vtanh.pop %v641
  %v654 = vtanh.pop %v643
  %v663 = vcombine.low %v647, %v648
  %v664 = vcombine.low %v649, %v650
  %v665 = vcombine.low %v651, %v652
  %v666 = vcombine.low %v653, %v654
  %v668 = vunpack.c.l.s4 1966171168
  %v669 = vunpack.c.0.s8 %v668
  %v670 = vlaneseq
  %v671 = vshrl.u32 %v670, 7
  %v672 = vsub.s32 %v669, %v671
  %v673 = vrot.slane %v663, %v672
  %v675 = vunpack.c.l.s4 1966171168
  %v676 = vunpack.c.0.s8 %v675
  %v677 = vlaneseq
  %v678 = vshrl.u32 %v677, 7
  %v679 = vsub.s32 %v676, %v678
  %v680 = vrot.slane %v664, %v679
  %v682 = vunpack.c.l.s4 1966171168
  %v683 = vunpack.c.0.s8 %v682
  %v684 = vlaneseq
  %v685 = vshrl.u32 %v684, 7
  %v686 = vsub.s32 %v683, %v685
  %v687 = vrot.slane %v665, %v686
  %v689 = vunpack.c.l.s4 1966171168
  %v690 = vunpack.c.0.s8 %v689
  %v691 = vlaneseq
  %v692 = vshrl.u32 %v691, 7
  %v693 = vsub.s32 %v690, %v692
  %v694 = vrot.slane %v666, %v693
  %v695 = vcombine.low %v673, %v680
  %v696 = vcombine.low %v687, %v694
  %v698 = vunpack.c.l.s4 1966171168
  %v699 = vunpack.c.0.s8 %v698
  %v700 = vlaneseq
  %v701 = vshrl.u32 %v700, 7
  %v702 = vsub.s32 %v699, %v701
  %v703 = vrot.slane %v695, %v702
  %v705 = vunpack.c.l.s4 1966171168
  %v706 = vunpack.c.0.s8 %v705
  %v707 = vlaneseq
  %v708 = vshrl.u32 %v707, 7
  %v709 = vsub.s32 %v706, %v708
  %v710 = vrot.slane %v696, %v709
  %v711 = vcombine.low %v703, %v710
  %713 = vst [vmem:[%s4] ss:$4 sm:$0xff] %v711
  %714 = vrot.lane.b32.xlu0 %v172, 127
  %v715 = vpop.permute.xlu0 %714
  %716 = vrot.lane.b32.xlu0 %v173, 127
  %v717 = vpop.permute.xlu0 %716
  %718 = vrot.lane.b32.xlu0 %v174, 127
  %v719 = vpop.permute.xlu0 %718
  %720 = vrot.lane.b32.xlu0 %v175, 127
  %v721 = vpop.permute.xlu0 %720
  %722 = vrot.lane.b32.xlu0 %v176, 127
  %v723 = vpop.permute.xlu0 %722
  %724 = vrot.lane.b32.xlu0 %v177, 127
  %v725 = vpop.permute.xlu0 %724
  %726 = vrot.lane.b32.xlu0 %v178, 127
  %v727 = vpop.permute.xlu0 %726
  %728 = vrot.lane.b32.xlu0 %v149, 127
  %v729 = vpop.permute.xlu0 %728
  %vm730 = vcmask 1039360
  %v731 = vsel %vm730, %v715, %v717
  %v732 = vsel %vm730, %v717, %v719
  %v733 = vsel %vm730, %v719, %v721
  %v734 = vsel %vm730, %v721, %v723
  %v735 = vsel %vm730, %v723, %v725
  %v736 = vsel %vm730, %v725, %v727
  %v737 = vsel %vm730, %v727, %v729
  %vm745 = vcmask 1039360
  %v748 = vsel %vm745, %v729, %v715
  %v750 = vlaneseq
  %v751 = vshrl.u32 %v750, 7
  %v752 = vsub.s32 2, %v751
  %v753 = vrot.slane %v214, %v752
  %v754 = vlaneseq
  %v755 = vshrl.u32 %v754, 7
  %v756 = vsub.s32 2, %v755
  %v757 = vrot.slane %v221, %v756
  %v758 = vlaneseq
  %v759 = vshrl.u32 %v758, 7
  %v760 = vsub.s32 2, %v759
  %v761 = vrot.slane %v228, %v760
  %v762 = vlaneseq
  %v763 = vshrl.u32 %v762, 7
  %v764 = vsub.s32 2, %v763
  %v765 = vrot.slane %v235, %v764
  %v766 = vlaneseq
  %v767 = vshrl.u32 %v766, 7
  %v768 = vsub.s32 2, %v767
  %v769 = vrot.slane %v242, %v768
  %v770 = vlaneseq
  %v771 = vshrl.u32 %v770, 7
  %v772 = vsub.s32 2, %v771
  %v773 = vrot.slane %v249, %v772
  %v774 = vlaneseq
  %v775 = vshrl.u32 %v774, 7
  %v776 = vsub.s32 2, %v775
  %v777 = vrot.slane %v256, %v776
  %v778 = vlaneseq
  %v779 = vshrl.u32 %v778, 7
  %v780 = vsub.s32 2, %v779
  %v781 = vrot.slane %v263, %v780
  %v782 = vmul.bf16 %v731, %v753
  %v783 = vmul.bf16 %v732, %v757
  %v784 = vmul.bf16 %v733, %v761
  %v785 = vmul.bf16 %v734, %v765
  %v786 = vmul.bf16 %v735, %v769
  %v787 = vmul.bf16 %v736, %v773
  %v788 = vmul.bf16 %v737, %v777
  %v789 = vmul.bf16 %v748, %v781
  %790 = vrot.lane.b32.xlu0 %v149, 15
  %v791 = vpop.permute.xlu0 %790
  %792 = vrot.lane.b32.xlu0 %v172, 15
  %v793 = vpop.permute.xlu0 %792
  %794 = vrot.lane.b32.xlu0 %v173, 15
  %v795 = vpop.permute.xlu0 %794
  %796 = vrot.lane.b32.xlu0 %v174, 15
  %v797 = vpop.permute.xlu0 %796
  %798 = vrot.lane.b32.xlu0 %v175, 15
  %v799 = vpop.permute.xlu0 %798
  %800 = vrot.lane.b32.xlu0 %v176, 15
  %v801 = vpop.permute.xlu0 %800
  %802 = vrot.lane.b32.xlu0 %v177, 15
  %v803 = vpop.permute.xlu0 %802
  %804 = vrot.lane.b32.xlu0 %v178, 15
  %v805 = vpop.permute.xlu0 %804
  %vm806 = vcmask 121856
  %v807 = vsel %vm806, %v793, %v795
  %v808 = vsel %vm806, %v795, %v797
  %v809 = vsel %vm806, %v797, %v799
  %v810 = vsel %vm806, %v799, %v801
  %v811 = vsel %vm806, %v801, %v803
  %v812 = vsel %vm806, %v803, %v805
  %v813 = vsel %vm806, %v805, %v791
  %vm821 = vcmask 121856
  %v824 = vsel %vm821, %v791, %v793
  %v826 = vlaneseq
  %v827 = vshrl.u32 %v826, 7
  %v828 = vsub.s32 1, %v827
  %v829 = vrot.slane %v58, %v828
  %v830 = vlaneseq
  %v831 = vshrl.u32 %v830, 7
  %v832 = vsub.s32 1, %v831
  %v833 = vrot.slane %v65, %v832
  %v834 = vlaneseq
  %v835 = vshrl.u32 %v834, 7
  %v836 = vsub.s32 1, %v835
  %v837 = vrot.slane %v72, %v836
  %v838 = vlaneseq
  %v839 = vshrl.u32 %v838, 7
  %v840 = vsub.s32 1, %v839
  %v841 = vrot.slane %v79, %v840
  %v842 = vlaneseq
  %v843 = vshrl.u32 %v842, 7
  %v844 = vsub.s32 1, %v843
  %v845 = vrot.slane %v86, %v844
  %v846 = vlaneseq
  %v847 = vshrl.u32 %v846, 7
  %v848 = vsub.s32 1, %v847
  %v849 = vrot.slane %v93, %v848
  %v850 = vlaneseq
  %v851 = vshrl.u32 %v850, 7
  %v852 = vsub.s32 1, %v851
  %v853 = vrot.slane %v100, %v852
  %v854 = vlaneseq
  %v855 = vshrl.u32 %v854, 7
  %v856 = vsub.s32 1, %v855
  %v857 = vrot.slane %v107, %v856
  %v858 = vmul.bf16 %v824, %v829
  %v859 = vmul.bf16 %v807, %v833
  %v860 = vmul.bf16 %v808, %v837
  %v861 = vmul.bf16 %v809, %v841
  %v862 = vmul.bf16 %v810, %v845
  %v863 = vmul.bf16 %v811, %v849
  %v864 = vmul.bf16 %v812, %v853
  %v865 = vmul.bf16 %v813, %v857
  %s866 = scalar_lea.vmem %s1, 1
  %v867 = vld [vmem:[%s866] sm:$0x1]
  %v869 = vsel %vm479, %v867, 0
  %871 = vmatprep.subr.bf16.mxu0 %v783
  %872 = vmatpush1.bf16.msra.mxu0 %v782
  %873 = vmatprep.subr.bf16.mxu0 %v454
  %874 = vmatpush1.bf16.msra.mxu0 %v453
  %875 = vmatprep.subr.bf16.mxu0 %v859
  %876 = vmatpush1.bf16.msra.mxu0 %v858
  %877 = vmatprep.subr.bf16.mxu0 %v346
  %878 = vmatpush1.bf16.msra.mxu0 %v345
  %879 = vmatprep.subr.bf16.mxu0 0
  %880 = vmatpush1.bf16.msra.mxu0 0
  %881 = vmatprep.subr.bf16.mxu0 0
  %882 = vmatpush1.bf16.msra.mxu0 0
  %883 = vmatprep.subr.bf16.mxu0 0
  %884 = vmatpush1.bf16.msra.mxu0 0
  %885 = vmatprep.subr.bf16.mxu0 0
  %886 = vmatpush1.bf16.msra.mxu0 0
  %887 = vmatprep.subr.bf16.mxu0 0
  %888 = vmatpush1.bf16.msra.mxu0 0
  %889 = vmatprep.subr.bf16.mxu0 0
  %890 = vmatpush1.bf16.msra.mxu0 0
  %891 = vmatprep.subr.bf16.mxu0 0
  %892 = vmatpush1.bf16.msra.mxu0 0
  %893 = vmatprep.subr.bf16.mxu0 0
  %894 = vmatpush1.bf16.msra.mxu0 0
  %895 = vmatprep.subr.bf16.mxu0 0
  %896 = vmatpush1.bf16.msra.mxu0 0
  %897 = vmatprep.subr.bf16.mxu0 0
  %898 = vmatpush1.bf16.msra.mxu0 0
  %899 = vmatprep.subr.bf16.mxu0 0
  %900 = vmatpush1.bf16.msra.mxu0 0
  %901 = vmatprep.subr.bf16.mxu0 0
  %902 = vmatpush1.bf16.msra.mxu0 0
  %903 = vmatprep.mubr.bf16.mxu0 0
  %904 = vmatmul.mubr.bf16.gmra.mrb[0].mxu0 %v869
  %v905 = vpop.f32.mrb[0].mxu0
  %v906 = vadd.f32 %v478, %v905
  %v907 = vpop.f32.mrb[0].mxu0
  %v908 = vadd.f32 %v478, %v907
  %v909 = vpop.f32.mrb[0].mxu0
  %v910 = vpop.f32.mrb[0].mxu0
  %911 = vdwg.mxu0
  %912 = vmatprep.subr.bf16.mxu0 %v785
  %913 = vmatpush1.bf16.msra.mxu0 %v784
  %914 = vmatprep.subr.bf16.mxu0 %v456
  %915 = vmatpush1.bf16.msra.mxu0 %v455
  %916 = vmatprep.subr.bf16.mxu0 %v861
  %917 = vmatpush1.bf16.msra.mxu0 %v860
  %918 = vmatprep.subr.bf16.mxu0 %v348
  %919 = vmatpush1.bf16.msra.mxu0 %v347
  %920 = vmatprep.subr.bf16.mxu0 0
  %921 = vmatpush1.bf16.msra.mxu0 0
  %922 = vmatprep.subr.bf16.mxu0 0
  %923 = vmatpush1.bf16.msra.mxu0 0
  %924 = vmatprep.subr.bf16.mxu0 0
  %925 = vmatpush1.bf16.msra.mxu0 0
  %926 = vmatprep.subr.bf16.mxu0 0
  %927 = vmatpush1.bf16.msra.mxu0 0
  %928 = vmatprep.subr.bf16.mxu0 0
  %929 = vmatpush1.bf16.msra.mxu0 0
  %930 = vmatprep.subr.bf16.mxu0 0
  %931 = vmatpush1.bf16.msra.mxu0 0
  %932 = vmatprep.subr.bf16.mxu0 0
  %933 = vmatpush1.bf16.msra.mxu0 0
  %934 = vmatprep.subr.bf16.mxu0 0
  %935 = vmatpush1.bf16.msra.mxu0 0
  %936 = vmatprep.subr.bf16.mxu0 0
  %937 = vmatpush1.bf16.msra.mxu0 0
  %938 = vmatprep.subr.bf16.mxu0 0
  %939 = vmatpush1.bf16.msra.mxu0 0
  %940 = vmatprep.subr.bf16.mxu0 0
  %941 = vmatpush1.bf16.msra.mxu0 0
  %942 = vmatprep.subr.bf16.mxu0 0
  %943 = vmatpush1.bf16.msra.mxu0 0
  %944 = vmatprep.mubr.bf16.mxu0 0
  %945 = vmatmul.mubr.bf16.gmra.mrb[0].mxu0 %v869
  %v946 = vpop.f32.mrb[0].mxu0
  %v947 = vadd.f32 %v478, %v946
  %v948 = vpop.f32.mrb[0].mxu0
  %v949 = vadd.f32 %v478, %v948
  %v950 = vpop.f32.mrb[0].mxu0
  %v951 = vpop.f32.mrb[0].mxu0
  %952 = vdwg.mxu0
  %953 = vmatprep.subr.bf16.mxu0 %v787
  %954 = vmatpush1.bf16.msra.mxu0 %v786
  %955 = vmatprep.subr.bf16.mxu0 %v458
  %956 = vmatpush1.bf16.msra.mxu0 %v457
  %957 = vmatprep.subr.bf16.mxu0 %v863
  %958 = vmatpush1.bf16.msra.mxu0 %v862
  %959 = vmatprep.subr.bf16.mxu0 %v350
  %960 = vmatpush1.bf16.msra.mxu0 %v349
  %961 = vmatprep.subr.bf16.mxu0 0
  %962 = vmatpush1.bf16.msra.mxu0 0
  %963 = vmatprep.subr.bf16.mxu0 0
  %964 = vmatpush1.bf16.msra.mxu0 0
  %965 = vmatprep.subr.bf16.mxu0 0
  %966 = vmatpush1.bf16.msra.mxu0 0
  %967 = vmatprep.subr.bf16.mxu0 0
  %968 = vmatpush1.bf16.msra.mxu0 0
  %969 = vmatprep.subr.bf16.mxu0 0
  %970 = vmatpush1.bf16.msra.mxu0 0
  %971 = vmatprep.subr.bf16.mxu0 0
  %972 = vmatpush1.bf16.msra.mxu0 0
  %973 = vmatprep.subr.bf16.mxu0 0
  %974 = vmatpush1.bf16.msra.mxu0 0
  %975 = vmatprep.subr.bf16.mxu0 0
  %976 = vmatpush1.bf16.msra.mxu0 0
  %977 = vmatprep.subr.bf16.mxu0 0
  %978 = vmatpush1.bf16.msra.mxu0 0
  %979 = vmatprep.subr.bf16.mxu0 0
  %980 = vmatpush1.bf16.msra.mxu0 0
  %981 = vmatprep.subr.bf16.mxu0 0
  %982 = vmatpush1.bf16.msra.mxu0 0
  %983 = vmatprep.subr.bf16.mxu0 0
  %984 = vmatpush1.bf16.msra.mxu0 0
  %985 = vmatprep.mubr.bf16.mxu0 0
  %986 = vmatmul.mubr.bf16.gmra.mrb[0].mxu0 %v869
  %v987 = vpop.f32.mrb[0].mxu0
  %v988 = vadd.f32 %v478, %v987
  %v989 = vpop.f32.mrb[0].mxu0
  %v990 = vadd.f32 %v478, %v989
  %v991 = vpop.f32.mrb[0].mxu0
  %v992 = vpop.f32.mrb[0].mxu0
  %993 = vdwg.mxu0
  %994 = vmatprep.subr.bf16.mxu0 %v789
  %995 = vmatpush1.bf16.msra.mxu0 %v788
  %996 = vmatprep.subr.bf16.mxu0 %v460
  %997 = vmatpush1.bf16.msra.mxu0 %v459
  %998 = vmatprep.subr.bf16.mxu0 %v865
  %999 = vmatpush1.bf16.msra.mxu0 %v864
  %1000 = vmatprep.subr.bf16.mxu0 %v352
  %1001 = vmatpush1.bf16.msra.mxu0 %v351
  %1002 = vmatprep.subr.bf16.mxu0 0
  %1003 = vmatpush1.bf16.msra.mxu0 0
  %1004 = vmatprep.subr.bf16.mxu0 0
  %1005 = vmatpush1.bf16.msra.mxu0 0
  %1006 = vmatprep.subr.bf16.mxu0 0
  %1007 = vmatpush1.bf16.msra.mxu0 0
  %1008 = vmatprep.subr.bf16.mxu0 0
  %1009 = vmatpush1.bf16.msra.mxu0 0
  %1010 = vmatprep.subr.bf16.mxu0 0
  %1011 = vmatpush1.bf16.msra.mxu0 0
  %1012 = vmatprep.subr.bf16.mxu0 0
  %1013 = vmatpush1.bf16.msra.mxu0 0
  %1014 = vmatprep.subr.bf16.mxu0 0
  %1015 = vmatpush1.bf16.msra.mxu0 0
  %1016 = vmatprep.subr.bf16.mxu0 0
  %1017 = vmatpush1.bf16.msra.mxu0 0
  %1018 = vmatprep.subr.bf16.mxu0 0
  %1019 = vmatpush1.bf16.msra.mxu0 0
  %1020 = vmatprep.subr.bf16.mxu0 0
  %1021 = vmatpush1.bf16.msra.mxu0 0
  %1022 = vmatprep.subr.bf16.mxu0 0
  %1023 = vmatpush1.bf16.msra.mxu0 0
  %1024 = vmatprep.subr.bf16.mxu0 0
  %1025 = vmatpush1.bf16.msra.mxu0 0
  %1026 = vmatprep.mubr.bf16.mxu0 0
  %1027 = vmatmul.mubr.bf16.gmra.mrb[0].mxu0 %v869
  %v1028 = vpop.f32.mrb[0].mxu0
  %v1029 = vadd.f32 %v478, %v1028
  %v1030 = vpop.f32.mrb[0].mxu0
  %v1031 = vadd.f32 %v478, %v1030
  %v1032 = vpop.f32.mrb[0].mxu0
  %v1033 = vpop.f32.mrb[0].mxu0
  %1034 = vdwg.mxu0
  %v1035 = vtanh.pop %v906
  %v1036 = vtanh.pop %v908
  %v1037 = vtanh.pop %v947
  %v1038 = vtanh.pop %v949
  %v1039 = vtanh.pop %v988
  %v1040 = vtanh.pop %v990
  %v1041 = vtanh.pop %v1029
  %v1042 = vtanh.pop %v1031
  %v1051 = vcombine.low %v1035, %v1036
  %v1052 = vcombine.low %v1037, %v1038
  %v1053 = vcombine.low %v1039, %v1040
  %v1054 = vcombine.low %v1041, %v1042
  %v1056 = vunpack.c.l.s4 1966171168
  %v1057 = vunpack.c.0.s8 %v1056
  %v1058 = vlaneseq
  %v1059 = vshrl.u32 %v1058, 7
  %v1060 = vsub.s32 %v1057, %v1059
  %v1061 = vrot.slane %v1051, %v1060
  %v1063 = vunpack.c.l.s4 1966171168
  %v1064 = vunpack.c.0.s8 %v1063
  %v1065 = vlaneseq
  %v1066 = vshrl.u32 %v1065, 7
  %v1067 = vsub.s32 %v1064, %v1066
  %v1068 = vrot.slane %v1052, %v1067
  %v1070 = vunpack.c.l.s4 1966171168
  %v1071 = vunpack.c.0.s8 %v1070
  %v1072 = vlaneseq
  %v1073 = vshrl.u32 %v1072, 7
  %v1074 = vsub.s32 %v1071, %v1073
  %v1075 = vrot.slane %v1053, %v1074
  %v1077 = vunpack.c.l.s4 1966171168
  %v1078 = vunpack.c.0.s8 %v1077
  %v1079 = vlaneseq
  %v1080 = vshrl.u32 %v1079, 7
  %v1081 = vsub.s32 %v1078, %v1080
  %v1082 = vrot.slane %v1054, %v1081
  %v1083 = vcombine.low %v1061, %v1068
  %v1084 = vcombine.low %v1075, %v1082
  %v1086 = vunpack.c.l.s4 1966171168
  %v1087 = vunpack.c.0.s8 %v1086
  %v1088 = vlaneseq
  %v1089 = vshrl.u32 %v1088, 7
  %v1090 = vsub.s32 %v1087, %v1089
  %v1091 = vrot.slane %v1083, %v1090
  %v1093 = vunpack.c.l.s4 1966171168
  %v1094 = vunpack.c.0.s8 %v1093
  %v1095 = vlaneseq
  %v1096 = vshrl.u32 %v1095, 7
  %v1097 = vsub.s32 %v1094, %v1096
  %v1098 = vrot.slane %v1084, %v1097
  %v1099 = vcombine.low %v1091, %v1098
  %s1101 = scalar_lea.vmem %s4, 1
  %1102 = vst [vmem:[%s1101] ss:$4 sm:$0xff] %v1099
  %1103 = vrot.lane.b32.xlu0 %v172, 112
  %v1104 = vpop.permute.xlu0 %1103
  %1105 = vrot.lane.b32.xlu0 %v173, 112
  %v1106 = vpop.permute.xlu0 %1105
  %1107 = vrot.lane.b32.xlu0 %v174, 112
  %v1108 = vpop.permute.xlu0 %1107
  %1109 = vrot.lane.b32.xlu0 %v175, 112
  %v1110 = vpop.permute.xlu0 %1109
  %1111 = vrot.lane.b32.xlu0 %v176, 112
  %v1112 = vpop.permute.xlu0 %1111
  %1113 = vrot.lane.b32.xlu0 %v177, 112
  %v1114 = vpop.permute.xlu0 %1113
  %1115 = vrot.lane.b32.xlu0 %v178, 112
  %v1116 = vpop.permute.xlu0 %1115
  %1117 = vrot.lane.b32.xlu0 %v149, 112
  %v1118 = vpop.permute.xlu0 %1117
  %vm1119 = vcmask 916480
  %v1120 = vsel %vm1119, %v1104, %v1106
  %v1121 = vsel %vm1119, %v1106, %v1108
  %v1122 = vsel %vm1119, %v1108, %v1110
  %v1123 = vsel %vm1119, %v1110, %v1112
  %v1124 = vsel %vm1119, %v1112, %v1114
  %v1125 = vsel %vm1119, %v1114, %v1116
  %v1126 = vsel %vm1119, %v1116, %v1118
  %vm1134 = vcmask 916480
  %v1137 = vsel %vm1134, %v1118, %v1104
  %v1139 = vlaneseq
  %v1140 = vshrl.u32 %v1139, 7
  %v1141 = vsub.s32 3, %v1140
  %v1142 = vrot.slane %v214, %v1141
  %v1143 = vlaneseq
  %v1144 = vshrl.u32 %v1143, 7
  %v1145 = vsub.s32 3, %v1144
  %v1146 = vrot.slane %v221, %v1145
  %v1147 = vlaneseq
  %v1148 = vshrl.u32 %v1147, 7
  %v1149 = vsub.s32 3, %v1148
  %v1150 = vrot.slane %v228, %v1149
  %v1151 = vlaneseq
  %v1152 = vshrl.u32 %v1151, 7
  %v1153 = vsub.s32 3, %v1152
  %v1154 = vrot.slane %v235, %v1153
  %v1155 = vlaneseq
  %v1156 = vshrl.u32 %v1155, 7
  %v1157 = vsub.s32 3, %v1156
  %v1158 = vrot.slane %v242, %v1157
  %v1159 = vlaneseq
  %v1160 = vshrl.u32 %v1159, 7
  %v1161 = vsub.s32 3, %v1160
  %v1162 = vrot.slane %v249, %v1161
  %v1163 = vlaneseq
  %v1164 = vshrl.u32 %v1163, 7
  %v1165 = vsub.s32 3, %v1164
  %v1166 = vrot.slane %v256, %v1165
  %v1167 = vlaneseq
  %v1168 = vshrl.u32 %v1167, 7
  %v1169 = vsub.s32 3, %v1168
  %v1170 = vrot.slane %v263, %v1169
  %v1171 = vmul.bf16 %v1120, %v1142
  %v1172 = vmul.bf16 %v1121, %v1146
  %v1173 = vmul.bf16 %v1122, %v1150
  %v1174 = vmul.bf16 %v1123, %v1154
  %v1175 = vmul.bf16 %v1124, %v1158
  %v1176 = vmul.bf16 %v1125, %v1162
  %v1177 = vmul.bf16 %v1126, %v1166
  %v1178 = vmul.bf16 %v1137, %v1170
  %1179 = vrot.lane.b32.xlu0 %v172, 113
  %v1180 = vpop.permute.xlu0 %1179
  %1181 = vrot.lane.b32.xlu0 %v173, 113
  %v1182 = vpop.permute.xlu0 %1181
  %1183 = vrot.lane.b32.xlu0 %v174, 113
  %v1184 = vpop.permute.xlu0 %1183
  %1185 = vrot.lane.b32.xlu0 %v175, 113
  %v1186 = vpop.permute.xlu0 %1185
  %1187 = vrot.lane.b32.xlu0 %v176, 113
  %v1188 = vpop.permute.xlu0 %1187
  %1189 = vrot.lane.b32.xlu0 %v177, 113
  %v1190 = vpop.permute.xlu0 %1189
  %1191 = vrot.lane.b32.xlu0 %v178, 113
  %v1192 = vpop.permute.xlu0 %1191
  %1193 = vrot.lane.b32.xlu0 %v149, 113
  %v1194 = vpop.permute.xlu0 %1193
  %vm1195 = vcmask 924672
  %v1196 = vsel %vm1195, %v1180, %v1182
  %v1197 = vsel %vm1195, %v1182, %v1184
  %v1198 = vsel %vm1195, %v1184, %v1186
  %v1199 = vsel %vm1195, %v1186, %v1188
  %v1200 = vsel %vm1195, %v1188, %v1190
  %v1201 = vsel %vm1195, %v1190, %v1192
  %v1202 = vsel %vm1195, %v1192, %v1194
  %vm1210 = vcmask 924672
  %v1213 = vsel %vm1210, %v1194, %v1180
  %v1215 = vlaneseq
  %v1216 = vshrl.u32 %v1215, 7
  %v1217 = vsub.s32 3, %v1216
  %v1218 = vrot.slane %v58, %v1217
  %v1219 = vlaneseq
  %v1220 = vshrl.u32 %v1219, 7
  %v1221 = vsub.s32 3, %v1220
  %v1222 = vrot.slane %v65, %v1221
  %v1223 = vlaneseq
  %v1224 = vshrl.u32 %v1223, 7
  %v1225 = vsub.s32 3, %v1224
  %v1226 = vrot.slane %v72, %v1225
  %v1227 = vlaneseq
  %v1228 = vshrl.u32 %v1227, 7
  %v1229 = vsub.s32 3, %v1228
  %v1230 = vrot.slane %v79, %v1229
  %v1231 = vlaneseq
  %v1232 = vshrl.u32 %v1231, 7
  %v1233 = vsub.s32 3, %v1232
  %v1234 = vrot.slane %v86, %v1233
  %v1235 = vlaneseq
  %v1236 = vshrl.u32 %v1235, 7
  %v1237 = vsub.s32 3, %v1236
  %v1238 = vrot.slane %v93, %v1237
  %v1239 = vlaneseq
  %v1240 = vshrl.u32 %v1239, 7
  %v1241 = vsub.s32 3, %v1240
  %v1242 = vrot.slane %v100, %v1241
  %v1243 = vlaneseq
  %v1244 = vshrl.u32 %v1243, 7
  %v1245 = vsub.s32 3, %v1244
  %v1246 = vrot.slane %v107, %v1245
  %v1247 = vmul.bf16 %v1196, %v1218
  %v1248 = vmul.bf16 %v1197, %v1222
  %v1249 = vmul.bf16 %v1198, %v1226
  %v1250 = vmul.bf16 %v1199, %v1230
  %v1251 = vmul.bf16 %v1200, %v1234
  %v1252 = vmul.bf16 %v1201, %v1238
  %v1253 = vmul.bf16 %v1202, %v1242
  %v1254 = vmul.bf16 %v1213, %v1246
  %s1255 = scalar_lea.vmem %s1, 2
  %v1256 = vld [vmem:[%s1255] sm:$0x1]
  %v1258 = vsel %vm479, %v1256, 0
  %1260 = vmatprep.subr.bf16.mxu0 %v1172
  %1261 = vmatpush1.bf16.msra.mxu0 %v1171
  %1262 = vmatprep.subr.bf16.mxu0 %v1248
  %1263 = vmatpush1.bf16.msra.mxu0 %v1247
  %1264 = vmatprep.subr.bf16.mxu0 %v454
  %1265 = vmatpush1.bf16.msra.mxu0 %v453
  %1266 = vmatprep.subr.bf16.mxu0 %v270
  %1267 = vmatpush1.bf16.msra.mxu0 %v269
  %1268 = vmatprep.subr.bf16.mxu0 0
  %1269 = vmatpush1.bf16.msra.mxu0 0
  %1270 = vmatprep.subr.bf16.mxu0 0
  %1271 = vmatpush1.bf16.msra.mxu0 0
  %1272 = vmatprep.subr.bf16.mxu0 0
  %1273 = vmatpush1.bf16.msra.mxu0 0
  %1274 = vmatprep.subr.bf16.mxu0 0
  %1275 = vmatpush1.bf16.msra.mxu0 0
  %1276 = vmatprep.subr.bf16.mxu0 0
  %1277 = vmatpush1.bf16.msra.mxu0 0
  %1278 = vmatprep.subr.bf16.mxu0 0
  %1279 = vmatpush1.bf16.msra.mxu0 0
  %1280 = vmatprep.subr.bf16.mxu0 0
  %1281 = vmatpush1.bf16.msra.mxu0 0
  %1282 = vmatprep.subr.bf16.mxu0 0
  %1283 = vmatpush1.bf16.msra.mxu0 0
  %1284 = vmatprep.subr.bf16.mxu0 0
  %1285 = vmatpush1.bf16.msra.mxu0 0
  %1286 = vmatprep.subr.bf16.mxu0 0
  %1287 = vmatpush1.bf16.msra.mxu0 0
  %1288 = vmatprep.subr.bf16.mxu0 0
  %1289 = vmatpush1.bf16.msra.mxu0 0
  %1290 = vmatprep.subr.bf16.mxu0 0
  %1291 = vmatpush1.bf16.msra.mxu0 0
  %1292 = vmatprep.mubr.bf16.mxu0 0
  %1293 = vmatmul.mubr.bf16.gmra.mrb[0].mxu0 %v1258
  %v1294 = vpop.f32.mrb[0].mxu0
  %v1295 = vadd.f32 %v478, %v1294
  %v1296 = vpop.f32.mrb[0].mxu0
  %v1297 = vadd.f32 %v478, %v1296
  %v1298 = vpop.f32.mrb[0].mxu0
  %v1299 = vpop.f32.mrb[0].mxu0
  %1300 = vdwg.mxu0
  %1301 = vmatprep.subr.bf16.mxu0 %v1174
  %1302 = vmatpush1.bf16.msra.mxu0 %v1173
  %1303 = vmatprep.subr.bf16.mxu0 %v1250
  %1304 = vmatpush1.bf16.msra.mxu0 %v1249
  %1305 = vmatprep.subr.bf16.mxu0 %v456
  %1306 = vmatpush1.bf16.msra.mxu0 %v455
  %1307 = vmatprep.subr.bf16.mxu0 %v272
  %1308 = vmatpush1.bf16.msra.mxu0 %v271
  %1309 = vmatprep.subr.bf16.mxu0 0
  %1310 = vmatpush1.bf16.msra.mxu0 0
  %1311 = vmatprep.subr.bf16.mxu0 0
  %1312 = vmatpush1.bf16.msra.mxu0 0
  %1313 = vmatprep.subr.bf16.mxu0 0
  %1314 = vmatpush1.bf16.msra.mxu0 0
  %1315 = vmatprep.subr.bf16.mxu0 0
  %1316 = vmatpush1.bf16.msra.mxu0 0
  %1317 = vmatprep.subr.bf16.mxu0 0
  %1318 = vmatpush1.bf16.msra.mxu0 0
  %1319 = vmatprep.subr.bf16.mxu0 0
  %1320 = vmatpush1.bf16.msra.mxu0 0
  %1321 = vmatprep.subr.bf16.mxu0 0
  %1322 = vmatpush1.bf16.msra.mxu0 0
  %1323 = vmatprep.subr.bf16.mxu0 0
  %1324 = vmatpush1.bf16.msra.mxu0 0
  %1325 = vmatprep.subr.bf16.mxu0 0
  %1326 = vmatpush1.bf16.msra.mxu0 0
  %1327 = vmatprep.subr.bf16.mxu0 0
  %1328 = vmatpush1.bf16.msra.mxu0 0
  %1329 = vmatprep.subr.bf16.mxu0 0
  %1330 = vmatpush1.bf16.msra.mxu0 0
  %1331 = vmatprep.subr.bf16.mxu0 0
  %1332 = vmatpush1.bf16.msra.mxu0 0
  %1333 = vmatprep.mubr.bf16.mxu0 0
  %1334 = vmatmul.mubr.bf16.gmra.mrb[0].mxu0 %v1258
  %v1335 = vpop.f32.mrb[0].mxu0
  %v1336 = vadd.f32 %v478, %v1335
  %v1337 = vpop.f32.mrb[0].mxu0
  %v1338 = vadd.f32 %v478, %v1337
  %v1339 = vpop.f32.mrb[0].mxu0
  %v1340 = vpop.f32.mrb[0].mxu0
  %1341 = vdwg.mxu0
  %1342 = vmatprep.subr.bf16.mxu0 %v1176
  %1343 = vmatpush1.bf16.msra.mxu0 %v1175
  %1344 = vmatprep.subr.bf16.mxu0 %v1252
  %1345 = vmatpush1.bf16.msra.mxu0 %v1251
  %1346 = vmatprep.subr.bf16.mxu0 %v458
  %1347 = vmatpush1.bf16.msra.mxu0 %v457
  %1348 = vmatprep.subr.bf16.mxu0 %v274
  %1349 = vmatpush1.bf16.msra.mxu0 %v273
  %1350 = vmatprep.subr.bf16.mxu0 0
  %1351 = vmatpush1.bf16.msra.mxu0 0
  %1352 = vmatprep.subr.bf16.mxu0 0
  %1353 = vmatpush1.bf16.msra.mxu0 0
  %1354 = vmatprep.subr.bf16.mxu0 0
  %1355 = vmatpush1.bf16.msra.mxu0 0
  %1356 = vmatprep.subr.bf16.mxu0 0
  %1357 = vmatpush1.bf16.msra.mxu0 0
  %1358 = vmatprep.subr.bf16.mxu0 0
  %1359 = vmatpush1.bf16.msra.mxu0 0
  %1360 = vmatprep.subr.bf16.mxu0 0
  %1361 = vmatpush1.bf16.msra.mxu0 0
  %1362 = vmatprep.subr.bf16.mxu0 0
  %1363 = vmatpush1.bf16.msra.mxu0 0
  %1364 = vmatprep.subr.bf16.mxu0 0
  %1365 = vmatpush1.bf16.msra.mxu0 0
  %1366 = vmatprep.subr.bf16.mxu0 0
  %1367 = vmatpush1.bf16.msra.mxu0 0
  %1368 = vmatprep.subr.bf16.mxu0 0
  %1369 = vmatpush1.bf16.msra.mxu0 0
  %1370 = vmatprep.subr.bf16.mxu0 0
  %1371 = vmatpush1.bf16.msra.mxu0 0
  %1372 = vmatprep.subr.bf16.mxu0 0
  %1373 = vmatpush1.bf16.msra.mxu0 0
  %1374 = vmatprep.mubr.bf16.mxu0 0
  %1375 = vmatmul.mubr.bf16.gmra.mrb[0].mxu0 %v1258
  %v1376 = vpop.f32.mrb[0].mxu0
  %v1377 = vadd.f32 %v478, %v1376
  %v1378 = vpop.f32.mrb[0].mxu0
  %v1379 = vadd.f32 %v478, %v1378
  %v1380 = vpop.f32.mrb[0].mxu0
  %v1381 = vpop.f32.mrb[0].mxu0
  %1382 = vdwg.mxu0
  %1383 = vmatprep.subr.bf16.mxu0 %v1178
  %1384 = vmatpush1.bf16.msra.mxu0 %v1177
  %1385 = vmatprep.subr.bf16.mxu0 %v1254
  %1386 = vmatpush1.bf16.msra.mxu0 %v1253
  %1387 = vmatprep.subr.bf16.mxu0 %v460
  %1388 = vmatpush1.bf16.msra.mxu0 %v459
  %1389 = vmatprep.subr.bf16.mxu0 %v276
  %1390 = vmatpush1.bf16.msra.mxu0 %v275
  %1391 = vmatprep.subr.bf16.mxu0 0
  %1392 = vmatpush1.bf16.msra.mxu0 0
  %1393 = vmatprep.subr.bf16.mxu0 0
  %1394 = vmatpush1.bf16.msra.mxu0 0
  %1395 = vmatprep.subr.bf16.mxu0 0
  %1396 = vmatpush1.bf16.msra.mxu0 0
  %1397 = vmatprep.subr.bf16.mxu0 0
  %1398 = vmatpush1.bf16.msra.mxu0 0
  %1399 = vmatprep.subr.bf16.mxu0 0
  %1400 = vmatpush1.bf16.msra.mxu0 0
  %1401 = vmatprep.subr.bf16.mxu0 0
  %1402 = vmatpush1.bf16.msra.mxu0 0
  %1403 = vmatprep.subr.bf16.mxu0 0
  %1404 = vmatpush1.bf16.msra.mxu0 0
  %1405 = vmatprep.subr.bf16.mxu0 0
  %1406 = vmatpush1.bf16.msra.mxu0 0
  %1407 = vmatprep.subr.bf16.mxu0 0
  %1408 = vmatpush1.bf16.msra.mxu0 0
  %1409 = vmatprep.subr.bf16.mxu0 0
  %1410 = vmatpush1.bf16.msra.mxu0 0
  %1411 = vmatprep.subr.bf16.mxu0 0
  %1412 = vmatpush1.bf16.msra.mxu0 0
  %1413 = vmatprep.subr.bf16.mxu0 0
  %1414 = vmatpush1.bf16.msra.mxu0 0
  %1415 = vmatprep.mubr.bf16.mxu0 0
  %1416 = vmatmul.mubr.bf16.gmra.mrb[0].mxu0 %v1258
  %v1417 = vpop.f32.mrb[0].mxu0
  %v1418 = vadd.f32 %v478, %v1417
  %v1419 = vpop.f32.mrb[0].mxu0
  %v1420 = vadd.f32 %v478, %v1419
  %v1421 = vpop.f32.mrb[0].mxu0
  %v1422 = vpop.f32.mrb[0].mxu0
  %1423 = vdwg.mxu0
  %v1424 = vtanh.pop %v1295
  %v1425 = vtanh.pop %v1297
  %v1426 = vtanh.pop %v1336
  %v1427 = vtanh.pop %v1338
  %v1428 = vtanh.pop %v1377
  %v1429 = vtanh.pop %v1379
  %v1430 = vtanh.pop %v1418
  %v1431 = vtanh.pop %v1420
  %v1440 = vcombine.low %v1424, %v1425
  %v1441 = vcombine.low %v1426, %v1427
  %v1442 = vcombine.low %v1428, %v1429
  %v1443 = vcombine.low %v1430, %v1431
  %v1445 = vunpack.c.l.s4 1966171168
  %v1446 = vunpack.c.0.s8 %v1445
  %v1447 = vlaneseq
  %v1448 = vshrl.u32 %v1447, 7
  %v1449 = vsub.s32 %v1446, %v1448
  %v1450 = vrot.slane %v1440, %v1449
  %v1452 = vunpack.c.l.s4 1966171168
  %v1453 = vunpack.c.0.s8 %v1452
  %v1454 = vlaneseq
  %v1455 = vshrl.u32 %v1454, 7
  %v1456 = vsub.s32 %v1453, %v1455
  %v1457 = vrot.slane %v1441, %v1456
  %v1459 = vunpack.c.l.s4 1966171168
  %v1460 = vunpack.c.0.s8 %v1459
  %v1461 = vlaneseq
  %v1462 = vshrl.u32 %v1461, 7
  %v1463 = vsub.s32 %v1460, %v1462
  %v1464 = vrot.slane %v1442, %v1463
  %v1466 = vunpack.c.l.s4 1966171168
  %v1467 = vunpack.c.0.s8 %v1466
  %v1468 = vlaneseq
  %v1469 = vshrl.u32 %v1468, 7
  %v1470 = vsub.s32 %v1467, %v1469
  %v1471 = vrot.slane %v1443, %v1470
  %v1472 = vcombine.low %v1450, %v1457
  %v1473 = vcombine.low %v1464, %v1471
  %v1475 = vunpack.c.l.s4 1966171168
  %v1476 = vunpack.c.0.s8 %v1475
  %v1477 = vlaneseq
  %v1478 = vshrl.u32 %v1477, 7
  %v1479 = vsub.s32 %v1476, %v1478
  %v1480 = vrot.slane %v1472, %v1479
  %v1482 = vunpack.c.l.s4 1966171168
  %v1483 = vunpack.c.0.s8 %v1482
  %v1484 = vlaneseq
  %v1485 = vshrl.u32 %v1484, 7
  %v1486 = vsub.s32 %v1483, %v1485
  %v1487 = vrot.slane %v1473, %v1486
  %v1488 = vcombine.low %v1480, %v1487
  %s1490 = scalar_lea.vmem %s4, 2
  %1491 = vst [vmem:[%s1490] ss:$4 sm:$0xff] %v1488
  %1492 = vrot.lane.b32.xlu0 %v172, 111
  %v1493 = vpop.permute.xlu0 %1492
  %1494 = vrot.lane.b32.xlu0 %v173, 111
  %v1495 = vpop.permute.xlu0 %1494
  %1496 = vrot.lane.b32.xlu0 %v174, 111
  %v1497 = vpop.permute.xlu0 %1496
  %1498 = vrot.lane.b32.xlu0 %v175, 111
  %v1499 = vpop.permute.xlu0 %1498
  %1500 = vrot.lane.b32.xlu0 %v176, 111
  %v1501 = vpop.permute.xlu0 %1500
  %1502 = vrot.lane.b32.xlu0 %v177, 111
  %v1503 = vpop.permute.xlu0 %1502
  %1504 = vrot.lane.b32.xlu0 %v178, 111
  %v1505 = vpop.permute.xlu0 %1504
  %1506 = vrot.lane.b32.xlu0 %v149, 111
  %v1507 = vpop.permute.xlu0 %1506
  %vm1508 = vcmask 908288
  %v1509 = vsel %vm1508, %v1493, %v1495
  %v1510 = vsel %vm1508, %v1495, %v1497
  %v1511 = vsel %vm1508, %v1497, %v1499
  %v1512 = vsel %vm1508, %v1499, %v1501
  %v1513 = vsel %vm1508, %v1501, %v1503
  %v1514 = vsel %vm1508, %v1503, %v1505
  %v1515 = vsel %vm1508, %v1505, %v1507
  %vm1523 = vcmask 908288
  %v1526 = vsel %vm1523, %v1507, %v1493
  %v1532 = vunpack.c.l.b16 %v32
  %v1533 = vunpack.c.h.b16 %v32
  %v1534 = vunpack.c.l.b16 %v33
  %v1535 = vunpack.c.h.b16 %v33
  %v1536 = vunpack.c.l.b16 %v34
  %v1537 = vunpack.c.h.b16 %v34
  %v1538 = vunpack.c.l.b16 %v35
  %v1539 = vunpack.c.h.b16 %v35
  %v1540 = vpack.c.b16 %v1532, %v1532
  %v1541 = vpack.c.b16 %v1533, %v1533
  %v1542 = vpack.c.b16 %v1534, %v1534
  %v1543 = vpack.c.b16 %v1535, %v1535
  %v1544 = vpack.c.b16 %v1536, %v1536
  %v1545 = vpack.c.b16 %v1537, %v1537
  %v1546 = vpack.c.b16 %v1538, %v1538
  %v1547 = vpack.c.b16 %v1539, %v1539
  %v1549 = vpack.i.b16 %v1540, %v1540
  %v1551 = vlaneseq
  %v1552 = vshrl.u32 %v1551, 7
  %v1553 = vsub.s32 0, %v1552
  %v1554 = vrot.slane %v1549, %v1553
  %v1556 = vpack.i.b16 %v1541, %v1541
  %v1558 = vlaneseq
  %v1559 = vshrl.u32 %v1558, 7
  %v1560 = vsub.s32 0, %v1559
  %v1561 = vrot.slane %v1556, %v1560
  %v1563 = vpack.i.b16 %v1542, %v1542
  %v1565 = vlaneseq
  %v1566 = vshrl.u32 %v1565, 7
  %v1567 = vsub.s32 0, %v1566
  %v1568 = vrot.slane %v1563, %v1567
  %v1570 = vpack.i.b16 %v1543, %v1543
  %v1572 = vlaneseq
  %v1573 = vshrl.u32 %v1572, 7
  %v1574 = vsub.s32 0, %v1573
  %v1575 = vrot.slane %v1570, %v1574
  %v1577 = vpack.i.b16 %v1544, %v1544
  %v1579 = vlaneseq
  %v1580 = vshrl.u32 %v1579, 7
  %v1581 = vsub.s32 0, %v1580
  %v1582 = vrot.slane %v1577, %v1581
  %v1584 = vpack.i.b16 %v1545, %v1545
  %v1586 = vlaneseq
  %v1587 = vshrl.u32 %v1586, 7
  %v1588 = vsub.s32 0, %v1587
  %v1589 = vrot.slane %v1584, %v1588
  %v1591 = vpack.i.b16 %v1546, %v1546
  %v1593 = vlaneseq
  %v1594 = vshrl.u32 %v1593, 7
  %v1595 = vsub.s32 0, %v1594
  %v1596 = vrot.slane %v1591, %v1595
  %v1598 = vpack.i.b16 %v1547, %v1547
  %v1600 = vlaneseq
  %v1601 = vshrl.u32 %v1600, 7
  %v1602 = vsub.s32 0, %v1601
  %v1603 = vrot.slane %v1598, %v1602
  %v1604 = vmul.bf16 %v1509, %v1554
  %v1605 = vmul.bf16 %v1510, %v1561
  %v1606 = vmul.bf16 %v1511, %v1568
  %v1607 = vmul.bf16 %v1512, %v1575
  %v1608 = vmul.bf16 %v1513, %v1582
  %v1609 = vmul.bf16 %v1514, %v1589
  %v1610 = vmul.bf16 %v1515, %v1596
  %v1611 = vmul.bf16 %v1526, %v1603
  %s1612 = scalar_lea.vmem %s1, 3
  %v1613 = vld [vmem:[%s1612] sm:$0x1]
  %v1615 = vsel %vm479, %v1613, 0
  %1617 = vmatprep.subr.bf16.mxu0 %v1605
  %1618 = vmatpush1.bf16.msra.mxu0 %v1604
  %1619 = vmatprep.subr.bf16.mxu0 %v1172
  %1620 = vmatpush1.bf16.msra.mxu0 %v1171
  %1621 = vmatprep.subr.bf16.mxu0 %v783
  %1622 = vmatpush1.bf16.msra.mxu0 %v782
  %1623 = vmatprep.subr.bf16.mxu0 %v454
  %1624 = vmatpush1.bf16.msra.mxu0 %v453
  %1625 = vmatprep.subr.bf16.mxu0 0
  %1626 = vmatpush1.bf16.msra.mxu0 0
  %1627 = vmatprep.subr.bf16.mxu0 0
  %1628 = vmatpush1.bf16.msra.mxu0 0
  %1629 = vmatprep.subr.bf16.mxu0 0
  %1630 = vmatpush1.bf16.msra.mxu0 0
  %1631 = vmatprep.subr.bf16.mxu0 0
  %1632 = vmatpush1.bf16.msra.mxu0 0
  %1633 = vmatprep.subr.bf16.mxu0 0
  %1634 = vmatpush1.bf16.msra.mxu0 0
  %1635 = vmatprep.subr.bf16.mxu0 0
  %1636 = vmatpush1.bf16.msra.mxu0 0
  %1637 = vmatprep.subr.bf16.mxu0 0
  %1638 = vmatpush1.bf16.msra.mxu0 0
  %1639 = vmatprep.subr.bf16.mxu0 0
  %1640 = vmatpush1.bf16.msra.mxu0 0
  %1641 = vmatprep.subr.bf16.mxu0 0
  %1642 = vmatpush1.bf16.msra.mxu0 0
  %1643 = vmatprep.subr.bf16.mxu0 0
  %1644 = vmatpush1.bf16.msra.mxu0 0
  %1645 = vmatprep.subr.bf16.mxu0 0
  %1646 = vmatpush1.bf16.msra.mxu0 0
  %1647 = vmatprep.subr.bf16.mxu0 0
  %1648 = vmatpush1.bf16.msra.mxu0 0
  %1649 = vmatprep.mubr.bf16.mxu0 0
  %1650 = vmatmul.mubr.bf16.gmra.mrb[0].mxu0 %v1615
  %v1651 = vpop.f32.mrb[0].mxu0
  %v1652 = vadd.f32 %v478, %v1651
  %v1653 = vpop.f32.mrb[0].mxu0
  %v1654 = vadd.f32 %v478, %v1653
  %v1655 = vpop.f32.mrb[0].mxu0
  %v1656 = vpop.f32.mrb[0].mxu0
  %1657 = vdwg.mxu0
  %1658 = vmatprep.subr.bf16.mxu0 %v1607
  %1659 = vmatpush1.bf16.msra.mxu0 %v1606
  %1660 = vmatprep.subr.bf16.mxu0 %v1174
  %1661 = vmatpush1.bf16.msra.mxu0 %v1173
  %1662 = vmatprep.subr.bf16.mxu0 %v785
  %1663 = vmatpush1.bf16.msra.mxu0 %v784
  %1664 = vmatprep.subr.bf16.mxu0 %v456
  %1665 = vmatpush1.bf16.msra.mxu0 %v455
  %1666 = vmatprep.subr.bf16.mxu0 0
  %1667 = vmatpush1.bf16.msra.mxu0 0
  %1668 = vmatprep.subr.bf16.mxu0 0
  %1669 = vmatpush1.bf16.msra.mxu0 0
  %1670 = vmatprep.subr.bf16.mxu0 0
  %1671 = vmatpush1.bf16.msra.mxu0 0
  %1672 = vmatprep.subr.bf16.mxu0 0
  %1673 = vmatpush1.bf16.msra.mxu0 0
  %1674 = vmatprep.subr.bf16.mxu0 0
  %1675 = vmatpush1.bf16.msra.mxu0 0
  %1676 = vmatprep.subr.bf16.mxu0 0
  %1677 = vmatpush1.bf16.msra.mxu0 0
  %1678 = vmatprep.subr.bf16.mxu0 0
  %1679 = vmatpush1.bf16.msra.mxu0 0
  %1680 = vmatprep.subr.bf16.mxu0 0
  %1681 = vmatpush1.bf16.msra.mxu0 0
  %1682 = vmatprep.subr.bf16.mxu0 0
  %1683 = vmatpush1.bf16.msra.mxu0 0
  %1684 = vmatprep.subr.bf16.mxu0 0
  %1685 = vmatpush1.bf16.msra.mxu0 0
  %1686 = vmatprep.subr.bf16.mxu0 0
  %1687 = vmatpush1.bf16.msra.mxu0 0
  %1688 = vmatprep.subr.bf16.mxu0 0
  %1689 = vmatpush1.bf16.msra.mxu0 0
  %1690 = vmatprep.mubr.bf16.mxu0 0
  %1691 = vmatmul.mubr.bf16.gmra.mrb[0].mxu0 %v1615
  %v1692 = vpop.f32.mrb[0].mxu0
  %v1693 = vadd.f32 %v478, %v1692
  %v1694 = vpop.f32.mrb[0].mxu0
  %v1695 = vadd.f32 %v478, %v1694
  %v1696 = vpop.f32.mrb[0].mxu0
  %v1697 = vpop.f32.mrb[0].mxu0
  %1698 = vdwg.mxu0
  %1699 = vmatprep.subr.bf16.mxu0 %v1609
  %1700 = vmatpush1.bf16.msra.mxu0 %v1608
  %1701 = vmatprep.subr.bf16.mxu0 %v1176
  %1702 = vmatpush1.bf16.msra.mxu0 %v1175
  %1703 = vmatprep.subr.bf16.mxu0 %v787
  %1704 = vmatpush1.bf16.msra.mxu0 %v786
  %1705 = vmatprep.subr.bf16.mxu0 %v458
  %1706 = vmatpush1.bf16.msra.mxu0 %v457
  %1707 = vmatprep.subr.bf16.mxu0 0
  %1708 = vmatpush1.bf16.msra.mxu0 0
  %1709 = vmatprep.subr.bf16.mxu0 0
  %1710 = vmatpush1.bf16.msra.mxu0 0
  %1711 = vmatprep.subr.bf16.mxu0 0
  %1712 = vmatpush1.bf16.msra.mxu0 0
  %1713 = vmatprep.subr.bf16.mxu0 0
  %1714 = vmatpush1.bf16.msra.mxu0 0
  %1715 = vmatprep.subr.bf16.mxu0 0
  %1716 = vmatpush1.bf16.msra.mxu0 0
  %1717 = vmatprep.subr.bf16.mxu0 0
  %1718 = vmatpush1.bf16.msra.mxu0 0
  %1719 = vmatprep.subr.bf16.mxu0 0
  %1720 = vmatpush1.bf16.msra.mxu0 0
  %1721 = vmatprep.subr.bf16.mxu0 0
  %1722 = vmatpush1.bf16.msra.mxu0 0
  %1723 = vmatprep.subr.bf16.mxu0 0
  %1724 = vmatpush1.bf16.msra.mxu0 0
  %1725 = vmatprep.subr.bf16.mxu0 0
  %1726 = vmatpush1.bf16.msra.mxu0 0
  %1727 = vmatprep.subr.bf16.mxu0 0
  %1728 = vmatpush1.bf16.msra.mxu0 0
  %1729 = vmatprep.subr.bf16.mxu0 0
  %1730 = vmatpush1.bf16.msra.mxu0 0
  %1731 = vmatprep.mubr.bf16.mxu0 0
  %1732 = vmatmul.mubr.bf16.gmra.mrb[0].mxu0 %v1615
  %v1733 = vpop.f32.mrb[0].mxu0
  %v1734 = vadd.f32 %v478, %v1733
  %v1735 = vpop.f32.mrb[0].mxu0
  %v1736 = vadd.f32 %v478, %v1735
  %v1737 = vpop.f32.mrb[0].mxu0
  %v1738 = vpop.f32.mrb[0].mxu0
  %1739 = vdwg.mxu0
  %1740 = vmatprep.subr.bf16.mxu0 %v1611
  %1741 = vmatpush1.bf16.msra.mxu0 %v1610
  %1742 = vmatprep.subr.bf16.mxu0 %v1178
  %1743 = vmatpush1.bf16.msra.mxu0 %v1177
  %1744 = vmatprep.subr.bf16.mxu0 %v789
  %1745 = vmatpush1.bf16.msra.mxu0 %v788
  %1746 = vmatprep.subr.bf16.mxu0 %v460
  %1747 = vmatpush1.bf16.msra.mxu0 %v459
  %1748 = vmatprep.subr.bf16.mxu0 0
  %1749 = vmatpush1.bf16.msra.mxu0 0
  %1750 = vmatprep.subr.bf16.mxu0 0
  %1751 = vmatpush1.bf16.msra.mxu0 0
  %1752 = vmatprep.subr.bf16.mxu0 0
  %1753 = vmatpush1.bf16.msra.mxu0 0
  %1754 = vmatprep.subr.bf16.mxu0 0
  %1755 = vmatpush1.bf16.msra.mxu0 0
  %1756 = vmatprep.subr.bf16.mxu0 0
  %1757 = vmatpush1.bf16.msra.mxu0 0
  %1758 = vmatprep.subr.bf16.mxu0 0
  %1759 = vmatpush1.bf16.msra.mxu0 0
  %1760 = vmatprep.subr.bf16.mxu0 0
  %1761 = vmatpush1.bf16.msra.mxu0 0
  %1762 = vmatprep.subr.bf16.mxu0 0
  %1763 = vmatpush1.bf16.msra.mxu0 0
  %1764 = vmatprep.subr.bf16.mxu0 0
  %1765 = vmatpush1.bf16.msra.mxu0 0
  %1766 = vmatprep.subr.bf16.mxu0 0
  %1767 = vmatpush1.bf16.msra.mxu0 0
  %1768 = vmatprep.subr.bf16.mxu0 0
  %1769 = vmatpush1.bf16.msra.mxu0 0
  %1770 = vmatprep.subr.bf16.mxu0 0
  %1771 = vmatpush1.bf16.msra.mxu0 0
  %1772 = vmatprep.mubr.bf16.mxu0 0
  %1773 = vmatmul.mubr.bf16.gmra.mrb[0].mxu0 %v1615
  %v1774 = vpop.f32.mrb[0].mxu0
  %v1775 = vadd.f32 %v478, %v1774
  %v1776 = vpop.f32.mrb[0].mxu0
  %v1777 = vadd.f32 %v478, %v1776
  %v1778 = vpop.f32.mrb[0].mxu0
  %v1779 = vpop.f32.mrb[0].mxu0
  %1780 = vdwg.mxu0
  %v1781 = vtanh.pop %v1652
  %v1782 = vtanh.pop %v1654
  %v1783 = vtanh.pop %v1693
  %v1784 = vtanh.pop %v1695
  %v1785 = vtanh.pop %v1734
  %v1786 = vtanh.pop %v1736
  %v1787 = vtanh.pop %v1775
  %v1788 = vtanh.pop %v1777
  %v1797 = vcombine.low %v1781, %v1782
  %v1798 = vcombine.low %v1783, %v1784
  %v1799 = vcombine.low %v1785, %v1786
  %v1800 = vcombine.low %v1787, %v1788
  %v1802 = vunpack.c.l.s4 1966171168
  %v1803 = vunpack.c.0.s8 %v1802
  %v1804 = vlaneseq
  %v1805 = vshrl.u32 %v1804, 7
  %v1806 = vsub.s32 %v1803, %v1805
  %v1807 = vrot.slane %v1797, %v1806
  %v1809 = vunpack.c.l.s4 1966171168
  %v1810 = vunpack.c.0.s8 %v1809
  %v1811 = vlaneseq
  %v1812 = vshrl.u32 %v1811, 7
  %v1813 = vsub.s32 %v1810, %v1812
  %v1814 = vrot.slane %v1798, %v1813
  %v1816 = vunpack.c.l.s4 1966171168
  %v1817 = vunpack.c.0.s8 %v1816
  %v1818 = vlaneseq
  %v1819 = vshrl.u32 %v1818, 7
  %v1820 = vsub.s32 %v1817, %v1819
  %v1821 = vrot.slane %v1799, %v1820
  %v1823 = vunpack.c.l.s4 1966171168
  %v1824 = vunpack.c.0.s8 %v1823
  %v1825 = vlaneseq
  %v1826 = vshrl.u32 %v1825, 7
  %v1827 = vsub.s32 %v1824, %v1826
  %v1828 = vrot.slane %v1800, %v1827
  %v1829 = vcombine.low %v1807, %v1814
  %v1830 = vcombine.low %v1821, %v1828
  %v1832 = vunpack.c.l.s4 1966171168
  %v1833 = vunpack.c.0.s8 %v1832
  %v1834 = vlaneseq
  %v1835 = vshrl.u32 %v1834, 7
  %v1836 = vsub.s32 %v1833, %v1835
  %v1837 = vrot.slane %v1829, %v1836
  %v1839 = vunpack.c.l.s4 1966171168
  %v1840 = vunpack.c.0.s8 %v1839
  %v1841 = vlaneseq
  %v1842 = vshrl.u32 %v1841, 7
  %v1843 = vsub.s32 %v1840, %v1842
  %v1844 = vrot.slane %v1830, %v1843
  %v1845 = vcombine.low %v1837, %v1844
  %s1847 = scalar_lea.vmem %s4, 3
  %1848 = vst [vmem:[%s1847] ss:$4 sm:$0xff] %v1845
  // Predicated region
  $region18: #{generator_forward.11} parent=0 // pred_check
    _
  $region19: #{generator_forward.11} parent=0 // pred_check_branch
    %1850 = sbr.rel (0) target = $region21
  $region20: #{generator_forward.11} parent=0 // pred_region
    _
  $region21: #{generator_forward.11} parent=0 // pred_fallthru
    _
  // Predicated region
  $region22: #{generator_forward.11} parent=0 // pred_check
    _
  $region23: #{generator_forward.11} parent=0 // pred_check_branch
    %1852 = sbr.rel (0) target = $region25
  $region24: #{generator_forward.11} parent=0 // pred_region
    _
  $region25: #{generator_forward.11} parent=0 // pred_fallthru
    _

</llo_original>
